<compile_context>
chip_gen: v7x
topology: tpu7x:2x2x1
jax: 0.10.0
libtpu: 0.0.40
codegen_flags: <defaults>
</compile_context>

<pallas_src>
import functools

import jax
import jax.numpy as jnp
import numpy as np
from jax import lax
from jax.experimental import pallas as pl
from jax.experimental.pallas import tpu as pltpu

VECTOR_SIZE = 32          # args.vector_size
HIDDEN_SIZE = 64          # hidden_size
POINT_LEVEL_4_3 = True    # 'point_level-4-3' in args.other_params
LN_EPS = 1e-5

# Set to jnp.bfloat16 on v6e/v7x to halve MXU-input / VMEM traffic (gate math
# and LayerNorm stay in f32 — required on v5e whose VPU/EUP have no bf16).
# Kept at f32 here so the strict numerical check against the f32 reference holds.
MXU_DTYPE = jnp.float32


# ---------------------------------------------------------------------------
# Fused kernel: [MLP -> MLP -> GRU-l0 input gates] (time-parallel) + 2-layer
# GRU recurrence (serial over time), one batch tile per grid step.
# ---------------------------------------------------------------------------
def _fused_subgraph_gru_kernel(
        x_ref,                                             # [S, tb, V]  (time-major)
        w0_ref, b0_ref, g0_ref, be0_ref,                   # MLP layer_0
        w1_ref, b1_ref, g1_ref, be1_ref,                   # MLP layer_0_again
        wih0_ref, bih0_ref, whh0_ref, bhh0_ref,            # GRU layer 0 (per-gate)
        wih1_ref, bih1_ref, whh1_ref, bhh1_ref,            # GRU layer 1 (per-gate)
        hn_ref,                                            # [tb, H]  (output)
        gx_scr,                                            # [3, S*tb, H] VMEM scratch
        *, unroll, second_mlp):
    S, tb, V = x_ref.shape
    H = hn_ref.shape[-1]

    def mxu_dot(a, b):
        return jnp.dot(a.astype(MXU_DTYPE), b.astype(MXU_DTYPE),
                       preferred_element_type=jnp.float32)

    def mlp(x, w_ref, b_ref, gamma_ref, beta_ref):
        y = mxu_dot(x, w_ref[...]) + b_ref[...]
        u = jnp.mean(y, axis=-1, keepdims=True)
        var = jnp.mean(jnp.square(y - u), axis=-1, keepdims=True)
        yn = (y - u) * lax.rsqrt(var + LN_EPS)
        return jnp.maximum(gamma_ref[...] * yn + beta_ref[...], 0.0)

    # ---- Phase 1 (time-parallel): MLP x2 + hoisted GRU layer-0 ih gates ----
    # x @ W_ih_l0 does not depend on t, so it is computed for ALL timesteps in
    # one matmul per gate (rows = S*tb, time-major: row index = s*tb + b) and
    # parked in VMEM scratch.  The reshape below is layout-free because the
    # wrapper guarantees tb % 8 == 0.
    x_all = x_ref[...].reshape(S * tb, V)                 # [S*tb, V]
    x1 = mlp(x_all, w0_ref, b0_ref, g0_ref, be0_ref)      # [S*tb, H]
    x2 = mlp(x1, w1_ref, b1_ref, g1_ref, be1_ref) if second_mlp else x1
    for g in range(3):                                    # gate order: r, z, n
        gx_scr[g] = mxu_dot(x2, wih0_ref[g]) + bih0_ref[g]

    # ---- Phase 2 (serial over time): 2-layer GRU recurrence ----------------
    def step(t, carry):
        h0, h1 = carry
        row = pl.multiple_of(t * tb, 8)                   # aligned contiguous slice
        gr0 = gx_scr[0, pl.ds(row, tb)]                   # [tb, H]
        gz0 = gx_scr[1, pl.ds(row, tb)]
        gn0 = gx_scr[2, pl.ds(row, tb)]
        # ----- layer 0 (ih part precomputed; per-gate [H,H] hh matmuls) -----
        ghr0 = mxu_dot(h0, whh0_ref[0]) + bhh0_ref[0]
        ghz0 = mxu_dot(h0, whh0_ref[1]) + bhh0_ref[1]
        ghn0 = mxu_dot(h0, whh0_ref[2]) + bhh0_ref[2]
        r0 = jax.nn.sigmoid(gr0 + ghr0)
        z0 = jax.nn.sigmoid(gz0 + ghz0)
        n0 = jnp.tanh(gn0 + r0 * ghn0)                    # torch: b_hn inside r*()
        h0n = (1.0 - z0) * n0 + z0 * h0
        # ----- layer 1 -------------------------------------------------------
        gir1 = mxu_dot(h0n, wih1_ref[0]) + bih1_ref[0]
        giz1 = mxu_dot(h0n, wih1_ref[1]) + bih1_ref[1]
        gin1 = mxu_dot(h0n, wih1_ref[2]) + bih1_ref[2]
        ghr1 = mxu_dot(h1, whh1_ref[0]) + bhh1_ref[0]
        ghz1 = mxu_dot(h1, whh1_ref[1]) + bhh1_ref[1]
        ghn1 = mxu_dot(h1, whh1_ref[2]) + bhh1_ref[2]
        r1 = jax.nn.sigmoid(gir1 + ghr1)
        z1 = jax.nn.sigmoid(giz1 + ghz1)
        n1 = jnp.tanh(gin1 + r1 * ghn1)
        h1n = (1.0 - z1) * n1 + z1 * h1
        return (h0n, h1n)

    h0 = jnp.zeros((tb, H), jnp.float32)
    h1 = jnp.zeros((tb, H), jnp.float32)
    _, h1 = lax.fori_loop(0, S, step, (h0, h1), unroll=unroll)
    hn_ref[...] = h1.astype(hn_ref.dtype)


def _subgraph_gru_pallas(x_tmajor, params, *, tb):
    """x_tmajor: [S, Bp, V] time-major, Bp a multiple of tb (tb % 8 == 0).
    Returns hn[-1]: [Bp, H]."""
    S, Bp, V = x_tmajor.shape
    w0, b0, g0, be0 = params["layer_0"]
    w1, b1, g1, be1 = params["layer_0_again"]
    wih0, bih0, whh0, bhh0, wih1, bih1, whh1, bhh1 = params["gru"]
    H = w0.shape[1]

    def full(shape):
        r = len(shape)
        return pl.BlockSpec(shape, lambda b, _r=r: (0,) * _r)

    unroll = True if S <= 32 else 8
    kernel = functools.partial(_fused_subgraph_gru_kernel,
                               unroll=unroll, second_mlp=POINT_LEVEL_4_3)

    return pl.pallas_call(
        kernel,
        out_shape=jax.ShapeDtypeStruct((Bp, H), jnp.float32),
        grid=(Bp // tb,),
        in_specs=[
            pl.BlockSpec((S, tb, V), lambda b: (0, b, 0)),
            full(w0.shape), full(b0.shape), full(g0.shape), full(be0.shape),
            full(w1.shape), full(b1.shape), full(g1.shape), full(be1.shape),
            full(wih0.shape), full(bih0.shape), full(whh0.shape), full(bhh0.shape),
            full(wih1.shape), full(bih1.shape), full(whh1.shape), full(bhh1.shape),
        ],
        out_specs=pl.BlockSpec((tb, H), lambda b: (b, 0)),
        scratch_shapes=[
            pltpu.VMEM((3, S * tb, H), jnp.float32),   # hoisted layer-0 ih gates
        ],
        compiler_params=pltpu.CompilerParams(
            dimension_semantics=("parallel",)),        # shard batch tiles across TCs
    )(x_tmajor, w0, b0, g0, be0, w1, b1, g1, be1,
      wih0, bih0, whh0, bhh0, wih1, bih1, whh1, bhh1)


# ---------------------------------------------------------------------------
# Module wrapper
# ---------------------------------------------------------------------------
def point_level_subgraph_lane_forward(hidden_states, lengths, params, *,
                                      batch_tile=256):
    """hidden_states: [B, S, vector_size]. Returns (hn[-1] of shape [B, H], None)."""
    del lengths  # unused in the torch forward as well
    assert batch_tile % 8 == 0
    B, S, V = hidden_states.shape
    x = hidden_states.astype(jnp.float32)

    # Always pad the batch to a multiple of 8 so every in-kernel slab is
    # sublane-tile aligned (zero rows are harmless; sliced off below).
    Bp = -(-B // 8) * 8
    if Bp <= batch_tile:
        tb = Bp                                        # single tile
    else:
        tb = batch_tile
        Bp = -(-B // tb) * tb
    if Bp != B:
        x = jnp.pad(x, ((0, Bp - B), (0, 0), (0, 0)))

    # Time-major layout: one cheap XLA transpose outside the kernel buys
    # contiguous per-timestep slabs inside it.
    x_tmajor = jnp.transpose(x, (1, 0, 2))             # [S, Bp, V]

    hn = _subgraph_gru_pallas(x_tmajor, params, tb=tb)
    return hn[:B], None


# ---------------------------------------------------------------------------
# Deterministic parameter init (mimics PyTorch default uniform init ranges)
# ---------------------------------------------------------------------------
def _uniform(key, shape, k):
    return jax.random.uniform(key, shape, jnp.float32, minval=-k, maxval=k)


def init_params(key, vector_size, hidden_size):
    H = hidden_size
    keys = jax.random.split(key, 16)
    params = {}

    k0 = 1.0 / np.sqrt(vector_size)
    params["layer_0"] = (
        _uniform(keys[0], (vector_size, H), k0),       # linear weight [in, out]
        _uniform(keys[1], (1, H), k0),                 # linear bias
        jnp.ones((1, H), jnp.float32),                 # LayerNorm weight
        jnp.zeros((1, H), jnp.float32),                # LayerNorm bias
    )

    k1 = 1.0 / np.sqrt(H)
    params["layer_0_again"] = (
        _uniform(keys[2], (H, H), k1),
        _uniform(keys[3], (1, H), k1),
        jnp.ones((1, H), jnp.float32),
        jnp.zeros((1, H), jnp.float32),
    )

    # GRU weights per gate (r, z, n):  [3, H, H], applied as x @ W[g].
    # From torch:  W[g] = weight_xx_l{k}[g*H:(g+1)*H, :].T
    kg = 1.0 / np.sqrt(H)
    params["gru"] = (
        _uniform(keys[4], (3, H, H), kg),    # W_ih_l0
        _uniform(keys[5], (3, 1, H), kg),    # b_ih_l0
        _uniform(keys[6], (3, H, H), kg),    # W_hh_l0
        _uniform(keys[7], (3, 1, H), kg),    # b_hh_l0
        _uniform(keys[8], (3, H, H), kg),    # W_ih_l1
        _uniform(keys[9], (3, 1, H), kg),    # b_ih_l1
        _uniform(keys[10], (3, H, H), kg),   # W_hh_l1
        _uniform(keys[11], (3, 1, H), kg),   # b_hh_l1
    )
    return params


# ---------------------------------------------------------------------------
# Pure-JAX reference (mirrors the PyTorch semantics exactly) for validation
# ---------------------------------------------------------------------------
def _mlp_ref(x, w, b, g, beta):
    y = x @ w + b
    u = y.mean(-1, keepdims=True)
    s = ((y - u) ** 2).mean(-1, keepdims=True)
    yn = (y - u) / jnp.sqrt(s + LN_EPS)
    return jnp.maximum(g * yn + beta, 0.0)


def _gru_ref(x_bsh, gru_params):
    wih0, bih0, whh0, bhh0, wih1, bih1, whh1, bhh1 = gru_params
    B, S, H = x_bsh.shape

    def cell(x_t, h, wih, bih, whh, bhh):
        r = jax.nn.sigmoid(x_t @ wih[0] + bih[0] + h @ whh[0] + bhh[0])
        z = jax.nn.sigmoid(x_t @ wih[1] + bih[1] + h @ whh[1] + bhh[1])
        n = jnp.tanh(x_t @ wih[2] + bih[2] + r * (h @ whh[2] + bhh[2]))
        return (1.0 - z) * n + z * h

    def step(carry, x_t):
        h0, h1 = carry
        h0 = cell(x_t, h0, wih0, bih0, whh0, bhh0)
        h1 = cell(h0, h1, wih1, bih1, whh1, bhh1)
        return (h0, h1), None

    h0 = jnp.zeros((B, H), jnp.float32)
    h1 = jnp.zeros((B, H), jnp.float32)
    (h0, h1), _ = lax.scan(step, (h0, h1), jnp.swapaxes(x_bsh, 0, 1))
    return h1


def reference_forward(hidden_states, params):
    B, S, V = hidden_states.shape
    x = _mlp_ref(hidden_states.reshape(B * S, V), *params["layer_0"])
    if POINT_LEVEL_4_3:
        x = _mlp_ref(x, *params["layer_0_again"])
    return _gru_ref(x.reshape(B, S, -1), params["gru"])


# ---------------------------------------------------------------------------
if __name__ == "__main__":
    key = jax.random.PRNGKey(0)
    k_params, k_x1, k_x2 = jax.random.split(key, 3)
    params = init_params(k_params, VECTOR_SIZE, HIDDEN_SIZE)

    # Case 1: small shapes matching the module defaults (single batch tile,
    # batch padded 2 -> 8 inside the wrapper).
    B, S = 2, 8
    hidden_states = jax.random.normal(k_x1, (B, S, VECTOR_SIZE), jnp.float32)
    lengths = jnp.full((B,), S, dtype=jnp.int32)  # present in signature, unused
    hn_last, _ = point_level_subgraph_lane_forward(hidden_states, lengths, params)
    hn_last = jax.block_until_ready(hn_last)
    ref = jax.block_until_ready(reference_forward(hidden_states, params))
    np.testing.assert_allclose(np.asarray(hn_last), np.asarray(ref),
                               rtol=1e-4, atol=1e-4)

    # Case 2: batch > tile (exercises padding + the multi-tile parallel grid).
    B2, S2 = 20, 8
    hs2 = jax.random.normal(k_x2, (B2, S2, VECTOR_SIZE), jnp.float32)
    hn2, _ = point_level_subgraph_lane_forward(
        hs2, jnp.full((B2,), S2, jnp.int32), params, batch_tile=8)
    hn2 = jax.block_until_ready(hn2)
    ref2 = jax.block_until_ready(reference_forward(hs2, params))
    np.testing.assert_allclose(np.asarray(hn2), np.asarray(ref2),
                               rtol=1e-4, atol=1e-4)

    print("KERNEL_OK")
</pallas_src>

<mosaic_0001>
module attributes {stable_mosaic.version = 11 : i64} {
  func.func @_fused_subgraph_gru_kernel(%arg0: i32, %arg1: memref<8x8x32xf32, #tpu.memory_space<vmem>>, %arg2: memref<32x64xf32, #tpu.memory_space<vmem>>, %arg3: memref<1x64xf32, #tpu.memory_space<vmem>>, %arg4: memref<1x64xf32, #tpu.memory_space<vmem>>, %arg5: memref<1x64xf32, #tpu.memory_space<vmem>>, %arg6: memref<64x64xf32, #tpu.memory_space<vmem>>, %arg7: memref<1x64xf32, #tpu.memory_space<vmem>>, %arg8: memref<1x64xf32, #tpu.memory_space<vmem>>, %arg9: memref<1x64xf32, #tpu.memory_space<vmem>>, %arg10: memref<3x64x64xf32, #tpu.memory_space<vmem>>, %arg11: memref<3x1x64xf32, #tpu.memory_space<vmem>>, %arg12: memref<3x64x64xf32, #tpu.memory_space<vmem>>, %arg13: memref<3x1x64xf32, #tpu.memory_space<vmem>>, %arg14: memref<3x64x64xf32, #tpu.memory_space<vmem>>, %arg15: memref<3x1x64xf32, #tpu.memory_space<vmem>>, %arg16: memref<3x64x64xf32, #tpu.memory_space<vmem>>, %arg17: memref<3x1x64xf32, #tpu.memory_space<vmem>>, %arg18: memref<8x64xf32, #tpu.memory_space<vmem>>, %arg19: memref<3x64x64xf32, #tpu.memory_space<vmem>>) attributes {dimension_semantics = [#tpu.dimension_semantics<parallel>], iteration_bounds = array<i64: 1>, scalar_prefetch = 0 : i64, scratch_operands = 1 : i64, tpu.core_type = #tpu.core_type<tc>, window_params = [{transform_indices = @transform_0, window_bounds = array<i64: 8, 8, 32>}, {pipeline_mode = #tpu.pipeline_mode<synchronous>, transform_indices = @transform_1, window_bounds = array<i64: 32, 64>}, {pipeline_mode = #tpu.pipeline_mode<synchronous>, transform_indices = @transform_2, window_bounds = array<i64: 1, 64>}, {pipeline_mode = #tpu.pipeline_mode<synchronous>, transform_indices = @transform_3, window_bounds = array<i64: 1, 64>}, {pipeline_mode = #tpu.pipeline_mode<synchronous>, transform_indices = @transform_4, window_bounds = array<i64: 1, 64>}, {pipeline_mode = #tpu.pipeline_mode<synchronous>, transform_indices = @transform_5, window_bounds = array<i64: 64, 64>}, {pipeline_mode = #tpu.pipeline_mode<synchronous>, transform_indices = @transform_6, window_bounds = array<i64: 1, 64>}, {pipeline_mode = #tpu.pipeline_mode<synchronous>, transform_indices = @transform_7, window_bounds = array<i64: 1, 64>}, {pipeline_mode = #tpu.pipeline_mode<synchronous>, transform_indices = @transform_8, window_bounds = array<i64: 1, 64>}, {pipeline_mode = #tpu.pipeline_mode<synchronous>, transform_indices = @transform_9, window_bounds = array<i64: 3, 64, 64>}, {pipeline_mode = #tpu.pipeline_mode<synchronous>, transform_indices = @transform_10, window_bounds = array<i64: 3, 1, 64>}, {pipeline_mode = #tpu.pipeline_mode<synchronous>, transform_indices = @transform_11, window_bounds = array<i64: 3, 64, 64>}, {pipeline_mode = #tpu.pipeline_mode<synchronous>, transform_indices = @transform_12, window_bounds = array<i64: 3, 1, 64>}, {pipeline_mode = #tpu.pipeline_mode<synchronous>, transform_indices = @transform_13, window_bounds = array<i64: 3, 64, 64>}, {pipeline_mode = #tpu.pipeline_mode<synchronous>, transform_indices = @transform_14, window_bounds = array<i64: 3, 1, 64>}, {pipeline_mode = #tpu.pipeline_mode<synchronous>, transform_indices = @transform_15, window_bounds = array<i64: 3, 64, 64>}, {pipeline_mode = #tpu.pipeline_mode<synchronous>, transform_indices = @transform_16, window_bounds = array<i64: 3, 1, 64>}, {transform_indices = @transform_17, window_bounds = array<i64: 8, 64>}]} {
    %c0 = arith.constant 0 : index
    %c0_0 = arith.constant 0 : index
    %c0_1 = arith.constant 0 : index
    %0 = vector.load %arg1[%c0, %c0_0, %c0_1] : memref<8x8x32xf32, #tpu.memory_space<vmem>>, vector<8x8x32xf32>
    %1 = vector.shape_cast %0 : vector<8x8x32xf32> to vector<64x32xf32>
    %c0_2 = arith.constant 0 : index
    %c0_3 = arith.constant 0 : index
    %2 = vector.load %arg2[%c0_2, %c0_3] : memref<32x64xf32, #tpu.memory_space<vmem>>, vector<32x64xf32>
    %cst = arith.constant dense<0.000000e+00> : vector<64x64xf32>
    %3 = tpu.matmul %1, %2, %cst {dimension_numbers = #tpu.dot_dimension_numbers<[1], [0], [0], [1], [0, 0, 1, 1], [], []>} : vector<64x32xf32>, vector<32x64xf32>, vector<64x64xf32> -> vector<64x64xf32>
    %c0_4 = arith.constant 0 : index
    %c0_5 = arith.constant 0 : index
    %4 = vector.load %arg3[%c0_4, %c0_5] : memref<1x64xf32, #tpu.memory_space<vmem>>, vector<1x64xf32>
    %5 = vector.broadcast %4 : vector<1x64xf32> to vector<64x64xf32>
    %6 = arith.addf %3, %5 : vector<64x64xf32>
    %cst_6 = arith.constant dense<0.000000e+00> : vector<64xf32>
    %7 = vector.multi_reduction <add>, %6, %cst_6 [1] : vector<64x64xf32> to vector<64xf32>
    %8 = vector.shape_cast %7 : vector<64xf32> to vector<64x1xf32>
    %cst_7 = arith.constant 6.400000e+01 : f32
    %9 = vector.broadcast %cst_7 : f32 to vector<64x1xf32>
    %10 = arith.divf %8, %9 : vector<64x1xf32>
    %11 = vector.broadcast %10 : vector<64x1xf32> to vector<64x64xf32>
    %12 = arith.subf %6, %11 : vector<64x64xf32>
    %13 = arith.mulf %12, %12 : vector<64x64xf32>
    %cst_8 = arith.constant dense<0.000000e+00> : vector<64xf32>
    %14 = vector.multi_reduction <add>, %13, %cst_8 [1] : vector<64x64xf32> to vector<64xf32>
    %15 = vector.shape_cast %14 : vector<64xf32> to vector<64x1xf32>
    %cst_9 = arith.constant 6.400000e+01 : f32
    %16 = vector.broadcast %cst_9 : f32 to vector<64x1xf32>
    %17 = arith.divf %15, %16 : vector<64x1xf32>
    %18 = vector.broadcast %10 : vector<64x1xf32> to vector<64x64xf32>
    %19 = arith.subf %6, %18 : vector<64x64xf32>
    %cst_10 = arith.constant 9.99999974E-6 : f32
    %20 = vector.broadcast %cst_10 : f32 to vector<64x1xf32>
    %21 = arith.addf %17, %20 : vector<64x1xf32>
    %22 = math.rsqrt %21 : vector<64x1xf32>
    %23 = vector.broadcast %22 : vector<64x1xf32> to vector<64x64xf32>
    %24 = arith.mulf %19, %23 : vector<64x64xf32>
    %c0_11 = arith.constant 0 : index
    %c0_12 = arith.constant 0 : index
    %25 = vector.load %arg4[%c0_11, %c0_12] : memref<1x64xf32, #tpu.memory_space<vmem>>, vector<1x64xf32>
    %26 = vector.broadcast %25 : vector<1x64xf32> to vector<64x64xf32>
    %27 = arith.mulf %26, %24 : vector<64x64xf32>
    %c0_13 = arith.constant 0 : index
    %c0_14 = arith.constant 0 : index
    %28 = vector.load %arg5[%c0_13, %c0_14] : memref<1x64xf32, #tpu.memory_space<vmem>>, vector<1x64xf32>
    %29 = vector.broadcast %28 : vector<1x64xf32> to vector<64x64xf32>
    %30 = arith.addf %27, %29 : vector<64x64xf32>
    %cst_15 = arith.constant 0.000000e+00 : f32
    %31 = vector.broadcast %cst_15 : f32 to vector<64x64xf32>
    %32 = arith.maximumf %30, %31 : vector<64x64xf32>
    %c0_16 = arith.constant 0 : index
    %c0_17 = arith.constant 0 : index
    %33 = vector.load %arg6[%c0_16, %c0_17] : memref<64x64xf32, #tpu.memory_space<vmem>>, vector<64x64xf32>
    %cst_18 = arith.constant dense<0.000000e+00> : vector<64x64xf32>
    %34 = tpu.matmul %32, %33, %cst_18 {dimension_numbers = #tpu.dot_dimension_numbers<[1], [0], [0], [1], [0, 0, 1, 1], [], []>} : vector<64x64xf32>, vector<64x64xf32>, vector<64x64xf32> -> vector<64x64xf32>
    %c0_19 = arith.constant 0 : index
    %c0_20 = arith.constant 0 : index
    %35 = vector.load %arg7[%c0_19, %c0_20] : memref<1x64xf32, #tpu.memory_space<vmem>>, vector<1x64xf32>
    %36 = vector.broadcast %35 : vector<1x64xf32> to vector<64x64xf32>
    %37 = arith.addf %34, %36 : vector<64x64xf32>
    %cst_21 = arith.constant dense<0.000000e+00> : vector<64xf32>
    %38 = vector.multi_reduction <add>, %37, %cst_21 [1] : vector<64x64xf32> to vector<64xf32>
    %39 = vector.shape_cast %38 : vector<64xf32> to vector<64x1xf32>
    %cst_22 = arith.constant 6.400000e+01 : f32
    %40 = vector.broadcast %cst_22 : f32 to vector<64x1xf32>
    %41 = arith.divf %39, %40 : vector<64x1xf32>
    %42 = vector.broadcast %41 : vector<64x1xf32> to vector<64x64xf32>
    %43 = arith.subf %37, %42 : vector<64x64xf32>
    %44 = arith.mulf %43, %43 : vector<64x64xf32>
    %cst_23 = arith.constant dense<0.000000e+00> : vector<64xf32>
    %45 = vector.multi_reduction <add>, %44, %cst_23 [1] : vector<64x64xf32> to vector<64xf32>
    %46 = vector.shape_cast %45 : vector<64xf32> to vector<64x1xf32>
    %cst_24 = arith.constant 6.400000e+01 : f32
    %47 = vector.broadcast %cst_24 : f32 to vector<64x1xf32>
    %48 = arith.divf %46, %47 : vector<64x1xf32>
    %49 = vector.broadcast %41 : vector<64x1xf32> to vector<64x64xf32>
    %50 = arith.subf %37, %49 : vector<64x64xf32>
    %cst_25 = arith.constant 9.99999974E-6 : f32
    %51 = vector.broadcast %cst_25 : f32 to vector<64x1xf32>
    %52 = arith.addf %48, %51 : vector<64x1xf32>
    %53 = math.rsqrt %52 : vector<64x1xf32>
    %54 = vector.broadcast %53 : vector<64x1xf32> to vector<64x64xf32>
    %55 = arith.mulf %50, %54 : vector<64x64xf32>
    %c0_26 = arith.constant 0 : index
    %c0_27 = arith.constant 0 : index
    %56 = vector.load %arg8[%c0_26, %c0_27] : memref<1x64xf32, #tpu.memory_space<vmem>>, vector<1x64xf32>
    %57 = vector.broadcast %56 : vector<1x64xf32> to vector<64x64xf32>
    %58 = arith.mulf %57, %55 : vector<64x64xf32>
    %c0_28 = arith.constant 0 : index
    %c0_29 = arith.constant 0 : index
    %59 = vector.load %arg9[%c0_28, %c0_29] : memref<1x64xf32, #tpu.memory_space<vmem>>, vector<1x64xf32>
    %60 = vector.broadcast %59 : vector<1x64xf32> to vector<64x64xf32>
    %61 = arith.addf %58, %60 : vector<64x64xf32>
    %cst_30 = arith.constant 0.000000e+00 : f32
    %62 = vector.broadcast %cst_30 : f32 to vector<64x64xf32>
    %63 = arith.maximumf %61, %62 : vector<64x64xf32>
    %c0_31 = arith.constant 0 : index
    %c0_32 = arith.constant 0 : index
    %c0_33 = arith.constant 0 : index
    %64 = vector.load %arg10[%c0_31, %c0_32, %c0_33] : memref<3x64x64xf32, #tpu.memory_space<vmem>>, vector<1x64x64xf32>
    %65 = vector.shape_cast %64 : vector<1x64x64xf32> to vector<64x64xf32>
    %cst_34 = arith.constant dense<0.000000e+00> : vector<64x64xf32>
    %66 = tpu.matmul %63, %65, %cst_34 {dimension_numbers = #tpu.dot_dimension_numbers<[1], [0], [0], [1], [0, 0, 1, 1], [], []>} : vector<64x64xf32>, vector<64x64xf32>, vector<64x64xf32> -> vector<64x64xf32>
    %c0_35 = arith.constant 0 : index
    %c0_36 = arith.constant 0 : index
    %c0_37 = arith.constant 0 : index
    %67 = vector.load %arg11[%c0_35, %c0_36, %c0_37] : memref<3x1x64xf32, #tpu.memory_space<vmem>>, vector<1x1x64xf32>
    %68 = vector.shape_cast %67 : vector<1x1x64xf32> to vector<1x64xf32>
    %69 = vector.broadcast %68 : vector<1x64xf32> to vector<64x64xf32>
    %70 = arith.addf %66, %69 : vector<64x64xf32>
    %c0_38 = arith.constant 0 : index
    %c0_39 = arith.constant 0 : index
    %c0_40 = arith.constant 0 : index
    %71 = vector.load %arg19[%c0_38, %c0_39, %c0_40] : memref<3x64x64xf32, #tpu.memory_space<vmem>>, vector<1x64x64xf32>
    %72 = vector.shape_cast %71 : vector<1x64x64xf32> to vector<64x64xf32>
    %73 = vector.shape_cast %70 : vector<64x64xf32> to vector<1x64x64xf32>
    tpu.vector_store %arg19[%c0_38, %c0_39, %c0_40], %73 {strides = array<i32>} : memref<3x64x64xf32, #tpu.memory_space<vmem>>, vector<1x64x64xf32>,
    %c1 = arith.constant 1 : index
    %c0_41 = arith.constant 0 : index
    %c0_42 = arith.constant 0 : index
    %74 = vector.load %arg10[%c1, %c0_41, %c0_42] : memref<3x64x64xf32, #tpu.memory_space<vmem>>, vector<1x64x64xf32>
    %75 = vector.shape_cast %74 : vector<1x64x64xf32> to vector<64x64xf32>
    %cst_43 = arith.constant dense<0.000000e+00> : vector<64x64xf32>
    %76 = tpu.matmul %63, %75, %cst_43 {dimension_numbers = #tpu.dot_dimension_numbers<[1], [0], [0], [1], [0, 0, 1, 1], [], []>} : vector<64x64xf32>, vector<64x64xf32>, vector<64x64xf32> -> vector<64x64xf32>
    %c1_44 = arith.constant 1 : index
    %c0_45 = arith.constant 0 : index
    %c0_46 = arith.constant 0 : index
    %77 = vector.load %arg11[%c1_44, %c0_45, %c0_46] : memref<3x1x64xf32, #tpu.memory_space<vmem>>, vector<1x1x64xf32>
    %78 = vector.shape_cast %77 : vector<1x1x64xf32> to vector<1x64xf32>
    %79 = vector.broadcast %78 : vector<1x64xf32> to vector<64x64xf32>
    %80 = arith.addf %76, %79 : vector<64x64xf32>
    %c1_47 = arith.constant 1 : index
    %c0_48 = arith.constant 0 : index
    %c0_49 = arith.constant 0 : index
    %81 = vector.load %arg19[%c1_47, %c0_48, %c0_49] : memref<3x64x64xf32, #tpu.memory_space<vmem>>, vector<1x64x64xf32>
    %82 = vector.shape_cast %81 : vector<1x64x64xf32> to vector<64x64xf32>
    %83 = vector.shape_cast %80 : vector<64x64xf32> to vector<1x64x64xf32>
    tpu.vector_store %arg19[%c1_47, %c0_48, %c0_49], %83 {strides = array<i32>} : memref<3x64x64xf32, #tpu.memory_space<vmem>>, vector<1x64x64xf32>,
    %c2 = arith.constant 2 : index
    %c0_50 = arith.constant 0 : index
    %c0_51 = arith.constant 0 : index
    %84 = vector.load %arg10[%c2, %c0_50, %c0_51] : memref<3x64x64xf32, #tpu.memory_space<vmem>>, vector<1x64x64xf32>
    %85 = vector.shape_cast %84 : vector<1x64x64xf32> to vector<64x64xf32>
    %cst_52 = arith.constant dense<0.000000e+00> : vector<64x64xf32>
    %86 = tpu.matmul %63, %85, %cst_52 {dimension_numbers = #tpu.dot_dimension_numbers<[1], [0], [0], [1], [0, 0, 1, 1], [], []>} : vector<64x64xf32>, vector<64x64xf32>, vector<64x64xf32> -> vector<64x64xf32>
    %c2_53 = arith.constant 2 : index
    %c0_54 = arith.constant 0 : index
    %c0_55 = arith.constant 0 : index
    %87 = vector.load %arg11[%c2_53, %c0_54, %c0_55] : memref<3x1x64xf32, #tpu.memory_space<vmem>>, vector<1x1x64xf32>
    %88 = vector.shape_cast %87 : vector<1x1x64xf32> to vector<1x64xf32>
    %89 = vector.broadcast %88 : vector<1x64xf32> to vector<64x64xf32>
    %90 = arith.addf %86, %89 : vector<64x64xf32>
    %c2_56 = arith.constant 2 : index
    %c0_57 = arith.constant 0 : index
    %c0_58 = arith.constant 0 : index
    %91 = vector.load %arg19[%c2_56, %c0_57, %c0_58] : memref<3x64x64xf32, #tpu.memory_space<vmem>>, vector<1x64x64xf32>
    %92 = vector.shape_cast %91 : vector<1x64x64xf32> to vector<64x64xf32>
    %93 = vector.shape_cast %90 : vector<64x64xf32> to vector<1x64x64xf32>
    tpu.vector_store %arg19[%c2_56, %c0_57, %c0_58], %93 {strides = array<i32>} : memref<3x64x64xf32, #tpu.memory_space<vmem>>, vector<1x64x64xf32>,
    %cst_59 = arith.constant 0.000000e+00 : f32
    %94 = vector.broadcast %cst_59 : f32 to vector<8x64xf32>
    %cst_60 = arith.constant 0.000000e+00 : f32
    %95 = vector.broadcast %cst_60 : f32 to vector<8x64xf32>
    %c0_i32 = arith.constant 0 : i32
    %c8_i32 = arith.constant 8 : i32
    %96 = arith.muli %c0_i32, %c8_i32 : i32
    %97 = tpu.assume_multiple %96, 8 : i32
    %c0_61 = arith.constant 0 : index
    %98 = arith.index_cast %97 : i32 to index
    %c0_62 = arith.constant 0 : index
    %99 = vector.load %arg19[%c0_61, %98, %c0_62] : memref<3x64x64xf32, #tpu.memory_space<vmem>>, vector<1x8x64xf32>
    %100 = vector.shape_cast %99 : vector<1x8x64xf32> to vector<8x64xf32>
    %c1_63 = arith.constant 1 : index
    %101 = arith.index_cast %97 : i32 to index
    %c0_64 = arith.constant 0 : index
    %102 = vector.load %arg19[%c1_63, %101, %c0_64] : memref<3x64x64xf32, #tpu.memory_space<vmem>>, vector<1x8x64xf32>
    %103 = vector.shape_cast %102 : vector<1x8x64xf32> to vector<8x64xf32>
    %c2_65 = arith.constant 2 : index
    %104 = arith.index_cast %97 : i32 to index
    %c0_66 = arith.constant 0 : index
    %105 = vector.load %arg19[%c2_65, %104, %c0_66] : memref<3x64x64xf32, #tpu.memory_space<vmem>>, vector<1x8x64xf32>
    %106 = vector.shape_cast %105 : vector<1x8x64xf32> to vector<8x64xf32>
    %c0_67 = arith.constant 0 : index
    %c0_68 = arith.constant 0 : index
    %c0_69 = arith.constant 0 : index
    %107 = vector.load %arg12[%c0_67, %c0_68, %c0_69] : memref<3x64x64xf32, #tpu.memory_space<vmem>>, vector<1x64x64xf32>
    %108 = vector.shape_cast %107 : vector<1x64x64xf32> to vector<64x64xf32>
    %cst_70 = arith.constant dense<0.000000e+00> : vector<8x64xf32>
    %109 = tpu.matmul %94, %108, %cst_70 {dimension_numbers = #tpu.dot_dimension_numbers<[1], [0], [0], [1], [0, 0, 1, 1], [], []>} : vector<8x64xf32>, vector<64x64xf32>, vector<8x64xf32> -> vector<8x64xf32>
    %c0_71 = arith.constant 0 : index
    %c0_72 = arith.constant 0 : index
    %c0_73 = arith.constant 0 : index
    %110 = vector.load %arg13[%c0_71, %c0_72, %c0_73] : memref<3x1x64xf32, #tpu.memory_space<vmem>>, vector<1x1x64xf32>
    %111 = vector.shape_cast %110 : vector<1x1x64xf32> to vector<1x64xf32>
    %112 = vector.broadcast %111 : vector<1x64xf32> to vector<8x64xf32>
    %113 = arith.addf %109, %112 : vector<8x64xf32>
    %c1_74 = arith.constant 1 : index
    %c0_75 = arith.constant 0 : index
    %c0_76 = arith.constant 0 : index
    %114 = vector.load %arg12[%c1_74, %c0_75, %c0_76] : memref<3x64x64xf32, #tpu.memory_space<vmem>>, vector<1x64x64xf32>
    %115 = vector.shape_cast %114 : vector<1x64x64xf32> to vector<64x64xf32>
    %cst_77 = arith.constant dense<0.000000e+00> : vector<8x64xf32>
    %116 = tpu.matmul %94, %115, %cst_77 {dimension_numbers = #tpu.dot_dimension_numbers<[1], [0], [0], [1], [0, 0, 1, 1], [], []>} : vector<8x64xf32>, vector<64x64xf32>, vector<8x64xf32> -> vector<8x64xf32>
    %c1_78 = arith.constant 1 : index
    %c0_79 = arith.constant 0 : index
    %c0_80 = arith.constant 0 : index
    %117 = vector.load %arg13[%c1_78, %c0_79, %c0_80] : memref<3x1x64xf32, #tpu.memory_space<vmem>>, vector<1x1x64xf32>
    %118 = vector.shape_cast %117 : vector<1x1x64xf32> to vector<1x64xf32>
    %119 = vector.broadcast %118 : vector<1x64xf32> to vector<8x64xf32>
    %120 = arith.addf %116, %119 : vector<8x64xf32>
    %c2_81 = arith.constant 2 : index
    %c0_82 = arith.constant 0 : index
    %c0_83 = arith.constant 0 : index
    %121 = vector.load %arg12[%c2_81, %c0_82, %c0_83] : memref<3x64x64xf32, #tpu.memory_space<vmem>>, vector<1x64x64xf32>
    %122 = vector.shape_cast %121 : vector<1x64x64xf32> to vector<64x64xf32>
    %cst_84 = arith.constant dense<0.000000e+00> : vector<8x64xf32>
    %123 = tpu.matmul %94, %122, %cst_84 {dimension_numbers = #tpu.dot_dimension_numbers<[1], [0], [0], [1], [0, 0, 1, 1], [], []>} : vector<8x64xf32>, vector<64x64xf32>, vector<8x64xf32> -> vector<8x64xf32>
    %c2_85 = arith.constant 2 : index
    %c0_86 = arith.constant 0 : index
    %c0_87 = arith.constant 0 : index
    %124 = vector.load %arg13[%c2_85, %c0_86, %c0_87] : memref<3x1x64xf32, #tpu.memory_space<vmem>>, vector<1x1x64xf32>
    %125 = vector.shape_cast %124 : vector<1x1x64xf32> to vector<1x64xf32>
    %126 = vector.broadcast %125 : vector<1x64xf32> to vector<8x64xf32>
    %127 = arith.addf %123, %126 : vector<8x64xf32>
    %128 = arith.addf %100, %113 : vector<8x64xf32>
    %129 = arith.negf %128 : vector<8x64xf32>
    %130 = math.exp %129 : vector<8x64xf32>
    %cst_88 = arith.constant 1.000000e+00 : f32
    %131 = vector.broadcast %cst_88 : f32 to vector<8x64xf32>
    %132 = arith.addf %131, %130 : vector<8x64xf32>
    %133 = arith.divf %131, %132 : vector<8x64xf32>
    %134 = arith.addf %103, %120 : vector<8x64xf32>
    %135 = arith.negf %134 : vector<8x64xf32>
    %136 = math.exp %135 : vector<8x64xf32>
    %cst_89 = arith.constant 1.000000e+00 : f32
    %137 = vector.broadcast %cst_89 : f32 to vector<8x64xf32>
    %138 = arith.addf %137, %136 : vector<8x64xf32>
    %139 = arith.divf %137, %138 : vector<8x64xf32>
    %140 = arith.mulf %133, %127 : vector<8x64xf32>
    %141 = arith.addf %106, %140 : vector<8x64xf32>
    %142 = math.tanh %141 : vector<8x64xf32>
    %cst_90 = arith.constant 1.000000e+00 : f32
    %143 = vector.broadcast %cst_90 : f32 to vector<8x64xf32>
    %144 = arith.subf %143, %139 : vector<8x64xf32>
    %145 = arith.mulf %144, %142 : vector<8x64xf32>
    %146 = arith.mulf %139, %94 : vector<8x64xf32>
    %147 = arith.addf %145, %146 : vector<8x64xf32>
    %c0_91 = arith.constant 0 : index
    %c0_92 = arith.constant 0 : index
    %c0_93 = arith.constant 0 : index
    %148 = vector.load %arg14[%c0_91, %c0_92, %c0_93] : memref<3x64x64xf32, #tpu.memory_space<vmem>>, vector<1x64x64xf32>
    %149 = vector.shape_cast %148 : vector<1x64x64xf32> to vector<64x64xf32>
    %cst_94 = arith.constant dense<0.000000e+00> : vector<8x64xf32>
    %150 = tpu.matmul %147, %149, %cst_94 {dimension_numbers = #tpu.dot_dimension_numbers<[1], [0], [0], [1], [0, 0, 1, 1], [], []>} : vector<8x64xf32>, vector<64x64xf32>, vector<8x64xf32> -> vector<8x64xf32>
    %c0_95 = arith.constant 0 : index
    %c0_96 = arith.constant 0 : index
    %c0_97 = arith.constant 0 : index
    %151 = vector.load %arg15[%c0_95, %c0_96, %c0_97] : memref<3x1x64xf32, #tpu.memory_space<vmem>>, vector<1x1x64xf32>
    %152 = vector.shape_cast %151 : vector<1x1x64xf32> to vector<1x64xf32>
    %153 = vector.broadcast %152 : vector<1x64xf32> to vector<8x64xf32>
    %154 = arith.addf %150, %153 : vector<8x64xf32>
    %c1_98 = arith.constant 1 : index
    %c0_99 = arith.constant 0 : index
    %c0_100 = arith.constant 0 : index
    %155 = vector.load %arg14[%c1_98, %c0_99, %c0_100] : memref<3x64x64xf32, #tpu.memory_space<vmem>>, vector<1x64x64xf32>
    %156 = vector.shape_cast %155 : vector<1x64x64xf32> to vector<64x64xf32>
    %cst_101 = arith.constant dense<0.000000e+00> : vector<8x64xf32>
    %157 = tpu.matmul %147, %156, %cst_101 {dimension_numbers = #tpu.dot_dimension_numbers<[1], [0], [0], [1], [0, 0, 1, 1], [], []>} : vector<8x64xf32>, vector<64x64xf32>, vector<8x64xf32> -> vector<8x64xf32>
    %c1_102 = arith.constant 1 : index
    %c0_103 = arith.constant 0 : index
    %c0_104 = arith.constant 0 : index
    %158 = vector.load %arg15[%c1_102, %c0_103, %c0_104] : memref<3x1x64xf32, #tpu.memory_space<vmem>>, vector<1x1x64xf32>
    %159 = vector.shape_cast %158 : vector<1x1x64xf32> to vector<1x64xf32>
    %160 = vector.broadcast %159 : vector<1x64xf32> to vector<8x64xf32>
    %161 = arith.addf %157, %160 : vector<8x64xf32>
    %c2_105 = arith.constant 2 : index
    %c0_106 = arith.constant 0 : index
    %c0_107 = arith.constant 0 : index
    %162 = vector.load %arg14[%c2_105, %c0_106, %c0_107] : memref<3x64x64xf32, #tpu.memory_space<vmem>>, vector<1x64x64xf32>
    %163 = vector.shape_cast %162 : vector<1x64x64xf32> to vector<64x64xf32>
    %cst_108 = arith.constant dense<0.000000e+00> : vector<8x64xf32>
    %164 = tpu.matmul %147, %163, %cst_108 {dimension_numbers = #tpu.dot_dimension_numbers<[1], [0], [0], [1], [0, 0, 1, 1], [], []>} : vector<8x64xf32>, vector<64x64xf32>, vector<8x64xf32> -> vector<8x64xf32>
    %c2_109 = arith.constant 2 : index
    %c0_110 = arith.constant 0 : index
    %c0_111 = arith.constant 0 : index
    %165 = vector.load %arg15[%c2_109, %c0_110, %c0_111] : memref<3x1x64xf32, #tpu.memory_space<vmem>>, vector<1x1x64xf32>
    %166 = vector.shape_cast %165 : vector<1x1x64xf32> to vector<1x64xf32>
    %167 = vector.broadcast %166 : vector<1x64xf32> to vector<8x64xf32>
    %168 = arith.addf %164, %167 : vector<8x64xf32>
    %c0_112 = arith.constant 0 : index
    %c0_113 = arith.constant 0 : index
    %c0_114 = arith.constant 0 : index
    %169 = vector.load %arg16[%c0_112, %c0_113, %c0_114] : memref<3x64x64xf32, #tpu.memory_space<vmem>>, vector<1x64x64xf32>
    %170 = vector.shape_cast %169 : vector<1x64x64xf32> to vector<64x64xf32>
    %cst_115 = arith.constant dense<0.000000e+00> : vector<8x64xf32>
    %171 = tpu.matmul %95, %170, %cst_115 {dimension_numbers = #tpu.dot_dimension_numbers<[1], [0], [0], [1], [0, 0, 1, 1], [], []>} : vector<8x64xf32>, vector<64x64xf32>, vector<8x64xf32> -> vector<8x64xf32>
    %c0_116 = arith.constant 0 : index
    %c0_117 = arith.constant 0 : index
    %c0_118 = arith.constant 0 : index
    %172 = vector.load %arg17[%c0_116, %c0_117, %c0_118] : memref<3x1x64xf32, #tpu.memory_space<vmem>>, vector<1x1x64xf32>
    %173 = vector.shape_cast %172 : vector<1x1x64xf32> to vector<1x64xf32>
    %174 = vector.broadcast %173 : vector<1x64xf32> to vector<8x64xf32>
    %175 = arith.addf %171, %174 : vector<8x64xf32>
    %c1_119 = arith.constant 1 : index
    %c0_120 = arith.constant 0 : index
    %c0_121 = arith.constant 0 : index
    %176 = vector.load %arg16[%c1_119, %c0_120, %c0_121] : memref<3x64x64xf32, #tpu.memory_space<vmem>>, vector<1x64x64xf32>
    %177 = vector.shape_cast %176 : vector<1x64x64xf32> to vector<64x64xf32>
    %cst_122 = arith.constant dense<0.000000e+00> : vector<8x64xf32>
    %178 = tpu.matmul %95, %177, %cst_122 {dimension_numbers = #tpu.dot_dimension_numbers<[1], [0], [0], [1], [0, 0, 1, 1], [], []>} : vector<8x64xf32>, vector<64x64xf32>, vector<8x64xf32> -> vector<8x64xf32>
    %c1_123 = arith.constant 1 : index
    %c0_124 = arith.constant 0 : index
    %c0_125 = arith.constant 0 : index
    %179 = vector.load %arg17[%c1_123, %c0_124, %c0_125] : memref<3x1x64xf32, #tpu.memory_space<vmem>>, vector<1x1x64xf32>
    %180 = vector.shape_cast %179 : vector<1x1x64xf32> to vector<1x64xf32>
    %181 = vector.broadcast %180 : vector<1x64xf32> to vector<8x64xf32>
    %182 = arith.addf %178, %181 : vector<8x64xf32>
    %c2_126 = arith.constant 2 : index
    %c0_127 = arith.constant 0 : index
    %c0_128 = arith.constant 0 : index
    %183 = vector.load %arg16[%c2_126, %c0_127, %c0_128] : memref<3x64x64xf32, #tpu.memory_space<vmem>>, vector<1x64x64xf32>
    %184 = vector.shape_cast %183 : vector<1x64x64xf32> to vector<64x64xf32>
    %cst_129 = arith.constant dense<0.000000e+00> : vector<8x64xf32>
    %185 = tpu.matmul %95, %184, %cst_129 {dimension_numbers = #tpu.dot_dimension_numbers<[1], [0], [0], [1], [0, 0, 1, 1], [], []>} : vector<8x64xf32>, vector<64x64xf32>, vector<8x64xf32> -> vector<8x64xf32>
    %c2_130 = arith.constant 2 : index
    %c0_131 = arith.constant 0 : index
    %c0_132 = arith.constant 0 : index
    %186 = vector.load %arg17[%c2_130, %c0_131, %c0_132] : memref<3x1x64xf32, #tpu.memory_space<vmem>>, vector<1x1x64xf32>
    %187 = vector.shape_cast %186 : vector<1x1x64xf32> to vector<1x64xf32>
    %188 = vector.broadcast %187 : vector<1x64xf32> to vector<8x64xf32>
    %189 = arith.addf %185, %188 : vector<8x64xf32>
    %190 = arith.addf %154, %175 : vector<8x64xf32>
    %191 = arith.negf %190 : vector<8x64xf32>
    %192 = math.exp %191 : vector<8x64xf32>
    %cst_133 = arith.constant 1.000000e+00 : f32
    %193 = vector.broadcast %cst_133 : f32 to vector<8x64xf32>
    %194 = arith.addf %193, %192 : vector<8x64xf32>
    %195 = arith.divf %193, %194 : vector<8x64xf32>
    %196 = arith.addf %161, %182 : vector<8x64xf32>
    %197 = arith.negf %196 : vector<8x64xf32>
    %198 = math.exp %197 : vector<8x64xf32>
    %cst_134 = arith.constant 1.000000e+00 : f32
    %199 = vector.broadcast %cst_134 : f32 to vector<8x64xf32>
    %200 = arith.addf %199, %198 : vector<8x64xf32>
    %201 = arith.divf %199, %200 : vector<8x64xf32>
    %202 = arith.mulf %195, %189 : vector<8x64xf32>
    %203 = arith.addf %168, %202 : vector<8x64xf32>
    %204 = math.tanh %203 : vector<8x64xf32>
    %cst_135 = arith.constant 1.000000e+00 : f32
    %205 = vector.broadcast %cst_135 : f32 to vector<8x64xf32>
    %206 = arith.subf %205, %201 : vector<8x64xf32>
    %207 = arith.mulf %206, %204 : vector<8x64xf32>
    %208 = arith.mulf %201, %95 : vector<8x64xf32>
    %209 = arith.addf %207, %208 : vector<8x64xf32>
    %c1_i32 = arith.constant 1 : i32
    %c8_i32_136 = arith.constant 8 : i32
    %210 = arith.muli %c1_i32, %c8_i32_136 : i32
    %211 = tpu.assume_multiple %210, 8 : i32
    %c0_137 = arith.constant 0 : index
    %212 = arith.index_cast %211 : i32 to index
    %c0_138 = arith.constant 0 : index
    %213 = vector.load %arg19[%c0_137, %212, %c0_138] : memref<3x64x64xf32, #tpu.memory_space<vmem>>, vector<1x8x64xf32>
    %214 = vector.shape_cast %213 : vector<1x8x64xf32> to vector<8x64xf32>
    %c1_139 = arith.constant 1 : index
    %215 = arith.index_cast %211 : i32 to index
    %c0_140 = arith.constant 0 : index
    %216 = vector.load %arg19[%c1_139, %215, %c0_140] : memref<3x64x64xf32, #tpu.memory_space<vmem>>, vector<1x8x64xf32>
    %217 = vector.shape_cast %216 : vector<1x8x64xf32> to vector<8x64xf32>
    %c2_141 = arith.constant 2 : index
    %218 = arith.index_cast %211 : i32 to index
    %c0_142 = arith.constant 0 : index
    %219 = vector.load %arg19[%c2_141, %218, %c0_142] : memref<3x64x64xf32, #tpu.memory_space<vmem>>, vector<1x8x64xf32>
    %220 = vector.shape_cast %219 : vector<1x8x64xf32> to vector<8x64xf32>
    %c0_143 = arith.constant 0 : index
    %c0_144 = arith.constant 0 : index
    %c0_145 = arith.constant 0 : index
    %221 = vector.load %arg12[%c0_143, %c0_144, %c0_145] : memref<3x64x64xf32, #tpu.memory_space<vmem>>, vector<1x64x64xf32>
    %222 = vector.shape_cast %221 : vector<1x64x64xf32> to vector<64x64xf32>
    %cst_146 = arith.constant dense<0.000000e+00> : vector<8x64xf32>
    %223 = tpu.matmul %147, %222, %cst_146 {dimension_numbers = #tpu.dot_dimension_numbers<[1], [0], [0], [1], [0, 0, 1, 1], [], []>} : vector<8x64xf32>, vector<64x64xf32>, vector<8x64xf32> -> vector<8x64xf32>
    %c0_147 = arith.constant 0 : index
    %c0_148 = arith.constant 0 : index
    %c0_149 = arith.constant 0 : index
    %224 = vector.load %arg13[%c0_147, %c0_148, %c0_149] : memref<3x1x64xf32, #tpu.memory_space<vmem>>, vector<1x1x64xf32>
    %225 = vector.shape_cast %224 : vector<1x1x64xf32> to vector<1x64xf32>
    %226 = vector.broadcast %225 : vector<1x64xf32> to vector<8x64xf32>
    %227 = arith.addf %223, %226 : vector<8x64xf32>
    %c1_150 = arith.constant 1 : index
    %c0_151 = arith.constant 0 : index
    %c0_152 = arith.constant 0 : index
    %228 = vector.load %arg12[%c1_150, %c0_151, %c0_152] : memref<3x64x64xf32, #tpu.memory_space<vmem>>, vector<1x64x64xf32>
    %229 = vector.shape_cast %228 : vector<1x64x64xf32> to vector<64x64xf32>
    %cst_153 = arith.constant dense<0.000000e+00> : vector<8x64xf32>
    %230 = tpu.matmul %147, %229, %cst_153 {dimension_numbers = #tpu.dot_dimension_numbers<[1], [0], [0], [1], [0, 0, 1, 1], [], []>} : vector<8x64xf32>, vector<64x64xf32>, vector<8x64xf32> -> vector<8x64xf32>
    %c1_154 = arith.constant 1 : index
    %c0_155 = arith.constant 0 : index
    %c0_156 = arith.constant 0 : index
    %231 = vector.load %arg13[%c1_154, %c0_155, %c0_156] : memref<3x1x64xf32, #tpu.memory_space<vmem>>, vector<1x1x64xf32>
    %232 = vector.shape_cast %231 : vector<1x1x64xf32> to vector<1x64xf32>
    %233 = vector.broadcast %232 : vector<1x64xf32> to vector<8x64xf32>
    %234 = arith.addf %230, %233 : vector<8x64xf32>
    %c2_157 = arith.constant 2 : index
    %c0_158 = arith.constant 0 : index
    %c0_159 = arith.constant 0 : index
    %235 = vector.load %arg12[%c2_157, %c0_158, %c0_159] : memref<3x64x64xf32, #tpu.memory_space<vmem>>, vector<1x64x64xf32>
    %236 = vector.shape_cast %235 : vector<1x64x64xf32> to vector<64x64xf32>
    %cst_160 = arith.constant dense<0.000000e+00> : vector<8x64xf32>
    %237 = tpu.matmul %147, %236, %cst_160 {dimension_numbers = #tpu.dot_dimension_numbers<[1], [0], [0], [1], [0, 0, 1, 1], [], []>} : vector<8x64xf32>, vector<64x64xf32>, vector<8x64xf32> -> vector<8x64xf32>
    %c2_161 = arith.constant 2 : index
    %c0_162 = arith.constant 0 : index
    %c0_163 = arith.constant 0 : index
    %238 = vector.load %arg13[%c2_161, %c0_162, %c0_163] : memref<3x1x64xf32, #tpu.memory_space<vmem>>, vector<1x1x64xf32>
    %239 = vector.shape_cast %238 : vector<1x1x64xf32> to vector<1x64xf32>
    %240 = vector.broadcast %239 : vector<1x64xf32> to vector<8x64xf32>
    %241 = arith.addf %237, %240 : vector<8x64xf32>
    %242 = arith.addf %214, %227 : vector<8x64xf32>
    %243 = arith.negf %242 : vector<8x64xf32>
    %244 = math.exp %243 : vector<8x64xf32>
    %cst_164 = arith.constant 1.000000e+00 : f32
    %245 = vector.broadcast %cst_164 : f32 to vector<8x64xf32>
    %246 = arith.addf %245, %244 : vector<8x64xf32>
    %247 = arith.divf %245, %246 : vector<8x64xf32>
    %248 = arith.addf %217, %234 : vector<8x64xf32>
    %249 = arith.negf %248 : vector<8x64xf32>
    %250 = math.exp %249 : vector<8x64xf32>
    %cst_165 = arith.constant 1.000000e+00 : f32
    %251 = vector.broadcast %cst_165 : f32 to vector<8x64xf32>
    %252 = arith.addf %251, %250 : vector<8x64xf32>
    %253 = arith.divf %251, %252 : vector<8x64xf32>
    %254 = arith.mulf %247, %241 : vector<8x64xf32>
    %255 = arith.addf %220, %254 : vector<8x64xf32>
    %256 = math.tanh %255 : vector<8x64xf32>
    %cst_166 = arith.constant 1.000000e+00 : f32
    %257 = vector.broadcast %cst_166 : f32 to vector<8x64xf32>
    %258 = arith.subf %257, %253 : vector<8x64xf32>
    %259 = arith.mulf %258, %256 : vector<8x64xf32>
    %260 = arith.mulf %253, %147 : vector<8x64xf32>
    %261 = arith.addf %259, %260 : vector<8x64xf32>
    %c0_167 = arith.constant 0 : index
    %c0_168 = arith.constant 0 : index
    %c0_169 = arith.constant 0 : index
    %262 = vector.load %arg14[%c0_167, %c0_168, %c0_169] : memref<3x64x64xf32, #tpu.memory_space<vmem>>, vector<1x64x64xf32>
    %263 = vector.shape_cast %262 : vector<1x64x64xf32> to vector<64x64xf32>
    %cst_170 = arith.constant dense<0.000000e+00> : vector<8x64xf32>
    %264 = tpu.matmul %261, %263, %cst_170 {dimension_numbers = #tpu.dot_dimension_numbers<[1], [0], [0], [1], [0, 0, 1, 1], [], []>} : vector<8x64xf32>, vector<64x64xf32>, vector<8x64xf32> -> vector<8x64xf32>
    %c0_171 = arith.constant 0 : index
    %c0_172 = arith.constant 0 : index
    %c0_173 = arith.constant 0 : index
    %265 = vector.load %arg15[%c0_171, %c0_172, %c0_173] : memref<3x1x64xf32, #tpu.memory_space<vmem>>, vector<1x1x64xf32>
    %266 = vector.shape_cast %265 : vector<1x1x64xf32> to vector<1x64xf32>
    %267 = vector.broadcast %266 : vector<1x64xf32> to vector<8x64xf32>
    %268 = arith.addf %264, %267 : vector<8x64xf32>
    %c1_174 = arith.constant 1 : index
    %c0_175 = arith.constant 0 : index
    %c0_176 = arith.constant 0 : index
    %269 = vector.load %arg14[%c1_174, %c0_175, %c0_176] : memref<3x64x64xf32, #tpu.memory_space<vmem>>, vector<1x64x64xf32>
    %270 = vector.shape_cast %269 : vector<1x64x64xf32> to vector<64x64xf32>
    %cst_177 = arith.constant dense<0.000000e+00> : vector<8x64xf32>
    %271 = tpu.matmul %261, %270, %cst_177 {dimension_numbers = #tpu.dot_dimension_numbers<[1], [0], [0], [1], [0, 0, 1, 1], [], []>} : vector<8x64xf32>, vector<64x64xf32>, vector<8x64xf32> -> vector<8x64xf32>
    %c1_178 = arith.constant 1 : index
    %c0_179 = arith.constant 0 : index
    %c0_180 = arith.constant 0 : index
    %272 = vector.load %arg15[%c1_178, %c0_179, %c0_180] : memref<3x1x64xf32, #tpu.memory_space<vmem>>, vector<1x1x64xf32>
    %273 = vector.shape_cast %272 : vector<1x1x64xf32> to vector<1x64xf32>
    %274 = vector.broadcast %273 : vector<1x64xf32> to vector<8x64xf32>
    %275 = arith.addf %271, %274 : vector<8x64xf32>
    %c2_181 = arith.constant 2 : index
    %c0_182 = arith.constant 0 : index
    %c0_183 = arith.constant 0 : index
    %276 = vector.load %arg14[%c2_181, %c0_182, %c0_183] : memref<3x64x64xf32, #tpu.memory_space<vmem>>, vector<1x64x64xf32>
    %277 = vector.shape_cast %276 : vector<1x64x64xf32> to vector<64x64xf32>
    %cst_184 = arith.constant dense<0.000000e+00> : vector<8x64xf32>
    %278 = tpu.matmul %261, %277, %cst_184 {dimension_numbers = #tpu.dot_dimension_numbers<[1], [0], [0], [1], [0, 0, 1, 1], [], []>} : vector<8x64xf32>, vector<64x64xf32>, vector<8x64xf32> -> vector<8x64xf32>
    %c2_185 = arith.constant 2 : index
    %c0_186 = arith.constant 0 : index
    %c0_187 = arith.constant 0 : index
    %279 = vector.load %arg15[%c2_185, %c0_186, %c0_187] : memref<3x1x64xf32, #tpu.memory_space<vmem>>, vector<1x1x64xf32>
    %280 = vector.shape_cast %279 : vector<1x1x64xf32> to vector<1x64xf32>
    %281 = vector.broadcast %280 : vector<1x64xf32> to vector<8x64xf32>
    %282 = arith.addf %278, %281 : vector<8x64xf32>
    %c0_188 = arith.constant 0 : index
    %c0_189 = arith.constant 0 : index
    %c0_190 = arith.constant 0 : index
    %283 = vector.load %arg16[%c0_188, %c0_189, %c0_190] : memref<3x64x64xf32, #tpu.memory_space<vmem>>, vector<1x64x64xf32>
    %284 = vector.shape_cast %283 : vector<1x64x64xf32> to vector<64x64xf32>
    %cst_191 = arith.constant dense<0.000000e+00> : vector<8x64xf32>
    %285 = tpu.matmul %209, %284, %cst_191 {dimension_numbers = #tpu.dot_dimension_numbers<[1], [0], [0], [1], [0, 0, 1, 1], [], []>} : vector<8x64xf32>, vector<64x64xf32>, vector<8x64xf32> -> vector<8x64xf32>
    %c0_192 = arith.constant 0 : index
    %c0_193 = arith.constant 0 : index
    %c0_194 = arith.constant 0 : index
    %286 = vector.load %arg17[%c0_192, %c0_193, %c0_194] : memref<3x1x64xf32, #tpu.memory_space<vmem>>, vector<1x1x64xf32>
    %287 = vector.shape_cast %286 : vector<1x1x64xf32> to vector<1x64xf32>
    %288 = vector.broadcast %287 : vector<1x64xf32> to vector<8x64xf32>
    %289 = arith.addf %285, %288 : vector<8x64xf32>
    %c1_195 = arith.constant 1 : index
    %c0_196 = arith.constant 0 : index
    %c0_197 = arith.constant 0 : index
    %290 = vector.load %arg16[%c1_195, %c0_196, %c0_197] : memref<3x64x64xf32, #tpu.memory_space<vmem>>, vector<1x64x64xf32>
    %291 = vector.shape_cast %290 : vector<1x64x64xf32> to vector<64x64xf32>
    %cst_198 = arith.constant dense<0.000000e+00> : vector<8x64xf32>
    %292 = tpu.matmul %209, %291, %cst_198 {dimension_numbers = #tpu.dot_dimension_numbers<[1], [0], [0], [1], [0, 0, 1, 1], [], []>} : vector<8x64xf32>, vector<64x64xf32>, vector<8x64xf32> -> vector<8x64xf32>
    %c1_199 = arith.constant 1 : index
    %c0_200 = arith.constant 0 : index
    %c0_201 = arith.constant 0 : index
    %293 = vector.load %arg17[%c1_199, %c0_200, %c0_201] : memref<3x1x64xf32, #tpu.memory_space<vmem>>, vector<1x1x64xf32>
    %294 = vector.shape_cast %293 : vector<1x1x64xf32> to vector<1x64xf32>
    %295 = vector.broadcast %294 : vector<1x64xf32> to vector<8x64xf32>
    %296 = arith.addf %292, %295 : vector<8x64xf32>
    %c2_202 = arith.constant 2 : index
    %c0_203 = arith.constant 0 : index
    %c0_204 = arith.constant 0 : index
    %297 = vector.load %arg16[%c2_202, %c0_203, %c0_204] : memref<3x64x64xf32, #tpu.memory_space<vmem>>, vector<1x64x64xf32>
    %298 = vector.shape_cast %297 : vector<1x64x64xf32> to vector<64x64xf32>
    %cst_205 = arith.constant dense<0.000000e+00> : vector<8x64xf32>
    %299 = tpu.matmul %209, %298, %cst_205 {dimension_numbers = #tpu.dot_dimension_numbers<[1], [0], [0], [1], [0, 0, 1, 1], [], []>} : vector<8x64xf32>, vector<64x64xf32>, vector<8x64xf32> -> vector<8x64xf32>
    %c2_206 = arith.constant 2 : index
    %c0_207 = arith.constant 0 : index
    %c0_208 = arith.constant 0 : index
    %300 = vector.load %arg17[%c2_206, %c0_207, %c0_208] : memref<3x1x64xf32, #tpu.memory_space<vmem>>, vector<1x1x64xf32>
    %301 = vector.shape_cast %300 : vector<1x1x64xf32> to vector<1x64xf32>
    %302 = vector.broadcast %301 : vector<1x64xf32> to vector<8x64xf32>
    %303 = arith.addf %299, %302 : vector<8x64xf32>
    %304 = arith.addf %268, %289 : vector<8x64xf32>
    %305 = arith.negf %304 : vector<8x64xf32>
    %306 = math.exp %305 : vector<8x64xf32>
    %cst_209 = arith.constant 1.000000e+00 : f32
    %307 = vector.broadcast %cst_209 : f32 to vector<8x64xf32>
    %308 = arith.addf %307, %306 : vector<8x64xf32>
    %309 = arith.divf %307, %308 : vector<8x64xf32>
    %310 = arith.addf %275, %296 : vector<8x64xf32>
    %311 = arith.negf %310 : vector<8x64xf32>
    %312 = math.exp %311 : vector<8x64xf32>
    %cst_210 = arith.constant 1.000000e+00 : f32
    %313 = vector.broadcast %cst_210 : f32 to vector<8x64xf32>
    %314 = arith.addf %313, %312 : vector<8x64xf32>
    %315 = arith.divf %313, %314 : vector<8x64xf32>
    %316 = arith.mulf %309, %303 : vector<8x64xf32>
    %317 = arith.addf %282, %316 : vector<8x64xf32>
    %318 = math.tanh %317 : vector<8x64xf32>
    %cst_211 = arith.constant 1.000000e+00 : f32
    %319 = vector.broadcast %cst_211 : f32 to vector<8x64xf32>
    %320 = arith.subf %319, %315 : vector<8x64xf32>
    %321 = arith.mulf %320, %318 : vector<8x64xf32>
    %322 = arith.mulf %315, %209 : vector<8x64xf32>
    %323 = arith.addf %321, %322 : vector<8x64xf32>
    %c2_i32 = arith.constant 2 : i32
    %c8_i32_212 = arith.constant 8 : i32
    %324 = arith.muli %c2_i32, %c8_i32_212 : i32
    %325 = tpu.assume_multiple %324, 8 : i32
    %c0_213 = arith.constant 0 : index
    %326 = arith.index_cast %325 : i32 to index
    %c0_214 = arith.constant 0 : index
    %327 = vector.load %arg19[%c0_213, %326, %c0_214] : memref<3x64x64xf32, #tpu.memory_space<vmem>>, vector<1x8x64xf32>
    %328 = vector.shape_cast %327 : vector<1x8x64xf32> to vector<8x64xf32>
    %c1_215 = arith.constant 1 : index
    %329 = arith.index_cast %325 : i32 to index
    %c0_216 = arith.constant 0 : index
    %330 = vector.load %arg19[%c1_215, %329, %c0_216] : memref<3x64x64xf32, #tpu.memory_space<vmem>>, vector<1x8x64xf32>
    %331 = vector.shape_cast %330 : vector<1x8x64xf32> to vector<8x64xf32>
    %c2_217 = arith.constant 2 : index
    %332 = arith.index_cast %325 : i32 to index
    %c0_218 = arith.constant 0 : index
    %333 = vector.load %arg19[%c2_217, %332, %c0_218] : memref<3x64x64xf32, #tpu.memory_space<vmem>>, vector<1x8x64xf32>
    %334 = vector.shape_cast %333 : vector<1x8x64xf32> to vector<8x64xf32>
    %c0_219 = arith.constant 0 : index
    %c0_220 = arith.constant 0 : index
    %c0_221 = arith.constant 0 : index
    %335 = vector.load %arg12[%c0_219, %c0_220, %c0_221] : memref<3x64x64xf32, #tpu.memory_space<vmem>>, vector<1x64x64xf32>
    %336 = vector.shape_cast %335 : vector<1x64x64xf32> to vector<64x64xf32>
    %cst_222 = arith.constant dense<0.000000e+00> : vector<8x64xf32>
    %337 = tpu.matmul %261, %336, %cst_222 {dimension_numbers = #tpu.dot_dimension_numbers<[1], [0], [0], [1], [0, 0, 1, 1], [], []>} : vector<8x64xf32>, vector<64x64xf32>, vector<8x64xf32> -> vector<8x64xf32>
    %c0_223 = arith.constant 0 : index
    %c0_224 = arith.constant 0 : index
    %c0_225 = arith.constant 0 : index
    %338 = vector.load %arg13[%c0_223, %c0_224, %c0_225] : memref<3x1x64xf32, #tpu.memory_space<vmem>>, vector<1x1x64xf32>
    %339 = vector.shape_cast %338 : vector<1x1x64xf32> to vector<1x64xf32>
    %340 = vector.broadcast %339 : vector<1x64xf32> to vector<8x64xf32>
    %341 = arith.addf %337, %340 : vector<8x64xf32>
    %c1_226 = arith.constant 1 : index
    %c0_227 = arith.constant 0 : index
    %c0_228 = arith.constant 0 : index
    %342 = vector.load %arg12[%c1_226, %c0_227, %c0_228] : memref<3x64x64xf32, #tpu.memory_space<vmem>>, vector<1x64x64xf32>
    %343 = vector.shape_cast %342 : vector<1x64x64xf32> to vector<64x64xf32>
    %cst_229 = arith.constant dense<0.000000e+00> : vector<8x64xf32>
    %344 = tpu.matmul %261, %343, %cst_229 {dimension_numbers = #tpu.dot_dimension_numbers<[1], [0], [0], [1], [0, 0, 1, 1], [], []>} : vector<8x64xf32>, vector<64x64xf32>, vector<8x64xf32> -> vector<8x64xf32>
    %c1_230 = arith.constant 1 : index
    %c0_231 = arith.constant 0 : index
    %c0_232 = arith.constant 0 : index
    %345 = vector.load %arg13[%c1_230, %c0_231, %c0_232] : memref<3x1x64xf32, #tpu.memory_space<vmem>>, vector<1x1x64xf32>
    %346 = vector.shape_cast %345 : vector<1x1x64xf32> to vector<1x64xf32>
    %347 = vector.broadcast %346 : vector<1x64xf32> to vector<8x64xf32>
    %348 = arith.addf %344, %347 : vector<8x64xf32>
    %c2_233 = arith.constant 2 : index
    %c0_234 = arith.constant 0 : index
    %c0_235 = arith.constant 0 : index
    %349 = vector.load %arg12[%c2_233, %c0_234, %c0_235] : memref<3x64x64xf32, #tpu.memory_space<vmem>>, vector<1x64x64xf32>
    %350 = vector.shape_cast %349 : vector<1x64x64xf32> to vector<64x64xf32>
    %cst_236 = arith.constant dense<0.000000e+00> : vector<8x64xf32>
    %351 = tpu.matmul %261, %350, %cst_236 {dimension_numbers = #tpu.dot_dimension_numbers<[1], [0], [0], [1], [0, 0, 1, 1], [], []>} : vector<8x64xf32>, vector<64x64xf32>, vector<8x64xf32> -> vector<8x64xf32>
    %c2_237 = arith.constant 2 : index
    %c0_238 = arith.constant 0 : index
    %c0_239 = arith.constant 0 : index
    %352 = vector.load %arg13[%c2_237, %c0_238, %c0_239] : memref<3x1x64xf32, #tpu.memory_space<vmem>>, vector<1x1x64xf32>
    %353 = vector.shape_cast %352 : vector<1x1x64xf32> to vector<1x64xf32>
    %354 = vector.broadcast %353 : vector<1x64xf32> to vector<8x64xf32>
    %355 = arith.addf %351, %354 : vector<8x64xf32>
    %356 = arith.addf %328, %341 : vector<8x64xf32>
    %357 = arith.negf %356 : vector<8x64xf32>
    %358 = math.exp %357 : vector<8x64xf32>
    %cst_240 = arith.constant 1.000000e+00 : f32
    %359 = vector.broadcast %cst_240 : f32 to vector<8x64xf32>
    %360 = arith.addf %359, %358 : vector<8x64xf32>
    %361 = arith.divf %359, %360 : vector<8x64xf32>
    %362 = arith.addf %331, %348 : vector<8x64xf32>
    %363 = arith.negf %362 : vector<8x64xf32>
    %364 = math.exp %363 : vector<8x64xf32>
    %cst_241 = arith.constant 1.000000e+00 : f32
    %365 = vector.broadcast %cst_241 : f32 to vector<8x64xf32>
    %366 = arith.addf %365, %364 : vector<8x64xf32>
    %367 = arith.divf %365, %366 : vector<8x64xf32>
    %368 = arith.mulf %361, %355 : vector<8x64xf32>
    %369 = arith.addf %334, %368 : vector<8x64xf32>
    %370 = math.tanh %369 : vector<8x64xf32>
    %cst_242 = arith.constant 1.000000e+00 : f32
    %371 = vector.broadcast %cst_242 : f32 to vector<8x64xf32>
    %372 = arith.subf %371, %367 : vector<8x64xf32>
    %373 = arith.mulf %372, %370 : vector<8x64xf32>
    %374 = arith.mulf %367, %261 : vector<8x64xf32>
    %375 = arith.addf %373, %374 : vector<8x64xf32>
    %c0_243 = arith.constant 0 : index
    %c0_244 = arith.constant 0 : index
    %c0_245 = arith.constant 0 : index
    %376 = vector.load %arg14[%c0_243, %c0_244, %c0_245] : memref<3x64x64xf32, #tpu.memory_space<vmem>>, vector<1x64x64xf32>
    %377 = vector.shape_cast %376 : vector<1x64x64xf32> to vector<64x64xf32>
    %cst_246 = arith.constant dense<0.000000e+00> : vector<8x64xf32>
    %378 = tpu.matmul %375, %377, %cst_246 {dimension_numbers = #tpu.dot_dimension_numbers<[1], [0], [0], [1], [0, 0, 1, 1], [], []>} : vector<8x64xf32>, vector<64x64xf32>, vector<8x64xf32> -> vector<8x64xf32>
    %c0_247 = arith.constant 0 : index
    %c0_248 = arith.constant 0 : index
    %c0_249 = arith.constant 0 : index
    %379 = vector.load %arg15[%c0_247, %c0_248, %c0_249] : memref<3x1x64xf32, #tpu.memory_space<vmem>>, vector<1x1x64xf32>
    %380 = vector.shape_cast %379 : vector<1x1x64xf32> to vector<1x64xf32>
    %381 = vector.broadcast %380 : vector<1x64xf32> to vector<8x64xf32>
    %382 = arith.addf %378, %381 : vector<8x64xf32>
    %c1_250 = arith.constant 1 : index
    %c0_251 = arith.constant 0 : index
    %c0_252 = arith.constant 0 : index
    %383 = vector.load %arg14[%c1_250, %c0_251, %c0_252] : memref<3x64x64xf32, #tpu.memory_space<vmem>>, vector<1x64x64xf32>
    %384 = vector.shape_cast %383 : vector<1x64x64xf32> to vector<64x64xf32>
    %cst_253 = arith.constant dense<0.000000e+00> : vector<8x64xf32>
    %385 = tpu.matmul %375, %384, %cst_253 {dimension_numbers = #tpu.dot_dimension_numbers<[1], [0], [0], [1], [0, 0, 1, 1], [], []>} : vector<8x64xf32>, vector<64x64xf32>, vector<8x64xf32> -> vector<8x64xf32>
    %c1_254 = arith.constant 1 : index
    %c0_255 = arith.constant 0 : index
    %c0_256 = arith.constant 0 : index
    %386 = vector.load %arg15[%c1_254, %c0_255, %c0_256] : memref<3x1x64xf32, #tpu.memory_space<vmem>>, vector<1x1x64xf32>
    %387 = vector.shape_cast %386 : vector<1x1x64xf32> to vector<1x64xf32>
    %388 = vector.broadcast %387 : vector<1x64xf32> to vector<8x64xf32>
    %389 = arith.addf %385, %388 : vector<8x64xf32>
    %c2_257 = arith.constant 2 : index
    %c0_258 = arith.constant 0 : index
    %c0_259 = arith.constant 0 : index
    %390 = vector.load %arg14[%c2_257, %c0_258, %c0_259] : memref<3x64x64xf32, #tpu.memory_space<vmem>>, vector<1x64x64xf32>
    %391 = vector.shape_cast %390 : vector<1x64x64xf32> to vector<64x64xf32>
    %cst_260 = arith.constant dense<0.000000e+00> : vector<8x64xf32>
    %392 = tpu.matmul %375, %391, %cst_260 {dimension_numbers = #tpu.dot_dimension_numbers<[1], [0], [0], [1], [0, 0, 1, 1], [], []>} : vector<8x64xf32>, vector<64x64xf32>, vector<8x64xf32> -> vector<8x64xf32>
    %c2_261 = arith.constant 2 : index
    %c0_262 = arith.constant 0 : index
    %c0_263 = arith.constant 0 : index
    %393 = vector.load %arg15[%c2_261, %c0_262, %c0_263] : memref<3x1x64xf32, #tpu.memory_space<vmem>>, vector<1x1x64xf32>
    %394 = vector.shape_cast %393 : vector<1x1x64xf32> to vector<1x64xf32>
    %395 = vector.broadcast %394 : vector<1x64xf32> to vector<8x64xf32>
    %396 = arith.addf %392, %395 : vector<8x64xf32>
    %c0_264 = arith.constant 0 : index
    %c0_265 = arith.constant 0 : index
    %c0_266 = arith.constant 0 : index
    %397 = vector.load %arg16[%c0_264, %c0_265, %c0_266] : memref<3x64x64xf32, #tpu.memory_space<vmem>>, vector<1x64x64xf32>
    %398 = vector.shape_cast %397 : vector<1x64x64xf32> to vector<64x64xf32>
    %cst_267 = arith.constant dense<0.000000e+00> : vector<8x64xf32>
    %399 = tpu.matmul %323, %398, %cst_267 {dimension_numbers = #tpu.dot_dimension_numbers<[1], [0], [0], [1], [0, 0, 1, 1], [], []>} : vector<8x64xf32>, vector<64x64xf32>, vector<8x64xf32> -> vector<8x64xf32>
    %c0_268 = arith.constant 0 : index
    %c0_269 = arith.constant 0 : index
    %c0_270 = arith.constant 0 : index
    %400 = vector.load %arg17[%c0_268, %c0_269, %c0_270] : memref<3x1x64xf32, #tpu.memory_space<vmem>>, vector<1x1x64xf32>
    %401 = vector.shape_cast %400 : vector<1x1x64xf32> to vector<1x64xf32>
    %402 = vector.broadcast %401 : vector<1x64xf32> to vector<8x64xf32>
    %403 = arith.addf %399, %402 : vector<8x64xf32>
    %c1_271 = arith.constant 1 : index
    %c0_272 = arith.constant 0 : index
    %c0_273 = arith.constant 0 : index
    %404 = vector.load %arg16[%c1_271, %c0_272, %c0_273] : memref<3x64x64xf32, #tpu.memory_space<vmem>>, vector<1x64x64xf32>
    %405 = vector.shape_cast %404 : vector<1x64x64xf32> to vector<64x64xf32>
    %cst_274 = arith.constant dense<0.000000e+00> : vector<8x64xf32>
    %406 = tpu.matmul %323, %405, %cst_274 {dimension_numbers = #tpu.dot_dimension_numbers<[1], [0], [0], [1], [0, 0, 1, 1], [], []>} : vector<8x64xf32>, vector<64x64xf32>, vector<8x64xf32> -> vector<8x64xf32>
    %c1_275 = arith.constant 1 : index
    %c0_276 = arith.constant 0 : index
    %c0_277 = arith.constant 0 : index
    %407 = vector.load %arg17[%c1_275, %c0_276, %c0_277] : memref<3x1x64xf32, #tpu.memory_space<vmem>>, vector<1x1x64xf32>
    %408 = vector.shape_cast %407 : vector<1x1x64xf32> to vector<1x64xf32>
    %409 = vector.broadcast %408 : vector<1x64xf32> to vector<8x64xf32>
    %410 = arith.addf %406, %409 : vector<8x64xf32>
    %c2_278 = arith.constant 2 : index
    %c0_279 = arith.constant 0 : index
    %c0_280 = arith.constant 0 : index
    %411 = vector.load %arg16[%c2_278, %c0_279, %c0_280] : memref<3x64x64xf32, #tpu.memory_space<vmem>>, vector<1x64x64xf32>
    %412 = vector.shape_cast %411 : vector<1x64x64xf32> to vector<64x64xf32>
    %cst_281 = arith.constant dense<0.000000e+00> : vector<8x64xf32>
    %413 = tpu.matmul %323, %412, %cst_281 {dimension_numbers = #tpu.dot_dimension_numbers<[1], [0], [0], [1], [0, 0, 1, 1], [], []>} : vector<8x64xf32>, vector<64x64xf32>, vector<8x64xf32> -> vector<8x64xf32>
    %c2_282 = arith.constant 2 : index
    %c0_283 = arith.constant 0 : index
    %c0_284 = arith.constant 0 : index
    %414 = vector.load %arg17[%c2_282, %c0_283, %c0_284] : memref<3x1x64xf32, #tpu.memory_space<vmem>>, vector<1x1x64xf32>
    %415 = vector.shape_cast %414 : vector<1x1x64xf32> to vector<1x64xf32>
    %416 = vector.broadcast %415 : vector<1x64xf32> to vector<8x64xf32>
    %417 = arith.addf %413, %416 : vector<8x64xf32>
    %418 = arith.addf %382, %403 : vector<8x64xf32>
    %419 = arith.negf %418 : vector<8x64xf32>
    %420 = math.exp %419 : vector<8x64xf32>
    %cst_285 = arith.constant 1.000000e+00 : f32
    %421 = vector.broadcast %cst_285 : f32 to vector<8x64xf32>
    %422 = arith.addf %421, %420 : vector<8x64xf32>
    %423 = arith.divf %421, %422 : vector<8x64xf32>
    %424 = arith.addf %389, %410 : vector<8x64xf32>
    %425 = arith.negf %424 : vector<8x64xf32>
    %426 = math.exp %425 : vector<8x64xf32>
    %cst_286 = arith.constant 1.000000e+00 : f32
    %427 = vector.broadcast %cst_286 : f32 to vector<8x64xf32>
    %428 = arith.addf %427, %426 : vector<8x64xf32>
    %429 = arith.divf %427, %428 : vector<8x64xf32>
    %430 = arith.mulf %423, %417 : vector<8x64xf32>
    %431 = arith.addf %396, %430 : vector<8x64xf32>
    %432 = math.tanh %431 : vector<8x64xf32>
    %cst_287 = arith.constant 1.000000e+00 : f32
    %433 = vector.broadcast %cst_287 : f32 to vector<8x64xf32>
    %434 = arith.subf %433, %429 : vector<8x64xf32>
    %435 = arith.mulf %434, %432 : vector<8x64xf32>
    %436 = arith.mulf %429, %323 : vector<8x64xf32>
    %437 = arith.addf %435, %436 : vector<8x64xf32>
    %c3_i32 = arith.constant 3 : i32
    %c8_i32_288 = arith.constant 8 : i32
    %438 = arith.muli %c3_i32, %c8_i32_288 : i32
    %439 = tpu.assume_multiple %438, 8 : i32
    %c0_289 = arith.constant 0 : index
    %440 = arith.index_cast %439 : i32 to index
    %c0_290 = arith.constant 0 : index
    %441 = vector.load %arg19[%c0_289, %440, %c0_290] : memref<3x64x64xf32, #tpu.memory_space<vmem>>, vector<1x8x64xf32>
    %442 = vector.shape_cast %441 : vector<1x8x64xf32> to vector<8x64xf32>
    %c1_291 = arith.constant 1 : index
    %443 = arith.index_cast %439 : i32 to index
    %c0_292 = arith.constant 0 : index
    %444 = vector.load %arg19[%c1_291, %443, %c0_292] : memref<3x64x64xf32, #tpu.memory_space<vmem>>, vector<1x8x64xf32>
    %445 = vector.shape_cast %444 : vector<1x8x64xf32> to vector<8x64xf32>
    %c2_293 = arith.constant 2 : index
    %446 = arith.index_cast %439 : i32 to index
    %c0_294 = arith.constant 0 : index
    %447 = vector.load %arg19[%c2_293, %446, %c0_294] : memref<3x64x64xf32, #tpu.memory_space<vmem>>, vector<1x8x64xf32>
    %448 = vector.shape_cast %447 : vector<1x8x64xf32> to vector<8x64xf32>
    %c0_295 = arith.constant 0 : index
    %c0_296 = arith.constant 0 : index
    %c0_297 = arith.constant 0 : index
    %449 = vector.load %arg12[%c0_295, %c0_296, %c0_297] : memref<3x64x64xf32, #tpu.memory_space<vmem>>, vector<1x64x64xf32>
    %450 = vector.shape_cast %449 : vector<1x64x64xf32> to vector<64x64xf32>
    %cst_298 = arith.constant dense<0.000000e+00> : vector<8x64xf32>
    %451 = tpu.matmul %375, %450, %cst_298 {dimension_numbers = #tpu.dot_dimension_numbers<[1], [0], [0], [1], [0, 0, 1, 1], [], []>} : vector<8x64xf32>, vector<64x64xf32>, vector<8x64xf32> -> vector<8x64xf32>
    %c0_299 = arith.constant 0 : index
    %c0_300 = arith.constant 0 : index
    %c0_301 = arith.constant 0 : index
    %452 = vector.load %arg13[%c0_299, %c0_300, %c0_301] : memref<3x1x64xf32, #tpu.memory_space<vmem>>, vector<1x1x64xf32>
    %453 = vector.shape_cast %452 : vector<1x1x64xf32> to vector<1x64xf32>
    %454 = vector.broadcast %453 : vector<1x64xf32> to vector<8x64xf32>
    %455 = arith.addf %451, %454 : vector<8x64xf32>
    %c1_302 = arith.constant 1 : index
    %c0_303 = arith.constant 0 : index
    %c0_304 = arith.constant 0 : index
    %456 = vector.load %arg12[%c1_302, %c0_303, %c0_304] : memref<3x64x64xf32, #tpu.memory_space<vmem>>, vector<1x64x64xf32>
    %457 = vector.shape_cast %456 : vector<1x64x64xf32> to vector<64x64xf32>
    %cst_305 = arith.constant dense<0.000000e+00> : vector<8x64xf32>
    %458 = tpu.matmul %375, %457, %cst_305 {dimension_numbers = #tpu.dot_dimension_numbers<[1], [0], [0], [1], [0, 0, 1, 1], [], []>} : vector<8x64xf32>, vector<64x64xf32>, vector<8x64xf32> -> vector<8x64xf32>
    %c1_306 = arith.constant 1 : index
    %c0_307 = arith.constant 0 : index
    %c0_308 = arith.constant 0 : index
    %459 = vector.load %arg13[%c1_306, %c0_307, %c0_308] : memref<3x1x64xf32, #tpu.memory_space<vmem>>, vector<1x1x64xf32>
    %460 = vector.shape_cast %459 : vector<1x1x64xf32> to vector<1x64xf32>
    %461 = vector.broadcast %460 : vector<1x64xf32> to vector<8x64xf32>
    %462 = arith.addf %458, %461 : vector<8x64xf32>
    %c2_309 = arith.constant 2 : index
    %c0_310 = arith.constant 0 : index
    %c0_311 = arith.constant 0 : index
    %463 = vector.load %arg12[%c2_309, %c0_310, %c0_311] : memref<3x64x64xf32, #tpu.memory_space<vmem>>, vector<1x64x64xf32>
    %464 = vector.shape_cast %463 : vector<1x64x64xf32> to vector<64x64xf32>
    %cst_312 = arith.constant dense<0.000000e+00> : vector<8x64xf32>
    %465 = tpu.matmul %375, %464, %cst_312 {dimension_numbers = #tpu.dot_dimension_numbers<[1], [0], [0], [1], [0, 0, 1, 1], [], []>} : vector<8x64xf32>, vector<64x64xf32>, vector<8x64xf32> -> vector<8x64xf32>
    %c2_313 = arith.constant 2 : index
    %c0_314 = arith.constant 0 : index
    %c0_315 = arith.constant 0 : index
    %466 = vector.load %arg13[%c2_313, %c0_314, %c0_315] : memref<3x1x64xf32, #tpu.memory_space<vmem>>, vector<1x1x64xf32>
    %467 = vector.shape_cast %466 : vector<1x1x64xf32> to vector<1x64xf32>
    %468 = vector.broadcast %467 : vector<1x64xf32> to vector<8x64xf32>
    %469 = arith.addf %465, %468 : vector<8x64xf32>
    %470 = arith.addf %442, %455 : vector<8x64xf32>
    %471 = arith.negf %470 : vector<8x64xf32>
    %472 = math.exp %471 : vector<8x64xf32>
    %cst_316 = arith.constant 1.000000e+00 : f32
    %473 = vector.broadcast %cst_316 : f32 to vector<8x64xf32>
    %474 = arith.addf %473, %472 : vector<8x64xf32>
    %475 = arith.divf %473, %474 : vector<8x64xf32>
    %476 = arith.addf %445, %462 : vector<8x64xf32>
    %477 = arith.negf %476 : vector<8x64xf32>
    %478 = math.exp %477 : vector<8x64xf32>
    %cst_317 = arith.constant 1.000000e+00 : f32
    %479 = vector.broadcast %cst_317 : f32 to vector<8x64xf32>
    %480 = arith.addf %479, %478 : vector<8x64xf32>
    %481 = arith.divf %479, %480 : vector<8x64xf32>
    %482 = arith.mulf %475, %469 : vector<8x64xf32>
    %483 = arith.addf %448, %482 : vector<8x64xf32>
    %484 = math.tanh %483 : vector<8x64xf32>
    %cst_318 = arith.constant 1.000000e+00 : f32
    %485 = vector.broadcast %cst_318 : f32 to vector<8x64xf32>
    %486 = arith.subf %485, %481 : vector<8x64xf32>
    %487 = arith.mulf %486, %484 : vector<8x64xf32>
    %488 = arith.mulf %481, %375 : vector<8x64xf32>
    %489 = arith.addf %487, %488 : vector<8x64xf32>
    %c0_319 = arith.constant 0 : index
    %c0_320 = arith.constant 0 : index
    %c0_321 = arith.constant 0 : index
    %490 = vector.load %arg14[%c0_319, %c0_320, %c0_321] : memref<3x64x64xf32, #tpu.memory_space<vmem>>, vector<1x64x64xf32>
    %491 = vector.shape_cast %490 : vector<1x64x64xf32> to vector<64x64xf32>
    %cst_322 = arith.constant dense<0.000000e+00> : vector<8x64xf32>
    %492 = tpu.matmul %489, %491, %cst_322 {dimension_numbers = #tpu.dot_dimension_numbers<[1], [0], [0], [1], [0, 0, 1, 1], [], []>} : vector<8x64xf32>, vector<64x64xf32>, vector<8x64xf32> -> vector<8x64xf32>
    %c0_323 = arith.constant 0 : index
    %c0_324 = arith.constant 0 : index
    %c0_325 = arith.constant 0 : index
    %493 = vector.load %arg15[%c0_323, %c0_324, %c0_325] : memref<3x1x64xf32, #tpu.memory_space<vmem>>, vector<1x1x64xf32>
    %494 = vector.shape_cast %493 : vector<1x1x64xf32> to vector<1x64xf32>
    %495 = vector.broadcast %494 : vector<1x64xf32> to vector<8x64xf32>
    %496 = arith.addf %492, %495 : vector<8x64xf32>
    %c1_326 = arith.constant 1 : index
    %c0_327 = arith.constant 0 : index
    %c0_328 = arith.constant 0 : index
    %497 = vector.load %arg14[%c1_326, %c0_327, %c0_328] : memref<3x64x64xf32, #tpu.memory_space<vmem>>, vector<1x64x64xf32>
    %498 = vector.shape_cast %497 : vector<1x64x64xf32> to vector<64x64xf32>
    %cst_329 = arith.constant dense<0.000000e+00> : vector<8x64xf32>
    %499 = tpu.matmul %489, %498, %cst_329 {dimension_numbers = #tpu.dot_dimension_numbers<[1], [0], [0], [1], [0, 0, 1, 1], [], []>} : vector<8x64xf32>, vector<64x64xf32>, vector<8x64xf32> -> vector<8x64xf32>
    %c1_330 = arith.constant 1 : index
    %c0_331 = arith.constant 0 : index
    %c0_332 = arith.constant 0 : index
    %500 = vector.load %arg15[%c1_330, %c0_331, %c0_332] : memref<3x1x64xf32, #tpu.memory_space<vmem>>, vector<1x1x64xf32>
    %501 = vector.shape_cast %500 : vector<1x1x64xf32> to vector<1x64xf32>
    %502 = vector.broadcast %501 : vector<1x64xf32> to vector<8x64xf32>
    %503 = arith.addf %499, %502 : vector<8x64xf32>
    %c2_333 = arith.constant 2 : index
    %c0_334 = arith.constant 0 : index
    %c0_335 = arith.constant 0 : index
    %504 = vector.load %arg14[%c2_333, %c0_334, %c0_335] : memref<3x64x64xf32, #tpu.memory_space<vmem>>, vector<1x64x64xf32>
    %505 = vector.shape_cast %504 : vector<1x64x64xf32> to vector<64x64xf32>
    %cst_336 = arith.constant dense<0.000000e+00> : vector<8x64xf32>
    %506 = tpu.matmul %489, %505, %cst_336 {dimension_numbers = #tpu.dot_dimension_numbers<[1], [0], [0], [1], [0, 0, 1, 1], [], []>} : vector<8x64xf32>, vector<64x64xf32>, vector<8x64xf32> -> vector<8x64xf32>
    %c2_337 = arith.constant 2 : index
    %c0_338 = arith.constant 0 : index
    %c0_339 = arith.constant 0 : index
    %507 = vector.load %arg15[%c2_337, %c0_338, %c0_339] : memref<3x1x64xf32, #tpu.memory_space<vmem>>, vector<1x1x64xf32>
    %508 = vector.shape_cast %507 : vector<1x1x64xf32> to vector<1x64xf32>
    %509 = vector.broadcast %508 : vector<1x64xf32> to vector<8x64xf32>
    %510 = arith.addf %506, %509 : vector<8x64xf32>
    %c0_340 = arith.constant 0 : index
    %c0_341 = arith.constant 0 : index
    %c0_342 = arith.constant 0 : index
    %511 = vector.load %arg16[%c0_340, %c0_341, %c0_342] : memref<3x64x64xf32, #tpu.memory_space<vmem>>, vector<1x64x64xf32>
    %512 = vector.shape_cast %511 : vector<1x64x64xf32> to vector<64x64xf32>
    %cst_343 = arith.constant dense<0.000000e+00> : vector<8x64xf32>
    %513 = tpu.matmul %437, %512, %cst_343 {dimension_numbers = #tpu.dot_dimension_numbers<[1], [0], [0], [1], [0, 0, 1, 1], [], []>} : vector<8x64xf32>, vector<64x64xf32>, vector<8x64xf32> -> vector<8x64xf32>
    %c0_344 = arith.constant 0 : index
    %c0_345 = arith.constant 0 : index
    %c0_346 = arith.constant 0 : index
    %514 = vector.load %arg17[%c0_344, %c0_345, %c0_346] : memref<3x1x64xf32, #tpu.memory_space<vmem>>, vector<1x1x64xf32>
    %515 = vector.shape_cast %514 : vector<1x1x64xf32> to vector<1x64xf32>
    %516 = vector.broadcast %515 : vector<1x64xf32> to vector<8x64xf32>
    %517 = arith.addf %513, %516 : vector<8x64xf32>
    %c1_347 = arith.constant 1 : index
    %c0_348 = arith.constant 0 : index
    %c0_349 = arith.constant 0 : index
    %518 = vector.load %arg16[%c1_347, %c0_348, %c0_349] : memref<3x64x64xf32, #tpu.memory_space<vmem>>, vector<1x64x64xf32>
    %519 = vector.shape_cast %518 : vector<1x64x64xf32> to vector<64x64xf32>
    %cst_350 = arith.constant dense<0.000000e+00> : vector<8x64xf32>
    %520 = tpu.matmul %437, %519, %cst_350 {dimension_numbers = #tpu.dot_dimension_numbers<[1], [0], [0], [1], [0, 0, 1, 1], [], []>} : vector<8x64xf32>, vector<64x64xf32>, vector<8x64xf32> -> vector<8x64xf32>
    %c1_351 = arith.constant 1 : index
    %c0_352 = arith.constant 0 : index
    %c0_353 = arith.constant 0 : index
    %521 = vector.load %arg17[%c1_351, %c0_352, %c0_353] : memref<3x1x64xf32, #tpu.memory_space<vmem>>, vector<1x1x64xf32>
    %522 = vector.shape_cast %521 : vector<1x1x64xf32> to vector<1x64xf32>
    %523 = vector.broadcast %522 : vector<1x64xf32> to vector<8x64xf32>
    %524 = arith.addf %520, %523 : vector<8x64xf32>
    %c2_354 = arith.constant 2 : index
    %c0_355 = arith.constant 0 : index
    %c0_356 = arith.constant 0 : index
    %525 = vector.load %arg16[%c2_354, %c0_355, %c0_356] : memref<3x64x64xf32, #tpu.memory_space<vmem>>, vector<1x64x64xf32>
    %526 = vector.shape_cast %525 : vector<1x64x64xf32> to vector<64x64xf32>
    %cst_357 = arith.constant dense<0.000000e+00> : vector<8x64xf32>
    %527 = tpu.matmul %437, %526, %cst_357 {dimension_numbers = #tpu.dot_dimension_numbers<[1], [0], [0], [1], [0, 0, 1, 1], [], []>} : vector<8x64xf32>, vector<64x64xf32>, vector<8x64xf32> -> vector<8x64xf32>
    %c2_358 = arith.constant 2 : index
    %c0_359 = arith.constant 0 : index
    %c0_360 = arith.constant 0 : index
    %528 = vector.load %arg17[%c2_358, %c0_359, %c0_360] : memref<3x1x64xf32, #tpu.memory_space<vmem>>, vector<1x1x64xf32>
    %529 = vector.shape_cast %528 : vector<1x1x64xf32> to vector<1x64xf32>
    %530 = vector.broadcast %529 : vector<1x64xf32> to vector<8x64xf32>
    %531 = arith.addf %527, %530 : vector<8x64xf32>
    %532 = arith.addf %496, %517 : vector<8x64xf32>
    %533 = arith.negf %532 : vector<8x64xf32>
    %534 = math.exp %533 : vector<8x64xf32>
    %cst_361 = arith.constant 1.000000e+00 : f32
    %535 = vector.broadcast %cst_361 : f32 to vector<8x64xf32>
    %536 = arith.addf %535, %534 : vector<8x64xf32>
    %537 = arith.divf %535, %536 : vector<8x64xf32>
    %538 = arith.addf %503, %524 : vector<8x64xf32>
    %539 = arith.negf %538 : vector<8x64xf32>
    %540 = math.exp %539 : vector<8x64xf32>
    %cst_362 = arith.constant 1.000000e+00 : f32
    %541 = vector.broadcast %cst_362 : f32 to vector<8x64xf32>
    %542 = arith.addf %541, %540 : vector<8x64xf32>
    %543 = arith.divf %541, %542 : vector<8x64xf32>
    %544 = arith.mulf %537, %531 : vector<8x64xf32>
    %545 = arith.addf %510, %544 : vector<8x64xf32>
    %546 = math.tanh %545 : vector<8x64xf32>
    %cst_363 = arith.constant 1.000000e+00 : f32
    %547 = vector.broadcast %cst_363 : f32 to vector<8x64xf32>
    %548 = arith.subf %547, %543 : vector<8x64xf32>
    %549 = arith.mulf %548, %546 : vector<8x64xf32>
    %550 = arith.mulf %543, %437 : vector<8x64xf32>
    %551 = arith.addf %549, %550 : vector<8x64xf32>
    %c4_i32 = arith.constant 4 : i32
    %c8_i32_364 = arith.constant 8 : i32
    %552 = arith.muli %c4_i32, %c8_i32_364 : i32
    %553 = tpu.assume_multiple %552, 8 : i32
    %c0_365 = arith.constant 0 : index
    %554 = arith.index_cast %553 : i32 to index
    %c0_366 = arith.constant 0 : index
    %555 = vector.load %arg19[%c0_365, %554, %c0_366] : memref<3x64x64xf32, #tpu.memory_space<vmem>>, vector<1x8x64xf32>
    %556 = vector.shape_cast %555 : vector<1x8x64xf32> to vector<8x64xf32>
    %c1_367 = arith.constant 1 : index
    %557 = arith.index_cast %553 : i32 to index
    %c0_368 = arith.constant 0 : index
    %558 = vector.load %arg19[%c1_367, %557, %c0_368] : memref<3x64x64xf32, #tpu.memory_space<vmem>>, vector<1x8x64xf32>
    %559 = vector.shape_cast %558 : vector<1x8x64xf32> to vector<8x64xf32>
    %c2_369 = arith.constant 2 : index
    %560 = arith.index_cast %553 : i32 to index
    %c0_370 = arith.constant 0 : index
    %561 = vector.load %arg19[%c2_369, %560, %c0_370] : memref<3x64x64xf32, #tpu.memory_space<vmem>>, vector<1x8x64xf32>
    %562 = vector.shape_cast %561 : vector<1x8x64xf32> to vector<8x64xf32>
    %c0_371 = arith.constant 0 : index
    %c0_372 = arith.constant 0 : index
    %c0_373 = arith.constant 0 : index
    %563 = vector.load %arg12[%c0_371, %c0_372, %c0_373] : memref<3x64x64xf32, #tpu.memory_space<vmem>>, vector<1x64x64xf32>
    %564 = vector.shape_cast %563 : vector<1x64x64xf32> to vector<64x64xf32>
    %cst_374 = arith.constant dense<0.000000e+00> : vector<8x64xf32>
    %565 = tpu.matmul %489, %564, %cst_374 {dimension_numbers = #tpu.dot_dimension_numbers<[1], [0], [0], [1], [0, 0, 1, 1], [], []>} : vector<8x64xf32>, vector<64x64xf32>, vector<8x64xf32> -> vector<8x64xf32>
    %c0_375 = arith.constant 0 : index
    %c0_376 = arith.constant 0 : index
    %c0_377 = arith.constant 0 : index
    %566 = vector.load %arg13[%c0_375, %c0_376, %c0_377] : memref<3x1x64xf32, #tpu.memory_space<vmem>>, vector<1x1x64xf32>
    %567 = vector.shape_cast %566 : vector<1x1x64xf32> to vector<1x64xf32>
    %568 = vector.broadcast %567 : vector<1x64xf32> to vector<8x64xf32>
    %569 = arith.addf %565, %568 : vector<8x64xf32>
    %c1_378 = arith.constant 1 : index
    %c0_379 = arith.constant 0 : index
    %c0_380 = arith.constant 0 : index
    %570 = vector.load %arg12[%c1_378, %c0_379, %c0_380] : memref<3x64x64xf32, #tpu.memory_space<vmem>>, vector<1x64x64xf32>
    %571 = vector.shape_cast %570 : vector<1x64x64xf32> to vector<64x64xf32>
    %cst_381 = arith.constant dense<0.000000e+00> : vector<8x64xf32>
    %572 = tpu.matmul %489, %571, %cst_381 {dimension_numbers = #tpu.dot_dimension_numbers<[1], [0], [0], [1], [0, 0, 1, 1], [], []>} : vector<8x64xf32>, vector<64x64xf32>, vector<8x64xf32> -> vector<8x64xf32>
    %c1_382 = arith.constant 1 : index
    %c0_383 = arith.constant 0 : index
    %c0_384 = arith.constant 0 : index
    %573 = vector.load %arg13[%c1_382, %c0_383, %c0_384] : memref<3x1x64xf32, #tpu.memory_space<vmem>>, vector<1x1x64xf32>
    %574 = vector.shape_cast %573 : vector<1x1x64xf32> to vector<1x64xf32>
    %575 = vector.broadcast %574 : vector<1x64xf32> to vector<8x64xf32>
    %576 = arith.addf %572, %575 : vector<8x64xf32>
    %c2_385 = arith.constant 2 : index
    %c0_386 = arith.constant 0 : index
    %c0_387 = arith.constant 0 : index
    %577 = vector.load %arg12[%c2_385, %c0_386, %c0_387] : memref<3x64x64xf32, #tpu.memory_space<vmem>>, vector<1x64x64xf32>
    %578 = vector.shape_cast %577 : vector<1x64x64xf32> to vector<64x64xf32>
    %cst_388 = arith.constant dense<0.000000e+00> : vector<8x64xf32>
    %579 = tpu.matmul %489, %578, %cst_388 {dimension_numbers = #tpu.dot_dimension_numbers<[1], [0], [0], [1], [0, 0, 1, 1], [], []>} : vector<8x64xf32>, vector<64x64xf32>, vector<8x64xf32> -> vector<8x64xf32>
    %c2_389 = arith.constant 2 : index
    %c0_390 = arith.constant 0 : index
    %c0_391 = arith.constant 0 : index
    %580 = vector.load %arg13[%c2_389, %c0_390, %c0_391] : memref<3x1x64xf32, #tpu.memory_space<vmem>>, vector<1x1x64xf32>
    %581 = vector.shape_cast %580 : vector<1x1x64xf32> to vector<1x64xf32>
    %582 = vector.broadcast %581 : vector<1x64xf32> to vector<8x64xf32>
    %583 = arith.addf %579, %582 : vector<8x64xf32>
    %584 = arith.addf %556, %569 : vector<8x64xf32>
    %585 = arith.negf %584 : vector<8x64xf32>
    %586 = math.exp %585 : vector<8x64xf32>
    %cst_392 = arith.constant 1.000000e+00 : f32
    %587 = vector.broadcast %cst_392 : f32 to vector<8x64xf32>
    %588 = arith.addf %587, %586 : vector<8x64xf32>
    %589 = arith.divf %587, %588 : vector<8x64xf32>
    %590 = arith.addf %559, %576 : vector<8x64xf32>
    %591 = arith.negf %590 : vector<8x64xf32>
    %592 = math.exp %591 : vector<8x64xf32>
    %cst_393 = arith.constant 1.000000e+00 : f32
    %593 = vector.broadcast %cst_393 : f32 to vector<8x64xf32>
    %594 = arith.addf %593, %592 : vector<8x64xf32>
    %595 = arith.divf %593, %594 : vector<8x64xf32>
    %596 = arith.mulf %589, %583 : vector<8x64xf32>
    %597 = arith.addf %562, %596 : vector<8x64xf32>
    %598 = math.tanh %597 : vector<8x64xf32>
    %cst_394 = arith.constant 1.000000e+00 : f32
    %599 = vector.broadcast %cst_394 : f32 to vector<8x64xf32>
    %600 = arith.subf %599, %595 : vector<8x64xf32>
    %601 = arith.mulf %600, %598 : vector<8x64xf32>
    %602 = arith.mulf %595, %489 : vector<8x64xf32>
    %603 = arith.addf %601, %602 : vector<8x64xf32>
    %c0_395 = arith.constant 0 : index
    %c0_396 = arith.constant 0 : index
    %c0_397 = arith.constant 0 : index
    %604 = vector.load %arg14[%c0_395, %c0_396, %c0_397] : memref<3x64x64xf32, #tpu.memory_space<vmem>>, vector<1x64x64xf32>
    %605 = vector.shape_cast %604 : vector<1x64x64xf32> to vector<64x64xf32>
    %cst_398 = arith.constant dense<0.000000e+00> : vector<8x64xf32>
    %606 = tpu.matmul %603, %605, %cst_398 {dimension_numbers = #tpu.dot_dimension_numbers<[1], [0], [0], [1], [0, 0, 1, 1], [], []>} : vector<8x64xf32>, vector<64x64xf32>, vector<8x64xf32> -> vector<8x64xf32>
    %c0_399 = arith.constant 0 : index
    %c0_400 = arith.constant 0 : index
    %c0_401 = arith.constant 0 : index
    %607 = vector.load %arg15[%c0_399, %c0_400, %c0_401] : memref<3x1x64xf32, #tpu.memory_space<vmem>>, vector<1x1x64xf32>
    %608 = vector.shape_cast %607 : vector<1x1x64xf32> to vector<1x64xf32>
    %609 = vector.broadcast %608 : vector<1x64xf32> to vector<8x64xf32>
    %610 = arith.addf %606, %609 : vector<8x64xf32>
    %c1_402 = arith.constant 1 : index
    %c0_403 = arith.constant 0 : index
    %c0_404 = arith.constant 0 : index
    %611 = vector.load %arg14[%c1_402, %c0_403, %c0_404] : memref<3x64x64xf32, #tpu.memory_space<vmem>>, vector<1x64x64xf32>
    %612 = vector.shape_cast %611 : vector<1x64x64xf32> to vector<64x64xf32>
    %cst_405 = arith.constant dense<0.000000e+00> : vector<8x64xf32>
    %613 = tpu.matmul %603, %612, %cst_405 {dimension_numbers = #tpu.dot_dimension_numbers<[1], [0], [0], [1], [0, 0, 1, 1], [], []>} : vector<8x64xf32>, vector<64x64xf32>, vector<8x64xf32> -> vector<8x64xf32>
    %c1_406 = arith.constant 1 : index
    %c0_407 = arith.constant 0 : index
    %c0_408 = arith.constant 0 : index
    %614 = vector.load %arg15[%c1_406, %c0_407, %c0_408] : memref<3x1x64xf32, #tpu.memory_space<vmem>>, vector<1x1x64xf32>
    %615 = vector.shape_cast %614 : vector<1x1x64xf32> to vector<1x64xf32>
    %616 = vector.broadcast %615 : vector<1x64xf32> to vector<8x64xf32>
    %617 = arith.addf %613, %616 : vector<8x64xf32>
    %c2_409 = arith.constant 2 : index
    %c0_410 = arith.constant 0 : index
    %c0_411 = arith.constant 0 : index
    %618 = vector.load %arg14[%c2_409, %c0_410, %c0_411] : memref<3x64x64xf32, #tpu.memory_space<vmem>>, vector<1x64x64xf32>
    %619 = vector.shape_cast %618 : vector<1x64x64xf32> to vector<64x64xf32>
    %cst_412 = arith.constant dense<0.000000e+00> : vector<8x64xf32>
    %620 = tpu.matmul %603, %619, %cst_412 {dimension_numbers = #tpu.dot_dimension_numbers<[1], [0], [0], [1], [0, 0, 1, 1], [], []>} : vector<8x64xf32>, vector<64x64xf32>, vector<8x64xf32> -> vector<8x64xf32>
    %c2_413 = arith.constant 2 : index
    %c0_414 = arith.constant 0 : index
    %c0_415 = arith.constant 0 : index
    %621 = vector.load %arg15[%c2_413, %c0_414, %c0_415] : memref<3x1x64xf32, #tpu.memory_space<vmem>>, vector<1x1x64xf32>
    %622 = vector.shape_cast %621 : vector<1x1x64xf32> to vector<1x64xf32>
    %623 = vector.broadcast %622 : vector<1x64xf32> to vector<8x64xf32>
    %624 = arith.addf %620, %623 : vector<8x64xf32>
    %c0_416 = arith.constant 0 : index
    %c0_417 = arith.constant 0 : index
    %c0_418 = arith.constant 0 : index
    %625 = vector.load %arg16[%c0_416, %c0_417, %c0_418] : memref<3x64x64xf32, #tpu.memory_space<vmem>>, vector<1x64x64xf32>
    %626 = vector.shape_cast %625 : vector<1x64x64xf32> to vector<64x64xf32>
    %cst_419 = arith.constant dense<0.000000e+00> : vector<8x64xf32>
    %627 = tpu.matmul %551, %626, %cst_419 {dimension_numbers = #tpu.dot_dimension_numbers<[1], [0], [0], [1], [0, 0, 1, 1], [], []>} : vector<8x64xf32>, vector<64x64xf32>, vector<8x64xf32> -> vector<8x64xf32>
    %c0_420 = arith.constant 0 : index
    %c0_421 = arith.constant 0 : index
    %c0_422 = arith.constant 0 : index
    %628 = vector.load %arg17[%c0_420, %c0_421, %c0_422] : memref<3x1x64xf32, #tpu.memory_space<vmem>>, vector<1x1x64xf32>
    %629 = vector.shape_cast %628 : vector<1x1x64xf32> to vector<1x64xf32>
    %630 = vector.broadcast %629 : vector<1x64xf32> to vector<8x64xf32>
    %631 = arith.addf %627, %630 : vector<8x64xf32>
    %c1_423 = arith.constant 1 : index
    %c0_424 = arith.constant 0 : index
    %c0_425 = arith.constant 0 : index
    %632 = vector.load %arg16[%c1_423, %c0_424, %c0_425] : memref<3x64x64xf32, #tpu.memory_space<vmem>>, vector<1x64x64xf32>
    %633 = vector.shape_cast %632 : vector<1x64x64xf32> to vector<64x64xf32>
    %cst_426 = arith.constant dense<0.000000e+00> : vector<8x64xf32>
    %634 = tpu.matmul %551, %633, %cst_426 {dimension_numbers = #tpu.dot_dimension_numbers<[1], [0], [0], [1], [0, 0, 1, 1], [], []>} : vector<8x64xf32>, vector<64x64xf32>, vector<8x64xf32> -> vector<8x64xf32>
    %c1_427 = arith.constant 1 : index
    %c0_428 = arith.constant 0 : index
    %c0_429 = arith.constant 0 : index
    %635 = vector.load %arg17[%c1_427, %c0_428, %c0_429] : memref<3x1x64xf32, #tpu.memory_space<vmem>>, vector<1x1x64xf32>
    %636 = vector.shape_cast %635 : vector<1x1x64xf32> to vector<1x64xf32>
    %637 = vector.broadcast %636 : vector<1x64xf32> to vector<8x64xf32>
    %638 = arith.addf %634, %637 : vector<8x64xf32>
    %c2_430 = arith.constant 2 : index
    %c0_431 = arith.constant 0 : index
    %c0_432 = arith.constant 0 : index
    %639 = vector.load %arg16[%c2_430, %c0_431, %c0_432] : memref<3x64x64xf32, #tpu.memory_space<vmem>>, vector<1x64x64xf32>
    %640 = vector.shape_cast %639 : vector<1x64x64xf32> to vector<64x64xf32>
    %cst_433 = arith.constant dense<0.000000e+00> : vector<8x64xf32>
    %641 = tpu.matmul %551, %640, %cst_433 {dimension_numbers = #tpu.dot_dimension_numbers<[1], [0], [0], [1], [0, 0, 1, 1], [], []>} : vector<8x64xf32>, vector<64x64xf32>, vector<8x64xf32> -> vector<8x64xf32>
    %c2_434 = arith.constant 2 : index
    %c0_435 = arith.constant 0 : index
    %c0_436 = arith.constant 0 : index
    %642 = vector.load %arg17[%c2_434, %c0_435, %c0_436] : memref<3x1x64xf32, #tpu.memory_space<vmem>>, vector<1x1x64xf32>
    %643 = vector.shape_cast %642 : vector<1x1x64xf32> to vector<1x64xf32>
    %644 = vector.broadcast %643 : vector<1x64xf32> to vector<8x64xf32>
    %645 = arith.addf %641, %644 : vector<8x64xf32>
    %646 = arith.addf %610, %631 : vector<8x64xf32>
    %647 = arith.negf %646 : vector<8x64xf32>
    %648 = math.exp %647 : vector<8x64xf32>
    %cst_437 = arith.constant 1.000000e+00 : f32
    %649 = vector.broadcast %cst_437 : f32 to vector<8x64xf32>
    %650 = arith.addf %649, %648 : vector<8x64xf32>
    %651 = arith.divf %649, %650 : vector<8x64xf32>
    %652 = arith.addf %617, %638 : vector<8x64xf32>
    %653 = arith.negf %652 : vector<8x64xf32>
    %654 = math.exp %653 : vector<8x64xf32>
    %cst_438 = arith.constant 1.000000e+00 : f32
    %655 = vector.broadcast %cst_438 : f32 to vector<8x64xf32>
    %656 = arith.addf %655, %654 : vector<8x64xf32>
    %657 = arith.divf %655, %656 : vector<8x64xf32>
    %658 = arith.mulf %651, %645 : vector<8x64xf32>
    %659 = arith.addf %624, %658 : vector<8x64xf32>
    %660 = math.tanh %659 : vector<8x64xf32>
    %cst_439 = arith.constant 1.000000e+00 : f32
    %661 = vector.broadcast %cst_439 : f32 to vector<8x64xf32>
    %662 = arith.subf %661, %657 : vector<8x64xf32>
    %663 = arith.mulf %662, %660 : vector<8x64xf32>
    %664 = arith.mulf %657, %551 : vector<8x64xf32>
    %665 = arith.addf %663, %664 : vector<8x64xf32>
    %c5_i32 = arith.constant 5 : i32
    %c8_i32_440 = arith.constant 8 : i32
    %666 = arith.muli %c5_i32, %c8_i32_440 : i32
    %667 = tpu.assume_multiple %666, 8 : i32
    %c0_441 = arith.constant 0 : index
    %668 = arith.index_cast %667 : i32 to index
    %c0_442 = arith.constant 0 : index
    %669 = vector.load %arg19[%c0_441, %668, %c0_442] : memref<3x64x64xf32, #tpu.memory_space<vmem>>, vector<1x8x64xf32>
    %670 = vector.shape_cast %669 : vector<1x8x64xf32> to vector<8x64xf32>
    %c1_443 = arith.constant 1 : index
    %671 = arith.index_cast %667 : i32 to index
    %c0_444 = arith.constant 0 : index
    %672 = vector.load %arg19[%c1_443, %671, %c0_444] : memref<3x64x64xf32, #tpu.memory_space<vmem>>, vector<1x8x64xf32>
    %673 = vector.shape_cast %672 : vector<1x8x64xf32> to vector<8x64xf32>
    %c2_445 = arith.constant 2 : index
    %674 = arith.index_cast %667 : i32 to index
    %c0_446 = arith.constant 0 : index
    %675 = vector.load %arg19[%c2_445, %674, %c0_446] : memref<3x64x64xf32, #tpu.memory_space<vmem>>, vector<1x8x64xf32>
    %676 = vector.shape_cast %675 : vector<1x8x64xf32> to vector<8x64xf32>
    %c0_447 = arith.constant 0 : index
    %c0_448 = arith.constant 0 : index
    %c0_449 = arith.constant 0 : index
    %677 = vector.load %arg12[%c0_447, %c0_448, %c0_449] : memref<3x64x64xf32, #tpu.memory_space<vmem>>, vector<1x64x64xf32>
    %678 = vector.shape_cast %677 : vector<1x64x64xf32> to vector<64x64xf32>
    %cst_450 = arith.constant dense<0.000000e+00> : vector<8x64xf32>
    %679 = tpu.matmul %603, %678, %cst_450 {dimension_numbers = #tpu.dot_dimension_numbers<[1], [0], [0], [1], [0, 0, 1, 1], [], []>} : vector<8x64xf32>, vector<64x64xf32>, vector<8x64xf32> -> vector<8x64xf32>
    %c0_451 = arith.constant 0 : index
    %c0_452 = arith.constant 0 : index
    %c0_453 = arith.constant 0 : index
    %680 = vector.load %arg13[%c0_451, %c0_452, %c0_453] : memref<3x1x64xf32, #tpu.memory_space<vmem>>, vector<1x1x64xf32>
    %681 = vector.shape_cast %680 : vector<1x1x64xf32> to vector<1x64xf32>
    %682 = vector.broadcast %681 : vector<1x64xf32> to vector<8x64xf32>
    %683 = arith.addf %679, %682 : vector<8x64xf32>
    %c1_454 = arith.constant 1 : index
    %c0_455 = arith.constant 0 : index
    %c0_456 = arith.constant 0 : index
    %684 = vector.load %arg12[%c1_454, %c0_455, %c0_456] : memref<3x64x64xf32, #tpu.memory_space<vmem>>, vector<1x64x64xf32>
    %685 = vector.shape_cast %684 : vector<1x64x64xf32> to vector<64x64xf32>
    %cst_457 = arith.constant dense<0.000000e+00> : vector<8x64xf32>
    %686 = tpu.matmul %603, %685, %cst_457 {dimension_numbers = #tpu.dot_dimension_numbers<[1], [0], [0], [1], [0, 0, 1, 1], [], []>} : vector<8x64xf32>, vector<64x64xf32>, vector<8x64xf32> -> vector<8x64xf32>
    %c1_458 = arith.constant 1 : index
    %c0_459 = arith.constant 0 : index
    %c0_460 = arith.constant 0 : index
    %687 = vector.load %arg13[%c1_458, %c0_459, %c0_460] : memref<3x1x64xf32, #tpu.memory_space<vmem>>, vector<1x1x64xf32>
    %688 = vector.shape_cast %687 : vector<1x1x64xf32> to vector<1x64xf32>
    %689 = vector.broadcast %688 : vector<1x64xf32> to vector<8x64xf32>
    %690 = arith.addf %686, %689 : vector<8x64xf32>
    %c2_461 = arith.constant 2 : index
    %c0_462 = arith.constant 0 : index
    %c0_463 = arith.constant 0 : index
    %691 = vector.load %arg12[%c2_461, %c0_462, %c0_463] : memref<3x64x64xf32, #tpu.memory_space<vmem>>, vector<1x64x64xf32>
    %692 = vector.shape_cast %691 : vector<1x64x64xf32> to vector<64x64xf32>
    %cst_464 = arith.constant dense<0.000000e+00> : vector<8x64xf32>
    %693 = tpu.matmul %603, %692, %cst_464 {dimension_numbers = #tpu.dot_dimension_numbers<[1], [0], [0], [1], [0, 0, 1, 1], [], []>} : vector<8x64xf32>, vector<64x64xf32>, vector<8x64xf32> -> vector<8x64xf32>
    %c2_465 = arith.constant 2 : index
    %c0_466 = arith.constant 0 : index
    %c0_467 = arith.constant 0 : index
    %694 = vector.load %arg13[%c2_465, %c0_466, %c0_467] : memref<3x1x64xf32, #tpu.memory_space<vmem>>, vector<1x1x64xf32>
    %695 = vector.shape_cast %694 : vector<1x1x64xf32> to vector<1x64xf32>
    %696 = vector.broadcast %695 : vector<1x64xf32> to vector<8x64xf32>
    %697 = arith.addf %693, %696 : vector<8x64xf32>
    %698 = arith.addf %670, %683 : vector<8x64xf32>
    %699 = arith.negf %698 : vector<8x64xf32>
    %700 = math.exp %699 : vector<8x64xf32>
    %cst_468 = arith.constant 1.000000e+00 : f32
    %701 = vector.broadcast %cst_468 : f32 to vector<8x64xf32>
    %702 = arith.addf %701, %700 : vector<8x64xf32>
    %703 = arith.divf %701, %702 : vector<8x64xf32>
    %704 = arith.addf %673, %690 : vector<8x64xf32>
    %705 = arith.negf %704 : vector<8x64xf32>
    %706 = math.exp %705 : vector<8x64xf32>
    %cst_469 = arith.constant 1.000000e+00 : f32
    %707 = vector.broadcast %cst_469 : f32 to vector<8x64xf32>
    %708 = arith.addf %707, %706 : vector<8x64xf32>
    %709 = arith.divf %707, %708 : vector<8x64xf32>
    %710 = arith.mulf %703, %697 : vector<8x64xf32>
    %711 = arith.addf %676, %710 : vector<8x64xf32>
    %712 = math.tanh %711 : vector<8x64xf32>
    %cst_470 = arith.constant 1.000000e+00 : f32
    %713 = vector.broadcast %cst_470 : f32 to vector<8x64xf32>
    %714 = arith.subf %713, %709 : vector<8x64xf32>
    %715 = arith.mulf %714, %712 : vector<8x64xf32>
    %716 = arith.mulf %709, %603 : vector<8x64xf32>
    %717 = arith.addf %715, %716 : vector<8x64xf32>
    %c0_471 = arith.constant 0 : index
    %c0_472 = arith.constant 0 : index
    %c0_473 = arith.constant 0 : index
    %718 = vector.load %arg14[%c0_471, %c0_472, %c0_473] : memref<3x64x64xf32, #tpu.memory_space<vmem>>, vector<1x64x64xf32>
    %719 = vector.shape_cast %718 : vector<1x64x64xf32> to vector<64x64xf32>
    %cst_474 = arith.constant dense<0.000000e+00> : vector<8x64xf32>
    %720 = tpu.matmul %717, %719, %cst_474 {dimension_numbers = #tpu.dot_dimension_numbers<[1], [0], [0], [1], [0, 0, 1, 1], [], []>} : vector<8x64xf32>, vector<64x64xf32>, vector<8x64xf32> -> vector<8x64xf32>
    %c0_475 = arith.constant 0 : index
    %c0_476 = arith.constant 0 : index
    %c0_477 = arith.constant 0 : index
    %721 = vector.load %arg15[%c0_475, %c0_476, %c0_477] : memref<3x1x64xf32, #tpu.memory_space<vmem>>, vector<1x1x64xf32>
    %722 = vector.shape_cast %721 : vector<1x1x64xf32> to vector<1x64xf32>
    %723 = vector.broadcast %722 : vector<1x64xf32> to vector<8x64xf32>
    %724 = arith.addf %720, %723 : vector<8x64xf32>
    %c1_478 = arith.constant 1 : index
    %c0_479 = arith.constant 0 : index
    %c0_480 = arith.constant 0 : index
    %725 = vector.load %arg14[%c1_478, %c0_479, %c0_480] : memref<3x64x64xf32, #tpu.memory_space<vmem>>, vector<1x64x64xf32>
    %726 = vector.shape_cast %725 : vector<1x64x64xf32> to vector<64x64xf32>
    %cst_481 = arith.constant dense<0.000000e+00> : vector<8x64xf32>
    %727 = tpu.matmul %717, %726, %cst_481 {dimension_numbers = #tpu.dot_dimension_numbers<[1], [0], [0], [1], [0, 0, 1, 1], [], []>} : vector<8x64xf32>, vector<64x64xf32>, vector<8x64xf32> -> vector<8x64xf32>
    %c1_482 = arith.constant 1 : index
    %c0_483 = arith.constant 0 : index
    %c0_484 = arith.constant 0 : index
    %728 = vector.load %arg15[%c1_482, %c0_483, %c0_484] : memref<3x1x64xf32, #tpu.memory_space<vmem>>, vector<1x1x64xf32>
    %729 = vector.shape_cast %728 : vector<1x1x64xf32> to vector<1x64xf32>
    %730 = vector.broadcast %729 : vector<1x64xf32> to vector<8x64xf32>
    %731 = arith.addf %727, %730 : vector<8x64xf32>
    %c2_485 = arith.constant 2 : index
    %c0_486 = arith.constant 0 : index
    %c0_487 = arith.constant 0 : index
    %732 = vector.load %arg14[%c2_485, %c0_486, %c0_487] : memref<3x64x64xf32, #tpu.memory_space<vmem>>, vector<1x64x64xf32>
    %733 = vector.shape_cast %732 : vector<1x64x64xf32> to vector<64x64xf32>
    %cst_488 = arith.constant dense<0.000000e+00> : vector<8x64xf32>
    %734 = tpu.matmul %717, %733, %cst_488 {dimension_numbers = #tpu.dot_dimension_numbers<[1], [0], [0], [1], [0, 0, 1, 1], [], []>} : vector<8x64xf32>, vector<64x64xf32>, vector<8x64xf32> -> vector<8x64xf32>
    %c2_489 = arith.constant 2 : index
    %c0_490 = arith.constant 0 : index
    %c0_491 = arith.constant 0 : index
    %735 = vector.load %arg15[%c2_489, %c0_490, %c0_491] : memref<3x1x64xf32, #tpu.memory_space<vmem>>, vector<1x1x64xf32>
    %736 = vector.shape_cast %735 : vector<1x1x64xf32> to vector<1x64xf32>
    %737 = vector.broadcast %736 : vector<1x64xf32> to vector<8x64xf32>
    %738 = arith.addf %734, %737 : vector<8x64xf32>
    %c0_492 = arith.constant 0 : index
    %c0_493 = arith.constant 0 : index
    %c0_494 = arith.constant 0 : index
    %739 = vector.load %arg16[%c0_492, %c0_493, %c0_494] : memref<3x64x64xf32, #tpu.memory_space<vmem>>, vector<1x64x64xf32>
    %740 = vector.shape_cast %739 : vector<1x64x64xf32> to vector<64x64xf32>
    %cst_495 = arith.constant dense<0.000000e+00> : vector<8x64xf32>
    %741 = tpu.matmul %665, %740, %cst_495 {dimension_numbers = #tpu.dot_dimension_numbers<[1], [0], [0], [1], [0, 0, 1, 1], [], []>} : vector<8x64xf32>, vector<64x64xf32>, vector<8x64xf32> -> vector<8x64xf32>
    %c0_496 = arith.constant 0 : index
    %c0_497 = arith.constant 0 : index
    %c0_498 = arith.constant 0 : index
    %742 = vector.load %arg17[%c0_496, %c0_497, %c0_498] : memref<3x1x64xf32, #tpu.memory_space<vmem>>, vector<1x1x64xf32>
    %743 = vector.shape_cast %742 : vector<1x1x64xf32> to vector<1x64xf32>
    %744 = vector.broadcast %743 : vector<1x64xf32> to vector<8x64xf32>
    %745 = arith.addf %741, %744 : vector<8x64xf32>
    %c1_499 = arith.constant 1 : index
    %c0_500 = arith.constant 0 : index
    %c0_501 = arith.constant 0 : index
    %746 = vector.load %arg16[%c1_499, %c0_500, %c0_501] : memref<3x64x64xf32, #tpu.memory_space<vmem>>, vector<1x64x64xf32>
    %747 = vector.shape_cast %746 : vector<1x64x64xf32> to vector<64x64xf32>
    %cst_502 = arith.constant dense<0.000000e+00> : vector<8x64xf32>
    %748 = tpu.matmul %665, %747, %cst_502 {dimension_numbers = #tpu.dot_dimension_numbers<[1], [0], [0], [1], [0, 0, 1, 1], [], []>} : vector<8x64xf32>, vector<64x64xf32>, vector<8x64xf32> -> vector<8x64xf32>
    %c1_503 = arith.constant 1 : index
    %c0_504 = arith.constant 0 : index
    %c0_505 = arith.constant 0 : index
    %749 = vector.load %arg17[%c1_503, %c0_504, %c0_505] : memref<3x1x64xf32, #tpu.memory_space<vmem>>, vector<1x1x64xf32>
    %750 = vector.shape_cast %749 : vector<1x1x64xf32> to vector<1x64xf32>
    %751 = vector.broadcast %750 : vector<1x64xf32> to vector<8x64xf32>
    %752 = arith.addf %748, %751 : vector<8x64xf32>
    %c2_506 = arith.constant 2 : index
    %c0_507 = arith.constant 0 : index
    %c0_508 = arith.constant 0 : index
    %753 = vector.load %arg16[%c2_506, %c0_507, %c0_508] : memref<3x64x64xf32, #tpu.memory_space<vmem>>, vector<1x64x64xf32>
    %754 = vector.shape_cast %753 : vector<1x64x64xf32> to vector<64x64xf32>
    %cst_509 = arith.constant dense<0.000000e+00> : vector<8x64xf32>
    %755 = tpu.matmul %665, %754, %cst_509 {dimension_numbers = #tpu.dot_dimension_numbers<[1], [0], [0], [1], [0, 0, 1, 1], [], []>} : vector<8x64xf32>, vector<64x64xf32>, vector<8x64xf32> -> vector<8x64xf32>
    %c2_510 = arith.constant 2 : index
    %c0_511 = arith.constant 0 : index
    %c0_512 = arith.constant 0 : index
    %756 = vector.load %arg17[%c2_510, %c0_511, %c0_512] : memref<3x1x64xf32, #tpu.memory_space<vmem>>, vector<1x1x64xf32>
    %757 = vector.shape_cast %756 : vector<1x1x64xf32> to vector<1x64xf32>
    %758 = vector.broadcast %757 : vector<1x64xf32> to vector<8x64xf32>
    %759 = arith.addf %755, %758 : vector<8x64xf32>
    %760 = arith.addf %724, %745 : vector<8x64xf32>
    %761 = arith.negf %760 : vector<8x64xf32>
    %762 = math.exp %761 : vector<8x64xf32>
    %cst_513 = arith.constant 1.000000e+00 : f32
    %763 = vector.broadcast %cst_513 : f32 to vector<8x64xf32>
    %764 = arith.addf %763, %762 : vector<8x64xf32>
    %765 = arith.divf %763, %764 : vector<8x64xf32>
    %766 = arith.addf %731, %752 : vector<8x64xf32>
    %767 = arith.negf %766 : vector<8x64xf32>
    %768 = math.exp %767 : vector<8x64xf32>
    %cst_514 = arith.constant 1.000000e+00 : f32
    %769 = vector.broadcast %cst_514 : f32 to vector<8x64xf32>
    %770 = arith.addf %769, %768 : vector<8x64xf32>
    %771 = arith.divf %769, %770 : vector<8x64xf32>
    %772 = arith.mulf %765, %759 : vector<8x64xf32>
    %773 = arith.addf %738, %772 : vector<8x64xf32>
    %774 = math.tanh %773 : vector<8x64xf32>
    %cst_515 = arith.constant 1.000000e+00 : f32
    %775 = vector.broadcast %cst_515 : f32 to vector<8x64xf32>
    %776 = arith.subf %775, %771 : vector<8x64xf32>
    %777 = arith.mulf %776, %774 : vector<8x64xf32>
    %778 = arith.mulf %771, %665 : vector<8x64xf32>
    %779 = arith.addf %777, %778 : vector<8x64xf32>
    %c6_i32 = arith.constant 6 : i32
    %c8_i32_516 = arith.constant 8 : i32
    %780 = arith.muli %c6_i32, %c8_i32_516 : i32
    %781 = tpu.assume_multiple %780, 8 : i32
    %c0_517 = arith.constant 0 : index
    %782 = arith.index_cast %781 : i32 to index
    %c0_518 = arith.constant 0 : index
    %783 = vector.load %arg19[%c0_517, %782, %c0_518] : memref<3x64x64xf32, #tpu.memory_space<vmem>>, vector<1x8x64xf32>
    %784 = vector.shape_cast %783 : vector<1x8x64xf32> to vector<8x64xf32>
    %c1_519 = arith.constant 1 : index
    %785 = arith.index_cast %781 : i32 to index
    %c0_520 = arith.constant 0 : index
    %786 = vector.load %arg19[%c1_519, %785, %c0_520] : memref<3x64x64xf32, #tpu.memory_space<vmem>>, vector<1x8x64xf32>
    %787 = vector.shape_cast %786 : vector<1x8x64xf32> to vector<8x64xf32>
    %c2_521 = arith.constant 2 : index
    %788 = arith.index_cast %781 : i32 to index
    %c0_522 = arith.constant 0 : index
    %789 = vector.load %arg19[%c2_521, %788, %c0_522] : memref<3x64x64xf32, #tpu.memory_space<vmem>>, vector<1x8x64xf32>
    %790 = vector.shape_cast %789 : vector<1x8x64xf32> to vector<8x64xf32>
    %c0_523 = arith.constant 0 : index
    %c0_524 = arith.constant 0 : index
    %c0_525 = arith.constant 0 : index
    %791 = vector.load %arg12[%c0_523, %c0_524, %c0_525] : memref<3x64x64xf32, #tpu.memory_space<vmem>>, vector<1x64x64xf32>
    %792 = vector.shape_cast %791 : vector<1x64x64xf32> to vector<64x64xf32>
    %cst_526 = arith.constant dense<0.000000e+00> : vector<8x64xf32>
    %793 = tpu.matmul %717, %792, %cst_526 {dimension_numbers = #tpu.dot_dimension_numbers<[1], [0], [0], [1], [0, 0, 1, 1], [], []>} : vector<8x64xf32>, vector<64x64xf32>, vector<8x64xf32> -> vector<8x64xf32>
    %c0_527 = arith.constant 0 : index
    %c0_528 = arith.constant 0 : index
    %c0_529 = arith.constant 0 : index
    %794 = vector.load %arg13[%c0_527, %c0_528, %c0_529] : memref<3x1x64xf32, #tpu.memory_space<vmem>>, vector<1x1x64xf32>
    %795 = vector.shape_cast %794 : vector<1x1x64xf32> to vector<1x64xf32>
    %796 = vector.broadcast %795 : vector<1x64xf32> to vector<8x64xf32>
    %797 = arith.addf %793, %796 : vector<8x64xf32>
    %c1_530 = arith.constant 1 : index
    %c0_531 = arith.constant 0 : index
    %c0_532 = arith.constant 0 : index
    %798 = vector.load %arg12[%c1_530, %c0_531, %c0_532] : memref<3x64x64xf32, #tpu.memory_space<vmem>>, vector<1x64x64xf32>
    %799 = vector.shape_cast %798 : vector<1x64x64xf32> to vector<64x64xf32>
    %cst_533 = arith.constant dense<0.000000e+00> : vector<8x64xf32>
    %800 = tpu.matmul %717, %799, %cst_533 {dimension_numbers = #tpu.dot_dimension_numbers<[1], [0], [0], [1], [0, 0, 1, 1], [], []>} : vector<8x64xf32>, vector<64x64xf32>, vector<8x64xf32> -> vector<8x64xf32>
    %c1_534 = arith.constant 1 : index
    %c0_535 = arith.constant 0 : index
    %c0_536 = arith.constant 0 : index
    %801 = vector.load %arg13[%c1_534, %c0_535, %c0_536] : memref<3x1x64xf32, #tpu.memory_space<vmem>>, vector<1x1x64xf32>
    %802 = vector.shape_cast %801 : vector<1x1x64xf32> to vector<1x64xf32>
    %803 = vector.broadcast %802 : vector<1x64xf32> to vector<8x64xf32>
    %804 = arith.addf %800, %803 : vector<8x64xf32>
    %c2_537 = arith.constant 2 : index
    %c0_538 = arith.constant 0 : index
    %c0_539 = arith.constant 0 : index
    %805 = vector.load %arg12[%c2_537, %c0_538, %c0_539] : memref<3x64x64xf32, #tpu.memory_space<vmem>>, vector<1x64x64xf32>
    %806 = vector.shape_cast %805 : vector<1x64x64xf32> to vector<64x64xf32>
    %cst_540 = arith.constant dense<0.000000e+00> : vector<8x64xf32>
    %807 = tpu.matmul %717, %806, %cst_540 {dimension_numbers = #tpu.dot_dimension_numbers<[1], [0], [0], [1], [0, 0, 1, 1], [], []>} : vector<8x64xf32>, vector<64x64xf32>, vector<8x64xf32> -> vector<8x64xf32>
    %c2_541 = arith.constant 2 : index
    %c0_542 = arith.constant 0 : index
    %c0_543 = arith.constant 0 : index
    %808 = vector.load %arg13[%c2_541, %c0_542, %c0_543] : memref<3x1x64xf32, #tpu.memory_space<vmem>>, vector<1x1x64xf32>
    %809 = vector.shape_cast %808 : vector<1x1x64xf32> to vector<1x64xf32>
    %810 = vector.broadcast %809 : vector<1x64xf32> to vector<8x64xf32>
    %811 = arith.addf %807, %810 : vector<8x64xf32>
    %812 = arith.addf %784, %797 : vector<8x64xf32>
    %813 = arith.negf %812 : vector<8x64xf32>
    %814 = math.exp %813 : vector<8x64xf32>
    %cst_544 = arith.constant 1.000000e+00 : f32
    %815 = vector.broadcast %cst_544 : f32 to vector<8x64xf32>
    %816 = arith.addf %815, %814 : vector<8x64xf32>
    %817 = arith.divf %815, %816 : vector<8x64xf32>
    %818 = arith.addf %787, %804 : vector<8x64xf32>
    %819 = arith.negf %818 : vector<8x64xf32>
    %820 = math.exp %819 : vector<8x64xf32>
    %cst_545 = arith.constant 1.000000e+00 : f32
    %821 = vector.broadcast %cst_545 : f32 to vector<8x64xf32>
    %822 = arith.addf %821, %820 : vector<8x64xf32>
    %823 = arith.divf %821, %822 : vector<8x64xf32>
    %824 = arith.mulf %817, %811 : vector<8x64xf32>
    %825 = arith.addf %790, %824 : vector<8x64xf32>
    %826 = math.tanh %825 : vector<8x64xf32>
    %cst_546 = arith.constant 1.000000e+00 : f32
    %827 = vector.broadcast %cst_546 : f32 to vector<8x64xf32>
    %828 = arith.subf %827, %823 : vector<8x64xf32>
    %829 = arith.mulf %828, %826 : vector<8x64xf32>
    %830 = arith.mulf %823, %717 : vector<8x64xf32>
    %831 = arith.addf %829, %830 : vector<8x64xf32>
    %c0_547 = arith.constant 0 : index
    %c0_548 = arith.constant 0 : index
    %c0_549 = arith.constant 0 : index
    %832 = vector.load %arg14[%c0_547, %c0_548, %c0_549] : memref<3x64x64xf32, #tpu.memory_space<vmem>>, vector<1x64x64xf32>
    %833 = vector.shape_cast %832 : vector<1x64x64xf32> to vector<64x64xf32>
    %cst_550 = arith.constant dense<0.000000e+00> : vector<8x64xf32>
    %834 = tpu.matmul %831, %833, %cst_550 {dimension_numbers = #tpu.dot_dimension_numbers<[1], [0], [0], [1], [0, 0, 1, 1], [], []>} : vector<8x64xf32>, vector<64x64xf32>, vector<8x64xf32> -> vector<8x64xf32>
    %c0_551 = arith.constant 0 : index
    %c0_552 = arith.constant 0 : index
    %c0_553 = arith.constant 0 : index
    %835 = vector.load %arg15[%c0_551, %c0_552, %c0_553] : memref<3x1x64xf32, #tpu.memory_space<vmem>>, vector<1x1x64xf32>
    %836 = vector.shape_cast %835 : vector<1x1x64xf32> to vector<1x64xf32>
    %837 = vector.broadcast %836 : vector<1x64xf32> to vector<8x64xf32>
    %838 = arith.addf %834, %837 : vector<8x64xf32>
    %c1_554 = arith.constant 1 : index
    %c0_555 = arith.constant 0 : index
    %c0_556 = arith.constant 0 : index
    %839 = vector.load %arg14[%c1_554, %c0_555, %c0_556] : memref<3x64x64xf32, #tpu.memory_space<vmem>>, vector<1x64x64xf32>
    %840 = vector.shape_cast %839 : vector<1x64x64xf32> to vector<64x64xf32>
    %cst_557 = arith.constant dense<0.000000e+00> : vector<8x64xf32>
    %841 = tpu.matmul %831, %840, %cst_557 {dimension_numbers = #tpu.dot_dimension_numbers<[1], [0], [0], [1], [0, 0, 1, 1], [], []>} : vector<8x64xf32>, vector<64x64xf32>, vector<8x64xf32> -> vector<8x64xf32>
    %c1_558 = arith.constant 1 : index
    %c0_559 = arith.constant 0 : index
    %c0_560 = arith.constant 0 : index
    %842 = vector.load %arg15[%c1_558, %c0_559, %c0_560] : memref<3x1x64xf32, #tpu.memory_space<vmem>>, vector<1x1x64xf32>
    %843 = vector.shape_cast %842 : vector<1x1x64xf32> to vector<1x64xf32>
    %844 = vector.broadcast %843 : vector<1x64xf32> to vector<8x64xf32>
    %845 = arith.addf %841, %844 : vector<8x64xf32>
    %c2_561 = arith.constant 2 : index
    %c0_562 = arith.constant 0 : index
    %c0_563 = arith.constant 0 : index
    %846 = vector.load %arg14[%c2_561, %c0_562, %c0_563] : memref<3x64x64xf32, #tpu.memory_space<vmem>>, vector<1x64x64xf32>
    %847 = vector.shape_cast %846 : vector<1x64x64xf32> to vector<64x64xf32>
    %cst_564 = arith.constant dense<0.000000e+00> : vector<8x64xf32>
    %848 = tpu.matmul %831, %847, %cst_564 {dimension_numbers = #tpu.dot_dimension_numbers<[1], [0], [0], [1], [0, 0, 1, 1], [], []>} : vector<8x64xf32>, vector<64x64xf32>, vector<8x64xf32> -> vector<8x64xf32>
    %c2_565 = arith.constant 2 : index
    %c0_566 = arith.constant 0 : index
    %c0_567 = arith.constant 0 : index
    %849 = vector.load %arg15[%c2_565, %c0_566, %c0_567] : memref<3x1x64xf32, #tpu.memory_space<vmem>>, vector<1x1x64xf32>
    %850 = vector.shape_cast %849 : vector<1x1x64xf32> to vector<1x64xf32>
    %851 = vector.broadcast %850 : vector<1x64xf32> to vector<8x64xf32>
    %852 = arith.addf %848, %851 : vector<8x64xf32>
    %c0_568 = arith.constant 0 : index
    %c0_569 = arith.constant 0 : index
    %c0_570 = arith.constant 0 : index
    %853 = vector.load %arg16[%c0_568, %c0_569, %c0_570] : memref<3x64x64xf32, #tpu.memory_space<vmem>>, vector<1x64x64xf32>
    %854 = vector.shape_cast %853 : vector<1x64x64xf32> to vector<64x64xf32>
    %cst_571 = arith.constant dense<0.000000e+00> : vector<8x64xf32>
    %855 = tpu.matmul %779, %854, %cst_571 {dimension_numbers = #tpu.dot_dimension_numbers<[1], [0], [0], [1], [0, 0, 1, 1], [], []>} : vector<8x64xf32>, vector<64x64xf32>, vector<8x64xf32> -> vector<8x64xf32>
    %c0_572 = arith.constant 0 : index
    %c0_573 = arith.constant 0 : index
    %c0_574 = arith.constant 0 : index
    %856 = vector.load %arg17[%c0_572, %c0_573, %c0_574] : memref<3x1x64xf32, #tpu.memory_space<vmem>>, vector<1x1x64xf32>
    %857 = vector.shape_cast %856 : vector<1x1x64xf32> to vector<1x64xf32>
    %858 = vector.broadcast %857 : vector<1x64xf32> to vector<8x64xf32>
    %859 = arith.addf %855, %858 : vector<8x64xf32>
    %c1_575 = arith.constant 1 : index
    %c0_576 = arith.constant 0 : index
    %c0_577 = arith.constant 0 : index
    %860 = vector.load %arg16[%c1_575, %c0_576, %c0_577] : memref<3x64x64xf32, #tpu.memory_space<vmem>>, vector<1x64x64xf32>
    %861 = vector.shape_cast %860 : vector<1x64x64xf32> to vector<64x64xf32>
    %cst_578 = arith.constant dense<0.000000e+00> : vector<8x64xf32>
    %862 = tpu.matmul %779, %861, %cst_578 {dimension_numbers = #tpu.dot_dimension_numbers<[1], [0], [0], [1], [0, 0, 1, 1], [], []>} : vector<8x64xf32>, vector<64x64xf32>, vector<8x64xf32> -> vector<8x64xf32>
    %c1_579 = arith.constant 1 : index
    %c0_580 = arith.constant 0 : index
    %c0_581 = arith.constant 0 : index
    %863 = vector.load %arg17[%c1_579, %c0_580, %c0_581] : memref<3x1x64xf32, #tpu.memory_space<vmem>>, vector<1x1x64xf32>
    %864 = vector.shape_cast %863 : vector<1x1x64xf32> to vector<1x64xf32>
    %865 = vector.broadcast %864 : vector<1x64xf32> to vector<8x64xf32>
    %866 = arith.addf %862, %865 : vector<8x64xf32>
    %c2_582 = arith.constant 2 : index
    %c0_583 = arith.constant 0 : index
    %c0_584 = arith.constant 0 : index
    %867 = vector.load %arg16[%c2_582, %c0_583, %c0_584] : memref<3x64x64xf32, #tpu.memory_space<vmem>>, vector<1x64x64xf32>
    %868 = vector.shape_cast %867 : vector<1x64x64xf32> to vector<64x64xf32>
    %cst_585 = arith.constant dense<0.000000e+00> : vector<8x64xf32>
    %869 = tpu.matmul %779, %868, %cst_585 {dimension_numbers = #tpu.dot_dimension_numbers<[1], [0], [0], [1], [0, 0, 1, 1], [], []>} : vector<8x64xf32>, vector<64x64xf32>, vector<8x64xf32> -> vector<8x64xf32>
    %c2_586 = arith.constant 2 : index
    %c0_587 = arith.constant 0 : index
    %c0_588 = arith.constant 0 : index
    %870 = vector.load %arg17[%c2_586, %c0_587, %c0_588] : memref<3x1x64xf32, #tpu.memory_space<vmem>>, vector<1x1x64xf32>
    %871 = vector.shape_cast %870 : vector<1x1x64xf32> to vector<1x64xf32>
    %872 = vector.broadcast %871 : vector<1x64xf32> to vector<8x64xf32>
    %873 = arith.addf %869, %872 : vector<8x64xf32>
    %874 = arith.addf %838, %859 : vector<8x64xf32>
    %875 = arith.negf %874 : vector<8x64xf32>
    %876 = math.exp %875 : vector<8x64xf32>
    %cst_589 = arith.constant 1.000000e+00 : f32
    %877 = vector.broadcast %cst_589 : f32 to vector<8x64xf32>
    %878 = arith.addf %877, %876 : vector<8x64xf32>
    %879 = arith.divf %877, %878 : vector<8x64xf32>
    %880 = arith.addf %845, %866 : vector<8x64xf32>
    %881 = arith.negf %880 : vector<8x64xf32>
    %882 = math.exp %881 : vector<8x64xf32>
    %cst_590 = arith.constant 1.000000e+00 : f32
    %883 = vector.broadcast %cst_590 : f32 to vector<8x64xf32>
    %884 = arith.addf %883, %882 : vector<8x64xf32>
    %885 = arith.divf %883, %884 : vector<8x64xf32>
    %886 = arith.mulf %879, %873 : vector<8x64xf32>
    %887 = arith.addf %852, %886 : vector<8x64xf32>
    %888 = math.tanh %887 : vector<8x64xf32>
    %cst_591 = arith.constant 1.000000e+00 : f32
    %889 = vector.broadcast %cst_591 : f32 to vector<8x64xf32>
    %890 = arith.subf %889, %885 : vector<8x64xf32>
    %891 = arith.mulf %890, %888 : vector<8x64xf32>
    %892 = arith.mulf %885, %779 : vector<8x64xf32>
    %893 = arith.addf %891, %892 : vector<8x64xf32>
    %c7_i32 = arith.constant 7 : i32
    %c8_i32_592 = arith.constant 8 : i32
    %894 = arith.muli %c7_i32, %c8_i32_592 : i32
    %895 = tpu.assume_multiple %894, 8 : i32
    %c0_593 = arith.constant 0 : index
    %896 = arith.index_cast %895 : i32 to index
    %c0_594 = arith.constant 0 : index
    %897 = vector.load %arg19[%c0_593, %896, %c0_594] : memref<3x64x64xf32, #tpu.memory_space<vmem>>, vector<1x8x64xf32>
    %898 = vector.shape_cast %897 : vector<1x8x64xf32> to vector<8x64xf32>
    %c1_595 = arith.constant 1 : index
    %899 = arith.index_cast %895 : i32 to index
    %c0_596 = arith.constant 0 : index
    %900 = vector.load %arg19[%c1_595, %899, %c0_596] : memref<3x64x64xf32, #tpu.memory_space<vmem>>, vector<1x8x64xf32>
    %901 = vector.shape_cast %900 : vector<1x8x64xf32> to vector<8x64xf32>
    %c2_597 = arith.constant 2 : index
    %902 = arith.index_cast %895 : i32 to index
    %c0_598 = arith.constant 0 : index
    %903 = vector.load %arg19[%c2_597, %902, %c0_598] : memref<3x64x64xf32, #tpu.memory_space<vmem>>, vector<1x8x64xf32>
    %904 = vector.shape_cast %903 : vector<1x8x64xf32> to vector<8x64xf32>
    %c0_599 = arith.constant 0 : index
    %c0_600 = arith.constant 0 : index
    %c0_601 = arith.constant 0 : index
    %905 = vector.load %arg12[%c0_599, %c0_600, %c0_601] : memref<3x64x64xf32, #tpu.memory_space<vmem>>, vector<1x64x64xf32>
    %906 = vector.shape_cast %905 : vector<1x64x64xf32> to vector<64x64xf32>
    %cst_602 = arith.constant dense<0.000000e+00> : vector<8x64xf32>
    %907 = tpu.matmul %831, %906, %cst_602 {dimension_numbers = #tpu.dot_dimension_numbers<[1], [0], [0], [1], [0, 0, 1, 1], [], []>} : vector<8x64xf32>, vector<64x64xf32>, vector<8x64xf32> -> vector<8x64xf32>
    %c0_603 = arith.constant 0 : index
    %c0_604 = arith.constant 0 : index
    %c0_605 = arith.constant 0 : index
    %908 = vector.load %arg13[%c0_603, %c0_604, %c0_605] : memref<3x1x64xf32, #tpu.memory_space<vmem>>, vector<1x1x64xf32>
    %909 = vector.shape_cast %908 : vector<1x1x64xf32> to vector<1x64xf32>
    %910 = vector.broadcast %909 : vector<1x64xf32> to vector<8x64xf32>
    %911 = arith.addf %907, %910 : vector<8x64xf32>
    %c1_606 = arith.constant 1 : index
    %c0_607 = arith.constant 0 : index
    %c0_608 = arith.constant 0 : index
    %912 = vector.load %arg12[%c1_606, %c0_607, %c0_608] : memref<3x64x64xf32, #tpu.memory_space<vmem>>, vector<1x64x64xf32>
    %913 = vector.shape_cast %912 : vector<1x64x64xf32> to vector<64x64xf32>
    %cst_609 = arith.constant dense<0.000000e+00> : vector<8x64xf32>
    %914 = tpu.matmul %831, %913, %cst_609 {dimension_numbers = #tpu.dot_dimension_numbers<[1], [0], [0], [1], [0, 0, 1, 1], [], []>} : vector<8x64xf32>, vector<64x64xf32>, vector<8x64xf32> -> vector<8x64xf32>
    %c1_610 = arith.constant 1 : index
    %c0_611 = arith.constant 0 : index
    %c0_612 = arith.constant 0 : index
    %915 = vector.load %arg13[%c1_610, %c0_611, %c0_612] : memref<3x1x64xf32, #tpu.memory_space<vmem>>, vector<1x1x64xf32>
    %916 = vector.shape_cast %915 : vector<1x1x64xf32> to vector<1x64xf32>
    %917 = vector.broadcast %916 : vector<1x64xf32> to vector<8x64xf32>
    %918 = arith.addf %914, %917 : vector<8x64xf32>
    %c2_613 = arith.constant 2 : index
    %c0_614 = arith.constant 0 : index
    %c0_615 = arith.constant 0 : index
    %919 = vector.load %arg12[%c2_613, %c0_614, %c0_615] : memref<3x64x64xf32, #tpu.memory_space<vmem>>, vector<1x64x64xf32>
    %920 = vector.shape_cast %919 : vector<1x64x64xf32> to vector<64x64xf32>
    %cst_616 = arith.constant dense<0.000000e+00> : vector<8x64xf32>
    %921 = tpu.matmul %831, %920, %cst_616 {dimension_numbers = #tpu.dot_dimension_numbers<[1], [0], [0], [1], [0, 0, 1, 1], [], []>} : vector<8x64xf32>, vector<64x64xf32>, vector<8x64xf32> -> vector<8x64xf32>
    %c2_617 = arith.constant 2 : index
    %c0_618 = arith.constant 0 : index
    %c0_619 = arith.constant 0 : index
    %922 = vector.load %arg13[%c2_617, %c0_618, %c0_619] : memref<3x1x64xf32, #tpu.memory_space<vmem>>, vector<1x1x64xf32>
    %923 = vector.shape_cast %922 : vector<1x1x64xf32> to vector<1x64xf32>
    %924 = vector.broadcast %923 : vector<1x64xf32> to vector<8x64xf32>
    %925 = arith.addf %921, %924 : vector<8x64xf32>
    %926 = arith.addf %898, %911 : vector<8x64xf32>
    %927 = arith.negf %926 : vector<8x64xf32>
    %928 = math.exp %927 : vector<8x64xf32>
    %cst_620 = arith.constant 1.000000e+00 : f32
    %929 = vector.broadcast %cst_620 : f32 to vector<8x64xf32>
    %930 = arith.addf %929, %928 : vector<8x64xf32>
    %931 = arith.divf %929, %930 : vector<8x64xf32>
    %932 = arith.addf %901, %918 : vector<8x64xf32>
    %933 = arith.negf %932 : vector<8x64xf32>
    %934 = math.exp %933 : vector<8x64xf32>
    %cst_621 = arith.constant 1.000000e+00 : f32
    %935 = vector.broadcast %cst_621 : f32 to vector<8x64xf32>
    %936 = arith.addf %935, %934 : vector<8x64xf32>
    %937 = arith.divf %935, %936 : vector<8x64xf32>
    %938 = arith.mulf %931, %925 : vector<8x64xf32>
    %939 = arith.addf %904, %938 : vector<8x64xf32>
    %940 = math.tanh %939 : vector<8x64xf32>
    %cst_622 = arith.constant 1.000000e+00 : f32
    %941 = vector.broadcast %cst_622 : f32 to vector<8x64xf32>
    %942 = arith.subf %941, %937 : vector<8x64xf32>
    %943 = arith.mulf %942, %940 : vector<8x64xf32>
    %944 = arith.mulf %937, %831 : vector<8x64xf32>
    %945 = arith.addf %943, %944 : vector<8x64xf32>
    %c0_623 = arith.constant 0 : index
    %c0_624 = arith.constant 0 : index
    %c0_625 = arith.constant 0 : index
    %946 = vector.load %arg14[%c0_623, %c0_624, %c0_625] : memref<3x64x64xf32, #tpu.memory_space<vmem>>, vector<1x64x64xf32>
    %947 = vector.shape_cast %946 : vector<1x64x64xf32> to vector<64x64xf32>
    %cst_626 = arith.constant dense<0.000000e+00> : vector<8x64xf32>
    %948 = tpu.matmul %945, %947, %cst_626 {dimension_numbers = #tpu.dot_dimension_numbers<[1], [0], [0], [1], [0, 0, 1, 1], [], []>} : vector<8x64xf32>, vector<64x64xf32>, vector<8x64xf32> -> vector<8x64xf32>
    %c0_627 = arith.constant 0 : index
    %c0_628 = arith.constant 0 : index
    %c0_629 = arith.constant 0 : index
    %949 = vector.load %arg15[%c0_627, %c0_628, %c0_629] : memref<3x1x64xf32, #tpu.memory_space<vmem>>, vector<1x1x64xf32>
    %950 = vector.shape_cast %949 : vector<1x1x64xf32> to vector<1x64xf32>
    %951 = vector.broadcast %950 : vector<1x64xf32> to vector<8x64xf32>
    %952 = arith.addf %948, %951 : vector<8x64xf32>
    %c1_630 = arith.constant 1 : index
    %c0_631 = arith.constant 0 : index
    %c0_632 = arith.constant 0 : index
    %953 = vector.load %arg14[%c1_630, %c0_631, %c0_632] : memref<3x64x64xf32, #tpu.memory_space<vmem>>, vector<1x64x64xf32>
    %954 = vector.shape_cast %953 : vector<1x64x64xf32> to vector<64x64xf32>
    %cst_633 = arith.constant dense<0.000000e+00> : vector<8x64xf32>
    %955 = tpu.matmul %945, %954, %cst_633 {dimension_numbers = #tpu.dot_dimension_numbers<[1], [0], [0], [1], [0, 0, 1, 1], [], []>} : vector<8x64xf32>, vector<64x64xf32>, vector<8x64xf32> -> vector<8x64xf32>
    %c1_634 = arith.constant 1 : index
    %c0_635 = arith.constant 0 : index
    %c0_636 = arith.constant 0 : index
    %956 = vector.load %arg15[%c1_634, %c0_635, %c0_636] : memref<3x1x64xf32, #tpu.memory_space<vmem>>, vector<1x1x64xf32>
    %957 = vector.shape_cast %956 : vector<1x1x64xf32> to vector<1x64xf32>
    %958 = vector.broadcast %957 : vector<1x64xf32> to vector<8x64xf32>
    %959 = arith.addf %955, %958 : vector<8x64xf32>
    %c2_637 = arith.constant 2 : index
    %c0_638 = arith.constant 0 : index
    %c0_639 = arith.constant 0 : index
    %960 = vector.load %arg14[%c2_637, %c0_638, %c0_639] : memref<3x64x64xf32, #tpu.memory_space<vmem>>, vector<1x64x64xf32>
    %961 = vector.shape_cast %960 : vector<1x64x64xf32> to vector<64x64xf32>
    %cst_640 = arith.constant dense<0.000000e+00> : vector<8x64xf32>
    %962 = tpu.matmul %945, %961, %cst_640 {dimension_numbers = #tpu.dot_dimension_numbers<[1], [0], [0], [1], [0, 0, 1, 1], [], []>} : vector<8x64xf32>, vector<64x64xf32>, vector<8x64xf32> -> vector<8x64xf32>
    %c2_641 = arith.constant 2 : index
    %c0_642 = arith.constant 0 : index
    %c0_643 = arith.constant 0 : index
    %963 = vector.load %arg15[%c2_641, %c0_642, %c0_643] : memref<3x1x64xf32, #tpu.memory_space<vmem>>, vector<1x1x64xf32>
    %964 = vector.shape_cast %963 : vector<1x1x64xf32> to vector<1x64xf32>
    %965 = vector.broadcast %964 : vector<1x64xf32> to vector<8x64xf32>
    %966 = arith.addf %962, %965 : vector<8x64xf32>
    %c0_644 = arith.constant 0 : index
    %c0_645 = arith.constant 0 : index
    %c0_646 = arith.constant 0 : index
    %967 = vector.load %arg16[%c0_644, %c0_645, %c0_646] : memref<3x64x64xf32, #tpu.memory_space<vmem>>, vector<1x64x64xf32>
    %968 = vector.shape_cast %967 : vector<1x64x64xf32> to vector<64x64xf32>
    %cst_647 = arith.constant dense<0.000000e+00> : vector<8x64xf32>
    %969 = tpu.matmul %893, %968, %cst_647 {dimension_numbers = #tpu.dot_dimension_numbers<[1], [0], [0], [1], [0, 0, 1, 1], [], []>} : vector<8x64xf32>, vector<64x64xf32>, vector<8x64xf32> -> vector<8x64xf32>
    %c0_648 = arith.constant 0 : index
    %c0_649 = arith.constant 0 : index
    %c0_650 = arith.constant 0 : index
    %970 = vector.load %arg17[%c0_648, %c0_649, %c0_650] : memref<3x1x64xf32, #tpu.memory_space<vmem>>, vector<1x1x64xf32>
    %971 = vector.shape_cast %970 : vector<1x1x64xf32> to vector<1x64xf32>
    %972 = vector.broadcast %971 : vector<1x64xf32> to vector<8x64xf32>
    %973 = arith.addf %969, %972 : vector<8x64xf32>
    %c1_651 = arith.constant 1 : index
    %c0_652 = arith.constant 0 : index
    %c0_653 = arith.constant 0 : index
    %974 = vector.load %arg16[%c1_651, %c0_652, %c0_653] : memref<3x64x64xf32, #tpu.memory_space<vmem>>, vector<1x64x64xf32>
    %975 = vector.shape_cast %974 : vector<1x64x64xf32> to vector<64x64xf32>
    %cst_654 = arith.constant dense<0.000000e+00> : vector<8x64xf32>
    %976 = tpu.matmul %893, %975, %cst_654 {dimension_numbers = #tpu.dot_dimension_numbers<[1], [0], [0], [1], [0, 0, 1, 1], [], []>} : vector<8x64xf32>, vector<64x64xf32>, vector<8x64xf32> -> vector<8x64xf32>
    %c1_655 = arith.constant 1 : index
    %c0_656 = arith.constant 0 : index
    %c0_657 = arith.constant 0 : index
    %977 = vector.load %arg17[%c1_655, %c0_656, %c0_657] : memref<3x1x64xf32, #tpu.memory_space<vmem>>, vector<1x1x64xf32>
    %978 = vector.shape_cast %977 : vector<1x1x64xf32> to vector<1x64xf32>
    %979 = vector.broadcast %978 : vector<1x64xf32> to vector<8x64xf32>
    %980 = arith.addf %976, %979 : vector<8x64xf32>
    %c2_658 = arith.constant 2 : index
    %c0_659 = arith.constant 0 : index
    %c0_660 = arith.constant 0 : index
    %981 = vector.load %arg16[%c2_658, %c0_659, %c0_660] : memref<3x64x64xf32, #tpu.memory_space<vmem>>, vector<1x64x64xf32>
    %982 = vector.shape_cast %981 : vector<1x64x64xf32> to vector<64x64xf32>
    %cst_661 = arith.constant dense<0.000000e+00> : vector<8x64xf32>
    %983 = tpu.matmul %893, %982, %cst_661 {dimension_numbers = #tpu.dot_dimension_numbers<[1], [0], [0], [1], [0, 0, 1, 1], [], []>} : vector<8x64xf32>, vector<64x64xf32>, vector<8x64xf32> -> vector<8x64xf32>
    %c2_662 = arith.constant 2 : index
    %c0_663 = arith.constant 0 : index
    %c0_664 = arith.constant 0 : index
    %984 = vector.load %arg17[%c2_662, %c0_663, %c0_664] : memref<3x1x64xf32, #tpu.memory_space<vmem>>, vector<1x1x64xf32>
    %985 = vector.shape_cast %984 : vector<1x1x64xf32> to vector<1x64xf32>
    %986 = vector.broadcast %985 : vector<1x64xf32> to vector<8x64xf32>
    %987 = arith.addf %983, %986 : vector<8x64xf32>
    %988 = arith.addf %952, %973 : vector<8x64xf32>
    %989 = arith.negf %988 : vector<8x64xf32>
    %990 = math.exp %989 : vector<8x64xf32>
    %cst_665 = arith.constant 1.000000e+00 : f32
    %991 = vector.broadcast %cst_665 : f32 to vector<8x64xf32>
    %992 = arith.addf %991, %990 : vector<8x64xf32>
    %993 = arith.divf %991, %992 : vector<8x64xf32>
    %994 = arith.addf %959, %980 : vector<8x64xf32>
    %995 = arith.negf %994 : vector<8x64xf32>
    %996 = math.exp %995 : vector<8x64xf32>
    %cst_666 = arith.constant 1.000000e+00 : f32
    %997 = vector.broadcast %cst_666 : f32 to vector<8x64xf32>
    %998 = arith.addf %997, %996 : vector<8x64xf32>
    %999 = arith.divf %997, %998 : vector<8x64xf32>
    %1000 = arith.mulf %993, %987 : vector<8x64xf32>
    %1001 = arith.addf %966, %1000 : vector<8x64xf32>
    %1002 = math.tanh %1001 : vector<8x64xf32>
    %cst_667 = arith.constant 1.000000e+00 : f32
    %1003 = vector.broadcast %cst_667 : f32 to vector<8x64xf32>
    %1004 = arith.subf %1003, %999 : vector<8x64xf32>
    %1005 = arith.mulf %1004, %1002 : vector<8x64xf32>
    %1006 = arith.mulf %999, %893 : vector<8x64xf32>
    %1007 = arith.addf %1005, %1006 : vector<8x64xf32>
    %c8_i32_668 = arith.constant 8 : i32
    %c0_669 = arith.constant 0 : index
    %c0_670 = arith.constant 0 : index
    %1008 = vector.load %arg18[%c0_669, %c0_670] : memref<8x64xf32, #tpu.memory_space<vmem>>, vector<8x64xf32>
    tpu.vector_store %arg18[%c0_669, %c0_670], %1007 {strides = array<i32>} : memref<8x64xf32, #tpu.memory_space<vmem>>, vector<8x64xf32>,
    return
  }
  func.func @transform_0(%arg0: i32) -> (i32, i32, i32) {
    %c0_i32 = arith.constant 0 : i32
    %c0_i32_0 = arith.constant 0 : i32
    %c0_i32_1 = arith.constant 0 : i32
    return %c0_i32, %arg0, %c0_i32_0 : i32, i32, i32
  }
  func.func @transform_1(%arg0: i32) -> (i32, i32) {
    %c0_i32 = arith.constant 0 : i32
    %c0_i32_0 = arith.constant 0 : i32
    %c0_i32_1 = arith.constant 0 : i32
    return %c0_i32, %c0_i32_0 : i32, i32
  }
  func.func @transform_2(%arg0: i32) -> (i32, i32) {
    %c0_i32 = arith.constant 0 : i32
    %c0_i32_0 = arith.constant 0 : i32
    %c0_i32_1 = arith.constant 0 : i32
    return %c0_i32, %c0_i32_0 : i32, i32
  }
  func.func @transform_3(%arg0: i32) -> (i32, i32) {
    %c0_i32 = arith.constant 0 : i32
    %c0_i32_0 = arith.constant 0 : i32
    %c0_i32_1 = arith.constant 0 : i32
    return %c0_i32, %c0_i32_0 : i32, i32
  }
  func.func @transform_4(%arg0: i32) -> (i32, i32) {
    %c0_i32 = arith.constant 0 : i32
    %c0_i32_0 = arith.constant 0 : i32
    %c0_i32_1 = arith.constant 0 : i32
    return %c0_i32, %c0_i32_0 : i32, i32
  }
  func.func @transform_5(%arg0: i32) -> (i32, i32) {
    %c0_i32 = arith.constant 0 : i32
    %c0_i32_0 = arith.constant 0 : i32
    %c0_i32_1 = arith.constant 0 : i32
    return %c0_i32, %c0_i32_0 : i32, i32
  }
  func.func @transform_6(%arg0: i32) -> (i32, i32) {
    %c0_i32 = arith.constant 0 : i32
    %c0_i32_0 = arith.constant 0 : i32
    %c0_i32_1 = arith.constant 0 : i32
    return %c0_i32, %c0_i32_0 : i32, i32
  }
  func.func @transform_7(%arg0: i32) -> (i32, i32) {
    %c0_i32 = arith.constant 0 : i32
    %c0_i32_0 = arith.constant 0 : i32
    %c0_i32_1 = arith.constant 0 : i32
    return %c0_i32, %c0_i32_0 : i32, i32
  }
  func.func @transform_8(%arg0: i32) -> (i32, i32) {
    %c0_i32 = arith.constant 0 : i32
    %c0_i32_0 = arith.constant 0 : i32
    %c0_i32_1 = arith.constant 0 : i32
    return %c0_i32, %c0_i32_0 : i32, i32
  }
  func.func @transform_9(%arg0: i32) -> (i32, i32, i32) {
    %c0_i32 = arith.constant 0 : i32
    %c0_i32_0 = arith.constant 0 : i32
    %c0_i32_1 = arith.constant 0 : i32
    %c0_i32_2 = arith.constant 0 : i32
    return %c0_i32, %c0_i32_0, %c0_i32_1 : i32, i32, i32
  }
  func.func @transform_10(%arg0: i32) -> (i32, i32, i32) {
    %c0_i32 = arith.constant 0 : i32
    %c0_i32_0 = arith.constant 0 : i32
    %c0_i32_1 = arith.constant 0 : i32
    %c0_i32_2 = arith.constant 0 : i32
    return %c0_i32, %c0_i32_0, %c0_i32_1 : i32, i32, i32
  }
  func.func @transform_11(%arg0: i32) -> (i32, i32, i32) {
    %c0_i32 = arith.constant 0 : i32
    %c0_i32_0 = arith.constant 0 : i32
    %c0_i32_1 = arith.constant 0 : i32
    %c0_i32_2 = arith.constant 0 : i32
    return %c0_i32, %c0_i32_0, %c0_i32_1 : i32, i32, i32
  }
  func.func @transform_12(%arg0: i32) -> (i32, i32, i32) {
    %c0_i32 = arith.constant 0 : i32
    %c0_i32_0 = arith.constant 0 : i32
    %c0_i32_1 = arith.constant 0 : i32
    %c0_i32_2 = arith.constant 0 : i32
    return %c0_i32, %c0_i32_0, %c0_i32_1 : i32, i32, i32
  }
  func.func @transform_13(%arg0: i32) -> (i32, i32, i32) {
    %c0_i32 = arith.constant 0 : i32
    %c0_i32_0 = arith.constant 0 : i32
    %c0_i32_1 = arith.constant 0 : i32
    %c0_i32_2 = arith.constant 0 : i32
    return %c0_i32, %c0_i32_0, %c0_i32_1 : i32, i32, i32
  }
  func.func @transform_14(%arg0: i32) -> (i32, i32, i32) {
    %c0_i32 = arith.constant 0 : i32
    %c0_i32_0 = arith.constant 0 : i32
    %c0_i32_1 = arith.constant 0 : i32
    %c0_i32_2 = arith.constant 0 : i32
    return %c0_i32, %c0_i32_0, %c0_i32_1 : i32, i32, i32
  }
  func.func @transform_15(%arg0: i32) -> (i32, i32, i32) {
    %c0_i32 = arith.constant 0 : i32
    %c0_i32_0 = arith.constant 0 : i32
    %c0_i32_1 = arith.constant 0 : i32
    %c0_i32_2 = arith.constant 0 : i32
    return %c0_i32, %c0_i32_0, %c0_i32_1 : i32, i32, i32
  }
  func.func @transform_16(%arg0: i32) -> (i32, i32, i32) {
    %c0_i32 = arith.constant 0 : i32
    %c0_i32_0 = arith.constant 0 : i32
    %c0_i32_1 = arith.constant 0 : i32
    %c0_i32_2 = arith.constant 0 : i32
    return %c0_i32, %c0_i32_0, %c0_i32_1 : i32, i32, i32
  }
  func.func @transform_17(%arg0: i32) -> (i32, i32) {
    %c0_i32 = arith.constant 0 : i32
    %c0_i32_0 = arith.constant 0 : i32
    return %arg0, %c0_i32 : i32, i32
  }
}

</mosaic_0001>

<llo_original>
// kernel: tpu_custom_call.1
$region0: #{tpu_custom_call.1}
  #allocation0 [shape = 'u32[]', space=smem, size = 0x4, offset = 0x4, fixed_abs, tag = 'smem constant byte address 0x4 - core index']
  #allocation1 [shape = 'u32[144,128]{1,0:T(1,128)}', space=vmem, size = 0x12000, scoped, tag = 'internal scratch']
  #allocation2 [shape = 'f32[3,64,64]{2,1,0:T(8,128)}', space=vmem, size = 0x18000, scoped, tag = 'scratch operand']
  %s0 = inlined_call_operand.hbm [shape: f32[8,8,32], index: 0, kind: input, shape index: {}]
  %s1 = inlined_call_operand.hbm [shape: f32[32,64], index: 1, kind: input, shape index: {}]
  %s2 = inlined_call_operand.vmem [shape: f32[1,64], index: 2, kind: input, shape index: {}]
  %s3 = inlined_call_operand.vmem [shape: f32[1,64], index: 3, kind: input, shape index: {}]
  %s4 = inlined_call_operand.vmem [shape: f32[1,64], index: 4, kind: input, shape index: {}]
  %s5 = inlined_call_operand.hbm [shape: f32[64,64], index: 5, kind: input, shape index: {}]
  %s6 = inlined_call_operand.vmem [shape: f32[1,64], index: 6, kind: input, shape index: {}]
  %s7 = inlined_call_operand.vmem [shape: f32[1,64], index: 7, kind: input, shape index: {}]
  %s8 = inlined_call_operand.vmem [shape: f32[1,64], index: 8, kind: input, shape index: {}]
  %s9 = inlined_call_operand.hbm [shape: f32[3,64,64], index: 9, kind: input, shape index: {}]
  %s10 = inlined_call_operand.vmem [shape: f32[3,1,64], index: 10, kind: input, shape index: {}]
  %s11 = inlined_call_operand.hbm [shape: f32[3,64,64], index: 11, kind: input, shape index: {}]
  %s12 = inlined_call_operand.vmem [shape: f32[3,1,64], index: 12, kind: input, shape index: {}]
  %s13 = inlined_call_operand.hbm [shape: f32[3,64,64], index: 13, kind: input, shape index: {}]
  %s14 = inlined_call_operand.vmem [shape: f32[3,1,64], index: 14, kind: input, shape index: {}]
  %s15 = inlined_call_operand.hbm [shape: f32[3,64,64], index: 15, kind: input, shape index: {}]
  %s16 = inlined_call_operand.vmem [shape: f32[3,1,64], index: 16, kind: input, shape index: {}]
  %s17 = inlined_call_operand.hbm [shape: f32[8,64], index: 17, kind: output, shape index: {}]
  %s18 = sld [smem:[#allocation0]]
  $region106: #{tpu_custom_call.1} parent=0
    _
  %s20 = ssub.s32 1, %s18
  %s21 = scalar_select 0, %s20, %s18
  $region1: #{tpu_custom_call.1} parent=0
    #allocation3 [shape = 'u8[32768]{0}', space=vmem, size = 0x8000, scoped, tag = 'input window, operand 0, single buffered']
    #allocation4 [shape = 's32[1]{0}', space=sflag, size = 0x4, scoped, tag = 'scoped memory for tpu_custom_call.1']
    #allocation5 [shape = 's32[1]{0}', space=sflag, size = 0x4, scoped, tag = 'scoped memory for tpu_custom_call.1']
    #allocation6 [shape = 'u8[16384]{0}', space=vmem, size = 0x4000, scoped, tag = 'input window, operand 1, single buffered']
    #allocation7 [shape = 's32[1]{0}', space=sflag, size = 0x4, scoped, tag = 'scoped memory for tpu_custom_call.1']
    #allocation8 [shape = 'u8[32768]{0}', space=vmem, size = 0x8000, scoped, tag = 'input window, operand 5, single buffered']
    #allocation9 [shape = 'u8[98304]{0}', space=vmem, size = 0x18000, scoped, tag = 'input window, operand 9, single buffered']
    #allocation10 [shape = 's32[1]{0}', space=sflag, size = 0x4, scoped, tag = 'scoped memory for tpu_custom_call.1']
    #allocation11 [shape = 'u8[98304]{0}', space=vmem, size = 0x18000, scoped, tag = 'input window, operand 11, single buffered']
    #allocation12 [shape = 'u8[98304]{0}', space=vmem, size = 0x18000, scoped, tag = 'input window, operand 13, single buffered']
    #allocation13 [shape = 's32[1]{0}', space=sflag, size = 0x4, scoped, tag = 'scoped memory for tpu_custom_call.1']
    #allocation14 [shape = 'u8[98304]{0}', space=vmem, size = 0x18000, scoped, tag = 'input window, operand 15, single buffered']
    #allocation15 [shape = 'u8[4096]{0}', space=vmem, size = 0x1000, scoped, tag = 'output window, operand 0, single buffered']
    %22 = vsyncpa [#allocation4], 0
    %23 = vsyncpa [#allocation7], 0
    %24 = vsyncpa [#allocation10], 0
    %25 = vsyncpa [#allocation13], 0
    %26 = vsyncpa [#allocation5], 0
    // Predicated region
    $region2: #{tpu_custom_call.1} parent=1 // pred_check
      _
    $region3: #{tpu_custom_call.1} parent=1 // pred_check_branch
      %28 = sbr.rel (0) target = $region5
    $region4: #{tpu_custom_call.1} parent=1 // pred_region
      %s30 = ssub.s32 1024, 1024
      %31 = vsyncadd [#allocation4], %s30
      %s32 = sshll.u32 [#allocation3], 4
      %s33 = int_to_ptr.vmem [resolvable:$true] %s32
      %38 = dma.hbm_to_vmem [thread:$0]  %s0, 1024, %s33, [#allocation4], 128, 128, 8
    $region5: #{tpu_custom_call.1} parent=1 // pred_fallthru
      _
    // Predicated region
    $region6: #{tpu_custom_call.1} parent=1 // pred_check
      _
    $region7: #{tpu_custom_call.1} parent=1 // pred_check_branch
      %40 = sbr.rel (0) target = $region9
    $region8: #{tpu_custom_call.1} parent=1 // pred_region
      %s42 = ssub.s32 512, 512
      %43 = vsyncadd [#allocation7], %s42
      %s44 = sshll.u32 [#allocation6], 4
      %s45 = int_to_ptr.vmem [resolvable:$true] %s44
      %50 = dma.hbm_to_vmem [thread:$0]  %s1, 512, %s45, [#allocation7], 128, 128, 8
    $region9: #{tpu_custom_call.1} parent=1 // pred_fallthru
      _
    // Predicated region
    $region10: #{tpu_custom_call.1} parent=1 // pred_check
      _
    $region11: #{tpu_custom_call.1} parent=1 // pred_check_branch
      %52 = sbr.rel (0) target = $region13
    $region12: #{tpu_custom_call.1} parent=1 // pred_region
      _
    $region13: #{tpu_custom_call.1} parent=1 // pred_fallthru
      _
    // Predicated region
    $region14: #{tpu_custom_call.1} parent=1 // pred_check
      _
    $region15: #{tpu_custom_call.1} parent=1 // pred_check_branch
      %54 = sbr.rel (0) target = $region17
    $region16: #{tpu_custom_call.1} parent=1 // pred_region
      _
    $region17: #{tpu_custom_call.1} parent=1 // pred_fallthru
      _
    // Predicated region
    $region18: #{tpu_custom_call.1} parent=1 // pred_check
      _
    $region19: #{tpu_custom_call.1} parent=1 // pred_check_branch
      %56 = sbr.rel (0) target = $region21
    $region20: #{tpu_custom_call.1} parent=1 // pred_region
      _
    $region21: #{tpu_custom_call.1} parent=1 // pred_fallthru
      _
    // Predicated region
    $region22: #{tpu_custom_call.1} parent=1 // pred_check
      _
    $region23: #{tpu_custom_call.1} parent=1 // pred_check_branch
      %58 = sbr.rel (0) target = $region25
    $region24: #{tpu_custom_call.1} parent=1 // pred_region
      %s60 = ssub.s32 1024, 1024
      %61 = vsyncadd [#allocation7], %s60
      %s62 = sshll.u32 [#allocation8], 4
      %s63 = int_to_ptr.vmem [resolvable:$true] %s62
      %68 = dma.hbm_to_vmem [thread:$0]  %s5, 1024, %s63, [#allocation7], 128, 128, 8
    $region25: #{tpu_custom_call.1} parent=1 // pred_fallthru
      _
    // Predicated region
    $region26: #{tpu_custom_call.1} parent=1 // pred_check
      _
    $region27: #{tpu_custom_call.1} parent=1 // pred_check_branch
      %70 = sbr.rel (0) target = $region29
    $region28: #{tpu_custom_call.1} parent=1 // pred_region
      _
    $region29: #{tpu_custom_call.1} parent=1 // pred_fallthru
      _
    // Predicated region
    $region30: #{tpu_custom_call.1} parent=1 // pred_check
      _
    $region31: #{tpu_custom_call.1} parent=1 // pred_check_branch
      %72 = sbr.rel (0) target = $region33
    $region32: #{tpu_custom_call.1} parent=1 // pred_region
      _
    $region33: #{tpu_custom_call.1} parent=1 // pred_fallthru
      _
    // Predicated region
    $region34: #{tpu_custom_call.1} parent=1 // pred_check
      _
    $region35: #{tpu_custom_call.1} parent=1 // pred_check_branch
      %74 = sbr.rel (0) target = $region37
    $region36: #{tpu_custom_call.1} parent=1 // pred_region
      _
    $region37: #{tpu_custom_call.1} parent=1 // pred_fallthru
      _
    // Predicated region
    $region38: #{tpu_custom_call.1} parent=1 // pred_check
      _
    $region39: #{tpu_custom_call.1} parent=1 // pred_check_branch
      %76 = sbr.rel (0) target = $region41
    $region40: #{tpu_custom_call.1} parent=1 // pred_region
      %s78 = ssub.s32 3072, 3072
      %79 = vsyncadd [#allocation10], %s78
      %s80 = sshll.u32 [#allocation9], 4
      %s81 = int_to_ptr.vmem [resolvable:$true] %s80
      %86 = dma.hbm_to_vmem [thread:$0]  %s9, 3072, %s81, [#allocation10], 128, 128, 8
    $region41: #{tpu_custom_call.1} parent=1 // pred_fallthru
      _
    // Predicated region
    $region42: #{tpu_custom_call.1} parent=1 // pred_check
      _
    $region43: #{tpu_custom_call.1} parent=1 // pred_check_branch
      %88 = sbr.rel (0) target = $region45
    $region44: #{tpu_custom_call.1} parent=1 // pred_region
      _
    $region45: #{tpu_custom_call.1} parent=1 // pred_fallthru
      _
    // Predicated region
    $region46: #{tpu_custom_call.1} parent=1 // pred_check
      _
    $region47: #{tpu_custom_call.1} parent=1 // pred_check_branch
      %90 = sbr.rel (0) target = $region49
    $region48: #{tpu_custom_call.1} parent=1 // pred_region
      %s92 = ssub.s32 3072, 3072
      %93 = vsyncadd [#allocation10], %s92
      %s94 = sshll.u32 [#allocation11], 4
      %s95 = int_to_ptr.vmem [resolvable:$true] %s94
      %100 = dma.hbm_to_vmem [thread:$0]  %s11, 3072, %s95, [#allocation10], 128, 128, 8
    $region49: #{tpu_custom_call.1} parent=1 // pred_fallthru
      _
    // Predicated region
    $region50: #{tpu_custom_call.1} parent=1 // pred_check
      _
    $region51: #{tpu_custom_call.1} parent=1 // pred_check_branch
      %102 = sbr.rel (0) target = $region53
    $region52: #{tpu_custom_call.1} parent=1 // pred_region
      _
    $region53: #{tpu_custom_call.1} parent=1 // pred_fallthru
      _
    // Predicated region
    $region54: #{tpu_custom_call.1} parent=1 // pred_check
      _
    $region55: #{tpu_custom_call.1} parent=1 // pred_check_branch
      %104 = sbr.rel (0) target = $region57
    $region56: #{tpu_custom_call.1} parent=1 // pred_region
      %s106 = ssub.s32 3072, 3072
      %107 = vsyncadd [#allocation13], %s106
      %s108 = sshll.u32 [#allocation12], 4
      %s109 = int_to_ptr.vmem [resolvable:$true] %s108
      %114 = dma.hbm_to_vmem [thread:$0]  %s13, 3072, %s109, [#allocation13], 128, 128, 8
    $region57: #{tpu_custom_call.1} parent=1 // pred_fallthru
      _
    // Predicated region
    $region58: #{tpu_custom_call.1} parent=1 // pred_check
      _
    $region59: #{tpu_custom_call.1} parent=1 // pred_check_branch
      %116 = sbr.rel (0) target = $region61
    $region60: #{tpu_custom_call.1} parent=1 // pred_region
      _
    $region61: #{tpu_custom_call.1} parent=1 // pred_fallthru
      _
    // Predicated region
    $region62: #{tpu_custom_call.1} parent=1 // pred_check
      _
    $region63: #{tpu_custom_call.1} parent=1 // pred_check_branch
      %118 = sbr.rel (0) target = $region65
    $region64: #{tpu_custom_call.1} parent=1 // pred_region
      %s120 = ssub.s32 3072, 3072
      %121 = vsyncadd [#allocation13], %s120
      %s122 = sshll.u32 [#allocation14], 4
      %s123 = int_to_ptr.vmem [resolvable:$true] %s122
      %128 = dma.hbm_to_vmem [thread:$0]  %s15, 3072, %s123, [#allocation13], 128, 128, 8
    $region65: #{tpu_custom_call.1} parent=1 // pred_fallthru
      _
    // Predicated region
    $region66: #{tpu_custom_call.1} parent=1 // pred_check
      _
    $region67: #{tpu_custom_call.1} parent=1 // pred_check_branch
      %130 = sbr.rel (0) target = $region69
    $region68: #{tpu_custom_call.1} parent=1 // pred_region
      _
    $region69: #{tpu_custom_call.1} parent=1 // pred_fallthru
      _
    // Predicated region
    $region70: #{tpu_custom_call.1} parent=1 // pred_check
      _
    $region71: #{tpu_custom_call.1} parent=1 // pred_check_branch
      %132 = sbr.rel (0) target = $region73
    $region72: #{tpu_custom_call.1} parent=1 // pred_region
      %133 = dma.done [#allocation4], 1024
    $region73: #{tpu_custom_call.1} parent=1 // pred_fallthru
      _
    // Predicated region
    $region74: #{tpu_custom_call.1} parent=1 // pred_check
      _
    $region75: #{tpu_custom_call.1} parent=1 // pred_check_branch
      %135 = sbr.rel (0) target = $region77
    $region76: #{tpu_custom_call.1} parent=1 // pred_region
      %136 = dma.done [#allocation7], 512
    $region77: #{tpu_custom_call.1} parent=1 // pred_fallthru
      _
    // Predicated region
    $region78: #{tpu_custom_call.1} parent=1 // pred_check
      _
    $region79: #{tpu_custom_call.1} parent=1 // pred_check_branch
      %138 = sbr.rel (0) target = $region81
    $region80: #{tpu_custom_call.1} parent=1 // pred_region
      %139 = dma.done [#allocation7], 1024
    $region81: #{tpu_custom_call.1} parent=1 // pred_fallthru
      _
    // Predicated region
    $region82: #{tpu_custom_call.1} parent=1 // pred_check
      _
    $region83: #{tpu_custom_call.1} parent=1 // pred_check_branch
      %141 = sbr.rel (0) target = $region85
    $region84: #{tpu_custom_call.1} parent=1 // pred_region
      %142 = dma.done [#allocation10], 3072
    $region85: #{tpu_custom_call.1} parent=1 // pred_fallthru
      _
    // Predicated region
    $region86: #{tpu_custom_call.1} parent=1 // pred_check
      _
    $region87: #{tpu_custom_call.1} parent=1 // pred_check_branch
      %144 = sbr.rel (0) target = $region89
    $region88: #{tpu_custom_call.1} parent=1 // pred_region
      %145 = dma.done [#allocation10], 3072
    $region89: #{tpu_custom_call.1} parent=1 // pred_fallthru
      _
    // Predicated region
    $region90: #{tpu_custom_call.1} parent=1 // pred_check
      _
    $region91: #{tpu_custom_call.1} parent=1 // pred_check_branch
      %147 = sbr.rel (0) target = $region93
    $region92: #{tpu_custom_call.1} parent=1 // pred_region
      %148 = dma.done [#allocation13], 3072
    $region93: #{tpu_custom_call.1} parent=1 // pred_fallthru
      _
    // Predicated region
    $region94: #{tpu_custom_call.1} parent=1 // pred_check
      _
    $region95: #{tpu_custom_call.1} parent=1 // pred_check_branch
      %150 = sbr.rel (0) target = $region97
    $region96: #{tpu_custom_call.1} parent=1 // pred_region
      %151 = dma.done [#allocation13], 3072
    $region97: #{tpu_custom_call.1} parent=1 // pred_fallthru
      _
    %v152 = vld [vmem:[#allocation3] sm:$0xff]
    %v153 = vld [vmem:[#allocation3 + $0x8] sm:$0xff]
    %v154 = vld [vmem:[#allocation3 + $0x10] sm:$0xff]
    %v155 = vld [vmem:[#allocation3 + $0x18] sm:$0xff]
    %v156 = vld [vmem:[#allocation3 + $0x20] sm:$0xff]
    %v157 = vld [vmem:[#allocation3 + $0x28] sm:$0xff]
    %v158 = vld [vmem:[#allocation3 + $0x30] sm:$0xff]
    %v159 = vld [vmem:[#allocation3 + $0x38] sm:$0xff]
    %v160 = vld [vmem:[#allocation6] sm:$0xff]
    %v161 = vld [vmem:[#allocation6 + $0x8] sm:$0xff]
    %v162 = vld [vmem:[#allocation6 + $0x10] sm:$0xff]
    %v163 = vld [vmem:[#allocation6 + $0x18] sm:$0xff]
    %v164 = vld [vmem:[%s2] sm:$0x1]
    %v166 = vlaneseq
    %v167 = vshrl.u32 %v166, 7
    %v168 = vsub.s32 0, %v167
    %v169 = vrot.slane %v164, %v168
    %vm171 = vcmask 261120
    %v173 = vsel %vm171, %v152, 0
    %v176 = vsel %vm171, %v153, 0
    %v179 = vsel %vm171, %v154, 0
    %v182 = vsel %vm171, %v155, 0
    %v185 = vsel %vm171, %v156, 0
    %v188 = vsel %vm171, %v157, 0
    %v191 = vsel %vm171, %v158, 0
    %v194 = vsel %vm171, %v159, 0
    %196 = vmatprep.subr.mxu0 0.0
    %197 = vmatpush1.msra.mxu0 %v160
    %198 = vmatprep.subr.mxu0 0.0
    %199 = vmatpush1.msra.mxu0 %v161
    %200 = vmatprep.subr.mxu0 0.0
    %201 = vmatpush1.msra.mxu0 %v162
    %202 = vmatprep.subr.mxu0 0.0
    %203 = vmatpush1.msra.mxu0 %v163
    %204 = vmatprep.subr.mxu0 0.0
    %205 = vmatpush1.msra.mxu0 0.0
    %206 = vmatprep.subr.mxu0 0.0
    %207 = vmatpush1.msra.mxu0 0.0
    %208 = vmatprep.subr.mxu0 0.0
    %209 = vmatpush1.msra.mxu0 0.0
    %210 = vmatprep.subr.mxu0 0.0
    %211 = vmatpush1.msra.mxu0 0.0
    %212 = vmatprep.subr.mxu0 0.0
    %213 = vmatpush1.msra.mxu0 0.0
    %214 = vmatprep.subr.mxu0 0.0
    %215 = vmatpush1.msra.mxu0 0.0
    %216 = vmatprep.subr.mxu0 0.0
    %217 = vmatpush1.msra.mxu0 0.0
    %218 = vmatprep.subr.mxu0 0.0
    %219 = vmatpush1.msra.mxu0 0.0
    %220 = vmatprep.subr.mxu0 0.0
    %221 = vmatpush1.msra.mxu0 0.0
    %222 = vmatprep.subr.mxu0 0.0
    %223 = vmatpush1.msra.mxu0 0.0
    %224 = vmatprep.subr.mxu0 0.0
    %225 = vmatpush1.msra.mxu0 0.0
    %226 = vmatprep.subr.mxu0 0.0
    %227 = vmatpush1.msra.mxu0 0.0
    %228 = vmatprep.subr.mxu0 0.0
    %229 = vmatpush1.msra.mxu0 0.0
    %230 = vmatprep.subr.mxu0 0.0
    %231 = vmatpush1.msra.mxu0 0.0
    %232 = vmatprep.subr.mxu0 0.0
    %233 = vmatpush1.msra.mxu0 0.0
    %234 = vmatprep.subr.mxu0 0.0
    %235 = vmatpush1.msra.mxu0 0.0
    %236 = vmatprep.subr.mxu0 0.0
    %237 = vmatpush1.msra.mxu0 0.0
    %238 = vmatprep.subr.mxu0 0.0
    %239 = vmatpush1.msra.mxu0 0.0
    %240 = vmatprep.subr.mxu0 0.0
    %241 = vmatpush1.msra.mxu0 0.0
    %242 = vmatprep.subr.mxu0 0.0
    %243 = vmatpush1.msra.mxu0 0.0
    %244 = vmatprep.subr.mxu0 0.0
    %245 = vmatpush1.msra.mxu0 0.0
    %246 = vmatprep.subr.mxu0 0.0
    %247 = vmatpush1.msra.mxu0 0.0
    %248 = vmatprep.subr.mxu0 0.0
    %249 = vmatpush1.msra.mxu0 0.0
    %250 = vmatprep.subr.mxu0 0.0
    %251 = vmatpush1.msra.mxu0 0.0
    %252 = vmatprep.subr.mxu0 0.0
    %253 = vmatpush1.msra.mxu0 0.0
    %254 = vmatprep.subr.mxu0 0.0
    %255 = vmatpush1.msra.mxu0 0.0
    %256 = vmatprep.subr.mxu0 0.0
    %257 = vmatpush1.msra.mxu0 0.0
    %258 = vmatprep.subr.mxu0 0.0
    %259 = vmatpush1.msra.mxu0 0.0
    %260 = vmatprep.mubr.f32.mxu0 0.0
    %261 = vmatmul.mubr.f32.gmra.mrb[0].mxu0 %v173
    %v262 = vpop.f32.mrb[0].mxu0
    %v263 = vadd.f32 %v169, %v262
    %v264 = vpop.f32.mrb[0].mxu0
    %265 = vmatprep.mubr.f32.mxu0 0.0
    %266 = vmatmul.mubr.f32.gmra.mrb[0].mxu0 %v176
    %v267 = vpop.f32.mrb[0].mxu0
    %v268 = vadd.f32 %v169, %v267
    %v269 = vpop.f32.mrb[0].mxu0
    %270 = vmatprep.mubr.f32.mxu0 0.0
    %271 = vmatmul.mubr.f32.gmra.mrb[0].mxu0 %v179
    %v272 = vpop.f32.mrb[0].mxu0
    %v273 = vadd.f32 %v169, %v272
    %v274 = vpop.f32.mrb[0].mxu0
    %275 = vmatprep.mubr.f32.mxu0 0.0
    %276 = vmatmul.mubr.f32.gmra.mrb[0].mxu0 %v182
    %v277 = vpop.f32.mrb[0].mxu0
    %v278 = vadd.f32 %v169, %v277
    %v279 = vpop.f32.mrb[0].mxu0
    %280 = vmatprep.mubr.f32.mxu0 0.0
    %281 = vmatmul.mubr.f32.gmra.mrb[0].mxu0 %v185
    %v282 = vpop.f32.mrb[0].mxu0
    %v283 = vadd.f32 %v169, %v282
    %v284 = vpop.f32.mrb[0].mxu0
    %285 = vmatprep.mubr.f32.mxu0 0.0
    %286 = vmatmul.mubr.f32.gmra.mrb[0].mxu0 %v188
    %v287 = vpop.f32.mrb[0].mxu0
    %v288 = vadd.f32 %v169, %v287
    %v289 = vpop.f32.mrb[0].mxu0
    %290 = vmatprep.mubr.f32.mxu0 0.0
    %291 = vmatmul.mubr.f32.gmra.mrb[0].mxu0 %v191
    %v292 = vpop.f32.mrb[0].mxu0
    %v293 = vadd.f32 %v169, %v292
    %v294 = vpop.f32.mrb[0].mxu0
    %295 = vmatprep.mubr.f32.mxu0 0.0
    %296 = vmatmul.mubr.f32.gmra.mrb[0].mxu0 %v194
    %v297 = vpop.f32.mrb[0].mxu0
    %v298 = vadd.f32 %v169, %v297
    %v299 = vpop.f32.mrb[0].mxu0
    %300 = vdwg.mxu0
    %vm301 = vcmask 523264
    %v302 = vsel %vm301, %v263, 0.0
    %303 = vadd.xlane.f32.xlu0 %v302
    %v304 = vpop.xlane.xlu0 %303
    %v305 = vsel %vm301, %v268, 0.0
    %306 = vadd.xlane.f32.xlu0 %v305
    %v307 = vpop.xlane.xlu0 %306
    %v308 = vsel %vm301, %v273, 0.0
    %309 = vadd.xlane.f32.xlu0 %v308
    %v310 = vpop.xlane.xlu0 %309
    %v311 = vsel %vm301, %v278, 0.0
    %312 = vadd.xlane.f32.xlu0 %v311
    %v313 = vpop.xlane.xlu0 %312
    %v314 = vsel %vm301, %v283, 0.0
    %315 = vadd.xlane.f32.xlu0 %v314
    %v316 = vpop.xlane.xlu0 %315
    %v317 = vsel %vm301, %v288, 0.0
    %318 = vadd.xlane.f32.xlu0 %v317
    %v319 = vpop.xlane.xlu0 %318
    %v320 = vsel %vm301, %v293, 0.0
    %321 = vadd.xlane.f32.xlu0 %v320
    %v322 = vpop.xlane.xlu0 %321
    %v323 = vsel %vm301, %v298, 0.0
    %324 = vadd.xlane.f32.xlu0 %v323
    %v325 = vpop.xlane.xlu0 %324
    %v326 = vrcp.pop 64.0
    %v327 = vmul.f32 %v304, %v326
    %v328 = vmul.f32 %v307, %v326
    %v329 = vmul.f32 %v310, %v326
    %v330 = vmul.f32 %v313, %v326
    %v331 = vmul.f32 %v316, %v326
    %v332 = vmul.f32 %v319, %v326
    %v333 = vmul.f32 %v322, %v326
    %v334 = vmul.f32 %v325, %v326
    %v335 = vsub.f32 %v263, %v327
    %v336 = vsub.f32 %v268, %v328
    %v337 = vsub.f32 %v273, %v329
    %v338 = vsub.f32 %v278, %v330
    %v339 = vsub.f32 %v283, %v331
    %v340 = vsub.f32 %v288, %v332
    %v341 = vsub.f32 %v293, %v333
    %v342 = vsub.f32 %v298, %v334
    %v343 = vmul.f32 %v335, %v335
    %v344 = vmul.f32 %v336, %v336
    %v345 = vmul.f32 %v337, %v337
    %v346 = vmul.f32 %v338, %v338
    %v347 = vmul.f32 %v339, %v339
    %v348 = vmul.f32 %v340, %v340
    %v349 = vmul.f32 %v341, %v341
    %v350 = vmul.f32 %v342, %v342
    %v351 = vsel %vm301, %v343, 0.0
    %352 = vadd.xlane.f32.xlu0 %v351
    %v353 = vpop.xlane.xlu0 %352
    %v354 = vsel %vm301, %v344, 0.0
    %355 = vadd.xlane.f32.xlu0 %v354
    %v356 = vpop.xlane.xlu0 %355
    %v357 = vsel %vm301, %v345, 0.0
    %358 = vadd.xlane.f32.xlu0 %v357
    %v359 = vpop.xlane.xlu0 %358
    %v360 = vsel %vm301, %v346, 0.0
    %361 = vadd.xlane.f32.xlu0 %v360
    %v362 = vpop.xlane.xlu0 %361
    %v363 = vsel %vm301, %v347, 0.0
    %364 = vadd.xlane.f32.xlu0 %v363
    %v365 = vpop.xlane.xlu0 %364
    %v366 = vsel %vm301, %v348, 0.0
    %367 = vadd.xlane.f32.xlu0 %v366
    %v368 = vpop.xlane.xlu0 %367
    %v369 = vsel %vm301, %v349, 0.0
    %370 = vadd.xlane.f32.xlu0 %v369
    %v371 = vpop.xlane.xlu0 %370
    %v372 = vsel %vm301, %v350, 0.0
    %373 = vadd.xlane.f32.xlu0 %v372
    %v374 = vpop.xlane.xlu0 %373
    %v375 = vmul.f32 %v353, %v326
    %v376 = vmul.f32 %v356, %v326
    %v377 = vmul.f32 %v359, %v326
    %v378 = vmul.f32 %v362, %v326
    %v379 = vmul.f32 %v365, %v326
    %v380 = vmul.f32 %v368, %v326
    %v381 = vmul.f32 %v371, %v326
    %v382 = vmul.f32 %v374, %v326
    %v383 = vadd.f32 %v375, 1e-05
    %v384 = vadd.f32 %v376, 1e-05
    %v385 = vadd.f32 %v377, 1e-05
    %v386 = vadd.f32 %v378, 1e-05
    %v387 = vadd.f32 %v379, 1e-05
    %v388 = vadd.f32 %v380, 1e-05
    %v389 = vadd.f32 %v381, 1e-05
    %v390 = vadd.f32 %v382, 1e-05
    %v391 = vrsqrt.pop %v383
    %v392 = vrsqrt.pop %v384
    %v393 = vrsqrt.pop %v385
    %v394 = vrsqrt.pop %v386
    %v395 = vrsqrt.pop %v387
    %v396 = vrsqrt.pop %v388
    %v397 = vrsqrt.pop %v389
    %v398 = vrsqrt.pop %v390
    %v399 = vmul.f32 %v335, %v391
    %v400 = vmul.f32 %v336, %v392
    %v401 = vmul.f32 %v337, %v393
    %v402 = vmul.f32 %v338, %v394
    %v403 = vmul.f32 %v339, %v395
    %v404 = vmul.f32 %v340, %v396
    %v405 = vmul.f32 %v341, %v397
    %v406 = vmul.f32 %v342, %v398
    %v407 = vld [vmem:[%s3] sm:$0x1]
    %v409 = vlaneseq
    %v410 = vshrl.u32 %v409, 7
    %v411 = vsub.s32 0, %v410
    %v412 = vrot.slane %v407, %v411
    %v414 = vmul.f32 %v412, %v399
    %v415 = vmul.f32 %v412, %v400
    %v416 = vmul.f32 %v412, %v401
    %v417 = vmul.f32 %v412, %v402
    %v418 = vmul.f32 %v412, %v403
    %v419 = vmul.f32 %v412, %v404
    %v420 = vmul.f32 %v412, %v405
    %v421 = vmul.f32 %v412, %v406
    %v422 = vld [vmem:[%s4] sm:$0x1]
    %v424 = vlaneseq
    %v425 = vshrl.u32 %v424, 7
    %v426 = vsub.s32 0, %v425
    %v427 = vrot.slane %v422, %v426
    %v429 = vadd.f32 %v414, %v427
    %v430 = vadd.f32 %v415, %v427
    %v431 = vadd.f32 %v416, %v427
    %v432 = vadd.f32 %v417, %v427
    %v433 = vadd.f32 %v418, %v427
    %v434 = vadd.f32 %v419, %v427
    %v435 = vadd.f32 %v420, %v427
    %v436 = vadd.f32 %v421, %v427
    %v437 = vmax.f32 %v429, 0.0
    %v438 = vmax.f32 %v430, 0.0
    %v439 = vmax.f32 %v431, 0.0
    %v440 = vmax.f32 %v432, 0.0
    %v441 = vmax.f32 %v433, 0.0
    %v442 = vmax.f32 %v434, 0.0
    %v443 = vmax.f32 %v435, 0.0
    %v444 = vmax.f32 %v436, 0.0
    %v445 = vld [vmem:[#allocation8] sm:$0xff]
    %v446 = vld [vmem:[#allocation8 + $0x8] sm:$0xff]
    %v447 = vld [vmem:[#allocation8 + $0x10] sm:$0xff]
    %v448 = vld [vmem:[#allocation8 + $0x18] sm:$0xff]
    %v449 = vld [vmem:[#allocation8 + $0x20] sm:$0xff]
    %v450 = vld [vmem:[#allocation8 + $0x28] sm:$0xff]
    %v451 = vld [vmem:[#allocation8 + $0x30] sm:$0xff]
    %v452 = vld [vmem:[#allocation8 + $0x38] sm:$0xff]
    %v453 = vld [vmem:[%s6] sm:$0x1]
    %v455 = vlaneseq
    %v456 = vshrl.u32 %v455, 7
    %v457 = vsub.s32 0, %v456
    %v458 = vrot.slane %v453, %v457
    %v461 = vsel %vm301, %v437, 0
    %v464 = vsel %vm301, %v438, 0
    %v467 = vsel %vm301, %v439, 0
    %v470 = vsel %vm301, %v440, 0
    %v473 = vsel %vm301, %v441, 0
    %v476 = vsel %vm301, %v442, 0
    %v479 = vsel %vm301, %v443, 0
    %v482 = vsel %vm301, %v444, 0
    %484 = vmatprep.subr.mxu0 0.0
    %485 = vmatpush1.msra.mxu0 %v445
    %486 = vmatprep.subr.mxu0 0.0
    %487 = vmatpush1.msra.mxu0 %v446
    %488 = vmatprep.subr.mxu0 0.0
    %489 = vmatpush1.msra.mxu0 %v447
    %490 = vmatprep.subr.mxu0 0.0
    %491 = vmatpush1.msra.mxu0 %v448
    %492 = vmatprep.subr.mxu0 0.0
    %493 = vmatpush1.msra.mxu0 %v449
    %494 = vmatprep.subr.mxu0 0.0
    %495 = vmatpush1.msra.mxu0 %v450
    %496 = vmatprep.subr.mxu0 0.0
    %497 = vmatpush1.msra.mxu0 %v451
    %498 = vmatprep.subr.mxu0 0.0
    %499 = vmatpush1.msra.mxu0 %v452
    %500 = vmatprep.subr.mxu0 0.0
    %501 = vmatpush1.msra.mxu0 0.0
    %502 = vmatprep.subr.mxu0 0.0
    %503 = vmatpush1.msra.mxu0 0.0
    %504 = vmatprep.subr.mxu0 0.0
    %505 = vmatpush1.msra.mxu0 0.0
    %506 = vmatprep.subr.mxu0 0.0
    %507 = vmatpush1.msra.mxu0 0.0
    %508 = vmatprep.subr.mxu0 0.0
    %509 = vmatpush1.msra.mxu0 0.0
    %510 = vmatprep.subr.mxu0 0.0
    %511 = vmatpush1.msra.mxu0 0.0
    %512 = vmatprep.subr.mxu0 0.0
    %513 = vmatpush1.msra.mxu0 0.0
    %514 = vmatprep.subr.mxu0 0.0
    %515 = vmatpush1.msra.mxu0 0.0
    %516 = vmatprep.subr.mxu0 0.0
    %517 = vmatpush1.msra.mxu0 0.0
    %518 = vmatprep.subr.mxu0 0.0
    %519 = vmatpush1.msra.mxu0 0.0
    %520 = vmatprep.subr.mxu0 0.0
    %521 = vmatpush1.msra.mxu0 0.0
    %522 = vmatprep.subr.mxu0 0.0
    %523 = vmatpush1.msra.mxu0 0.0
    %524 = vmatprep.subr.mxu0 0.0
    %525 = vmatpush1.msra.mxu0 0.0
    %526 = vmatprep.subr.mxu0 0.0
    %527 = vmatpush1.msra.mxu0 0.0
    %528 = vmatprep.subr.mxu0 0.0
    %529 = vmatpush1.msra.mxu0 0.0
    %530 = vmatprep.subr.mxu0 0.0
    %531 = vmatpush1.msra.mxu0 0.0
    %532 = vmatprep.subr.mxu0 0.0
    %533 = vmatpush1.msra.mxu0 0.0
    %534 = vmatprep.subr.mxu0 0.0
    %535 = vmatpush1.msra.mxu0 0.0
    %536 = vmatprep.subr.mxu0 0.0
    %537 = vmatpush1.msra.mxu0 0.0
    %538 = vmatprep.subr.mxu0 0.0
    %539 = vmatpush1.msra.mxu0 0.0
    %540 = vmatprep.subr.mxu0 0.0
    %541 = vmatpush1.msra.mxu0 0.0
    %542 = vmatprep.subr.mxu0 0.0
    %543 = vmatpush1.msra.mxu0 0.0
    %544 = vmatprep.subr.mxu0 0.0
    %545 = vmatpush1.msra.mxu0 0.0
    %546 = vmatprep.subr.mxu0 0.0
    %547 = vmatpush1.msra.mxu0 0.0
    %548 = vmatprep.mubr.f32.mxu0 0.0
    %549 = vmatmul.mubr.f32.gmra.mrb[0].mxu0 %v461
    %v550 = vpop.f32.mrb[0].mxu0
    %v551 = vadd.f32 %v458, %v550
    %v552 = vpop.f32.mrb[0].mxu0
    %553 = vmatprep.mubr.f32.mxu0 0.0
    %554 = vmatmul.mubr.f32.gmra.mrb[0].mxu0 %v464
    %v555 = vpop.f32.mrb[0].mxu0
    %v556 = vadd.f32 %v458, %v555
    %v557 = vpop.f32.mrb[0].mxu0
    %558 = vmatprep.mubr.f32.mxu0 0.0
    %559 = vmatmul.mubr.f32.gmra.mrb[0].mxu0 %v467
    %v560 = vpop.f32.mrb[0].mxu0
    %v561 = vadd.f32 %v458, %v560
    %v562 = vpop.f32.mrb[0].mxu0
    %563 = vmatprep.mubr.f32.mxu0 0.0
    %564 = vmatmul.mubr.f32.gmra.mrb[0].mxu0 %v470
    %v565 = vpop.f32.mrb[0].mxu0
    %v566 = vadd.f32 %v458, %v565
    %v567 = vpop.f32.mrb[0].mxu0
    %568 = vmatprep.mubr.f32.mxu0 0.0
    %569 = vmatmul.mubr.f32.gmra.mrb[0].mxu0 %v473
    %v570 = vpop.f32.mrb[0].mxu0
    %v571 = vadd.f32 %v458, %v570
    %v572 = vpop.f32.mrb[0].mxu0
    %573 = vmatprep.mubr.f32.mxu0 0.0
    %574 = vmatmul.mubr.f32.gmra.mrb[0].mxu0 %v476
    %v575 = vpop.f32.mrb[0].mxu0
    %v576 = vadd.f32 %v458, %v575
    %v577 = vpop.f32.mrb[0].mxu0
    %578 = vmatprep.mubr.f32.mxu0 0.0
    %579 = vmatmul.mubr.f32.gmra.mrb[0].mxu0 %v479
    %v580 = vpop.f32.mrb[0].mxu0
    %v581 = vadd.f32 %v458, %v580
    %v582 = vpop.f32.mrb[0].mxu0
    %583 = vmatprep.mubr.f32.mxu0 0.0
    %584 = vmatmul.mubr.f32.gmra.mrb[0].mxu0 %v482
    %v585 = vpop.f32.mrb[0].mxu0
    %v586 = vadd.f32 %v458, %v585
    %v587 = vpop.f32.mrb[0].mxu0
    %588 = vdwg.mxu0
    %v589 = vsel %vm301, %v551, 0.0
    %590 = vadd.xlane.f32.xlu0 %v589
    %v591 = vpop.xlane.xlu0 %590
    %v592 = vsel %vm301, %v556, 0.0
    %593 = vadd.xlane.f32.xlu0 %v592
    %v594 = vpop.xlane.xlu0 %593
    %v595 = vsel %vm301, %v561, 0.0
    %596 = vadd.xlane.f32.xlu0 %v595
    %v597 = vpop.xlane.xlu0 %596
    %v598 = vsel %vm301, %v566, 0.0
    %599 = vadd.xlane.f32.xlu0 %v598
    %v600 = vpop.xlane.xlu0 %599
    %v601 = vsel %vm301, %v571, 0.0
    %602 = vadd.xlane.f32.xlu0 %v601
    %v603 = vpop.xlane.xlu0 %602
    %v604 = vsel %vm301, %v576, 0.0
    %605 = vadd.xlane.f32.xlu0 %v604
    %v606 = vpop.xlane.xlu0 %605
    %v607 = vsel %vm301, %v581, 0.0
    %608 = vadd.xlane.f32.xlu0 %v607
    %v609 = vpop.xlane.xlu0 %608
    %v610 = vsel %vm301, %v586, 0.0
    %611 = vadd.xlane.f32.xlu0 %v610
    %v612 = vpop.xlane.xlu0 %611
    %v613 = vmul.f32 %v591, %v326
    %v614 = vmul.f32 %v594, %v326
    %v615 = vmul.f32 %v597, %v326
    %v616 = vmul.f32 %v600, %v326
    %v617 = vmul.f32 %v603, %v326
    %v618 = vmul.f32 %v606, %v326
    %v619 = vmul.f32 %v609, %v326
    %v620 = vmul.f32 %v612, %v326
    %v621 = vsub.f32 %v551, %v613
    %v622 = vsub.f32 %v556, %v614
    %v623 = vsub.f32 %v561, %v615
    %v624 = vsub.f32 %v566, %v616
    %v625 = vsub.f32 %v571, %v617
    %v626 = vsub.f32 %v576, %v618
    %v627 = vsub.f32 %v581, %v619
    %v628 = vsub.f32 %v586, %v620
    %v629 = vmul.f32 %v621, %v621
    %v630 = vmul.f32 %v622, %v622
    %v631 = vmul.f32 %v623, %v623
    %v632 = vmul.f32 %v624, %v624
    %v633 = vmul.f32 %v625, %v625
    %v634 = vmul.f32 %v626, %v626
    %v635 = vmul.f32 %v627, %v627
    %v636 = vmul.f32 %v628, %v628
    %v637 = vsel %vm301, %v629, 0.0
    %638 = vadd.xlane.f32.xlu0 %v637
    %v639 = vpop.xlane.xlu0 %638
    %v640 = vsel %vm301, %v630, 0.0
    %641 = vadd.xlane.f32.xlu0 %v640
    %v642 = vpop.xlane.xlu0 %641
    %v643 = vsel %vm301, %v631, 0.0
    %644 = vadd.xlane.f32.xlu0 %v643
    %v645 = vpop.xlane.xlu0 %644
    %v646 = vsel %vm301, %v632, 0.0
    %647 = vadd.xlane.f32.xlu0 %v646
    %v648 = vpop.xlane.xlu0 %647
    %v649 = vsel %vm301, %v633, 0.0
    %650 = vadd.xlane.f32.xlu0 %v649
    %v651 = vpop.xlane.xlu0 %650
    %v652 = vsel %vm301, %v634, 0.0
    %653 = vadd.xlane.f32.xlu0 %v652
    %v654 = vpop.xlane.xlu0 %653
    %v655 = vsel %vm301, %v635, 0.0
    %656 = vadd.xlane.f32.xlu0 %v655
    %v657 = vpop.xlane.xlu0 %656
    %v658 = vsel %vm301, %v636, 0.0
    %659 = vadd.xlane.f32.xlu0 %v658
    %v660 = vpop.xlane.xlu0 %659
    %v661 = vmul.f32 %v639, %v326
    %v662 = vmul.f32 %v642, %v326
    %v663 = vmul.f32 %v645, %v326
    %v664 = vmul.f32 %v648, %v326
    %v665 = vmul.f32 %v651, %v326
    %v666 = vmul.f32 %v654, %v326
    %v667 = vmul.f32 %v657, %v326
    %v668 = vmul.f32 %v660, %v326
    %v669 = vadd.f32 %v661, 1e-05
    %v670 = vadd.f32 %v662, 1e-05
    %v671 = vadd.f32 %v663, 1e-05
    %v672 = vadd.f32 %v664, 1e-05
    %v673 = vadd.f32 %v665, 1e-05
    %v674 = vadd.f32 %v666, 1e-05
    %v675 = vadd.f32 %v667, 1e-05
    %v676 = vadd.f32 %v668, 1e-05
    %v677 = vrsqrt.pop %v669
    %v678 = vrsqrt.pop %v670
    %v679 = vrsqrt.pop %v671
    %v680 = vrsqrt.pop %v672
    %v681 = vrsqrt.pop %v673
    %v682 = vrsqrt.pop %v674
    %v683 = vrsqrt.pop %v675
    %v684 = vrsqrt.pop %v676
    %v685 = vmul.f32 %v621, %v677
    %v686 = vmul.f32 %v622, %v678
    %v687 = vmul.f32 %v623, %v679
    %v688 = vmul.f32 %v624, %v680
    %v689 = vmul.f32 %v625, %v681
    %v690 = vmul.f32 %v626, %v682
    %v691 = vmul.f32 %v627, %v683
    %v692 = vmul.f32 %v628, %v684
    %v693 = vld [vmem:[%s7] sm:$0x1]
    %v695 = vlaneseq
    %v696 = vshrl.u32 %v695, 7
    %v697 = vsub.s32 0, %v696
    %v698 = vrot.slane %v693, %v697
    %v700 = vmul.f32 %v698, %v685
    %v701 = vmul.f32 %v698, %v686
    %v702 = vmul.f32 %v698, %v687
    %v703 = vmul.f32 %v698, %v688
    %v704 = vmul.f32 %v698, %v689
    %v705 = vmul.f32 %v698, %v690
    %v706 = vmul.f32 %v698, %v691
    %v707 = vmul.f32 %v698, %v692
    %v708 = vld [vmem:[%s8] sm:$0x1]
    %v710 = vlaneseq
    %v711 = vshrl.u32 %v710, 7
    %v712 = vsub.s32 0, %v711
    %v713 = vrot.slane %v708, %v712
    %v715 = vadd.f32 %v700, %v713
    %v716 = vadd.f32 %v701, %v713
    %v717 = vadd.f32 %v702, %v713
    %v718 = vadd.f32 %v703, %v713
    %v719 = vadd.f32 %v704, %v713
    %v720 = vadd.f32 %v705, %v713
    %v721 = vadd.f32 %v706, %v713
    %v722 = vadd.f32 %v707, %v713
    %v723 = vmax.f32 %v715, 0.0
    %v724 = vmax.f32 %v716, 0.0
    %v725 = vmax.f32 %v717, 0.0
    %v726 = vmax.f32 %v718, 0.0
    %v727 = vmax.f32 %v719, 0.0
    %v728 = vmax.f32 %v720, 0.0
    %v729 = vmax.f32 %v721, 0.0
    %v730 = vmax.f32 %v722, 0.0
    %v731 = vld [vmem:[#allocation9] sm:$0xff]
    %v732 = vld [vmem:[#allocation9 + $0x8] sm:$0xff]
    %v733 = vld [vmem:[#allocation9 + $0x10] sm:$0xff]
    %v734 = vld [vmem:[#allocation9 + $0x18] sm:$0xff]
    %v735 = vld [vmem:[#allocation9 + $0x20] sm:$0xff]
    %v736 = vld [vmem:[#allocation9 + $0x28] sm:$0xff]
    %v737 = vld [vmem:[#allocation9 + $0x30] sm:$0xff]
    %v738 = vld [vmem:[#allocation9 + $0x38] sm:$0xff]
    %v739 = vld [vmem:[%s10] sm:$0x1]
    %v741 = vlaneseq
    %v742 = vshrl.u32 %v741, 7
    %v743 = vsub.s32 0, %v742
    %v744 = vrot.slane %v739, %v743
    %v747 = vsel %vm301, %v723, 0
    %v750 = vsel %vm301, %v724, 0
    %v753 = vsel %vm301, %v725, 0
    %v756 = vsel %vm301, %v726, 0
    %v759 = vsel %vm301, %v727, 0
    %v762 = vsel %vm301, %v728, 0
    %v765 = vsel %vm301, %v729, 0
    %v768 = vsel %vm301, %v730, 0
    %770 = vmatprep.subr.mxu0 0.0
    %771 = vmatpush1.msra.mxu0 %v731
    %772 = vmatprep.subr.mxu0 0.0
    %773 = vmatpush1.msra.mxu0 %v732
    %774 = vmatprep.subr.mxu0 0.0
    %775 = vmatpush1.msra.mxu0 %v733
    %776 = vmatprep.subr.mxu0 0.0
    %777 = vmatpush1.msra.mxu0 %v734
    %778 = vmatprep.subr.mxu0 0.0
    %779 = vmatpush1.msra.mxu0 %v735
    %780 = vmatprep.subr.mxu0 0.0
    %781 = vmatpush1.msra.mxu0 %v736
    %782 = vmatprep.subr.mxu0 0.0
    %783 = vmatpush1.msra.mxu0 %v737
    %784 = vmatprep.subr.mxu0 0.0
    %785 = vmatpush1.msra.mxu0 %v738
    %786 = vmatprep.subr.mxu0 0.0
    %787 = vmatpush1.msra.mxu0 0.0
    %788 = vmatprep.subr.mxu0 0.0
    %789 = vmatpush1.msra.mxu0 0.0
    %790 = vmatprep.subr.mxu0 0.0
    %791 = vmatpush1.msra.mxu0 0.0
    %792 = vmatprep.subr.mxu0 0.0
    %793 = vmatpush1.msra.mxu0 0.0
    %794 = vmatprep.subr.mxu0 0.0
    %795 = vmatpush1.msra.mxu0 0.0
    %796 = vmatprep.subr.mxu0 0.0
    %797 = vmatpush1.msra.mxu0 0.0
    %798 = vmatprep.subr.mxu0 0.0
    %799 = vmatpush1.msra.mxu0 0.0
    %800 = vmatprep.subr.mxu0 0.0
    %801 = vmatpush1.msra.mxu0 0.0
    %802 = vmatprep.subr.mxu0 0.0
    %803 = vmatpush1.msra.mxu0 0.0
    %804 = vmatprep.subr.mxu0 0.0
    %805 = vmatpush1.msra.mxu0 0.0
    %806 = vmatprep.subr.mxu0 0.0
    %807 = vmatpush1.msra.mxu0 0.0
    %808 = vmatprep.subr.mxu0 0.0
    %809 = vmatpush1.msra.mxu0 0.0
    %810 = vmatprep.subr.mxu0 0.0
    %811 = vmatpush1.msra.mxu0 0.0
    %812 = vmatprep.subr.mxu0 0.0
    %813 = vmatpush1.msra.mxu0 0.0
    %814 = vmatprep.subr.mxu0 0.0
    %815 = vmatpush1.msra.mxu0 0.0
    %816 = vmatprep.subr.mxu0 0.0
    %817 = vmatpush1.msra.mxu0 0.0
    %818 = vmatprep.subr.mxu0 0.0
    %819 = vmatpush1.msra.mxu0 0.0
    %820 = vmatprep.subr.mxu0 0.0
    %821 = vmatpush1.msra.mxu0 0.0
    %822 = vmatprep.subr.mxu0 0.0
    %823 = vmatpush1.msra.mxu0 0.0
    %824 = vmatprep.subr.mxu0 0.0
    %825 = vmatpush1.msra.mxu0 0.0
    %826 = vmatprep.subr.mxu0 0.0
    %827 = vmatpush1.msra.mxu0 0.0
    %828 = vmatprep.subr.mxu0 0.0
    %829 = vmatpush1.msra.mxu0 0.0
    %830 = vmatprep.subr.mxu0 0.0
    %831 = vmatpush1.msra.mxu0 0.0
    %832 = vmatprep.subr.mxu0 0.0
    %833 = vmatpush1.msra.mxu0 0.0
    %834 = vmatprep.mubr.f32.mxu0 0.0
    %835 = vmatmul.mubr.f32.gmra.mrb[0].mxu0 %v747
    %v836 = vpop.f32.mrb[0].mxu0
    %v837 = vadd.f32 %v744, %v836
    %v838 = vpop.f32.mrb[0].mxu0
    %839 = vmatprep.mubr.f32.mxu0 0.0
    %840 = vmatmul.mubr.f32.gmra.mrb[0].mxu0 %v750
    %v841 = vpop.f32.mrb[0].mxu0
    %v842 = vadd.f32 %v744, %v841
    %v843 = vpop.f32.mrb[0].mxu0
    %844 = vmatprep.mubr.f32.mxu0 0.0
    %845 = vmatmul.mubr.f32.gmra.mrb[0].mxu0 %v753
    %v846 = vpop.f32.mrb[0].mxu0
    %v847 = vadd.f32 %v744, %v846
    %v848 = vpop.f32.mrb[0].mxu0
    %849 = vmatprep.mubr.f32.mxu0 0.0
    %850 = vmatmul.mubr.f32.gmra.mrb[0].mxu0 %v756
    %v851 = vpop.f32.mrb[0].mxu0
    %v852 = vadd.f32 %v744, %v851
    %v853 = vpop.f32.mrb[0].mxu0
    %854 = vmatprep.mubr.f32.mxu0 0.0
    %855 = vmatmul.mubr.f32.gmra.mrb[0].mxu0 %v759
    %v856 = vpop.f32.mrb[0].mxu0
    %v857 = vadd.f32 %v744, %v856
    %v858 = vpop.f32.mrb[0].mxu0
    %859 = vmatprep.mubr.f32.mxu0 0.0
    %860 = vmatmul.mubr.f32.gmra.mrb[0].mxu0 %v762
    %v861 = vpop.f32.mrb[0].mxu0
    %v862 = vadd.f32 %v744, %v861
    %v863 = vpop.f32.mrb[0].mxu0
    %864 = vmatprep.mubr.f32.mxu0 0.0
    %865 = vmatmul.mubr.f32.gmra.mrb[0].mxu0 %v765
    %v866 = vpop.f32.mrb[0].mxu0
    %v867 = vadd.f32 %v744, %v866
    %v868 = vpop.f32.mrb[0].mxu0
    %869 = vmatprep.mubr.f32.mxu0 0.0
    %870 = vmatmul.mubr.f32.gmra.mrb[0].mxu0 %v768
    %v871 = vpop.f32.mrb[0].mxu0
    %v872 = vadd.f32 %v744, %v871
    %v873 = vpop.f32.mrb[0].mxu0
    %874 = vdwg.mxu0
    %875 = vst.msk [vmem:[#allocation2] sm:$0xff] %vm301, %v837
    %876 = vst.msk [vmem:[#allocation2 + $0x8] sm:$0xff] %vm301, %v842
    %877 = vst.msk [vmem:[#allocation2 + $0x10] sm:$0xff] %vm301, %v847
    %878 = vst.msk [vmem:[#allocation2 + $0x18] sm:$0xff] %vm301, %v852
    %879 = vst.msk [vmem:[#allocation2 + $0x20] sm:$0xff] %vm301, %v857
    %880 = vst.msk [vmem:[#allocation2 + $0x28] sm:$0xff] %vm301, %v862
    %881 = vst.msk [vmem:[#allocation2 + $0x30] sm:$0xff] %vm301, %v867
    %882 = vst.msk [vmem:[#allocation2 + $0x38] sm:$0xff] %vm301, %v872
    %s883 = scalar_lea.vmem [#allocation9], 64
    %v884 = vld [vmem:[%s883] sm:$0xff]
    %v885 = vld [vmem:[%s883 + $0x8] sm:$0xff]
    %v886 = vld [vmem:[%s883 + $0x10] sm:$0xff]
    %v887 = vld [vmem:[%s883 + $0x18] sm:$0xff]
    %v888 = vld [vmem:[%s883 + $0x20] sm:$0xff]
    %v889 = vld [vmem:[%s883 + $0x28] sm:$0xff]
    %v890 = vld [vmem:[%s883 + $0x30] sm:$0xff]
    %v891 = vld [vmem:[%s883 + $0x38] sm:$0xff]
    %s892 = scalar_lea.vmem %s10, 1
    %v893 = vld [vmem:[%s892] sm:$0x1]
    %v895 = vlaneseq
    %v896 = vshrl.u32 %v895, 7
    %v897 = vsub.s32 0, %v896
    %v898 = vrot.slane %v893, %v897
    %900 = vmatprep.subr.mxu0 0.0
    %901 = vmatpush1.msra.mxu0 %v884
    %902 = vmatprep.subr.mxu0 0.0
    %903 = vmatpush1.msra.mxu0 %v885
    %904 = vmatprep.subr.mxu0 0.0
    %905 = vmatpush1.msra.mxu0 %v886
    %906 = vmatprep.subr.mxu0 0.0
    %907 = vmatpush1.msra.mxu0 %v887
    %908 = vmatprep.subr.mxu0 0.0
    %909 = vmatpush1.msra.mxu0 %v888
    %910 = vmatprep.subr.mxu0 0.0
    %911 = vmatpush1.msra.mxu0 %v889
    %912 = vmatprep.subr.mxu0 0.0
    %913 = vmatpush1.msra.mxu0 %v890
    %914 = vmatprep.subr.mxu0 0.0
    %915 = vmatpush1.msra.mxu0 %v891
    %916 = vmatprep.subr.mxu0 0.0
    %917 = vmatpush1.msra.mxu0 0.0
    %918 = vmatprep.subr.mxu0 0.0
    %919 = vmatpush1.msra.mxu0 0.0
    %920 = vmatprep.subr.mxu0 0.0
    %921 = vmatpush1.msra.mxu0 0.0
    %922 = vmatprep.subr.mxu0 0.0
    %923 = vmatpush1.msra.mxu0 0.0
    %924 = vmatprep.subr.mxu0 0.0
    %925 = vmatpush1.msra.mxu0 0.0
    %926 = vmatprep.subr.mxu0 0.0
    %927 = vmatpush1.msra.mxu0 0.0
    %928 = vmatprep.subr.mxu0 0.0
    %929 = vmatpush1.msra.mxu0 0.0
    %930 = vmatprep.subr.mxu0 0.0
    %931 = vmatpush1.msra.mxu0 0.0
    %932 = vmatprep.subr.mxu0 0.0
    %933 = vmatpush1.msra.mxu0 0.0
    %934 = vmatprep.subr.mxu0 0.0
    %935 = vmatpush1.msra.mxu0 0.0
    %936 = vmatprep.subr.mxu0 0.0
    %937 = vmatpush1.msra.mxu0 0.0
    %938 = vmatprep.subr.mxu0 0.0
    %939 = vmatpush1.msra.mxu0 0.0
    %940 = vmatprep.subr.mxu0 0.0
    %941 = vmatpush1.msra.mxu0 0.0
    %942 = vmatprep.subr.mxu0 0.0
    %943 = vmatpush1.msra.mxu0 0.0
    %944 = vmatprep.subr.mxu0 0.0
    %945 = vmatpush1.msra.mxu0 0.0
    %946 = vmatprep.subr.mxu0 0.0
    %947 = vmatpush1.msra.mxu0 0.0
    %948 = vmatprep.subr.mxu0 0.0
    %949 = vmatpush1.msra.mxu0 0.0
    %950 = vmatprep.subr.mxu0 0.0
    %951 = vmatpush1.msra.mxu0 0.0
    %952 = vmatprep.subr.mxu0 0.0
    %953 = vmatpush1.msra.mxu0 0.0
    %954 = vmatprep.subr.mxu0 0.0
    %955 = vmatpush1.msra.mxu0 0.0
    %956 = vmatprep.subr.mxu0 0.0
    %957 = vmatpush1.msra.mxu0 0.0
    %958 = vmatprep.subr.mxu0 0.0
    %959 = vmatpush1.msra.mxu0 0.0
    %960 = vmatprep.subr.mxu0 0.0
    %961 = vmatpush1.msra.mxu0 0.0
    %962 = vmatprep.subr.mxu0 0.0
    %963 = vmatpush1.msra.mxu0 0.0
    %964 = vmatprep.mubr.f32.mxu0 0.0
    %965 = vmatmul.mubr.f32.gmra.mrb[0].mxu0 %v747
    %v966 = vpop.f32.mrb[0].mxu0
    %v967 = vadd.f32 %v898, %v966
    %v968 = vpop.f32.mrb[0].mxu0
    %969 = vmatprep.mubr.f32.mxu0 0.0
    %970 = vmatmul.mubr.f32.gmra.mrb[0].mxu0 %v750
    %v971 = vpop.f32.mrb[0].mxu0
    %v972 = vadd.f32 %v898, %v971
    %v973 = vpop.f32.mrb[0].mxu0
    %974 = vmatprep.mubr.f32.mxu0 0.0
    %975 = vmatmul.mubr.f32.gmra.mrb[0].mxu0 %v753
    %v976 = vpop.f32.mrb[0].mxu0
    %v977 = vadd.f32 %v898, %v976
    %v978 = vpop.f32.mrb[0].mxu0
    %979 = vmatprep.mubr.f32.mxu0 0.0
    %980 = vmatmul.mubr.f32.gmra.mrb[0].mxu0 %v756
    %v981 = vpop.f32.mrb[0].mxu0
    %v982 = vadd.f32 %v898, %v981
    %v983 = vpop.f32.mrb[0].mxu0
    %984 = vmatprep.mubr.f32.mxu0 0.0
    %985 = vmatmul.mubr.f32.gmra.mrb[0].mxu0 %v759
    %v986 = vpop.f32.mrb[0].mxu0
    %v987 = vadd.f32 %v898, %v986
    %v988 = vpop.f32.mrb[0].mxu0
    %989 = vmatprep.mubr.f32.mxu0 0.0
    %990 = vmatmul.mubr.f32.gmra.mrb[0].mxu0 %v762
    %v991 = vpop.f32.mrb[0].mxu0
    %v992 = vadd.f32 %v898, %v991
    %v993 = vpop.f32.mrb[0].mxu0
    %994 = vmatprep.mubr.f32.mxu0 0.0
    %995 = vmatmul.mubr.f32.gmra.mrb[0].mxu0 %v765
    %v996 = vpop.f32.mrb[0].mxu0
    %v997 = vadd.f32 %v898, %v996
    %v998 = vpop.f32.mrb[0].mxu0
    %999 = vmatprep.mubr.f32.mxu0 0.0
    %1000 = vmatmul.mubr.f32.gmra.mrb[0].mxu0 %v768
    %v1001 = vpop.f32.mrb[0].mxu0
    %v1002 = vadd.f32 %v898, %v1001
    %v1003 = vpop.f32.mrb[0].mxu0
    %1004 = vdwg.mxu0
    %s1005 = scalar_lea.vmem [#allocation2], 64
    %1006 = vst.msk [vmem:[%s1005] sm:$0xff] %vm301, %v967
    %1007 = vst.msk [vmem:[%s1005 + $0x8] sm:$0xff] %vm301, %v972
    %1008 = vst.msk [vmem:[%s1005 + $0x10] sm:$0xff] %vm301, %v977
    %1009 = vst.msk [vmem:[%s1005 + $0x18] sm:$0xff] %vm301, %v982
    %1010 = vst.msk [vmem:[%s1005 + $0x20] sm:$0xff] %vm301, %v987
    %1011 = vst.msk [vmem:[%s1005 + $0x28] sm:$0xff] %vm301, %v992
    %1012 = vst.msk [vmem:[%s1005 + $0x30] sm:$0xff] %vm301, %v997
    %1013 = vst.msk [vmem:[%s1005 + $0x38] sm:$0xff] %vm301, %v1002
    %s1014 = scalar_lea.vmem [#allocation9], 128
    %v1015 = vld [vmem:[%s1014] sm:$0xff]
    %v1016 = vld [vmem:[%s1014 + $0x8] sm:$0xff]
    %v1017 = vld [vmem:[%s1014 + $0x10] sm:$0xff]
    %v1018 = vld [vmem:[%s1014 + $0x18] sm:$0xff]
    %v1019 = vld [vmem:[%s1014 + $0x20] sm:$0xff]
    %v1020 = vld [vmem:[%s1014 + $0x28] sm:$0xff]
    %v1021 = vld [vmem:[%s1014 + $0x30] sm:$0xff]
    %v1022 = vld [vmem:[%s1014 + $0x38] sm:$0xff]
    %s1023 = scalar_lea.vmem %s10, 2
    %v1024 = vld [vmem:[%s1023] sm:$0x1]
    %v1026 = vlaneseq
    %v1027 = vshrl.u32 %v1026, 7
    %v1028 = vsub.s32 0, %v1027
    %v1029 = vrot.slane %v1024, %v1028
    %1031 = vmatprep.subr.mxu0 0.0
    %1032 = vmatpush1.msra.mxu0 %v1015
    %1033 = vmatprep.subr.mxu0 0.0
    %1034 = vmatpush1.msra.mxu0 %v1016
    %1035 = vmatprep.subr.mxu0 0.0
    %1036 = vmatpush1.msra.mxu0 %v1017
    %1037 = vmatprep.subr.mxu0 0.0
    %1038 = vmatpush1.msra.mxu0 %v1018
    %1039 = vmatprep.subr.mxu0 0.0
    %1040 = vmatpush1.msra.mxu0 %v1019
    %1041 = vmatprep.subr.mxu0 0.0
    %1042 = vmatpush1.msra.mxu0 %v1020
    %1043 = vmatprep.subr.mxu0 0.0
    %1044 = vmatpush1.msra.mxu0 %v1021
    %1045 = vmatprep.subr.mxu0 0.0
    %1046 = vmatpush1.msra.mxu0 %v1022
    %1047 = vmatprep.subr.mxu0 0.0
    %1048 = vmatpush1.msra.mxu0 0.0
    %1049 = vmatprep.subr.mxu0 0.0
    %1050 = vmatpush1.msra.mxu0 0.0
    %1051 = vmatprep.subr.mxu0 0.0
    %1052 = vmatpush1.msra.mxu0 0.0
    %1053 = vmatprep.subr.mxu0 0.0
    %1054 = vmatpush1.msra.mxu0 0.0
    %1055 = vmatprep.subr.mxu0 0.0
    %1056 = vmatpush1.msra.mxu0 0.0
    %1057 = vmatprep.subr.mxu0 0.0
    %1058 = vmatpush1.msra.mxu0 0.0
    %1059 = vmatprep.subr.mxu0 0.0
    %1060 = vmatpush1.msra.mxu0 0.0
    %1061 = vmatprep.subr.mxu0 0.0
    %1062 = vmatpush1.msra.mxu0 0.0
    %1063 = vmatprep.subr.mxu0 0.0
    %1064 = vmatpush1.msra.mxu0 0.0
    %1065 = vmatprep.subr.mxu0 0.0
    %1066 = vmatpush1.msra.mxu0 0.0
    %1067 = vmatprep.subr.mxu0 0.0
    %1068 = vmatpush1.msra.mxu0 0.0
    %1069 = vmatprep.subr.mxu0 0.0
    %1070 = vmatpush1.msra.mxu0 0.0
    %1071 = vmatprep.subr.mxu0 0.0
    %1072 = vmatpush1.msra.mxu0 0.0
    %1073 = vmatprep.subr.mxu0 0.0
    %1074 = vmatpush1.msra.mxu0 0.0
    %1075 = vmatprep.subr.mxu0 0.0
    %1076 = vmatpush1.msra.mxu0 0.0
    %1077 = vmatprep.subr.mxu0 0.0
    %1078 = vmatpush1.msra.mxu0 0.0
    %1079 = vmatprep.subr.mxu0 0.0
    %1080 = vmatpush1.msra.mxu0 0.0
    %1081 = vmatprep.subr.mxu0 0.0
    %1082 = vmatpush1.msra.mxu0 0.0
    %1083 = vmatprep.subr.mxu0 0.0
    %1084 = vmatpush1.msra.mxu0 0.0
    %1085 = vmatprep.subr.mxu0 0.0
    %1086 = vmatpush1.msra.mxu0 0.0
    %1087 = vmatprep.subr.mxu0 0.0
    %1088 = vmatpush1.msra.mxu0 0.0
    %1089 = vmatprep.subr.mxu0 0.0
    %1090 = vmatpush1.msra.mxu0 0.0
    %1091 = vmatprep.subr.mxu0 0.0
    %1092 = vmatpush1.msra.mxu0 0.0
    %1093 = vmatprep.subr.mxu0 0.0
    %1094 = vmatpush1.msra.mxu0 0.0
    %1095 = vmatprep.mubr.f32.mxu0 0.0
    %1096 = vmatmul.mubr.f32.gmra.mrb[0].mxu0 %v747
    %v1097 = vpop.f32.mrb[0].mxu0
    %v1098 = vadd.f32 %v1029, %v1097
    %v1099 = vpop.f32.mrb[0].mxu0
    %1100 = vmatprep.mubr.f32.mxu0 0.0
    %1101 = vmatmul.mubr.f32.gmra.mrb[0].mxu0 %v750
    %v1102 = vpop.f32.mrb[0].mxu0
    %v1103 = vadd.f32 %v1029, %v1102
    %v1104 = vpop.f32.mrb[0].mxu0
    %1105 = vmatprep.mubr.f32.mxu0 0.0
    %1106 = vmatmul.mubr.f32.gmra.mrb[0].mxu0 %v753
    %v1107 = vpop.f32.mrb[0].mxu0
    %v1108 = vadd.f32 %v1029, %v1107
    %v1109 = vpop.f32.mrb[0].mxu0
    %1110 = vmatprep.mubr.f32.mxu0 0.0
    %1111 = vmatmul.mubr.f32.gmra.mrb[0].mxu0 %v756
    %v1112 = vpop.f32.mrb[0].mxu0
    %v1113 = vadd.f32 %v1029, %v1112
    %v1114 = vpop.f32.mrb[0].mxu0
    %1115 = vmatprep.mubr.f32.mxu0 0.0
    %1116 = vmatmul.mubr.f32.gmra.mrb[0].mxu0 %v759
    %v1117 = vpop.f32.mrb[0].mxu0
    %v1118 = vadd.f32 %v1029, %v1117
    %v1119 = vpop.f32.mrb[0].mxu0
    %1120 = vmatprep.mubr.f32.mxu0 0.0
    %1121 = vmatmul.mubr.f32.gmra.mrb[0].mxu0 %v762
    %v1122 = vpop.f32.mrb[0].mxu0
    %v1123 = vadd.f32 %v1029, %v1122
    %v1124 = vpop.f32.mrb[0].mxu0
    %1125 = vmatprep.mubr.f32.mxu0 0.0
    %1126 = vmatmul.mubr.f32.gmra.mrb[0].mxu0 %v765
    %v1127 = vpop.f32.mrb[0].mxu0
    %v1128 = vadd.f32 %v1029, %v1127
    %v1129 = vpop.f32.mrb[0].mxu0
    %1130 = vmatprep.mubr.f32.mxu0 0.0
    %1131 = vmatmul.mubr.f32.gmra.mrb[0].mxu0 %v768
    %v1132 = vpop.f32.mrb[0].mxu0
    %v1133 = vadd.f32 %v1029, %v1132
    %v1134 = vpop.f32.mrb[0].mxu0
    %1135 = vdwg.mxu0
    %s1136 = scalar_lea.vmem [#allocation2], 128
    %1137 = vst.msk [vmem:[%s1136] sm:$0xff] %vm301, %v1098
    %1138 = vst.msk [vmem:[%s1136 + $0x8] sm:$0xff] %vm301, %v1103
    %1139 = vst.msk [vmem:[%s1136 + $0x10] sm:$0xff] %vm301, %v1108
    %1140 = vst.msk [vmem:[%s1136 + $0x18] sm:$0xff] %vm301, %v1113
    %1141 = vst.msk [vmem:[%s1136 + $0x20] sm:$0xff] %vm301, %v1118
    %1142 = vst.msk [vmem:[%s1136 + $0x28] sm:$0xff] %vm301, %v1123
    %1143 = vst.msk [vmem:[%s1136 + $0x30] sm:$0xff] %vm301, %v1128
    %1144 = vst.msk [vmem:[%s1136 + $0x38] sm:$0xff] %vm301, %v1133
    %v1145 = vld [vmem:[#allocation2] sm:$0xff]
    %s1146 = sadd.s32 0, 64
    %s1147 = scalar_lea.vmem [#allocation2], %s1146
    %v1148 = vld [vmem:[%s1147] sm:$0xff]
    %s1149 = sadd.s32 0, 128
    %s1150 = scalar_lea.vmem [#allocation2], %s1149
    %v1151 = vld [vmem:[%s1150] sm:$0xff]
    %v1152 = vld [vmem:[#allocation11] sm:$0xff]
    %v1153 = vld [vmem:[#allocation11 + $0x8] sm:$0xff]
    %v1154 = vld [vmem:[#allocation11 + $0x10] sm:$0xff]
    %v1155 = vld [vmem:[#allocation11 + $0x18] sm:$0xff]
    %v1156 = vld [vmem:[#allocation11 + $0x20] sm:$0xff]
    %v1157 = vld [vmem:[#allocation11 + $0x28] sm:$0xff]
    %v1158 = vld [vmem:[#allocation11 + $0x30] sm:$0xff]
    %v1159 = vld [vmem:[#allocation11 + $0x38] sm:$0xff]
    %v1160 = vld [vmem:[%s12] sm:$0x1]
    %v1162 = vlaneseq
    %v1163 = vshrl.u32 %v1162, 7
    %v1164 = vsub.s32 0, %v1163
    %v1165 = vrot.slane %v1160, %v1164
    %v1168 = vsel %vm301, 0.0, 0
    %1170 = vmatprep.subr.mxu0 0.0
    %1171 = vmatpush1.msra.mxu0 %v1152
    %1172 = vmatprep.subr.mxu0 0.0
    %1173 = vmatpush1.msra.mxu0 %v1153
    %1174 = vmatprep.subr.mxu0 0.0
    %1175 = vmatpush1.msra.mxu0 %v1154
    %1176 = vmatprep.subr.mxu0 0.0
    %1177 = vmatpush1.msra.mxu0 %v1155
    %1178 = vmatprep.subr.mxu0 0.0
    %1179 = vmatpush1.msra.mxu0 %v1156
    %1180 = vmatprep.subr.mxu0 0.0
    %1181 = vmatpush1.msra.mxu0 %v1157
    %1182 = vmatprep.subr.mxu0 0.0
    %1183 = vmatpush1.msra.mxu0 %v1158
    %1184 = vmatprep.subr.mxu0 0.0
    %1185 = vmatpush1.msra.mxu0 %v1159
    %1186 = vmatprep.subr.mxu0 0.0
    %1187 = vmatpush1.msra.mxu0 0.0
    %1188 = vmatprep.subr.mxu0 0.0
    %1189 = vmatpush1.msra.mxu0 0.0
    %1190 = vmatprep.subr.mxu0 0.0
    %1191 = vmatpush1.msra.mxu0 0.0
    %1192 = vmatprep.subr.mxu0 0.0
    %1193 = vmatpush1.msra.mxu0 0.0
    %1194 = vmatprep.subr.mxu0 0.0
    %1195 = vmatpush1.msra.mxu0 0.0
    %1196 = vmatprep.subr.mxu0 0.0
    %1197 = vmatpush1.msra.mxu0 0.0
    %1198 = vmatprep.subr.mxu0 0.0
    %1199 = vmatpush1.msra.mxu0 0.0
    %1200 = vmatprep.subr.mxu0 0.0
    %1201 = vmatpush1.msra.mxu0 0.0
    %1202 = vmatprep.subr.mxu0 0.0
    %1203 = vmatpush1.msra.mxu0 0.0
    %1204 = vmatprep.subr.mxu0 0.0
    %1205 = vmatpush1.msra.mxu0 0.0
    %1206 = vmatprep.subr.mxu0 0.0
    %1207 = vmatpush1.msra.mxu0 0.0
    %1208 = vmatprep.subr.mxu0 0.0
    %1209 = vmatpush1.msra.mxu0 0.0
    %1210 = vmatprep.subr.mxu0 0.0
    %1211 = vmatpush1.msra.mxu0 0.0
    %1212 = vmatprep.subr.mxu0 0.0
    %1213 = vmatpush1.msra.mxu0 0.0
    %1214 = vmatprep.subr.mxu0 0.0
    %1215 = vmatpush1.msra.mxu0 0.0
    %1216 = vmatprep.subr.mxu0 0.0
    %1217 = vmatpush1.msra.mxu0 0.0
    %1218 = vmatprep.subr.mxu0 0.0
    %1219 = vmatpush1.msra.mxu0 0.0
    %1220 = vmatprep.subr.mxu0 0.0
    %1221 = vmatpush1.msra.mxu0 0.0
    %1222 = vmatprep.subr.mxu0 0.0
    %1223 = vmatpush1.msra.mxu0 0.0
    %1224 = vmatprep.subr.mxu0 0.0
    %1225 = vmatpush1.msra.mxu0 0.0
    %1226 = vmatprep.subr.mxu0 0.0
    %1227 = vmatpush1.msra.mxu0 0.0
    %1228 = vmatprep.subr.mxu0 0.0
    %1229 = vmatpush1.msra.mxu0 0.0
    %1230 = vmatprep.subr.mxu0 0.0
    %1231 = vmatpush1.msra.mxu0 0.0
    %1232 = vmatprep.subr.mxu0 0.0
    %1233 = vmatpush1.msra.mxu0 0.0
    %1234 = vmatprep.mubr.f32.mxu0 0.0
    %1235 = vmatmul.mubr.f32.gmra.mrb[0].mxu0 %v1168
    %v1236 = vpop.f32.mrb[0].mxu0
    %v1237 = vadd.f32 %v1165, %v1236
    %v1238 = vpop.f32.mrb[0].mxu0
    %1239 = vdwg.mxu0
    %s1240 = scalar_lea.vmem [#allocation11], 64
    %v1241 = vld [vmem:[%s1240] sm:$0xff]
    %v1242 = vld [vmem:[%s1240 + $0x8] sm:$0xff]
    %v1243 = vld [vmem:[%s1240 + $0x10] sm:$0xff]
    %v1244 = vld [vmem:[%s1240 + $0x18] sm:$0xff]
    %v1245 = vld [vmem:[%s1240 + $0x20] sm:$0xff]
    %v1246 = vld [vmem:[%s1240 + $0x28] sm:$0xff]
    %v1247 = vld [vmem:[%s1240 + $0x30] sm:$0xff]
    %v1248 = vld [vmem:[%s1240 + $0x38] sm:$0xff]
    %s1249 = scalar_lea.vmem %s12, 1
    %v1250 = vld [vmem:[%s1249] sm:$0x1]
    %v1252 = vlaneseq
    %v1253 = vshrl.u32 %v1252, 7
    %v1254 = vsub.s32 0, %v1253
    %v1255 = vrot.slane %v1250, %v1254
    %1257 = vmatprep.subr.mxu0 0.0
    %1258 = vmatpush1.msra.mxu0 %v1241
    %1259 = vmatprep.subr.mxu0 0.0
    %1260 = vmatpush1.msra.mxu0 %v1242
    %1261 = vmatprep.subr.mxu0 0.0
    %1262 = vmatpush1.msra.mxu0 %v1243
    %1263 = vmatprep.subr.mxu0 0.0
    %1264 = vmatpush1.msra.mxu0 %v1244
    %1265 = vmatprep.subr.mxu0 0.0
    %1266 = vmatpush1.msra.mxu0 %v1245
    %1267 = vmatprep.subr.mxu0 0.0
    %1268 = vmatpush1.msra.mxu0 %v1246
    %1269 = vmatprep.subr.mxu0 0.0
    %1270 = vmatpush1.msra.mxu0 %v1247
    %1271 = vmatprep.subr.mxu0 0.0
    %1272 = vmatpush1.msra.mxu0 %v1248
    %1273 = vmatprep.subr.mxu0 0.0
    %1274 = vmatpush1.msra.mxu0 0.0
    %1275 = vmatprep.subr.mxu0 0.0
    %1276 = vmatpush1.msra.mxu0 0.0
    %1277 = vmatprep.subr.mxu0 0.0
    %1278 = vmatpush1.msra.mxu0 0.0
    %1279 = vmatprep.subr.mxu0 0.0
    %1280 = vmatpush1.msra.mxu0 0.0
    %1281 = vmatprep.subr.mxu0 0.0
    %1282 = vmatpush1.msra.mxu0 0.0
    %1283 = vmatprep.subr.mxu0 0.0
    %1284 = vmatpush1.msra.mxu0 0.0
    %1285 = vmatprep.subr.mxu0 0.0
    %1286 = vmatpush1.msra.mxu0 0.0
    %1287 = vmatprep.subr.mxu0 0.0
    %1288 = vmatpush1.msra.mxu0 0.0
    %1289 = vmatprep.subr.mxu0 0.0
    %1290 = vmatpush1.msra.mxu0 0.0
    %1291 = vmatprep.subr.mxu0 0.0
    %1292 = vmatpush1.msra.mxu0 0.0
    %1293 = vmatprep.subr.mxu0 0.0
    %1294 = vmatpush1.msra.mxu0 0.0
    %1295 = vmatprep.subr.mxu0 0.0
    %1296 = vmatpush1.msra.mxu0 0.0
    %1297 = vmatprep.subr.mxu0 0.0
    %1298 = vmatpush1.msra.mxu0 0.0
    %1299 = vmatprep.subr.mxu0 0.0
    %1300 = vmatpush1.msra.mxu0 0.0
    %1301 = vmatprep.subr.mxu0 0.0
    %1302 = vmatpush1.msra.mxu0 0.0
    %1303 = vmatprep.subr.mxu0 0.0
    %1304 = vmatpush1.msra.mxu0 0.0
    %1305 = vmatprep.subr.mxu0 0.0
    %1306 = vmatpush1.msra.mxu0 0.0
    %1307 = vmatprep.subr.mxu0 0.0
    %1308 = vmatpush1.msra.mxu0 0.0
    %1309 = vmatprep.subr.mxu0 0.0
    %1310 = vmatpush1.msra.mxu0 0.0
    %1311 = vmatprep.subr.mxu0 0.0
    %1312 = vmatpush1.msra.mxu0 0.0
    %1313 = vmatprep.subr.mxu0 0.0
    %1314 = vmatpush1.msra.mxu0 0.0
    %1315 = vmatprep.subr.mxu0 0.0
    %1316 = vmatpush1.msra.mxu0 0.0
    %1317 = vmatprep.subr.mxu0 0.0
    %1318 = vmatpush1.msra.mxu0 0.0
    %1319 = vmatprep.subr.mxu0 0.0
    %1320 = vmatpush1.msra.mxu0 0.0
    %1321 = vmatprep.mubr.f32.mxu0 0.0
    %1322 = vmatmul.mubr.f32.gmra.mrb[0].mxu0 %v1168
    %v1323 = vpop.f32.mrb[0].mxu0
    %v1324 = vadd.f32 %v1255, %v1323
    %v1325 = vpop.f32.mrb[0].mxu0
    %1326 = vdwg.mxu0
    %s1327 = scalar_lea.vmem [#allocation11], 128
    %v1328 = vld [vmem:[%s1327] sm:$0xff]
    %v1329 = vld [vmem:[%s1327 + $0x8] sm:$0xff]
    %v1330 = vld [vmem:[%s1327 + $0x10] sm:$0xff]
    %v1331 = vld [vmem:[%s1327 + $0x18] sm:$0xff]
    %v1332 = vld [vmem:[%s1327 + $0x20] sm:$0xff]
    %v1333 = vld [vmem:[%s1327 + $0x28] sm:$0xff]
    %v1334 = vld [vmem:[%s1327 + $0x30] sm:$0xff]
    %v1335 = vld [vmem:[%s1327 + $0x38] sm:$0xff]
    %s1336 = scalar_lea.vmem %s12, 2
    %v1337 = vld [vmem:[%s1336] sm:$0x1]
    %v1339 = vlaneseq
    %v1340 = vshrl.u32 %v1339, 7
    %v1341 = vsub.s32 0, %v1340
    %v1342 = vrot.slane %v1337, %v1341
    %1344 = vmatprep.subr.mxu0 0.0
    %1345 = vmatpush1.msra.mxu0 %v1328
    %1346 = vmatprep.subr.mxu0 0.0
    %1347 = vmatpush1.msra.mxu0 %v1329
    %1348 = vmatprep.subr.mxu0 0.0
    %1349 = vmatpush1.msra.mxu0 %v1330
    %1350 = vmatprep.subr.mxu0 0.0
    %1351 = vmatpush1.msra.mxu0 %v1331
    %1352 = vmatprep.subr.mxu0 0.0
    %1353 = vmatpush1.msra.mxu0 %v1332
    %1354 = vmatprep.subr.mxu0 0.0
    %1355 = vmatpush1.msra.mxu0 %v1333
    %1356 = vmatprep.subr.mxu0 0.0
    %1357 = vmatpush1.msra.mxu0 %v1334
    %1358 = vmatprep.subr.mxu0 0.0
    %1359 = vmatpush1.msra.mxu0 %v1335
    %1360 = vmatprep.subr.mxu0 0.0
    %1361 = vmatpush1.msra.mxu0 0.0
    %1362 = vmatprep.subr.mxu0 0.0
    %1363 = vmatpush1.msra.mxu0 0.0
    %1364 = vmatprep.subr.mxu0 0.0
    %1365 = vmatpush1.msra.mxu0 0.0
    %1366 = vmatprep.subr.mxu0 0.0
    %1367 = vmatpush1.msra.mxu0 0.0
    %1368 = vmatprep.subr.mxu0 0.0
    %1369 = vmatpush1.msra.mxu0 0.0
    %1370 = vmatprep.subr.mxu0 0.0
    %1371 = vmatpush1.msra.mxu0 0.0
    %1372 = vmatprep.subr.mxu0 0.0
    %1373 = vmatpush1.msra.mxu0 0.0
    %1374 = vmatprep.subr.mxu0 0.0
    %1375 = vmatpush1.msra.mxu0 0.0
    %1376 = vmatprep.subr.mxu0 0.0
    %1377 = vmatpush1.msra.mxu0 0.0
    %1378 = vmatprep.subr.mxu0 0.0
    %1379 = vmatpush1.msra.mxu0 0.0
    %1380 = vmatprep.subr.mxu0 0.0
    %1381 = vmatpush1.msra.mxu0 0.0
    %1382 = vmatprep.subr.mxu0 0.0
    %1383 = vmatpush1.msra.mxu0 0.0
    %1384 = vmatprep.subr.mxu0 0.0
    %1385 = vmatpush1.msra.mxu0 0.0
    %1386 = vmatprep.subr.mxu0 0.0
    %1387 = vmatpush1.msra.mxu0 0.0
    %1388 = vmatprep.subr.mxu0 0.0
    %1389 = vmatpush1.msra.mxu0 0.0
    %1390 = vmatprep.subr.mxu0 0.0
    %1391 = vmatpush1.msra.mxu0 0.0
    %1392 = vmatprep.subr.mxu0 0.0
    %1393 = vmatpush1.msra.mxu0 0.0
    %1394 = vmatprep.subr.mxu0 0.0
    %1395 = vmatpush1.msra.mxu0 0.0
    %1396 = vmatprep.subr.mxu0 0.0
    %1397 = vmatpush1.msra.mxu0 0.0
    %1398 = vmatprep.subr.mxu0 0.0
    %1399 = vmatpush1.msra.mxu0 0.0
    %1400 = vmatprep.subr.mxu0 0.0
    %1401 = vmatpush1.msra.mxu0 0.0
    %1402 = vmatprep.subr.mxu0 0.0
    %1403 = vmatpush1.msra.mxu0 0.0
    %1404 = vmatprep.subr.mxu0 0.0
    %1405 = vmatpush1.msra.mxu0 0.0
    %1406 = vmatprep.subr.mxu0 0.0
    %1407 = vmatpush1.msra.mxu0 0.0
    %1408 = vmatprep.mubr.f32.mxu0 0.0
    %1409 = vmatmul.mubr.f32.gmra.mrb[0].mxu0 %v1168
    %v1410 = vpop.f32.mrb[0].mxu0
    %v1411 = vadd.f32 %v1342, %v1410
    %v1412 = vpop.f32.mrb[0].mxu0
    %1413 = vdwg.mxu0
    %v1414 = vadd.f32 %v1145, %v1237
    %v1415 = vxor.u32 %v1414, 2147483648
    %v1416 = vmul.f32 %v1415, 1.442695
    %v1417 = vpow.pop %v1416
    %v1418 = vadd.f32 %v1417, 1.0
    %v1419 = vrcp.pop %v1418
    %v1420 = vmul.f32 1.0, %v1419
    %v1421 = vadd.f32 %v1148, %v1324
    %v1422 = vxor.u32 %v1421, 2147483648
    %v1423 = vmul.f32 %v1422, 1.442695
    %v1424 = vpow.pop %v1423
    %v1425 = vadd.f32 %v1424, 1.0
    %v1426 = vrcp.pop %v1425
    %v1427 = vmul.f32 1.0, %v1426
    %v1428 = vmul.f32 %v1420, %v1411
    %v1429 = vadd.f32 %v1151, %v1428
    %v1430 = vtanh.pop %v1429
    %v1431 = vsub.f32 1.0, %v1427
    %v1432 = vmul.f32 %v1431, %v1430
    %v1433 = vmul.f32 %v1427, 0.0
    %v1434 = vadd.f32 %v1432, %v1433
    %v1435 = vld [vmem:[#allocation12] sm:$0xff]
    %v1436 = vld [vmem:[#allocation12 + $0x8] sm:$0xff]
    %v1437 = vld [vmem:[#allocation12 + $0x10] sm:$0xff]
    %v1438 = vld [vmem:[#allocation12 + $0x18] sm:$0xff]
    %v1439 = vld [vmem:[#allocation12 + $0x20] sm:$0xff]
    %v1440 = vld [vmem:[#allocation12 + $0x28] sm:$0xff]
    %v1441 = vld [vmem:[#allocation12 + $0x30] sm:$0xff]
    %v1442 = vld [vmem:[#allocation12 + $0x38] sm:$0xff]
    %v1443 = vld [vmem:[%s14] sm:$0x1]
    %v1445 = vlaneseq
    %v1446 = vshrl.u32 %v1445, 7
    %v1447 = vsub.s32 0, %v1446
    %v1448 = vrot.slane %v1443, %v1447
    %v1451 = vsel %vm301, %v1434, 0
    %1453 = vmatprep.subr.mxu0 0.0
    %1454 = vmatpush1.msra.mxu0 %v1435
    %1455 = vmatprep.subr.mxu0 0.0
    %1456 = vmatpush1.msra.mxu0 %v1436
    %1457 = vmatprep.subr.mxu0 0.0
    %1458 = vmatpush1.msra.mxu0 %v1437
    %1459 = vmatprep.subr.mxu0 0.0
    %1460 = vmatpush1.msra.mxu0 %v1438
    %1461 = vmatprep.subr.mxu0 0.0
    %1462 = vmatpush1.msra.mxu0 %v1439
    %1463 = vmatprep.subr.mxu0 0.0
    %1464 = vmatpush1.msra.mxu0 %v1440
    %1465 = vmatprep.subr.mxu0 0.0
    %1466 = vmatpush1.msra.mxu0 %v1441
    %1467 = vmatprep.subr.mxu0 0.0
    %1468 = vmatpush1.msra.mxu0 %v1442
    %1469 = vmatprep.subr.mxu0 0.0
    %1470 = vmatpush1.msra.mxu0 0.0
    %1471 = vmatprep.subr.mxu0 0.0
    %1472 = vmatpush1.msra.mxu0 0.0
    %1473 = vmatprep.subr.mxu0 0.0
    %1474 = vmatpush1.msra.mxu0 0.0
    %1475 = vmatprep.subr.mxu0 0.0
    %1476 = vmatpush1.msra.mxu0 0.0
    %1477 = vmatprep.subr.mxu0 0.0
    %1478 = vmatpush1.msra.mxu0 0.0
    %1479 = vmatprep.subr.mxu0 0.0
    %1480 = vmatpush1.msra.mxu0 0.0
    %1481 = vmatprep.subr.mxu0 0.0
    %1482 = vmatpush1.msra.mxu0 0.0
    %1483 = vmatprep.subr.mxu0 0.0
    %1484 = vmatpush1.msra.mxu0 0.0
    %1485 = vmatprep.subr.mxu0 0.0
    %1486 = vmatpush1.msra.mxu0 0.0
    %1487 = vmatprep.subr.mxu0 0.0
    %1488 = vmatpush1.msra.mxu0 0.0
    %1489 = vmatprep.subr.mxu0 0.0
    %1490 = vmatpush1.msra.mxu0 0.0
    %1491 = vmatprep.subr.mxu0 0.0
    %1492 = vmatpush1.msra.mxu0 0.0
    %1493 = vmatprep.subr.mxu0 0.0
    %1494 = vmatpush1.msra.mxu0 0.0
    %1495 = vmatprep.subr.mxu0 0.0
    %1496 = vmatpush1.msra.mxu0 0.0
    %1497 = vmatprep.subr.mxu0 0.0
    %1498 = vmatpush1.msra.mxu0 0.0
    %1499 = vmatprep.subr.mxu0 0.0
    %1500 = vmatpush1.msra.mxu0 0.0
    %1501 = vmatprep.subr.mxu0 0.0
    %1502 = vmatpush1.msra.mxu0 0.0
    %1503 = vmatprep.subr.mxu0 0.0
    %1504 = vmatpush1.msra.mxu0 0.0
    %1505 = vmatprep.subr.mxu0 0.0
    %1506 = vmatpush1.msra.mxu0 0.0
    %1507 = vmatprep.subr.mxu0 0.0
    %1508 = vmatpush1.msra.mxu0 0.0
    %1509 = vmatprep.subr.mxu0 0.0
    %1510 = vmatpush1.msra.mxu0 0.0
    %1511 = vmatprep.subr.mxu0 0.0
    %1512 = vmatpush1.msra.mxu0 0.0
    %1513 = vmatprep.subr.mxu0 0.0
    %1514 = vmatpush1.msra.mxu0 0.0
    %1515 = vmatprep.subr.mxu0 0.0
    %1516 = vmatpush1.msra.mxu0 0.0
    %1517 = vmatprep.mubr.f32.mxu0 0.0
    %1518 = vmatmul.mubr.f32.gmra.mrb[0].mxu0 %v1451
    %v1519 = vpop.f32.mrb[0].mxu0
    %v1520 = vadd.f32 %v1448, %v1519
    %v1521 = vpop.f32.mrb[0].mxu0
    %1522 = vdwg.mxu0
    %s1523 = scalar_lea.vmem [#allocation12], 64
    %v1524 = vld [vmem:[%s1523] sm:$0xff]
    %v1525 = vld [vmem:[%s1523 + $0x8] sm:$0xff]
    %v1526 = vld [vmem:[%s1523 + $0x10] sm:$0xff]
    %v1527 = vld [vmem:[%s1523 + $0x18] sm:$0xff]
    %v1528 = vld [vmem:[%s1523 + $0x20] sm:$0xff]
    %v1529 = vld [vmem:[%s1523 + $0x28] sm:$0xff]
    %v1530 = vld [vmem:[%s1523 + $0x30] sm:$0xff]
    %v1531 = vld [vmem:[%s1523 + $0x38] sm:$0xff]
    %s1532 = scalar_lea.vmem %s14, 1
    %v1533 = vld [vmem:[%s1532] sm:$0x1]
    %v1535 = vlaneseq
    %v1536 = vshrl.u32 %v1535, 7
    %v1537 = vsub.s32 0, %v1536
    %v1538 = vrot.slane %v1533, %v1537
    %1540 = vmatprep.subr.mxu0 0.0
    %1541 = vmatpush1.msra.mxu0 %v1524
    %1542 = vmatprep.subr.mxu0 0.0
    %1543 = vmatpush1.msra.mxu0 %v1525
    %1544 = vmatprep.subr.mxu0 0.0
    %1545 = vmatpush1.msra.mxu0 %v1526
    %1546 = vmatprep.subr.mxu0 0.0
    %1547 = vmatpush1.msra.mxu0 %v1527
    %1548 = vmatprep.subr.mxu0 0.0
    %1549 = vmatpush1.msra.mxu0 %v1528
    %1550 = vmatprep.subr.mxu0 0.0
    %1551 = vmatpush1.msra.mxu0 %v1529
    %1552 = vmatprep.subr.mxu0 0.0
    %1553 = vmatpush1.msra.mxu0 %v1530
    %1554 = vmatprep.subr.mxu0 0.0
    %1555 = vmatpush1.msra.mxu0 %v1531
    %1556 = vmatprep.subr.mxu0 0.0
    %1557 = vmatpush1.msra.mxu0 0.0
    %1558 = vmatprep.subr.mxu0 0.0
    %1559 = vmatpush1.msra.mxu0 0.0
    %1560 = vmatprep.subr.mxu0 0.0
    %1561 = vmatpush1.msra.mxu0 0.0
    %1562 = vmatprep.subr.mxu0 0.0
    %1563 = vmatpush1.msra.mxu0 0.0
    %1564 = vmatprep.subr.mxu0 0.0
    %1565 = vmatpush1.msra.mxu0 0.0
    %1566 = vmatprep.subr.mxu0 0.0
    %1567 = vmatpush1.msra.mxu0 0.0
    %1568 = vmatprep.subr.mxu0 0.0
    %1569 = vmatpush1.msra.mxu0 0.0
    %1570 = vmatprep.subr.mxu0 0.0
    %1571 = vmatpush1.msra.mxu0 0.0
    %1572 = vmatprep.subr.mxu0 0.0
    %1573 = vmatpush1.msra.mxu0 0.0
    %1574 = vmatprep.subr.mxu0 0.0
    %1575 = vmatpush1.msra.mxu0 0.0
    %1576 = vmatprep.subr.mxu0 0.0
    %1577 = vmatpush1.msra.mxu0 0.0
    %1578 = vmatprep.subr.mxu0 0.0
    %1579 = vmatpush1.msra.mxu0 0.0
    %1580 = vmatprep.subr.mxu0 0.0
    %1581 = vmatpush1.msra.mxu0 0.0
    %1582 = vmatprep.subr.mxu0 0.0
    %1583 = vmatpush1.msra.mxu0 0.0
    %1584 = vmatprep.subr.mxu0 0.0
    %1585 = vmatpush1.msra.mxu0 0.0
    %1586 = vmatprep.subr.mxu0 0.0
    %1587 = vmatpush1.msra.mxu0 0.0
    %1588 = vmatprep.subr.mxu0 0.0
    %1589 = vmatpush1.msra.mxu0 0.0
    %1590 = vmatprep.subr.mxu0 0.0
    %1591 = vmatpush1.msra.mxu0 0.0
    %1592 = vmatprep.subr.mxu0 0.0
    %1593 = vmatpush1.msra.mxu0 0.0
    %1594 = vmatprep.subr.mxu0 0.0
    %1595 = vmatpush1.msra.mxu0 0.0
    %1596 = vmatprep.subr.mxu0 0.0
    %1597 = vmatpush1.msra.mxu0 0.0
    %1598 = vmatprep.subr.mxu0 0.0
    %1599 = vmatpush1.msra.mxu0 0.0
    %1600 = vmatprep.subr.mxu0 0.0
    %1601 = vmatpush1.msra.mxu0 0.0
    %1602 = vmatprep.subr.mxu0 0.0
    %1603 = vmatpush1.msra.mxu0 0.0
    %1604 = vmatprep.mubr.f32.mxu0 0.0
    %1605 = vmatmul.mubr.f32.gmra.mrb[0].mxu0 %v1451
    %v1606 = vpop.f32.mrb[0].mxu0
    %v1607 = vadd.f32 %v1538, %v1606
    %v1608 = vpop.f32.mrb[0].mxu0
    %1609 = vdwg.mxu0
    %s1610 = scalar_lea.vmem [#allocation12], 128
    %v1611 = vld [vmem:[%s1610] sm:$0xff]
    %v1612 = vld [vmem:[%s1610 + $0x8] sm:$0xff]
    %v1613 = vld [vmem:[%s1610 + $0x10] sm:$0xff]
    %v1614 = vld [vmem:[%s1610 + $0x18] sm:$0xff]
    %v1615 = vld [vmem:[%s1610 + $0x20] sm:$0xff]
    %v1616 = vld [vmem:[%s1610 + $0x28] sm:$0xff]
    %v1617 = vld [vmem:[%s1610 + $0x30] sm:$0xff]
    %v1618 = vld [vmem:[%s1610 + $0x38] sm:$0xff]
    %s1619 = scalar_lea.vmem %s14, 2
    %v1620 = vld [vmem:[%s1619] sm:$0x1]
    %v1622 = vlaneseq
    %v1623 = vshrl.u32 %v1622, 7
    %v1624 = vsub.s32 0, %v1623
    %v1625 = vrot.slane %v1620, %v1624
    %1627 = vmatprep.subr.mxu0 0.0
    %1628 = vmatpush1.msra.mxu0 %v1611
    %1629 = vmatprep.subr.mxu0 0.0
    %1630 = vmatpush1.msra.mxu0 %v1612
    %1631 = vmatprep.subr.mxu0 0.0
    %1632 = vmatpush1.msra.mxu0 %v1613
    %1633 = vmatprep.subr.mxu0 0.0
    %1634 = vmatpush1.msra.mxu0 %v1614
    %1635 = vmatprep.subr.mxu0 0.0
    %1636 = vmatpush1.msra.mxu0 %v1615
    %1637 = vmatprep.subr.mxu0 0.0
    %1638 = vmatpush1.msra.mxu0 %v1616
    %1639 = vmatprep.subr.mxu0 0.0
    %1640 = vmatpush1.msra.mxu0 %v1617
    %1641 = vmatprep.subr.mxu0 0.0
    %1642 = vmatpush1.msra.mxu0 %v1618
    %1643 = vmatprep.subr.mxu0 0.0
    %1644 = vmatpush1.msra.mxu0 0.0
    %1645 = vmatprep.subr.mxu0 0.0
    %1646 = vmatpush1.msra.mxu0 0.0
    %1647 = vmatprep.subr.mxu0 0.0
    %1648 = vmatpush1.msra.mxu0 0.0
    %1649 = vmatprep.subr.mxu0 0.0
    %1650 = vmatpush1.msra.mxu0 0.0
    %1651 = vmatprep.subr.mxu0 0.0
    %1652 = vmatpush1.msra.mxu0 0.0
    %1653 = vmatprep.subr.mxu0 0.0
    %1654 = vmatpush1.msra.mxu0 0.0
    %1655 = vmatprep.subr.mxu0 0.0
    %1656 = vmatpush1.msra.mxu0 0.0
    %1657 = vmatprep.subr.mxu0 0.0
    %1658 = vmatpush1.msra.mxu0 0.0
    %1659 = vmatprep.subr.mxu0 0.0
    %1660 = vmatpush1.msra.mxu0 0.0
    %1661 = vmatprep.subr.mxu0 0.0
    %1662 = vmatpush1.msra.mxu0 0.0
    %1663 = vmatprep.subr.mxu0 0.0
    %1664 = vmatpush1.msra.mxu0 0.0
    %1665 = vmatprep.subr.mxu0 0.0
    %1666 = vmatpush1.msra.mxu0 0.0
    %1667 = vmatprep.subr.mxu0 0.0
    %1668 = vmatpush1.msra.mxu0 0.0
    %1669 = vmatprep.subr.mxu0 0.0
    %1670 = vmatpush1.msra.mxu0 0.0
    %1671 = vmatprep.subr.mxu0 0.0
    %1672 = vmatpush1.msra.mxu0 0.0
    %1673 = vmatprep.subr.mxu0 0.0
    %1674 = vmatpush1.msra.mxu0 0.0
    %1675 = vmatprep.subr.mxu0 0.0
    %1676 = vmatpush1.msra.mxu0 0.0
    %1677 = vmatprep.subr.mxu0 0.0
    %1678 = vmatpush1.msra.mxu0 0.0
    %1679 = vmatprep.subr.mxu0 0.0
    %1680 = vmatpush1.msra.mxu0 0.0
    %1681 = vmatprep.subr.mxu0 0.0
    %1682 = vmatpush1.msra.mxu0 0.0
    %1683 = vmatprep.subr.mxu0 0.0
    %1684 = vmatpush1.msra.mxu0 0.0
    %1685 = vmatprep.subr.mxu0 0.0
    %1686 = vmatpush1.msra.mxu0 0.0
    %1687 = vmatprep.subr.mxu0 0.0
    %1688 = vmatpush1.msra.mxu0 0.0
    %1689 = vmatprep.subr.mxu0 0.0
    %1690 = vmatpush1.msra.mxu0 0.0
    %1691 = vmatprep.mubr.f32.mxu0 0.0
    %1692 = vmatmul.mubr.f32.gmra.mrb[0].mxu0 %v1451
    %v1693 = vpop.f32.mrb[0].mxu0
    %v1694 = vadd.f32 %v1625, %v1693
    %v1695 = vpop.f32.mrb[0].mxu0
    %1696 = vdwg.mxu0
    %v1697 = vld [vmem:[#allocation14] sm:$0xff]
    %v1698 = vld [vmem:[#allocation14 + $0x8] sm:$0xff]
    %v1699 = vld [vmem:[#allocation14 + $0x10] sm:$0xff]
    %v1700 = vld [vmem:[#allocation14 + $0x18] sm:$0xff]
    %v1701 = vld [vmem:[#allocation14 + $0x20] sm:$0xff]
    %v1702 = vld [vmem:[#allocation14 + $0x28] sm:$0xff]
    %v1703 = vld [vmem:[#allocation14 + $0x30] sm:$0xff]
    %v1704 = vld [vmem:[#allocation14 + $0x38] sm:$0xff]
    %v1705 = vld [vmem:[%s16] sm:$0x1]
    %v1707 = vlaneseq
    %v1708 = vshrl.u32 %v1707, 7
    %v1709 = vsub.s32 0, %v1708
    %v1710 = vrot.slane %v1705, %v1709
    %1712 = vmatprep.subr.mxu0 0.0
    %1713 = vmatpush1.msra.mxu0 %v1697
    %1714 = vmatprep.subr.mxu0 0.0
    %1715 = vmatpush1.msra.mxu0 %v1698
    %1716 = vmatprep.subr.mxu0 0.0
    %1717 = vmatpush1.msra.mxu0 %v1699
    %1718 = vmatprep.subr.mxu0 0.0
    %1719 = vmatpush1.msra.mxu0 %v1700
    %1720 = vmatprep.subr.mxu0 0.0
    %1721 = vmatpush1.msra.mxu0 %v1701
    %1722 = vmatprep.subr.mxu0 0.0
    %1723 = vmatpush1.msra.mxu0 %v1702
    %1724 = vmatprep.subr.mxu0 0.0
    %1725 = vmatpush1.msra.mxu0 %v1703
    %1726 = vmatprep.subr.mxu0 0.0
    %1727 = vmatpush1.msra.mxu0 %v1704
    %1728 = vmatprep.subr.mxu0 0.0
    %1729 = vmatpush1.msra.mxu0 0.0
    %1730 = vmatprep.subr.mxu0 0.0
    %1731 = vmatpush1.msra.mxu0 0.0
    %1732 = vmatprep.subr.mxu0 0.0
    %1733 = vmatpush1.msra.mxu0 0.0
    %1734 = vmatprep.subr.mxu0 0.0
    %1735 = vmatpush1.msra.mxu0 0.0
    %1736 = vmatprep.subr.mxu0 0.0
    %1737 = vmatpush1.msra.mxu0 0.0
    %1738 = vmatprep.subr.mxu0 0.0
    %1739 = vmatpush1.msra.mxu0 0.0
    %1740 = vmatprep.subr.mxu0 0.0
    %1741 = vmatpush1.msra.mxu0 0.0
    %1742 = vmatprep.subr.mxu0 0.0
    %1743 = vmatpush1.msra.mxu0 0.0
    %1744 = vmatprep.subr.mxu0 0.0
    %1745 = vmatpush1.msra.mxu0 0.0
    %1746 = vmatprep.subr.mxu0 0.0
    %1747 = vmatpush1.msra.mxu0 0.0
    %1748 = vmatprep.subr.mxu0 0.0
    %1749 = vmatpush1.msra.mxu0 0.0
    %1750 = vmatprep.subr.mxu0 0.0
    %1751 = vmatpush1.msra.mxu0 0.0
    %1752 = vmatprep.subr.mxu0 0.0
    %1753 = vmatpush1.msra.mxu0 0.0
    %1754 = vmatprep.subr.mxu0 0.0
    %1755 = vmatpush1.msra.mxu0 0.0
    %1756 = vmatprep.subr.mxu0 0.0
    %1757 = vmatpush1.msra.mxu0 0.0
    %1758 = vmatprep.subr.mxu0 0.0
    %1759 = vmatpush1.msra.mxu0 0.0
    %1760 = vmatprep.subr.mxu0 0.0
    %1761 = vmatpush1.msra.mxu0 0.0
    %1762 = vmatprep.subr.mxu0 0.0
    %1763 = vmatpush1.msra.mxu0 0.0
    %1764 = vmatprep.subr.mxu0 0.0
    %1765 = vmatpush1.msra.mxu0 0.0
    %1766 = vmatprep.subr.mxu0 0.0
    %1767 = vmatpush1.msra.mxu0 0.0
    %1768 = vmatprep.subr.mxu0 0.0
    %1769 = vmatpush1.msra.mxu0 0.0
    %1770 = vmatprep.subr.mxu0 0.0
    %1771 = vmatpush1.msra.mxu0 0.0
    %1772 = vmatprep.subr.mxu0 0.0
    %1773 = vmatpush1.msra.mxu0 0.0
    %1774 = vmatprep.subr.mxu0 0.0
    %1775 = vmatpush1.msra.mxu0 0.0
    %1776 = vmatprep.mubr.f32.mxu0 0.0
    %1777 = vmatmul.mubr.f32.gmra.mrb[0].mxu0 %v1168
    %v1778 = vpop.f32.mrb[0].mxu0
    %v1779 = vadd.f32 %v1710, %v1778
    %v1780 = vpop.f32.mrb[0].mxu0
    %1781 = vdwg.mxu0
    %s1782 = scalar_lea.vmem [#allocation14], 64
    %v1783 = vld [vmem:[%s1782] sm:$0xff]
    %v1784 = vld [vmem:[%s1782 + $0x8] sm:$0xff]
    %v1785 = vld [vmem:[%s1782 + $0x10] sm:$0xff]
    %v1786 = vld [vmem:[%s1782 + $0x18] sm:$0xff]
    %v1787 = vld [vmem:[%s1782 + $0x20] sm:$0xff]
    %v1788 = vld [vmem:[%s1782 + $0x28] sm:$0xff]
    %v1789 = vld [vmem:[%s1782 + $0x30] sm:$0xff]
    %v1790 = vld [vmem:[%s1782 + $0x38] sm:$0xff]
    %s1791 = scalar_lea.vmem %s16, 1
    %v1792 = vld [vmem:[%s1791] sm:$0x1]
    %v1794 = vlaneseq
    %v1795 = vshrl.u32 %v1794, 7
    %v1796 = vsub.s32 0, %v1795
    %v1797 = vrot.slane %v1792, %v1796
    %1799 = vmatprep.subr.mxu0 0.0
    %1800 = vmatpush1.msra.mxu0 %v1783
    %1801 = vmatprep.subr.mxu0 0.0
    %1802 = vmatpush1.msra.mxu0 %v1784
    %1803 = vmatprep.subr.mxu0 0.0
    %1804 = vmatpush1.msra.mxu0 %v1785
    %1805 = vmatprep.subr.mxu0 0.0
    %1806 = vmatpush1.msra.mxu0 %v1786
    %1807 = vmatprep.subr.mxu0 0.0
    %1808 = vmatpush1.msra.mxu0 %v1787
    %1809 = vmatprep.subr.mxu0 0.0
    %1810 = vmatpush1.msra.mxu0 %v1788
    %1811 = vmatprep.subr.mxu0 0.0
    %1812 = vmatpush1.msra.mxu0 %v1789
    %1813 = vmatprep.subr.mxu0 0.0
    %1814 = vmatpush1.msra.mxu0 %v1790
    %1815 = vmatprep.subr.mxu0 0.0
    %1816 = vmatpush1.msra.mxu0 0.0
    %1817 = vmatprep.subr.mxu0 0.0
    %1818 = vmatpush1.msra.mxu0 0.0
    %1819 = vmatprep.subr.mxu0 0.0
    %1820 = vmatpush1.msra.mxu0 0.0
    %1821 = vmatprep.subr.mxu0 0.0
    %1822 = vmatpush1.msra.mxu0 0.0
    %1823 = vmatprep.subr.mxu0 0.0
    %1824 = vmatpush1.msra.mxu0 0.0
    %1825 = vmatprep.subr.mxu0 0.0
    %1826 = vmatpush1.msra.mxu0 0.0
    %1827 = vmatprep.subr.mxu0 0.0
    %1828 = vmatpush1.msra.mxu0 0.0
    %1829 = vmatprep.subr.mxu0 0.0
    %1830 = vmatpush1.msra.mxu0 0.0
    %1831 = vmatprep.subr.mxu0 0.0
    %1832 = vmatpush1.msra.mxu0 0.0
    %1833 = vmatprep.subr.mxu0 0.0
    %1834 = vmatpush1.msra.mxu0 0.0
    %1835 = vmatprep.subr.mxu0 0.0
    %1836 = vmatpush1.msra.mxu0 0.0
    %1837 = vmatprep.subr.mxu0 0.0
    %1838 = vmatpush1.msra.mxu0 0.0
    %1839 = vmatprep.subr.mxu0 0.0
    %1840 = vmatpush1.msra.mxu0 0.0
    %1841 = vmatprep.subr.mxu0 0.0
    %1842 = vmatpush1.msra.mxu0 0.0
    %1843 = vmatprep.subr.mxu0 0.0
    %1844 = vmatpush1.msra.mxu0 0.0
    %1845 = vmatprep.subr.mxu0 0.0
    %1846 = vmatpush1.msra.mxu0 0.0
    %1847 = vmatprep.subr.mxu0 0.0
    %1848 = vmatpush1.msra.mxu0 0.0
    %1849 = vmatprep.subr.mxu0 0.0
    %1850 = vmatpush1.msra.mxu0 0.0
    %1851 = vmatprep.subr.mxu0 0.0
    %1852 = vmatpush1.msra.mxu0 0.0
    %1853 = vmatprep.subr.mxu0 0.0
    %1854 = vmatpush1.msra.mxu0 0.0
    %1855 = vmatprep.subr.mxu0 0.0
    %1856 = vmatpush1.msra.mxu0 0.0
    %1857 = vmatprep.subr.mxu0 0.0
    %1858 = vmatpush1.msra.mxu0 0.0
    %1859 = vmatprep.subr.mxu0 0.0
    %1860 = vmatpush1.msra.mxu0 0.0
    %1861 = vmatprep.subr.mxu0 0.0
    %1862 = vmatpush1.msra.mxu0 0.0
    %1863 = vmatprep.mubr.f32.mxu0 0.0
    %1864 = vmatmul.mubr.f32.gmra.mrb[0].mxu0 %v1168
    %v1865 = vpop.f32.mrb[0].mxu0
    %v1866 = vadd.f32 %v1797, %v1865
    %v1867 = vpop.f32.mrb[0].mxu0
    %1868 = vdwg.mxu0
    %s1869 = scalar_lea.vmem [#allocation14], 128
    %v1870 = vld [vmem:[%s1869] sm:$0xff]
    %v1871 = vld [vmem:[%s1869 + $0x8] sm:$0xff]
    %v1872 = vld [vmem:[%s1869 + $0x10] sm:$0xff]
    %v1873 = vld [vmem:[%s1869 + $0x18] sm:$0xff]
    %v1874 = vld [vmem:[%s1869 + $0x20] sm:$0xff]
    %v1875 = vld [vmem:[%s1869 + $0x28] sm:$0xff]
    %v1876 = vld [vmem:[%s1869 + $0x30] sm:$0xff]
    %v1877 = vld [vmem:[%s1869 + $0x38] sm:$0xff]
    %s1878 = scalar_lea.vmem %s16, 2
    %v1879 = vld [vmem:[%s1878] sm:$0x1]
    %v1881 = vlaneseq
    %v1882 = vshrl.u32 %v1881, 7
    %v1883 = vsub.s32 0, %v1882
    %v1884 = vrot.slane %v1879, %v1883
    %1886 = vmatprep.subr.mxu0 0.0
    %1887 = vmatpush1.msra.mxu0 %v1870
    %1888 = vmatprep.subr.mxu0 0.0
    %1889 = vmatpush1.msra.mxu0 %v1871
    %1890 = vmatprep.subr.mxu0 0.0
    %1891 = vmatpush1.msra.mxu0 %v1872
    %1892 = vmatprep.subr.mxu0 0.0
    %1893 = vmatpush1.msra.mxu0 %v1873
    %1894 = vmatprep.subr.mxu0 0.0
    %1895 = vmatpush1.msra.mxu0 %v1874
    %1896 = vmatprep.subr.mxu0 0.0
    %1897 = vmatpush1.msra.mxu0 %v1875
    %1898 = vmatprep.subr.mxu0 0.0
    %1899 = vmatpush1.msra.mxu0 %v1876
    %1900 = vmatprep.subr.mxu0 0.0
    %1901 = vmatpush1.msra.mxu0 %v1877
    %1902 = vmatprep.subr.mxu0 0.0
    %1903 = vmatpush1.msra.mxu0 0.0
    %1904 = vmatprep.subr.mxu0 0.0
    %1905 = vmatpush1.msra.mxu0 0.0
    %1906 = vmatprep.subr.mxu0 0.0
    %1907 = vmatpush1.msra.mxu0 0.0
    %1908 = vmatprep.subr.mxu0 0.0
    %1909 = vmatpush1.msra.mxu0 0.0
    %1910 = vmatprep.subr.mxu0 0.0
    %1911 = vmatpush1.msra.mxu0 0.0
    %1912 = vmatprep.subr.mxu0 0.0
    %1913 = vmatpush1.msra.mxu0 0.0
    %1914 = vmatprep.subr.mxu0 0.0
    %1915 = vmatpush1.msra.mxu0 0.0
    %1916 = vmatprep.subr.mxu0 0.0
    %1917 = vmatpush1.msra.mxu0 0.0
    %1918 = vmatprep.subr.mxu0 0.0
    %1919 = vmatpush1.msra.mxu0 0.0
    %1920 = vmatprep.subr.mxu0 0.0
    %1921 = vmatpush1.msra.mxu0 0.0
    %1922 = vmatprep.subr.mxu0 0.0
    %1923 = vmatpush1.msra.mxu0 0.0
    %1924 = vmatprep.subr.mxu0 0.0
    %1925 = vmatpush1.msra.mxu0 0.0
    %1926 = vmatprep.subr.mxu0 0.0
    %1927 = vmatpush1.msra.mxu0 0.0
    %1928 = vmatprep.subr.mxu0 0.0
    %1929 = vmatpush1.msra.mxu0 0.0
    %1930 = vmatprep.subr.mxu0 0.0
    %1931 = vmatpush1.msra.mxu0 0.0
    %1932 = vmatprep.subr.mxu0 0.0
    %1933 = vmatpush1.msra.mxu0 0.0
    %1934 = vmatprep.subr.mxu0 0.0
    %1935 = vmatpush1.msra.mxu0 0.0
    %1936 = vmatprep.subr.mxu0 0.0
    %1937 = vmatpush1.msra.mxu0 0.0
    %1938 = vmatprep.subr.mxu0 0.0
    %1939 = vmatpush1.msra.mxu0 0.0
    %1940 = vmatprep.subr.mxu0 0.0
    %1941 = vmatpush1.msra.mxu0 0.0
    %1942 = vmatprep.subr.mxu0 0.0
    %1943 = vmatpush1.msra.mxu0 0.0
    %1944 = vmatprep.subr.mxu0 0.0
    %1945 = vmatpush1.msra.mxu0 0.0
    %1946 = vmatprep.subr.mxu0 0.0
    %1947 = vmatpush1.msra.mxu0 0.0
    %1948 = vmatprep.subr.mxu0 0.0
    %1949 = vmatpush1.msra.mxu0 0.0
    %1950 = vmatprep.mubr.f32.mxu0 0.0
    %1951 = vmatmul.mubr.f32.gmra.mrb[0].mxu0 %v1168
    %v1952 = vpop.f32.mrb[0].mxu0
    %v1953 = vadd.f32 %v1884, %v1952
    %v1954 = vpop.f32.mrb[0].mxu0
    %1955 = vdwg.mxu0
    %v1956 = vadd.f32 %v1520, %v1779
    %v1957 = vxor.u32 %v1956, 2147483648
    %v1958 = vmul.f32 %v1957, 1.442695
    %v1959 = vpow.pop %v1958
    %v1960 = vadd.f32 %v1959, 1.0
    %v1961 = vrcp.pop %v1960
    %v1962 = vmul.f32 1.0, %v1961
    %v1963 = vadd.f32 %v1607, %v1866
    %v1964 = vxor.u32 %v1963, 2147483648
    %v1965 = vmul.f32 %v1964, 1.442695
    %v1966 = vpow.pop %v1965
    %v1967 = vadd.f32 %v1966, 1.0
    %v1968 = vrcp.pop %v1967
    %v1969 = vmul.f32 1.0, %v1968
    %v1970 = vmul.f32 %v1962, %v1953
    %v1971 = vadd.f32 %v1694, %v1970
    %v1972 = vtanh.pop %v1971
    %v1973 = vsub.f32 1.0, %v1969
    %v1974 = vmul.f32 %v1973, %v1972
    %v1975 = vmul.f32 %v1969, 0.0
    %v1976 = vadd.f32 %v1974, %v1975
    %s1977 = scalar_lea.vmem [#allocation2], 8
    %v1978 = vld [vmem:[%s1977] sm:$0xff]
    %s1979 = sadd.s32 8, 64
    %s1980 = scalar_lea.vmem [#allocation2], %s1979
    %v1981 = vld [vmem:[%s1980] sm:$0xff]
    %s1982 = sadd.s32 8, 128
    %s1983 = scalar_lea.vmem [#allocation2], %s1982
    %v1984 = vld [vmem:[%s1983] sm:$0xff]
    %1985 = vmatprep.subr.mxu0 0.0
    %1986 = vmatpush1.msra.mxu0 %v1152
    %1987 = vmatprep.subr.mxu0 0.0
    %1988 = vmatpush1.msra.mxu0 %v1153
    %1989 = vmatprep.subr.mxu0 0.0
    %1990 = vmatpush1.msra.mxu0 %v1154
    %1991 = vmatprep.subr.mxu0 0.0
    %1992 = vmatpush1.msra.mxu0 %v1155
    %1993 = vmatprep.subr.mxu0 0.0
    %1994 = vmatpush1.msra.mxu0 %v1156
    %1995 = vmatprep.subr.mxu0 0.0
    %1996 = vmatpush1.msra.mxu0 %v1157
    %1997 = vmatprep.subr.mxu0 0.0
    %1998 = vmatpush1.msra.mxu0 %v1158
    %1999 = vmatprep.subr.mxu0 0.0
    %2000 = vmatpush1.msra.mxu0 %v1159
    %2001 = vmatprep.subr.mxu0 0.0
    %2002 = vmatpush1.msra.mxu0 0.0
    %2003 = vmatprep.subr.mxu0 0.0
    %2004 = vmatpush1.msra.mxu0 0.0
    %2005 = vmatprep.subr.mxu0 0.0
    %2006 = vmatpush1.msra.mxu0 0.0
    %2007 = vmatprep.subr.mxu0 0.0
    %2008 = vmatpush1.msra.mxu0 0.0
    %2009 = vmatprep.subr.mxu0 0.0
    %2010 = vmatpush1.msra.mxu0 0.0
    %2011 = vmatprep.subr.mxu0 0.0
    %2012 = vmatpush1.msra.mxu0 0.0
    %2013 = vmatprep.subr.mxu0 0.0
    %2014 = vmatpush1.msra.mxu0 0.0
    %2015 = vmatprep.subr.mxu0 0.0
    %2016 = vmatpush1.msra.mxu0 0.0
    %2017 = vmatprep.subr.mxu0 0.0
    %2018 = vmatpush1.msra.mxu0 0.0
    %2019 = vmatprep.subr.mxu0 0.0
    %2020 = vmatpush1.msra.mxu0 0.0
    %2021 = vmatprep.subr.mxu0 0.0
    %2022 = vmatpush1.msra.mxu0 0.0
    %2023 = vmatprep.subr.mxu0 0.0
    %2024 = vmatpush1.msra.mxu0 0.0
    %2025 = vmatprep.subr.mxu0 0.0
    %2026 = vmatpush1.msra.mxu0 0.0
    %2027 = vmatprep.subr.mxu0 0.0
    %2028 = vmatpush1.msra.mxu0 0.0
    %2029 = vmatprep.subr.mxu0 0.0
    %2030 = vmatpush1.msra.mxu0 0.0
    %2031 = vmatprep.subr.mxu0 0.0
    %2032 = vmatpush1.msra.mxu0 0.0
    %2033 = vmatprep.subr.mxu0 0.0
    %2034 = vmatpush1.msra.mxu0 0.0
    %2035 = vmatprep.subr.mxu0 0.0
    %2036 = vmatpush1.msra.mxu0 0.0
    %2037 = vmatprep.subr.mxu0 0.0
    %2038 = vmatpush1.msra.mxu0 0.0
    %2039 = vmatprep.subr.mxu0 0.0
    %2040 = vmatpush1.msra.mxu0 0.0
    %2041 = vmatprep.subr.mxu0 0.0
    %2042 = vmatpush1.msra.mxu0 0.0
    %2043 = vmatprep.subr.mxu0 0.0
    %2044 = vmatpush1.msra.mxu0 0.0
    %2045 = vmatprep.subr.mxu0 0.0
    %2046 = vmatpush1.msra.mxu0 0.0
    %2047 = vmatprep.subr.mxu0 0.0
    %2048 = vmatpush1.msra.mxu0 0.0
    %2049 = vmatprep.mubr.f32.mxu0 0.0
    %2050 = vmatmul.mubr.f32.gmra.mrb[0].mxu0 %v1451
    %v2051 = vpop.f32.mrb[0].mxu0
    %v2052 = vadd.f32 %v1165, %v2051
    %v2053 = vpop.f32.mrb[0].mxu0
    %2054 = vdwg.mxu0
    %2055 = vmatprep.subr.mxu0 0.0
    %2056 = vmatpush1.msra.mxu0 %v1241
    %2057 = vmatprep.subr.mxu0 0.0
    %2058 = vmatpush1.msra.mxu0 %v1242
    %2059 = vmatprep.subr.mxu0 0.0
    %2060 = vmatpush1.msra.mxu0 %v1243
    %2061 = vmatprep.subr.mxu0 0.0
    %2062 = vmatpush1.msra.mxu0 %v1244
    %2063 = vmatprep.subr.mxu0 0.0
    %2064 = vmatpush1.msra.mxu0 %v1245
    %2065 = vmatprep.subr.mxu0 0.0
    %2066 = vmatpush1.msra.mxu0 %v1246
    %2067 = vmatprep.subr.mxu0 0.0
    %2068 = vmatpush1.msra.mxu0 %v1247
    %2069 = vmatprep.subr.mxu0 0.0
    %2070 = vmatpush1.msra.mxu0 %v1248
    %2071 = vmatprep.subr.mxu0 0.0
    %2072 = vmatpush1.msra.mxu0 0.0
    %2073 = vmatprep.subr.mxu0 0.0
    %2074 = vmatpush1.msra.mxu0 0.0
    %2075 = vmatprep.subr.mxu0 0.0
    %2076 = vmatpush1.msra.mxu0 0.0
    %2077 = vmatprep.subr.mxu0 0.0
    %2078 = vmatpush1.msra.mxu0 0.0
    %2079 = vmatprep.subr.mxu0 0.0
    %2080 = vmatpush1.msra.mxu0 0.0
    %2081 = vmatprep.subr.mxu0 0.0
    %2082 = vmatpush1.msra.mxu0 0.0
    %2083 = vmatprep.subr.mxu0 0.0
    %2084 = vmatpush1.msra.mxu0 0.0
    %2085 = vmatprep.subr.mxu0 0.0
    %2086 = vmatpush1.msra.mxu0 0.0
    %2087 = vmatprep.subr.mxu0 0.0
    %2088 = vmatpush1.msra.mxu0 0.0
    %2089 = vmatprep.subr.mxu0 0.0
    %2090 = vmatpush1.msra.mxu0 0.0
    %2091 = vmatprep.subr.mxu0 0.0
    %2092 = vmatpush1.msra.mxu0 0.0
    %2093 = vmatprep.subr.mxu0 0.0
    %2094 = vmatpush1.msra.mxu0 0.0
    %2095 = vmatprep.subr.mxu0 0.0
    %2096 = vmatpush1.msra.mxu0 0.0
    %2097 = vmatprep.subr.mxu0 0.0
    %2098 = vmatpush1.msra.mxu0 0.0
    %2099 = vmatprep.subr.mxu0 0.0
    %2100 = vmatpush1.msra.mxu0 0.0
    %2101 = vmatprep.subr.mxu0 0.0
    %2102 = vmatpush1.msra.mxu0 0.0
    %2103 = vmatprep.subr.mxu0 0.0
    %2104 = vmatpush1.msra.mxu0 0.0
    %2105 = vmatprep.subr.mxu0 0.0
    %2106 = vmatpush1.msra.mxu0 0.0
    %2107 = vmatprep.subr.mxu0 0.0
    %2108 = vmatpush1.msra.mxu0 0.0
    %2109 = vmatprep.subr.mxu0 0.0
    %2110 = vmatpush1.msra.mxu0 0.0
    %2111 = vmatprep.subr.mxu0 0.0
    %2112 = vmatpush1.msra.mxu0 0.0
    %2113 = vmatprep.subr.mxu0 0.0
    %2114 = vmatpush1.msra.mxu0 0.0
    %2115 = vmatprep.subr.mxu0 0.0
    %2116 = vmatpush1.msra.mxu0 0.0
    %2117 = vmatprep.subr.mxu0 0.0
    %2118 = vmatpush1.msra.mxu0 0.0
    %2119 = vmatprep.mubr.f32.mxu0 0.0
    %2120 = vmatmul.mubr.f32.gmra.mrb[0].mxu0 %v1451
    %v2121 = vpop.f32.mrb[0].mxu0
    %v2122 = vadd.f32 %v1255, %v2121
    %v2123 = vpop.f32.mrb[0].mxu0
    %2124 = vdwg.mxu0
    %2125 = vmatprep.subr.mxu0 0.0
    %2126 = vmatpush1.msra.mxu0 %v1328
    %2127 = vmatprep.subr.mxu0 0.0
    %2128 = vmatpush1.msra.mxu0 %v1329
    %2129 = vmatprep.subr.mxu0 0.0
    %2130 = vmatpush1.msra.mxu0 %v1330
    %2131 = vmatprep.subr.mxu0 0.0
    %2132 = vmatpush1.msra.mxu0 %v1331
    %2133 = vmatprep.subr.mxu0 0.0
    %2134 = vmatpush1.msra.mxu0 %v1332
    %2135 = vmatprep.subr.mxu0 0.0
    %2136 = vmatpush1.msra.mxu0 %v1333
    %2137 = vmatprep.subr.mxu0 0.0
    %2138 = vmatpush1.msra.mxu0 %v1334
    %2139 = vmatprep.subr.mxu0 0.0
    %2140 = vmatpush1.msra.mxu0 %v1335
    %2141 = vmatprep.subr.mxu0 0.0
    %2142 = vmatpush1.msra.mxu0 0.0
    %2143 = vmatprep.subr.mxu0 0.0
    %2144 = vmatpush1.msra.mxu0 0.0
    %2145 = vmatprep.subr.mxu0 0.0
    %2146 = vmatpush1.msra.mxu0 0.0
    %2147 = vmatprep.subr.mxu0 0.0
    %2148 = vmatpush1.msra.mxu0 0.0
    %2149 = vmatprep.subr.mxu0 0.0
    %2150 = vmatpush1.msra.mxu0 0.0
    %2151 = vmatprep.subr.mxu0 0.0
    %2152 = vmatpush1.msra.mxu0 0.0
    %2153 = vmatprep.subr.mxu0 0.0
    %2154 = vmatpush1.msra.mxu0 0.0
    %2155 = vmatprep.subr.mxu0 0.0
    %2156 = vmatpush1.msra.mxu0 0.0
    %2157 = vmatprep.subr.mxu0 0.0
    %2158 = vmatpush1.msra.mxu0 0.0
    %2159 = vmatprep.subr.mxu0 0.0
    %2160 = vmatpush1.msra.mxu0 0.0
    %2161 = vmatprep.subr.mxu0 0.0
    %2162 = vmatpush1.msra.mxu0 0.0
    %2163 = vmatprep.subr.mxu0 0.0
    %2164 = vmatpush1.msra.mxu0 0.0
    %2165 = vmatprep.subr.mxu0 0.0
    %2166 = vmatpush1.msra.mxu0 0.0
    %2167 = vmatprep.subr.mxu0 0.0
    %2168 = vmatpush1.msra.mxu0 0.0
    %2169 = vmatprep.subr.mxu0 0.0
    %2170 = vmatpush1.msra.mxu0 0.0
    %2171 = vmatprep.subr.mxu0 0.0
    %2172 = vmatpush1.msra.mxu0 0.0
    %2173 = vmatprep.subr.mxu0 0.0
    %2174 = vmatpush1.msra.mxu0 0.0
    %2175 = vmatprep.subr.mxu0 0.0
    %2176 = vmatpush1.msra.mxu0 0.0
    %2177 = vmatprep.subr.mxu0 0.0
    %2178 = vmatpush1.msra.mxu0 0.0
    %2179 = vmatprep.subr.mxu0 0.0
    %2180 = vmatpush1.msra.mxu0 0.0
    %2181 = vmatprep.subr.mxu0 0.0
    %2182 = vmatpush1.msra.mxu0 0.0
    %2183 = vmatprep.subr.mxu0 0.0
    %2184 = vmatpush1.msra.mxu0 0.0
    %2185 = vmatprep.subr.mxu0 0.0
    %2186 = vmatpush1.msra.mxu0 0.0
    %2187 = vmatprep.subr.mxu0 0.0
    %2188 = vmatpush1.msra.mxu0 0.0
    %2189 = vmatprep.mubr.f32.mxu0 0.0
    %2190 = vmatmul.mubr.f32.gmra.mrb[0].mxu0 %v1451
    %v2191 = vpop.f32.mrb[0].mxu0
    %v2192 = vadd.f32 %v1342, %v2191
    %v2193 = vpop.f32.mrb[0].mxu0
    %2194 = vdwg.mxu0
    %v2195 = vadd.f32 %v1978, %v2052
    %v2196 = vxor.u32 %v2195, 2147483648
    %v2197 = vmul.f32 %v2196, 1.442695
    %v2198 = vpow.pop %v2197
    %v2199 = vadd.f32 %v2198, 1.0
    %v2200 = vrcp.pop %v2199
    %v2201 = vmul.f32 1.0, %v2200
    %v2202 = vadd.f32 %v1981, %v2122
    %v2203 = vxor.u32 %v2202, 2147483648
    %v2204 = vmul.f32 %v2203, 1.442695
    %v2205 = vpow.pop %v2204
    %v2206 = vadd.f32 %v2205, 1.0
    %v2207 = vrcp.pop %v2206
    %v2208 = vmul.f32 1.0, %v2207
    %v2209 = vmul.f32 %v2201, %v2192
    %v2210 = vadd.f32 %v1984, %v2209
    %v2211 = vtanh.pop %v2210
    %v2212 = vsub.f32 1.0, %v2208
    %v2213 = vmul.f32 %v2212, %v2211
    %v2214 = vmul.f32 %v2208, %v1434
    %v2215 = vadd.f32 %v2213, %v2214
    %v2217 = vsel %vm301, %v2215, 0
    %2219 = vmatprep.subr.mxu0 0.0
    %2220 = vmatpush1.msra.mxu0 %v1435
    %2221 = vmatprep.subr.mxu0 0.0
    %2222 = vmatpush1.msra.mxu0 %v1436
    %2223 = vmatprep.subr.mxu0 0.0
    %2224 = vmatpush1.msra.mxu0 %v1437
    %2225 = vmatprep.subr.mxu0 0.0
    %2226 = vmatpush1.msra.mxu0 %v1438
    %2227 = vmatprep.subr.mxu0 0.0
    %2228 = vmatpush1.msra.mxu0 %v1439
    %2229 = vmatprep.subr.mxu0 0.0
    %2230 = vmatpush1.msra.mxu0 %v1440
    %2231 = vmatprep.subr.mxu0 0.0
    %2232 = vmatpush1.msra.mxu0 %v1441
    %2233 = vmatprep.subr.mxu0 0.0
    %2234 = vmatpush1.msra.mxu0 %v1442
    %2235 = vmatprep.subr.mxu0 0.0
    %2236 = vmatpush1.msra.mxu0 0.0
    %2237 = vmatprep.subr.mxu0 0.0
    %2238 = vmatpush1.msra.mxu0 0.0
    %2239 = vmatprep.subr.mxu0 0.0
    %2240 = vmatpush1.msra.mxu0 0.0
    %2241 = vmatprep.subr.mxu0 0.0
    %2242 = vmatpush1.msra.mxu0 0.0
    %2243 = vmatprep.subr.mxu0 0.0
    %2244 = vmatpush1.msra.mxu0 0.0
    %2245 = vmatprep.subr.mxu0 0.0
    %2246 = vmatpush1.msra.mxu0 0.0
    %2247 = vmatprep.subr.mxu0 0.0
    %2248 = vmatpush1.msra.mxu0 0.0
    %2249 = vmatprep.subr.mxu0 0.0
    %2250 = vmatpush1.msra.mxu0 0.0
    %2251 = vmatprep.subr.mxu0 0.0
    %2252 = vmatpush1.msra.mxu0 0.0
    %2253 = vmatprep.subr.mxu0 0.0
    %2254 = vmatpush1.msra.mxu0 0.0
    %2255 = vmatprep.subr.mxu0 0.0
    %2256 = vmatpush1.msra.mxu0 0.0
    %2257 = vmatprep.subr.mxu0 0.0
    %2258 = vmatpush1.msra.mxu0 0.0
    %2259 = vmatprep.subr.mxu0 0.0
    %2260 = vmatpush1.msra.mxu0 0.0
    %2261 = vmatprep.subr.mxu0 0.0
    %2262 = vmatpush1.msra.mxu0 0.0
    %2263 = vmatprep.subr.mxu0 0.0
    %2264 = vmatpush1.msra.mxu0 0.0
    %2265 = vmatprep.subr.mxu0 0.0
    %2266 = vmatpush1.msra.mxu0 0.0
    %2267 = vmatprep.subr.mxu0 0.0
    %2268 = vmatpush1.msra.mxu0 0.0
    %2269 = vmatprep.subr.mxu0 0.0
    %2270 = vmatpush1.msra.mxu0 0.0
    %2271 = vmatprep.subr.mxu0 0.0
    %2272 = vmatpush1.msra.mxu0 0.0
    %2273 = vmatprep.subr.mxu0 0.0
    %2274 = vmatpush1.msra.mxu0 0.0
    %2275 = vmatprep.subr.mxu0 0.0
    %2276 = vmatpush1.msra.mxu0 0.0
    %2277 = vmatprep.subr.mxu0 0.0
    %2278 = vmatpush1.msra.mxu0 0.0
    %2279 = vmatprep.subr.mxu0 0.0
    %2280 = vmatpush1.msra.mxu0 0.0
    %2281 = vmatprep.subr.mxu0 0.0
    %2282 = vmatpush1.msra.mxu0 0.0
    %2283 = vmatprep.mubr.f32.mxu0 0.0
    %2284 = vmatmul.mubr.f32.gmra.mrb[0].mxu0 %v2217
    %v2285 = vpop.f32.mrb[0].mxu0
    %v2286 = vadd.f32 %v1448, %v2285
    %v2287 = vpop.f32.mrb[0].mxu0
    %2288 = vdwg.mxu0
    %2289 = vmatprep.subr.mxu0 0.0
    %2290 = vmatpush1.msra.mxu0 %v1524
    %2291 = vmatprep.subr.mxu0 0.0
    %2292 = vmatpush1.msra.mxu0 %v1525
    %2293 = vmatprep.subr.mxu0 0.0
    %2294 = vmatpush1.msra.mxu0 %v1526
    %2295 = vmatprep.subr.mxu0 0.0
    %2296 = vmatpush1.msra.mxu0 %v1527
    %2297 = vmatprep.subr.mxu0 0.0
    %2298 = vmatpush1.msra.mxu0 %v1528
    %2299 = vmatprep.subr.mxu0 0.0
    %2300 = vmatpush1.msra.mxu0 %v1529
    %2301 = vmatprep.subr.mxu0 0.0
    %2302 = vmatpush1.msra.mxu0 %v1530
    %2303 = vmatprep.subr.mxu0 0.0
    %2304 = vmatpush1.msra.mxu0 %v1531
    %2305 = vmatprep.subr.mxu0 0.0
    %2306 = vmatpush1.msra.mxu0 0.0
    %2307 = vmatprep.subr.mxu0 0.0
    %2308 = vmatpush1.msra.mxu0 0.0
    %2309 = vmatprep.subr.mxu0 0.0
    %2310 = vmatpush1.msra.mxu0 0.0
    %2311 = vmatprep.subr.mxu0 0.0
    %2312 = vmatpush1.msra.mxu0 0.0
    %2313 = vmatprep.subr.mxu0 0.0
    %2314 = vmatpush1.msra.mxu0 0.0
    %2315 = vmatprep.subr.mxu0 0.0
    %2316 = vmatpush1.msra.mxu0 0.0
    %2317 = vmatprep.subr.mxu0 0.0
    %2318 = vmatpush1.msra.mxu0 0.0
    %2319 = vmatprep.subr.mxu0 0.0
    %2320 = vmatpush1.msra.mxu0 0.0
    %2321 = vmatprep.subr.mxu0 0.0
    %2322 = vmatpush1.msra.mxu0 0.0
    %2323 = vmatprep.subr.mxu0 0.0
    %2324 = vmatpush1.msra.mxu0 0.0
    %2325 = vmatprep.subr.mxu0 0.0
    %2326 = vmatpush1.msra.mxu0 0.0
    %2327 = vmatprep.subr.mxu0 0.0
    %2328 = vmatpush1.msra.mxu0 0.0
    %2329 = vmatprep.subr.mxu0 0.0
    %2330 = vmatpush1.msra.mxu0 0.0
    %2331 = vmatprep.subr.mxu0 0.0
    %2332 = vmatpush1.msra.mxu0 0.0
    %2333 = vmatprep.subr.mxu0 0.0
    %2334 = vmatpush1.msra.mxu0 0.0
    %2335 = vmatprep.subr.mxu0 0.0
    %2336 = vmatpush1.msra.mxu0 0.0
    %2337 = vmatprep.subr.mxu0 0.0
    %2338 = vmatpush1.msra.mxu0 0.0
    %2339 = vmatprep.subr.mxu0 0.0
    %2340 = vmatpush1.msra.mxu0 0.0
    %2341 = vmatprep.subr.mxu0 0.0
    %2342 = vmatpush1.msra.mxu0 0.0
    %2343 = vmatprep.subr.mxu0 0.0
    %2344 = vmatpush1.msra.mxu0 0.0
    %2345 = vmatprep.subr.mxu0 0.0
    %2346 = vmatpush1.msra.mxu0 0.0
    %2347 = vmatprep.subr.mxu0 0.0
    %2348 = vmatpush1.msra.mxu0 0.0
    %2349 = vmatprep.subr.mxu0 0.0
    %2350 = vmatpush1.msra.mxu0 0.0
    %2351 = vmatprep.subr.mxu0 0.0
    %2352 = vmatpush1.msra.mxu0 0.0
    %2353 = vmatprep.mubr.f32.mxu0 0.0
    %2354 = vmatmul.mubr.f32.gmra.mrb[0].mxu0 %v2217
    %v2355 = vpop.f32.mrb[0].mxu0
    %v2356 = vadd.f32 %v1538, %v2355
    %v2357 = vpop.f32.mrb[0].mxu0
    %2358 = vdwg.mxu0
    %2359 = vmatprep.subr.mxu0 0.0
    %2360 = vmatpush1.msra.mxu0 %v1611
    %2361 = vmatprep.subr.mxu0 0.0
    %2362 = vmatpush1.msra.mxu0 %v1612
    %2363 = vmatprep.subr.mxu0 0.0
    %2364 = vmatpush1.msra.mxu0 %v1613
    %2365 = vmatprep.subr.mxu0 0.0
    %2366 = vmatpush1.msra.mxu0 %v1614
    %2367 = vmatprep.subr.mxu0 0.0
    %2368 = vmatpush1.msra.mxu0 %v1615
    %2369 = vmatprep.subr.mxu0 0.0
    %2370 = vmatpush1.msra.mxu0 %v1616
    %2371 = vmatprep.subr.mxu0 0.0
    %2372 = vmatpush1.msra.mxu0 %v1617
    %2373 = vmatprep.subr.mxu0 0.0
    %2374 = vmatpush1.msra.mxu0 %v1618
    %2375 = vmatprep.subr.mxu0 0.0
    %2376 = vmatpush1.msra.mxu0 0.0
    %2377 = vmatprep.subr.mxu0 0.0
    %2378 = vmatpush1.msra.mxu0 0.0
    %2379 = vmatprep.subr.mxu0 0.0
    %2380 = vmatpush1.msra.mxu0 0.0
    %2381 = vmatprep.subr.mxu0 0.0
    %2382 = vmatpush1.msra.mxu0 0.0
    %2383 = vmatprep.subr.mxu0 0.0
    %2384 = vmatpush1.msra.mxu0 0.0
    %2385 = vmatprep.subr.mxu0 0.0
    %2386 = vmatpush1.msra.mxu0 0.0
    %2387 = vmatprep.subr.mxu0 0.0
    %2388 = vmatpush1.msra.mxu0 0.0
    %2389 = vmatprep.subr.mxu0 0.0
    %2390 = vmatpush1.msra.mxu0 0.0
    %2391 = vmatprep.subr.mxu0 0.0
    %2392 = vmatpush1.msra.mxu0 0.0
    %2393 = vmatprep.subr.mxu0 0.0
    %2394 = vmatpush1.msra.mxu0 0.0
    %2395 = vmatprep.subr.mxu0 0.0
    %2396 = vmatpush1.msra.mxu0 0.0
    %2397 = vmatprep.subr.mxu0 0.0
    %2398 = vmatpush1.msra.mxu0 0.0
    %2399 = vmatprep.subr.mxu0 0.0
    %2400 = vmatpush1.msra.mxu0 0.0
    %2401 = vmatprep.subr.mxu0 0.0
    %2402 = vmatpush1.msra.mxu0 0.0
    %2403 = vmatprep.subr.mxu0 0.0
    %2404 = vmatpush1.msra.mxu0 0.0
    %2405 = vmatprep.subr.mxu0 0.0
    %2406 = vmatpush1.msra.mxu0 0.0
    %2407 = vmatprep.subr.mxu0 0.0
    %2408 = vmatpush1.msra.mxu0 0.0
    %2409 = vmatprep.subr.mxu0 0.0
    %2410 = vmatpush1.msra.mxu0 0.0
    %2411 = vmatprep.subr.mxu0 0.0
    %2412 = vmatpush1.msra.mxu0 0.0
    %2413 = vmatprep.subr.mxu0 0.0
    %2414 = vmatpush1.msra.mxu0 0.0
    %2415 = vmatprep.subr.mxu0 0.0
    %2416 = vmatpush1.msra.mxu0 0.0
    %2417 = vmatprep.subr.mxu0 0.0
    %2418 = vmatpush1.msra.mxu0 0.0
    %2419 = vmatprep.subr.mxu0 0.0
    %2420 = vmatpush1.msra.mxu0 0.0
    %2421 = vmatprep.subr.mxu0 0.0
    %2422 = vmatpush1.msra.mxu0 0.0
    %2423 = vmatprep.mubr.f32.mxu0 0.0
    %2424 = vmatmul.mubr.f32.gmra.mrb[0].mxu0 %v2217
    %v2425 = vpop.f32.mrb[0].mxu0
    %v2426 = vadd.f32 %v1625, %v2425
    %v2427 = vpop.f32.mrb[0].mxu0
    %2428 = vdwg.mxu0
    %v2430 = vsel %vm301, %v1976, 0
    %2432 = vmatprep.subr.mxu0 0.0
    %2433 = vmatpush1.msra.mxu0 %v1697
    %2434 = vmatprep.subr.mxu0 0.0
    %2435 = vmatpush1.msra.mxu0 %v1698
    %2436 = vmatprep.subr.mxu0 0.0
    %2437 = vmatpush1.msra.mxu0 %v1699
    %2438 = vmatprep.subr.mxu0 0.0
    %2439 = vmatpush1.msra.mxu0 %v1700
    %2440 = vmatprep.subr.mxu0 0.0
    %2441 = vmatpush1.msra.mxu0 %v1701
    %2442 = vmatprep.subr.mxu0 0.0
    %2443 = vmatpush1.msra.mxu0 %v1702
    %2444 = vmatprep.subr.mxu0 0.0
    %2445 = vmatpush1.msra.mxu0 %v1703
    %2446 = vmatprep.subr.mxu0 0.0
    %2447 = vmatpush1.msra.mxu0 %v1704
    %2448 = vmatprep.subr.mxu0 0.0
    %2449 = vmatpush1.msra.mxu0 0.0
    %2450 = vmatprep.subr.mxu0 0.0
    %2451 = vmatpush1.msra.mxu0 0.0
    %2452 = vmatprep.subr.mxu0 0.0
    %2453 = vmatpush1.msra.mxu0 0.0
    %2454 = vmatprep.subr.mxu0 0.0
    %2455 = vmatpush1.msra.mxu0 0.0
    %2456 = vmatprep.subr.mxu0 0.0
    %2457 = vmatpush1.msra.mxu0 0.0
    %2458 = vmatprep.subr.mxu0 0.0
    %2459 = vmatpush1.msra.mxu0 0.0
    %2460 = vmatprep.subr.mxu0 0.0
    %2461 = vmatpush1.msra.mxu0 0.0
    %2462 = vmatprep.subr.mxu0 0.0
    %2463 = vmatpush1.msra.mxu0 0.0
    %2464 = vmatprep.subr.mxu0 0.0
    %2465 = vmatpush1.msra.mxu0 0.0
    %2466 = vmatprep.subr.mxu0 0.0
    %2467 = vmatpush1.msra.mxu0 0.0
    %2468 = vmatprep.subr.mxu0 0.0
    %2469 = vmatpush1.msra.mxu0 0.0
    %2470 = vmatprep.subr.mxu0 0.0
    %2471 = vmatpush1.msra.mxu0 0.0
    %2472 = vmatprep.subr.mxu0 0.0
    %2473 = vmatpush1.msra.mxu0 0.0
    %2474 = vmatprep.subr.mxu0 0.0
    %2475 = vmatpush1.msra.mxu0 0.0
    %2476 = vmatprep.subr.mxu0 0.0
    %2477 = vmatpush1.msra.mxu0 0.0
    %2478 = vmatprep.subr.mxu0 0.0
    %2479 = vmatpush1.msra.mxu0 0.0
    %2480 = vmatprep.subr.mxu0 0.0
    %2481 = vmatpush1.msra.mxu0 0.0
    %2482 = vmatprep.subr.mxu0 0.0
    %2483 = vmatpush1.msra.mxu0 0.0
    %2484 = vmatprep.subr.mxu0 0.0
    %2485 = vmatpush1.msra.mxu0 0.0
    %2486 = vmatprep.subr.mxu0 0.0
    %2487 = vmatpush1.msra.mxu0 0.0
    %2488 = vmatprep.subr.mxu0 0.0
    %2489 = vmatpush1.msra.mxu0 0.0
    %2490 = vmatprep.subr.mxu0 0.0
    %2491 = vmatpush1.msra.mxu0 0.0
    %2492 = vmatprep.subr.mxu0 0.0
    %2493 = vmatpush1.msra.mxu0 0.0
    %2494 = vmatprep.subr.mxu0 0.0
    %2495 = vmatpush1.msra.mxu0 0.0
    %2496 = vmatprep.mubr.f32.mxu0 0.0
    %2497 = vmatmul.mubr.f32.gmra.mrb[0].mxu0 %v2430
    %v2498 = vpop.f32.mrb[0].mxu0
    %v2499 = vadd.f32 %v1710, %v2498
    %v2500 = vpop.f32.mrb[0].mxu0
    %2501 = vdwg.mxu0
    %2502 = vmatprep.subr.mxu0 0.0
    %2503 = vmatpush1.msra.mxu0 %v1783
    %2504 = vmatprep.subr.mxu0 0.0
    %2505 = vmatpush1.msra.mxu0 %v1784
    %2506 = vmatprep.subr.mxu0 0.0
    %2507 = vmatpush1.msra.mxu0 %v1785
    %2508 = vmatprep.subr.mxu0 0.0
    %2509 = vmatpush1.msra.mxu0 %v1786
    %2510 = vmatprep.subr.mxu0 0.0
    %2511 = vmatpush1.msra.mxu0 %v1787
    %2512 = vmatprep.subr.mxu0 0.0
    %2513 = vmatpush1.msra.mxu0 %v1788
    %2514 = vmatprep.subr.mxu0 0.0
    %2515 = vmatpush1.msra.mxu0 %v1789
    %2516 = vmatprep.subr.mxu0 0.0
    %2517 = vmatpush1.msra.mxu0 %v1790
    %2518 = vmatprep.subr.mxu0 0.0
    %2519 = vmatpush1.msra.mxu0 0.0
    %2520 = vmatprep.subr.mxu0 0.0
    %2521 = vmatpush1.msra.mxu0 0.0
    %2522 = vmatprep.subr.mxu0 0.0
    %2523 = vmatpush1.msra.mxu0 0.0
    %2524 = vmatprep.subr.mxu0 0.0
    %2525 = vmatpush1.msra.mxu0 0.0
    %2526 = vmatprep.subr.mxu0 0.0
    %2527 = vmatpush1.msra.mxu0 0.0
    %2528 = vmatprep.subr.mxu0 0.0
    %2529 = vmatpush1.msra.mxu0 0.0
    %2530 = vmatprep.subr.mxu0 0.0
    %2531 = vmatpush1.msra.mxu0 0.0
    %2532 = vmatprep.subr.mxu0 0.0
    %2533 = vmatpush1.msra.mxu0 0.0
    %2534 = vmatprep.subr.mxu0 0.0
    %2535 = vmatpush1.msra.mxu0 0.0
    %2536 = vmatprep.subr.mxu0 0.0
    %2537 = vmatpush1.msra.mxu0 0.0
    %2538 = vmatprep.subr.mxu0 0.0
    %2539 = vmatpush1.msra.mxu0 0.0
    %2540 = vmatprep.subr.mxu0 0.0
    %2541 = vmatpush1.msra.mxu0 0.0
    %2542 = vmatprep.subr.mxu0 0.0
    %2543 = vmatpush1.msra.mxu0 0.0
    %2544 = vmatprep.subr.mxu0 0.0
    %2545 = vmatpush1.msra.mxu0 0.0
    %2546 = vmatprep.subr.mxu0 0.0
    %2547 = vmatpush1.msra.mxu0 0.0
    %2548 = vmatprep.subr.mxu0 0.0
    %2549 = vmatpush1.msra.mxu0 0.0
    %2550 = vmatprep.subr.mxu0 0.0
    %2551 = vmatpush1.msra.mxu0 0.0
    %2552 = vmatprep.subr.mxu0 0.0
    %2553 = vmatpush1.msra.mxu0 0.0
    %2554 = vmatprep.subr.mxu0 0.0
    %2555 = vmatpush1.msra.mxu0 0.0
    %2556 = vmatprep.subr.mxu0 0.0
    %2557 = vmatpush1.msra.mxu0 0.0
    %2558 = vmatprep.subr.mxu0 0.0
    %2559 = vmatpush1.msra.mxu0 0.0
    %2560 = vmatprep.subr.mxu0 0.0
    %2561 = vmatpush1.msra.mxu0 0.0
    %2562 = vmatprep.subr.mxu0 0.0
    %2563 = vmatpush1.msra.mxu0 0.0
    %2564 = vmatprep.subr.mxu0 0.0
    %2565 = vmatpush1.msra.mxu0 0.0
    %2566 = vmatprep.mubr.f32.mxu0 0.0
    %2567 = vmatmul.mubr.f32.gmra.mrb[0].mxu0 %v2430
    %v2568 = vpop.f32.mrb[0].mxu0
    %v2569 = vadd.f32 %v1797, %v2568
    %v2570 = vpop.f32.mrb[0].mxu0
    %2571 = vdwg.mxu0
    %2572 = vmatprep.subr.mxu0 0.0
    %2573 = vmatpush1.msra.mxu0 %v1870
    %2574 = vmatprep.subr.mxu0 0.0
    %2575 = vmatpush1.msra.mxu0 %v1871
    %2576 = vmatprep.subr.mxu0 0.0
    %2577 = vmatpush1.msra.mxu0 %v1872
    %2578 = vmatprep.subr.mxu0 0.0
    %2579 = vmatpush1.msra.mxu0 %v1873
    %2580 = vmatprep.subr.mxu0 0.0
    %2581 = vmatpush1.msra.mxu0 %v1874
    %2582 = vmatprep.subr.mxu0 0.0
    %2583 = vmatpush1.msra.mxu0 %v1875
    %2584 = vmatprep.subr.mxu0 0.0
    %2585 = vmatpush1.msra.mxu0 %v1876
    %2586 = vmatprep.subr.mxu0 0.0
    %2587 = vmatpush1.msra.mxu0 %v1877
    %2588 = vmatprep.subr.mxu0 0.0
    %2589 = vmatpush1.msra.mxu0 0.0
    %2590 = vmatprep.subr.mxu0 0.0
    %2591 = vmatpush1.msra.mxu0 0.0
    %2592 = vmatprep.subr.mxu0 0.0
    %2593 = vmatpush1.msra.mxu0 0.0
    %2594 = vmatprep.subr.mxu0 0.0
    %2595 = vmatpush1.msra.mxu0 0.0
    %2596 = vmatprep.subr.mxu0 0.0
    %2597 = vmatpush1.msra.mxu0 0.0
    %2598 = vmatprep.subr.mxu0 0.0
    %2599 = vmatpush1.msra.mxu0 0.0
    %2600 = vmatprep.subr.mxu0 0.0
    %2601 = vmatpush1.msra.mxu0 0.0
    %2602 = vmatprep.subr.mxu0 0.0
    %2603 = vmatpush1.msra.mxu0 0.0
    %2604 = vmatprep.subr.mxu0 0.0
    %2605 = vmatpush1.msra.mxu0 0.0
    %2606 = vmatprep.subr.mxu0 0.0
    %2607 = vmatpush1.msra.mxu0 0.0
    %2608 = vmatprep.subr.mxu0 0.0
    %2609 = vmatpush1.msra.mxu0 0.0
    %2610 = vmatprep.subr.mxu0 0.0
    %2611 = vmatpush1.msra.mxu0 0.0
    %2612 = vmatprep.subr.mxu0 0.0
    %2613 = vmatpush1.msra.mxu0 0.0
    %2614 = vmatprep.subr.mxu0 0.0
    %2615 = vmatpush1.msra.mxu0 0.0
    %2616 = vmatprep.subr.mxu0 0.0
    %2617 = vmatpush1.msra.mxu0 0.0
    %2618 = vmatprep.subr.mxu0 0.0
    %2619 = vmatpush1.msra.mxu0 0.0
    %2620 = vmatprep.subr.mxu0 0.0
    %2621 = vmatpush1.msra.mxu0 0.0
    %2622 = vmatprep.subr.mxu0 0.0
    %2623 = vmatpush1.msra.mxu0 0.0
    %2624 = vmatprep.subr.mxu0 0.0
    %2625 = vmatpush1.msra.mxu0 0.0
    %2626 = vmatprep.subr.mxu0 0.0
    %2627 = vmatpush1.msra.mxu0 0.0
    %2628 = vmatprep.subr.mxu0 0.0
    %2629 = vmatpush1.msra.mxu0 0.0
    %2630 = vmatprep.subr.mxu0 0.0
    %2631 = vmatpush1.msra.mxu0 0.0
    %2632 = vmatprep.subr.mxu0 0.0
    %2633 = vmatpush1.msra.mxu0 0.0
    %2634 = vmatprep.subr.mxu0 0.0
    %2635 = vmatpush1.msra.mxu0 0.0
    %2636 = vmatprep.mubr.f32.mxu0 0.0
    %2637 = vmatmul.mubr.f32.gmra.mrb[0].mxu0 %v2430
    %v2638 = vpop.f32.mrb[0].mxu0
    %v2639 = vadd.f32 %v1884, %v2638
    %v2640 = vpop.f32.mrb[0].mxu0
    %2641 = vdwg.mxu0
    %v2642 = vadd.f32 %v2286, %v2499
    %v2643 = vxor.u32 %v2642, 2147483648
    %v2644 = vmul.f32 %v2643, 1.442695
    %v2645 = vpow.pop %v2644
    %v2646 = vadd.f32 %v2645, 1.0
    %v2647 = vrcp.pop %v2646
    %v2648 = vmul.f32 1.0, %v2647
    %v2649 = vadd.f32 %v2356, %v2569
    %v2650 = vxor.u32 %v2649, 2147483648
    %v2651 = vmul.f32 %v2650, 1.442695
    %v2652 = vpow.pop %v2651
    %v2653 = vadd.f32 %v2652, 1.0
    %v2654 = vrcp.pop %v2653
    %v2655 = vmul.f32 1.0, %v2654
    %v2656 = vmul.f32 %v2648, %v2639
    %v2657 = vadd.f32 %v2426, %v2656
    %v2658 = vtanh.pop %v2657
    %v2659 = vsub.f32 1.0, %v2655
    %v2660 = vmul.f32 %v2659, %v2658
    %v2661 = vmul.f32 %v2655, %v1976
    %v2662 = vadd.f32 %v2660, %v2661
    %s2663 = scalar_lea.vmem [#allocation2], 16
    %v2664 = vld [vmem:[%s2663] sm:$0xff]
    %s2665 = sadd.s32 16, 64
    %s2666 = scalar_lea.vmem [#allocation2], %s2665
    %v2667 = vld [vmem:[%s2666] sm:$0xff]
    %s2668 = sadd.s32 16, 128
    %s2669 = scalar_lea.vmem [#allocation2], %s2668
    %v2670 = vld [vmem:[%s2669] sm:$0xff]
    %2671 = vmatprep.subr.mxu0 0.0
    %2672 = vmatpush1.msra.mxu0 %v1152
    %2673 = vmatprep.subr.mxu0 0.0
    %2674 = vmatpush1.msra.mxu0 %v1153
    %2675 = vmatprep.subr.mxu0 0.0
    %2676 = vmatpush1.msra.mxu0 %v1154
    %2677 = vmatprep.subr.mxu0 0.0
    %2678 = vmatpush1.msra.mxu0 %v1155
    %2679 = vmatprep.subr.mxu0 0.0
    %2680 = vmatpush1.msra.mxu0 %v1156
    %2681 = vmatprep.subr.mxu0 0.0
    %2682 = vmatpush1.msra.mxu0 %v1157
    %2683 = vmatprep.subr.mxu0 0.0
    %2684 = vmatpush1.msra.mxu0 %v1158
    %2685 = vmatprep.subr.mxu0 0.0
    %2686 = vmatpush1.msra.mxu0 %v1159
    %2687 = vmatprep.subr.mxu0 0.0
    %2688 = vmatpush1.msra.mxu0 0.0
    %2689 = vmatprep.subr.mxu0 0.0
    %2690 = vmatpush1.msra.mxu0 0.0
    %2691 = vmatprep.subr.mxu0 0.0
    %2692 = vmatpush1.msra.mxu0 0.0
    %2693 = vmatprep.subr.mxu0 0.0
    %2694 = vmatpush1.msra.mxu0 0.0
    %2695 = vmatprep.subr.mxu0 0.0
    %2696 = vmatpush1.msra.mxu0 0.0
    %2697 = vmatprep.subr.mxu0 0.0
    %2698 = vmatpush1.msra.mxu0 0.0
    %2699 = vmatprep.subr.mxu0 0.0
    %2700 = vmatpush1.msra.mxu0 0.0
    %2701 = vmatprep.subr.mxu0 0.0
    %2702 = vmatpush1.msra.mxu0 0.0
    %2703 = vmatprep.subr.mxu0 0.0
    %2704 = vmatpush1.msra.mxu0 0.0
    %2705 = vmatprep.subr.mxu0 0.0
    %2706 = vmatpush1.msra.mxu0 0.0
    %2707 = vmatprep.subr.mxu0 0.0
    %2708 = vmatpush1.msra.mxu0 0.0
    %2709 = vmatprep.subr.mxu0 0.0
    %2710 = vmatpush1.msra.mxu0 0.0
    %2711 = vmatprep.subr.mxu0 0.0
    %2712 = vmatpush1.msra.mxu0 0.0
    %2713 = vmatprep.subr.mxu0 0.0
    %2714 = vmatpush1.msra.mxu0 0.0
    %2715 = vmatprep.subr.mxu0 0.0
    %2716 = vmatpush1.msra.mxu0 0.0
    %2717 = vmatprep.subr.mxu0 0.0
    %2718 = vmatpush1.msra.mxu0 0.0
    %2719 = vmatprep.subr.mxu0 0.0
    %2720 = vmatpush1.msra.mxu0 0.0
    %2721 = vmatprep.subr.mxu0 0.0
    %2722 = vmatpush1.msra.mxu0 0.0
    %2723 = vmatprep.subr.mxu0 0.0
    %2724 = vmatpush1.msra.mxu0 0.0
    %2725 = vmatprep.subr.mxu0 0.0
    %2726 = vmatpush1.msra.mxu0 0.0
    %2727 = vmatprep.subr.mxu0 0.0
    %2728 = vmatpush1.msra.mxu0 0.0
    %2729 = vmatprep.subr.mxu0 0.0
    %2730 = vmatpush1.msra.mxu0 0.0
    %2731 = vmatprep.subr.mxu0 0.0
    %2732 = vmatpush1.msra.mxu0 0.0
    %2733 = vmatprep.subr.mxu0 0.0
    %2734 = vmatpush1.msra.mxu0 0.0
    %2735 = vmatprep.mubr.f32.mxu0 0.0
    %2736 = vmatmul.mubr.f32.gmra.mrb[0].mxu0 %v2217
    %v2737 = vpop.f32.mrb[0].mxu0
    %v2738 = vadd.f32 %v1165, %v2737
    %v2739 = vpop.f32.mrb[0].mxu0
    %2740 = vdwg.mxu0
    %2741 = vmatprep.subr.mxu0 0.0
    %2742 = vmatpush1.msra.mxu0 %v1241
    %2743 = vmatprep.subr.mxu0 0.0
    %2744 = vmatpush1.msra.mxu0 %v1242
    %2745 = vmatprep.subr.mxu0 0.0
    %2746 = vmatpush1.msra.mxu0 %v1243
    %2747 = vmatprep.subr.mxu0 0.0
    %2748 = vmatpush1.msra.mxu0 %v1244
    %2749 = vmatprep.subr.mxu0 0.0
    %2750 = vmatpush1.msra.mxu0 %v1245
    %2751 = vmatprep.subr.mxu0 0.0
    %2752 = vmatpush1.msra.mxu0 %v1246
    %2753 = vmatprep.subr.mxu0 0.0
    %2754 = vmatpush1.msra.mxu0 %v1247
    %2755 = vmatprep.subr.mxu0 0.0
    %2756 = vmatpush1.msra.mxu0 %v1248
    %2757 = vmatprep.subr.mxu0 0.0
    %2758 = vmatpush1.msra.mxu0 0.0
    %2759 = vmatprep.subr.mxu0 0.0
    %2760 = vmatpush1.msra.mxu0 0.0
    %2761 = vmatprep.subr.mxu0 0.0
    %2762 = vmatpush1.msra.mxu0 0.0
    %2763 = vmatprep.subr.mxu0 0.0
    %2764 = vmatpush1.msra.mxu0 0.0
    %2765 = vmatprep.subr.mxu0 0.0
    %2766 = vmatpush1.msra.mxu0 0.0
    %2767 = vmatprep.subr.mxu0 0.0
    %2768 = vmatpush1.msra.mxu0 0.0
    %2769 = vmatprep.subr.mxu0 0.0
    %2770 = vmatpush1.msra.mxu0 0.0
    %2771 = vmatprep.subr.mxu0 0.0
    %2772 = vmatpush1.msra.mxu0 0.0
    %2773 = vmatprep.subr.mxu0 0.0
    %2774 = vmatpush1.msra.mxu0 0.0
    %2775 = vmatprep.subr.mxu0 0.0
    %2776 = vmatpush1.msra.mxu0 0.0
    %2777 = vmatprep.subr.mxu0 0.0
    %2778 = vmatpush1.msra.mxu0 0.0
    %2779 = vmatprep.subr.mxu0 0.0
    %2780 = vmatpush1.msra.mxu0 0.0
    %2781 = vmatprep.subr.mxu0 0.0
    %2782 = vmatpush1.msra.mxu0 0.0
    %2783 = vmatprep.subr.mxu0 0.0
    %2784 = vmatpush1.msra.mxu0 0.0
    %2785 = vmatprep.subr.mxu0 0.0
    %2786 = vmatpush1.msra.mxu0 0.0
    %2787 = vmatprep.subr.mxu0 0.0
    %2788 = vmatpush1.msra.mxu0 0.0
    %2789 = vmatprep.subr.mxu0 0.0
    %2790 = vmatpush1.msra.mxu0 0.0
    %2791 = vmatprep.subr.mxu0 0.0
    %2792 = vmatpush1.msra.mxu0 0.0
    %2793 = vmatprep.subr.mxu0 0.0
    %2794 = vmatpush1.msra.mxu0 0.0
    %2795 = vmatprep.subr.mxu0 0.0
    %2796 = vmatpush1.msra.mxu0 0.0
    %2797 = vmatprep.subr.mxu0 0.0
    %2798 = vmatpush1.msra.mxu0 0.0
    %2799 = vmatprep.subr.mxu0 0.0
    %2800 = vmatpush1.msra.mxu0 0.0
    %2801 = vmatprep.subr.mxu0 0.0
    %2802 = vmatpush1.msra.mxu0 0.0
    %2803 = vmatprep.subr.mxu0 0.0
    %2804 = vmatpush1.msra.mxu0 0.0
    %2805 = vmatprep.mubr.f32.mxu0 0.0
    %2806 = vmatmul.mubr.f32.gmra.mrb[0].mxu0 %v2217
    %v2807 = vpop.f32.mrb[0].mxu0
    %v2808 = vadd.f32 %v1255, %v2807
    %v2809 = vpop.f32.mrb[0].mxu0
    %2810 = vdwg.mxu0
    %2811 = vmatprep.subr.mxu0 0.0
    %2812 = vmatpush1.msra.mxu0 %v1328
    %2813 = vmatprep.subr.mxu0 0.0
    %2814 = vmatpush1.msra.mxu0 %v1329
    %2815 = vmatprep.subr.mxu0 0.0
    %2816 = vmatpush1.msra.mxu0 %v1330
    %2817 = vmatprep.subr.mxu0 0.0
    %2818 = vmatpush1.msra.mxu0 %v1331
    %2819 = vmatprep.subr.mxu0 0.0
    %2820 = vmatpush1.msra.mxu0 %v1332
    %2821 = vmatprep.subr.mxu0 0.0
    %2822 = vmatpush1.msra.mxu0 %v1333
    %2823 = vmatprep.subr.mxu0 0.0
    %2824 = vmatpush1.msra.mxu0 %v1334
    %2825 = vmatprep.subr.mxu0 0.0
    %2826 = vmatpush1.msra.mxu0 %v1335
    %2827 = vmatprep.subr.mxu0 0.0
    %2828 = vmatpush1.msra.mxu0 0.0
    %2829 = vmatprep.subr.mxu0 0.0
    %2830 = vmatpush1.msra.mxu0 0.0
    %2831 = vmatprep.subr.mxu0 0.0
    %2832 = vmatpush1.msra.mxu0 0.0
    %2833 = vmatprep.subr.mxu0 0.0
    %2834 = vmatpush1.msra.mxu0 0.0
    %2835 = vmatprep.subr.mxu0 0.0
    %2836 = vmatpush1.msra.mxu0 0.0
    %2837 = vmatprep.subr.mxu0 0.0
    %2838 = vmatpush1.msra.mxu0 0.0
    %2839 = vmatprep.subr.mxu0 0.0
    %2840 = vmatpush1.msra.mxu0 0.0
    %2841 = vmatprep.subr.mxu0 0.0
    %2842 = vmatpush1.msra.mxu0 0.0
    %2843 = vmatprep.subr.mxu0 0.0
    %2844 = vmatpush1.msra.mxu0 0.0
    %2845 = vmatprep.subr.mxu0 0.0
    %2846 = vmatpush1.msra.mxu0 0.0
    %2847 = vmatprep.subr.mxu0 0.0
    %2848 = vmatpush1.msra.mxu0 0.0
    %2849 = vmatprep.subr.mxu0 0.0
    %2850 = vmatpush1.msra.mxu0 0.0
    %2851 = vmatprep.subr.mxu0 0.0
    %2852 = vmatpush1.msra.mxu0 0.0
    %2853 = vmatprep.subr.mxu0 0.0
    %2854 = vmatpush1.msra.mxu0 0.0
    %2855 = vmatprep.subr.mxu0 0.0
    %2856 = vmatpush1.msra.mxu0 0.0
    %2857 = vmatprep.subr.mxu0 0.0
    %2858 = vmatpush1.msra.mxu0 0.0
    %2859 = vmatprep.subr.mxu0 0.0
    %2860 = vmatpush1.msra.mxu0 0.0
    %2861 = vmatprep.subr.mxu0 0.0
    %2862 = vmatpush1.msra.mxu0 0.0
    %2863 = vmatprep.subr.mxu0 0.0
    %2864 = vmatpush1.msra.mxu0 0.0
    %2865 = vmatprep.subr.mxu0 0.0
    %2866 = vmatpush1.msra.mxu0 0.0
    %2867 = vmatprep.subr.mxu0 0.0
    %2868 = vmatpush1.msra.mxu0 0.0
    %2869 = vmatprep.subr.mxu0 0.0
    %2870 = vmatpush1.msra.mxu0 0.0
    %2871 = vmatprep.subr.mxu0 0.0
    %2872 = vmatpush1.msra.mxu0 0.0
    %2873 = vmatprep.subr.mxu0 0.0
    %2874 = vmatpush1.msra.mxu0 0.0
    %2875 = vmatprep.mubr.f32.mxu0 0.0
    %2876 = vmatmul.mubr.f32.gmra.mrb[0].mxu0 %v2217
    %v2877 = vpop.f32.mrb[0].mxu0
    %v2878 = vadd.f32 %v1342, %v2877
    %v2879 = vpop.f32.mrb[0].mxu0
    %2880 = vdwg.mxu0
    %v2881 = vadd.f32 %v2664, %v2738
    %v2882 = vxor.u32 %v2881, 2147483648
    %v2883 = vmul.f32 %v2882, 1.442695
    %v2884 = vpow.pop %v2883
    %v2885 = vadd.f32 %v2884, 1.0
    %v2886 = vrcp.pop %v2885
    %v2887 = vmul.f32 1.0, %v2886
    %v2888 = vadd.f32 %v2667, %v2808
    %v2889 = vxor.u32 %v2888, 2147483648
    %v2890 = vmul.f32 %v2889, 1.442695
    %v2891 = vpow.pop %v2890
    %v2892 = vadd.f32 %v2891, 1.0
    %v2893 = vrcp.pop %v2892
    %v2894 = vmul.f32 1.0, %v2893
    %v2895 = vmul.f32 %v2887, %v2878
    %v2896 = vadd.f32 %v2670, %v2895
    %v2897 = vtanh.pop %v2896
    %v2898 = vsub.f32 1.0, %v2894
    %v2899 = vmul.f32 %v2898, %v2897
    %v2900 = vmul.f32 %v2894, %v2215
    %v2901 = vadd.f32 %v2899, %v2900
    %v2903 = vsel %vm301, %v2901, 0
    %2905 = vmatprep.subr.mxu0 0.0
    %2906 = vmatpush1.msra.mxu0 %v1435
    %2907 = vmatprep.subr.mxu0 0.0
    %2908 = vmatpush1.msra.mxu0 %v1436
    %2909 = vmatprep.subr.mxu0 0.0
    %2910 = vmatpush1.msra.mxu0 %v1437
    %2911 = vmatprep.subr.mxu0 0.0
    %2912 = vmatpush1.msra.mxu0 %v1438
    %2913 = vmatprep.subr.mxu0 0.0
    %2914 = vmatpush1.msra.mxu0 %v1439
    %2915 = vmatprep.subr.mxu0 0.0
    %2916 = vmatpush1.msra.mxu0 %v1440
    %2917 = vmatprep.subr.mxu0 0.0
    %2918 = vmatpush1.msra.mxu0 %v1441
    %2919 = vmatprep.subr.mxu0 0.0
    %2920 = vmatpush1.msra.mxu0 %v1442
    %2921 = vmatprep.subr.mxu0 0.0
    %2922 = vmatpush1.msra.mxu0 0.0
    %2923 = vmatprep.subr.mxu0 0.0
    %2924 = vmatpush1.msra.mxu0 0.0
    %2925 = vmatprep.subr.mxu0 0.0
    %2926 = vmatpush1.msra.mxu0 0.0
    %2927 = vmatprep.subr.mxu0 0.0
    %2928 = vmatpush1.msra.mxu0 0.0
    %2929 = vmatprep.subr.mxu0 0.0
    %2930 = vmatpush1.msra.mxu0 0.0
    %2931 = vmatprep.subr.mxu0 0.0
    %2932 = vmatpush1.msra.mxu0 0.0
    %2933 = vmatprep.subr.mxu0 0.0
    %2934 = vmatpush1.msra.mxu0 0.0
    %2935 = vmatprep.subr.mxu0 0.0
    %2936 = vmatpush1.msra.mxu0 0.0
    %2937 = vmatprep.subr.mxu0 0.0
    %2938 = vmatpush1.msra.mxu0 0.0
    %2939 = vmatprep.subr.mxu0 0.0
    %2940 = vmatpush1.msra.mxu0 0.0
    %2941 = vmatprep.subr.mxu0 0.0
    %2942 = vmatpush1.msra.mxu0 0.0
    %2943 = vmatprep.subr.mxu0 0.0
    %2944 = vmatpush1.msra.mxu0 0.0
    %2945 = vmatprep.subr.mxu0 0.0
    %2946 = vmatpush1.msra.mxu0 0.0
    %2947 = vmatprep.subr.mxu0 0.0
    %2948 = vmatpush1.msra.mxu0 0.0
    %2949 = vmatprep.subr.mxu0 0.0
    %2950 = vmatpush1.msra.mxu0 0.0
    %2951 = vmatprep.subr.mxu0 0.0
    %2952 = vmatpush1.msra.mxu0 0.0
    %2953 = vmatprep.subr.mxu0 0.0
    %2954 = vmatpush1.msra.mxu0 0.0
    %2955 = vmatprep.subr.mxu0 0.0
    %2956 = vmatpush1.msra.mxu0 0.0
    %2957 = vmatprep.subr.mxu0 0.0
    %2958 = vmatpush1.msra.mxu0 0.0
    %2959 = vmatprep.subr.mxu0 0.0
    %2960 = vmatpush1.msra.mxu0 0.0
    %2961 = vmatprep.subr.mxu0 0.0
    %2962 = vmatpush1.msra.mxu0 0.0
    %2963 = vmatprep.subr.mxu0 0.0
    %2964 = vmatpush1.msra.mxu0 0.0
    %2965 = vmatprep.subr.mxu0 0.0
    %2966 = vmatpush1.msra.mxu0 0.0
    %2967 = vmatprep.subr.mxu0 0.0
    %2968 = vmatpush1.msra.mxu0 0.0
    %2969 = vmatprep.mubr.f32.mxu0 0.0
    %2970 = vmatmul.mubr.f32.gmra.mrb[0].mxu0 %v2903
    %v2971 = vpop.f32.mrb[0].mxu0
    %v2972 = vadd.f32 %v1448, %v2971
    %v2973 = vpop.f32.mrb[0].mxu0
    %2974 = vdwg.mxu0
    %2975 = vmatprep.subr.mxu0 0.0
    %2976 = vmatpush1.msra.mxu0 %v1524
    %2977 = vmatprep.subr.mxu0 0.0
    %2978 = vmatpush1.msra.mxu0 %v1525
    %2979 = vmatprep.subr.mxu0 0.0
    %2980 = vmatpush1.msra.mxu0 %v1526
    %2981 = vmatprep.subr.mxu0 0.0
    %2982 = vmatpush1.msra.mxu0 %v1527
    %2983 = vmatprep.subr.mxu0 0.0
    %2984 = vmatpush1.msra.mxu0 %v1528
    %2985 = vmatprep.subr.mxu0 0.0
    %2986 = vmatpush1.msra.mxu0 %v1529
    %2987 = vmatprep.subr.mxu0 0.0
    %2988 = vmatpush1.msra.mxu0 %v1530
    %2989 = vmatprep.subr.mxu0 0.0
    %2990 = vmatpush1.msra.mxu0 %v1531
    %2991 = vmatprep.subr.mxu0 0.0
    %2992 = vmatpush1.msra.mxu0 0.0
    %2993 = vmatprep.subr.mxu0 0.0
    %2994 = vmatpush1.msra.mxu0 0.0
    %2995 = vmatprep.subr.mxu0 0.0
    %2996 = vmatpush1.msra.mxu0 0.0
    %2997 = vmatprep.subr.mxu0 0.0
    %2998 = vmatpush1.msra.mxu0 0.0
    %2999 = vmatprep.subr.mxu0 0.0
    %3000 = vmatpush1.msra.mxu0 0.0
    %3001 = vmatprep.subr.mxu0 0.0
    %3002 = vmatpush1.msra.mxu0 0.0
    %3003 = vmatprep.subr.mxu0 0.0
    %3004 = vmatpush1.msra.mxu0 0.0
    %3005 = vmatprep.subr.mxu0 0.0
    %3006 = vmatpush1.msra.mxu0 0.0
    %3007 = vmatprep.subr.mxu0 0.0
    %3008 = vmatpush1.msra.mxu0 0.0
    %3009 = vmatprep.subr.mxu0 0.0
    %3010 = vmatpush1.msra.mxu0 0.0
    %3011 = vmatprep.subr.mxu0 0.0
    %3012 = vmatpush1.msra.mxu0 0.0
    %3013 = vmatprep.subr.mxu0 0.0
    %3014 = vmatpush1.msra.mxu0 0.0
    %3015 = vmatprep.subr.mxu0 0.0
    %3016 = vmatpush1.msra.mxu0 0.0
    %3017 = vmatprep.subr.mxu0 0.0
    %3018 = vmatpush1.msra.mxu0 0.0
    %3019 = vmatprep.subr.mxu0 0.0
    %3020 = vmatpush1.msra.mxu0 0.0
    %3021 = vmatprep.subr.mxu0 0.0
    %3022 = vmatpush1.msra.mxu0 0.0
    %3023 = vmatprep.subr.mxu0 0.0
    %3024 = vmatpush1.msra.mxu0 0.0
    %3025 = vmatprep.subr.mxu0 0.0
    %3026 = vmatpush1.msra.mxu0 0.0
    %3027 = vmatprep.subr.mxu0 0.0
    %3028 = vmatpush1.msra.mxu0 0.0
    %3029 = vmatprep.subr.mxu0 0.0
    %3030 = vmatpush1.msra.mxu0 0.0
    %3031 = vmatprep.subr.mxu0 0.0
    %3032 = vmatpush1.msra.mxu0 0.0
    %3033 = vmatprep.subr.mxu0 0.0
    %3034 = vmatpush1.msra.mxu0 0.0
    %3035 = vmatprep.subr.mxu0 0.0
    %3036 = vmatpush1.msra.mxu0 0.0
    %3037 = vmatprep.subr.mxu0 0.0
    %3038 = vmatpush1.msra.mxu0 0.0
    %3039 = vmatprep.mubr.f32.mxu0 0.0
    %3040 = vmatmul.mubr.f32.gmra.mrb[0].mxu0 %v2903
    %v3041 = vpop.f32.mrb[0].mxu0
    %v3042 = vadd.f32 %v1538, %v3041
    %v3043 = vpop.f32.mrb[0].mxu0
    %3044 = vdwg.mxu0
    %3045 = vmatprep.subr.mxu0 0.0
    %3046 = vmatpush1.msra.mxu0 %v1611
    %3047 = vmatprep.subr.mxu0 0.0
    %3048 = vmatpush1.msra.mxu0 %v1612
    %3049 = vmatprep.subr.mxu0 0.0
    %3050 = vmatpush1.msra.mxu0 %v1613
    %3051 = vmatprep.subr.mxu0 0.0
    %3052 = vmatpush1.msra.mxu0 %v1614
    %3053 = vmatprep.subr.mxu0 0.0
    %3054 = vmatpush1.msra.mxu0 %v1615
    %3055 = vmatprep.subr.mxu0 0.0
    %3056 = vmatpush1.msra.mxu0 %v1616
    %3057 = vmatprep.subr.mxu0 0.0
    %3058 = vmatpush1.msra.mxu0 %v1617
    %3059 = vmatprep.subr.mxu0 0.0
    %3060 = vmatpush1.msra.mxu0 %v1618
    %3061 = vmatprep.subr.mxu0 0.0
    %3062 = vmatpush1.msra.mxu0 0.0
    %3063 = vmatprep.subr.mxu0 0.0
    %3064 = vmatpush1.msra.mxu0 0.0
    %3065 = vmatprep.subr.mxu0 0.0
    %3066 = vmatpush1.msra.mxu0 0.0
    %3067 = vmatprep.subr.mxu0 0.0
    %3068 = vmatpush1.msra.mxu0 0.0
    %3069 = vmatprep.subr.mxu0 0.0
    %3070 = vmatpush1.msra.mxu0 0.0
    %3071 = vmatprep.subr.mxu0 0.0
    %3072 = vmatpush1.msra.mxu0 0.0
    %3073 = vmatprep.subr.mxu0 0.0
    %3074 = vmatpush1.msra.mxu0 0.0
    %3075 = vmatprep.subr.mxu0 0.0
    %3076 = vmatpush1.msra.mxu0 0.0
    %3077 = vmatprep.subr.mxu0 0.0
    %3078 = vmatpush1.msra.mxu0 0.0
    %3079 = vmatprep.subr.mxu0 0.0
    %3080 = vmatpush1.msra.mxu0 0.0
    %3081 = vmatprep.subr.mxu0 0.0
    %3082 = vmatpush1.msra.mxu0 0.0
    %3083 = vmatprep.subr.mxu0 0.0
    %3084 = vmatpush1.msra.mxu0 0.0
    %3085 = vmatprep.subr.mxu0 0.0
    %3086 = vmatpush1.msra.mxu0 0.0
    %3087 = vmatprep.subr.mxu0 0.0
    %3088 = vmatpush1.msra.mxu0 0.0
    %3089 = vmatprep.subr.mxu0 0.0
    %3090 = vmatpush1.msra.mxu0 0.0
    %3091 = vmatprep.subr.mxu0 0.0
    %3092 = vmatpush1.msra.mxu0 0.0
    %3093 = vmatprep.subr.mxu0 0.0
    %3094 = vmatpush1.msra.mxu0 0.0
    %3095 = vmatprep.subr.mxu0 0.0
    %3096 = vmatpush1.msra.mxu0 0.0
    %3097 = vmatprep.subr.mxu0 0.0
    %3098 = vmatpush1.msra.mxu0 0.0
    %3099 = vmatprep.subr.mxu0 0.0
    %3100 = vmatpush1.msra.mxu0 0.0
    %3101 = vmatprep.subr.mxu0 0.0
    %3102 = vmatpush1.msra.mxu0 0.0
    %3103 = vmatprep.subr.mxu0 0.0
    %3104 = vmatpush1.msra.mxu0 0.0
    %3105 = vmatprep.subr.mxu0 0.0
    %3106 = vmatpush1.msra.mxu0 0.0
    %3107 = vmatprep.subr.mxu0 0.0
    %3108 = vmatpush1.msra.mxu0 0.0
    %3109 = vmatprep.mubr.f32.mxu0 0.0
    %3110 = vmatmul.mubr.f32.gmra.mrb[0].mxu0 %v2903
    %v3111 = vpop.f32.mrb[0].mxu0
    %v3112 = vadd.f32 %v1625, %v3111
    %v3113 = vpop.f32.mrb[0].mxu0
    %3114 = vdwg.mxu0
    %v3116 = vsel %vm301, %v2662, 0
    %3118 = vmatprep.subr.mxu0 0.0
    %3119 = vmatpush1.msra.mxu0 %v1697
    %3120 = vmatprep.subr.mxu0 0.0
    %3121 = vmatpush1.msra.mxu0 %v1698
    %3122 = vmatprep.subr.mxu0 0.0
    %3123 = vmatpush1.msra.mxu0 %v1699
    %3124 = vmatprep.subr.mxu0 0.0
    %3125 = vmatpush1.msra.mxu0 %v1700
    %3126 = vmatprep.subr.mxu0 0.0
    %3127 = vmatpush1.msra.mxu0 %v1701
    %3128 = vmatprep.subr.mxu0 0.0
    %3129 = vmatpush1.msra.mxu0 %v1702
    %3130 = vmatprep.subr.mxu0 0.0
    %3131 = vmatpush1.msra.mxu0 %v1703
    %3132 = vmatprep.subr.mxu0 0.0
    %3133 = vmatpush1.msra.mxu0 %v1704
    %3134 = vmatprep.subr.mxu0 0.0
    %3135 = vmatpush1.msra.mxu0 0.0
    %3136 = vmatprep.subr.mxu0 0.0
    %3137 = vmatpush1.msra.mxu0 0.0
    %3138 = vmatprep.subr.mxu0 0.0
    %3139 = vmatpush1.msra.mxu0 0.0
    %3140 = vmatprep.subr.mxu0 0.0
    %3141 = vmatpush1.msra.mxu0 0.0
    %3142 = vmatprep.subr.mxu0 0.0
    %3143 = vmatpush1.msra.mxu0 0.0
    %3144 = vmatprep.subr.mxu0 0.0
    %3145 = vmatpush1.msra.mxu0 0.0
    %3146 = vmatprep.subr.mxu0 0.0
    %3147 = vmatpush1.msra.mxu0 0.0
    %3148 = vmatprep.subr.mxu0 0.0
    %3149 = vmatpush1.msra.mxu0 0.0
    %3150 = vmatprep.subr.mxu0 0.0
    %3151 = vmatpush1.msra.mxu0 0.0
    %3152 = vmatprep.subr.mxu0 0.0
    %3153 = vmatpush1.msra.mxu0 0.0
    %3154 = vmatprep.subr.mxu0 0.0
    %3155 = vmatpush1.msra.mxu0 0.0
    %3156 = vmatprep.subr.mxu0 0.0
    %3157 = vmatpush1.msra.mxu0 0.0
    %3158 = vmatprep.subr.mxu0 0.0
    %3159 = vmatpush1.msra.mxu0 0.0
    %3160 = vmatprep.subr.mxu0 0.0
    %3161 = vmatpush1.msra.mxu0 0.0
    %3162 = vmatprep.subr.mxu0 0.0
    %3163 = vmatpush1.msra.mxu0 0.0
    %3164 = vmatprep.subr.mxu0 0.0
    %3165 = vmatpush1.msra.mxu0 0.0
    %3166 = vmatprep.subr.mxu0 0.0
    %3167 = vmatpush1.msra.mxu0 0.0
    %3168 = vmatprep.subr.mxu0 0.0
    %3169 = vmatpush1.msra.mxu0 0.0
    %3170 = vmatprep.subr.mxu0 0.0
    %3171 = vmatpush1.msra.mxu0 0.0
    %3172 = vmatprep.subr.mxu0 0.0
    %3173 = vmatpush1.msra.mxu0 0.0
    %3174 = vmatprep.subr.mxu0 0.0
    %3175 = vmatpush1.msra.mxu0 0.0
    %3176 = vmatprep.subr.mxu0 0.0
    %3177 = vmatpush1.msra.mxu0 0.0
    %3178 = vmatprep.subr.mxu0 0.0
    %3179 = vmatpush1.msra.mxu0 0.0
    %3180 = vmatprep.subr.mxu0 0.0
    %3181 = vmatpush1.msra.mxu0 0.0
    %3182 = vmatprep.mubr.f32.mxu0 0.0
    %3183 = vmatmul.mubr.f32.gmra.mrb[0].mxu0 %v3116
    %v3184 = vpop.f32.mrb[0].mxu0
    %v3185 = vadd.f32 %v1710, %v3184
    %v3186 = vpop.f32.mrb[0].mxu0
    %3187 = vdwg.mxu0
    %3188 = vmatprep.subr.mxu0 0.0
    %3189 = vmatpush1.msra.mxu0 %v1783
    %3190 = vmatprep.subr.mxu0 0.0
    %3191 = vmatpush1.msra.mxu0 %v1784
    %3192 = vmatprep.subr.mxu0 0.0
    %3193 = vmatpush1.msra.mxu0 %v1785
    %3194 = vmatprep.subr.mxu0 0.0
    %3195 = vmatpush1.msra.mxu0 %v1786
    %3196 = vmatprep.subr.mxu0 0.0
    %3197 = vmatpush1.msra.mxu0 %v1787
    %3198 = vmatprep.subr.mxu0 0.0
    %3199 = vmatpush1.msra.mxu0 %v1788
    %3200 = vmatprep.subr.mxu0 0.0
    %3201 = vmatpush1.msra.mxu0 %v1789
    %3202 = vmatprep.subr.mxu0 0.0
    %3203 = vmatpush1.msra.mxu0 %v1790
    %3204 = vmatprep.subr.mxu0 0.0
    %3205 = vmatpush1.msra.mxu0 0.0
    %3206 = vmatprep.subr.mxu0 0.0
    %3207 = vmatpush1.msra.mxu0 0.0
    %3208 = vmatprep.subr.mxu0 0.0
    %3209 = vmatpush1.msra.mxu0 0.0
    %3210 = vmatprep.subr.mxu0 0.0
    %3211 = vmatpush1.msra.mxu0 0.0
    %3212 = vmatprep.subr.mxu0 0.0
    %3213 = vmatpush1.msra.mxu0 0.0
    %3214 = vmatprep.subr.mxu0 0.0
    %3215 = vmatpush1.msra.mxu0 0.0
    %3216 = vmatprep.subr.mxu0 0.0
    %3217 = vmatpush1.msra.mxu0 0.0
    %3218 = vmatprep.subr.mxu0 0.0
    %3219 = vmatpush1.msra.mxu0 0.0
    %3220 = vmatprep.subr.mxu0 0.0
    %3221 = vmatpush1.msra.mxu0 0.0
    %3222 = vmatprep.subr.mxu0 0.0
    %3223 = vmatpush1.msra.mxu0 0.0
    %3224 = vmatprep.subr.mxu0 0.0
    %3225 = vmatpush1.msra.mxu0 0.0
    %3226 = vmatprep.subr.mxu0 0.0
    %3227 = vmatpush1.msra.mxu0 0.0
    %3228 = vmatprep.subr.mxu0 0.0
    %3229 = vmatpush1.msra.mxu0 0.0
    %3230 = vmatprep.subr.mxu0 0.0
    %3231 = vmatpush1.msra.mxu0 0.0
    %3232 = vmatprep.subr.mxu0 0.0
    %3233 = vmatpush1.msra.mxu0 0.0
    %3234 = vmatprep.subr.mxu0 0.0
    %3235 = vmatpush1.msra.mxu0 0.0
    %3236 = vmatprep.subr.mxu0 0.0
    %3237 = vmatpush1.msra.mxu0 0.0
    %3238 = vmatprep.subr.mxu0 0.0
    %3239 = vmatpush1.msra.mxu0 0.0
    %3240 = vmatprep.subr.mxu0 0.0
    %3241 = vmatpush1.msra.mxu0 0.0
    %3242 = vmatprep.subr.mxu0 0.0
    %3243 = vmatpush1.msra.mxu0 0.0
    %3244 = vmatprep.subr.mxu0 0.0
    %3245 = vmatpush1.msra.mxu0 0.0
    %3246 = vmatprep.subr.mxu0 0.0
    %3247 = vmatpush1.msra.mxu0 0.0
    %3248 = vmatprep.subr.mxu0 0.0
    %3249 = vmatpush1.msra.mxu0 0.0
    %3250 = vmatprep.subr.mxu0 0.0
    %3251 = vmatpush1.msra.mxu0 0.0
    %3252 = vmatprep.mubr.f32.mxu0 0.0
    %3253 = vmatmul.mubr.f32.gmra.mrb[0].mxu0 %v3116
    %v3254 = vpop.f32.mrb[0].mxu0
    %v3255 = vadd.f32 %v1797, %v3254
    %v3256 = vpop.f32.mrb[0].mxu0
    %3257 = vdwg.mxu0
    %3258 = vmatprep.subr.mxu0 0.0
    %3259 = vmatpush1.msra.mxu0 %v1870
    %3260 = vmatprep.subr.mxu0 0.0
    %3261 = vmatpush1.msra.mxu0 %v1871
    %3262 = vmatprep.subr.mxu0 0.0
    %3263 = vmatpush1.msra.mxu0 %v1872
    %3264 = vmatprep.subr.mxu0 0.0
    %3265 = vmatpush1.msra.mxu0 %v1873
    %3266 = vmatprep.subr.mxu0 0.0
    %3267 = vmatpush1.msra.mxu0 %v1874
    %3268 = vmatprep.subr.mxu0 0.0
    %3269 = vmatpush1.msra.mxu0 %v1875
    %3270 = vmatprep.subr.mxu0 0.0
    %3271 = vmatpush1.msra.mxu0 %v1876
    %3272 = vmatprep.subr.mxu0 0.0
    %3273 = vmatpush1.msra.mxu0 %v1877
    %3274 = vmatprep.subr.mxu0 0.0
    %3275 = vmatpush1.msra.mxu0 0.0
    %3276 = vmatprep.subr.mxu0 0.0
    %3277 = vmatpush1.msra.mxu0 0.0
    %3278 = vmatprep.subr.mxu0 0.0
    %3279 = vmatpush1.msra.mxu0 0.0
    %3280 = vmatprep.subr.mxu0 0.0
    %3281 = vmatpush1.msra.mxu0 0.0
    %3282 = vmatprep.subr.mxu0 0.0
    %3283 = vmatpush1.msra.mxu0 0.0
    %3284 = vmatprep.subr.mxu0 0.0
    %3285 = vmatpush1.msra.mxu0 0.0
    %3286 = vmatprep.subr.mxu0 0.0
    %3287 = vmatpush1.msra.mxu0 0.0
    %3288 = vmatprep.subr.mxu0 0.0
    %3289 = vmatpush1.msra.mxu0 0.0
    %3290 = vmatprep.subr.mxu0 0.0
    %3291 = vmatpush1.msra.mxu0 0.0
    %3292 = vmatprep.subr.mxu0 0.0
    %3293 = vmatpush1.msra.mxu0 0.0
    %3294 = vmatprep.subr.mxu0 0.0
    %3295 = vmatpush1.msra.mxu0 0.0
    %3296 = vmatprep.subr.mxu0 0.0
    %3297 = vmatpush1.msra.mxu0 0.0
    %3298 = vmatprep.subr.mxu0 0.0
    %3299 = vmatpush1.msra.mxu0 0.0
    %3300 = vmatprep.subr.mxu0 0.0
    %3301 = vmatpush1.msra.mxu0 0.0
    %3302 = vmatprep.subr.mxu0 0.0
    %3303 = vmatpush1.msra.mxu0 0.0
    %3304 = vmatprep.subr.mxu0 0.0
    %3305 = vmatpush1.msra.mxu0 0.0
    %3306 = vmatprep.subr.mxu0 0.0
    %3307 = vmatpush1.msra.mxu0 0.0
    %3308 = vmatprep.subr.mxu0 0.0
    %3309 = vmatpush1.msra.mxu0 0.0
    %3310 = vmatprep.subr.mxu0 0.0
    %3311 = vmatpush1.msra.mxu0 0.0
    %3312 = vmatprep.subr.mxu0 0.0
    %3313 = vmatpush1.msra.mxu0 0.0
    %3314 = vmatprep.subr.mxu0 0.0
    %3315 = vmatpush1.msra.mxu0 0.0
    %3316 = vmatprep.subr.mxu0 0.0
    %3317 = vmatpush1.msra.mxu0 0.0
    %3318 = vmatprep.subr.mxu0 0.0
    %3319 = vmatpush1.msra.mxu0 0.0
    %3320 = vmatprep.subr.mxu0 0.0
    %3321 = vmatpush1.msra.mxu0 0.0
    %3322 = vmatprep.mubr.f32.mxu0 0.0
    %3323 = vmatmul.mubr.f32.gmra.mrb[0].mxu0 %v3116
    %v3324 = vpop.f32.mrb[0].mxu0
    %v3325 = vadd.f32 %v1884, %v3324
    %v3326 = vpop.f32.mrb[0].mxu0
    %3327 = vdwg.mxu0
    %v3328 = vadd.f32 %v2972, %v3185
    %v3329 = vxor.u32 %v3328, 2147483648
    %v3330 = vmul.f32 %v3329, 1.442695
    %v3331 = vpow.pop %v3330
    %v3332 = vadd.f32 %v3331, 1.0
    %v3333 = vrcp.pop %v3332
    %v3334 = vmul.f32 1.0, %v3333
    %v3335 = vadd.f32 %v3042, %v3255
    %v3336 = vxor.u32 %v3335, 2147483648
    %v3337 = vmul.f32 %v3336, 1.442695
    %v3338 = vpow.pop %v3337
    %v3339 = vadd.f32 %v3338, 1.0
    %v3340 = vrcp.pop %v3339
    %v3341 = vmul.f32 1.0, %v3340
    %v3342 = vmul.f32 %v3334, %v3325
    %v3343 = vadd.f32 %v3112, %v3342
    %v3344 = vtanh.pop %v3343
    %v3345 = vsub.f32 1.0, %v3341
    %v3346 = vmul.f32 %v3345, %v3344
    %v3347 = vmul.f32 %v3341, %v2662
    %v3348 = vadd.f32 %v3346, %v3347
    %s3349 = scalar_lea.vmem [#allocation2], 24
    %v3350 = vld [vmem:[%s3349] sm:$0xff]
    %s3351 = sadd.s32 24, 64
    %s3352 = scalar_lea.vmem [#allocation2], %s3351
    %v3353 = vld [vmem:[%s3352] sm:$0xff]
    %s3354 = sadd.s32 24, 128
    %s3355 = scalar_lea.vmem [#allocation2], %s3354
    %v3356 = vld [vmem:[%s3355] sm:$0xff]
    %3357 = vmatprep.subr.mxu0 0.0
    %3358 = vmatpush1.msra.mxu0 %v1152
    %3359 = vmatprep.subr.mxu0 0.0
    %3360 = vmatpush1.msra.mxu0 %v1153
    %3361 = vmatprep.subr.mxu0 0.0
    %3362 = vmatpush1.msra.mxu0 %v1154
    %3363 = vmatprep.subr.mxu0 0.0
    %3364 = vmatpush1.msra.mxu0 %v1155
    %3365 = vmatprep.subr.mxu0 0.0
    %3366 = vmatpush1.msra.mxu0 %v1156
    %3367 = vmatprep.subr.mxu0 0.0
    %3368 = vmatpush1.msra.mxu0 %v1157
    %3369 = vmatprep.subr.mxu0 0.0
    %3370 = vmatpush1.msra.mxu0 %v1158
    %3371 = vmatprep.subr.mxu0 0.0
    %3372 = vmatpush1.msra.mxu0 %v1159
    %3373 = vmatprep.subr.mxu0 0.0
    %3374 = vmatpush1.msra.mxu0 0.0
    %3375 = vmatprep.subr.mxu0 0.0
    %3376 = vmatpush1.msra.mxu0 0.0
    %3377 = vmatprep.subr.mxu0 0.0
    %3378 = vmatpush1.msra.mxu0 0.0
    %3379 = vmatprep.subr.mxu0 0.0
    %3380 = vmatpush1.msra.mxu0 0.0
    %3381 = vmatprep.subr.mxu0 0.0
    %3382 = vmatpush1.msra.mxu0 0.0
    %3383 = vmatprep.subr.mxu0 0.0
    %3384 = vmatpush1.msra.mxu0 0.0
    %3385 = vmatprep.subr.mxu0 0.0
    %3386 = vmatpush1.msra.mxu0 0.0
    %3387 = vmatprep.subr.mxu0 0.0
    %3388 = vmatpush1.msra.mxu0 0.0
    %3389 = vmatprep.subr.mxu0 0.0
    %3390 = vmatpush1.msra.mxu0 0.0
    %3391 = vmatprep.subr.mxu0 0.0
    %3392 = vmatpush1.msra.mxu0 0.0
    %3393 = vmatprep.subr.mxu0 0.0
    %3394 = vmatpush1.msra.mxu0 0.0
    %3395 = vmatprep.subr.mxu0 0.0
    %3396 = vmatpush1.msra.mxu0 0.0
    %3397 = vmatprep.subr.mxu0 0.0
    %3398 = vmatpush1.msra.mxu0 0.0
    %3399 = vmatprep.subr.mxu0 0.0
    %3400 = vmatpush1.msra.mxu0 0.0
    %3401 = vmatprep.subr.mxu0 0.0
    %3402 = vmatpush1.msra.mxu0 0.0
    %3403 = vmatprep.subr.mxu0 0.0
    %3404 = vmatpush1.msra.mxu0 0.0
    %3405 = vmatprep.subr.mxu0 0.0
    %3406 = vmatpush1.msra.mxu0 0.0
    %3407 = vmatprep.subr.mxu0 0.0
    %3408 = vmatpush1.msra.mxu0 0.0
    %3409 = vmatprep.subr.mxu0 0.0
    %3410 = vmatpush1.msra.mxu0 0.0
    %3411 = vmatprep.subr.mxu0 0.0
    %3412 = vmatpush1.msra.mxu0 0.0
    %3413 = vmatprep.subr.mxu0 0.0
    %3414 = vmatpush1.msra.mxu0 0.0
    %3415 = vmatprep.subr.mxu0 0.0
    %3416 = vmatpush1.msra.mxu0 0.0
    %3417 = vmatprep.subr.mxu0 0.0
    %3418 = vmatpush1.msra.mxu0 0.0
    %3419 = vmatprep.subr.mxu0 0.0
    %3420 = vmatpush1.msra.mxu0 0.0
    %3421 = vmatprep.mubr.f32.mxu0 0.0
    %3422 = vmatmul.mubr.f32.gmra.mrb[0].mxu0 %v2903
    %v3423 = vpop.f32.mrb[0].mxu0
    %v3424 = vadd.f32 %v1165, %v3423
    %v3425 = vpop.f32.mrb[0].mxu0
    %3426 = vdwg.mxu0
    %3427 = vmatprep.subr.mxu0 0.0
    %3428 = vmatpush1.msra.mxu0 %v1241
    %3429 = vmatprep.subr.mxu0 0.0
    %3430 = vmatpush1.msra.mxu0 %v1242
    %3431 = vmatprep.subr.mxu0 0.0
    %3432 = vmatpush1.msra.mxu0 %v1243
    %3433 = vmatprep.subr.mxu0 0.0
    %3434 = vmatpush1.msra.mxu0 %v1244
    %3435 = vmatprep.subr.mxu0 0.0
    %3436 = vmatpush1.msra.mxu0 %v1245
    %3437 = vmatprep.subr.mxu0 0.0
    %3438 = vmatpush1.msra.mxu0 %v1246
    %3439 = vmatprep.subr.mxu0 0.0
    %3440 = vmatpush1.msra.mxu0 %v1247
    %3441 = vmatprep.subr.mxu0 0.0
    %3442 = vmatpush1.msra.mxu0 %v1248
    %3443 = vmatprep.subr.mxu0 0.0
    %3444 = vmatpush1.msra.mxu0 0.0
    %3445 = vmatprep.subr.mxu0 0.0
    %3446 = vmatpush1.msra.mxu0 0.0
    %3447 = vmatprep.subr.mxu0 0.0
    %3448 = vmatpush1.msra.mxu0 0.0
    %3449 = vmatprep.subr.mxu0 0.0
    %3450 = vmatpush1.msra.mxu0 0.0
    %3451 = vmatprep.subr.mxu0 0.0
    %3452 = vmatpush1.msra.mxu0 0.0
    %3453 = vmatprep.subr.mxu0 0.0
    %3454 = vmatpush1.msra.mxu0 0.0
    %3455 = vmatprep.subr.mxu0 0.0
    %3456 = vmatpush1.msra.mxu0 0.0
    %3457 = vmatprep.subr.mxu0 0.0
    %3458 = vmatpush1.msra.mxu0 0.0
    %3459 = vmatprep.subr.mxu0 0.0
    %3460 = vmatpush1.msra.mxu0 0.0
    %3461 = vmatprep.subr.mxu0 0.0
    %3462 = vmatpush1.msra.mxu0 0.0
    %3463 = vmatprep.subr.mxu0 0.0
    %3464 = vmatpush1.msra.mxu0 0.0
    %3465 = vmatprep.subr.mxu0 0.0
    %3466 = vmatpush1.msra.mxu0 0.0
    %3467 = vmatprep.subr.mxu0 0.0
    %3468 = vmatpush1.msra.mxu0 0.0
    %3469 = vmatprep.subr.mxu0 0.0
    %3470 = vmatpush1.msra.mxu0 0.0
    %3471 = vmatprep.subr.mxu0 0.0
    %3472 = vmatpush1.msra.mxu0 0.0
    %3473 = vmatprep.subr.mxu0 0.0
    %3474 = vmatpush1.msra.mxu0 0.0
    %3475 = vmatprep.subr.mxu0 0.0
    %3476 = vmatpush1.msra.mxu0 0.0
    %3477 = vmatprep.subr.mxu0 0.0
    %3478 = vmatpush1.msra.mxu0 0.0
    %3479 = vmatprep.subr.mxu0 0.0
    %3480 = vmatpush1.msra.mxu0 0.0
    %3481 = vmatprep.subr.mxu0 0.0
    %3482 = vmatpush1.msra.mxu0 0.0
    %3483 = vmatprep.subr.mxu0 0.0
    %3484 = vmatpush1.msra.mxu0 0.0
    %3485 = vmatprep.subr.mxu0 0.0
    %3486 = vmatpush1.msra.mxu0 0.0
    %3487 = vmatprep.subr.mxu0 0.0
    %3488 = vmatpush1.msra.mxu0 0.0
    %3489 = vmatprep.subr.mxu0 0.0
    %3490 = vmatpush1.msra.mxu0 0.0
    %3491 = vmatprep.mubr.f32.mxu0 0.0
    %3492 = vmatmul.mubr.f32.gmra.mrb[0].mxu0 %v2903
    %v3493 = vpop.f32.mrb[0].mxu0
    %v3494 = vadd.f32 %v1255, %v3493
    %v3495 = vpop.f32.mrb[0].mxu0
    %3496 = vdwg.mxu0
    %3497 = vmatprep.subr.mxu0 0.0
    %3498 = vmatpush1.msra.mxu0 %v1328
    %3499 = vmatprep.subr.mxu0 0.0
    %3500 = vmatpush1.msra.mxu0 %v1329
    %3501 = vmatprep.subr.mxu0 0.0
    %3502 = vmatpush1.msra.mxu0 %v1330
    %3503 = vmatprep.subr.mxu0 0.0
    %3504 = vmatpush1.msra.mxu0 %v1331
    %3505 = vmatprep.subr.mxu0 0.0
    %3506 = vmatpush1.msra.mxu0 %v1332
    %3507 = vmatprep.subr.mxu0 0.0
    %3508 = vmatpush1.msra.mxu0 %v1333
    %3509 = vmatprep.subr.mxu0 0.0
    %3510 = vmatpush1.msra.mxu0 %v1334
    %3511 = vmatprep.subr.mxu0 0.0
    %3512 = vmatpush1.msra.mxu0 %v1335
    %3513 = vmatprep.subr.mxu0 0.0
    %3514 = vmatpush1.msra.mxu0 0.0
    %3515 = vmatprep.subr.mxu0 0.0
    %3516 = vmatpush1.msra.mxu0 0.0
    %3517 = vmatprep.subr.mxu0 0.0
    %3518 = vmatpush1.msra.mxu0 0.0
    %3519 = vmatprep.subr.mxu0 0.0
    %3520 = vmatpush1.msra.mxu0 0.0
    %3521 = vmatprep.subr.mxu0 0.0
    %3522 = vmatpush1.msra.mxu0 0.0
    %3523 = vmatprep.subr.mxu0 0.0
    %3524 = vmatpush1.msra.mxu0 0.0
    %3525 = vmatprep.subr.mxu0 0.0
    %3526 = vmatpush1.msra.mxu0 0.0
    %3527 = vmatprep.subr.mxu0 0.0
    %3528 = vmatpush1.msra.mxu0 0.0
    %3529 = vmatprep.subr.mxu0 0.0
    %3530 = vmatpush1.msra.mxu0 0.0
    %3531 = vmatprep.subr.mxu0 0.0
    %3532 = vmatpush1.msra.mxu0 0.0
    %3533 = vmatprep.subr.mxu0 0.0
    %3534 = vmatpush1.msra.mxu0 0.0
    %3535 = vmatprep.subr.mxu0 0.0
    %3536 = vmatpush1.msra.mxu0 0.0
    %3537 = vmatprep.subr.mxu0 0.0
    %3538 = vmatpush1.msra.mxu0 0.0
    %3539 = vmatprep.subr.mxu0 0.0
    %3540 = vmatpush1.msra.mxu0 0.0
    %3541 = vmatprep.subr.mxu0 0.0
    %3542 = vmatpush1.msra.mxu0 0.0
    %3543 = vmatprep.subr.mxu0 0.0
    %3544 = vmatpush1.msra.mxu0 0.0
    %3545 = vmatprep.subr.mxu0 0.0
    %3546 = vmatpush1.msra.mxu0 0.0
    %3547 = vmatprep.subr.mxu0 0.0
    %3548 = vmatpush1.msra.mxu0 0.0
    %3549 = vmatprep.subr.mxu0 0.0
    %3550 = vmatpush1.msra.mxu0 0.0
    %3551 = vmatprep.subr.mxu0 0.0
    %3552 = vmatpush1.msra.mxu0 0.0
    %3553 = vmatprep.subr.mxu0 0.0
    %3554 = vmatpush1.msra.mxu0 0.0
    %3555 = vmatprep.subr.mxu0 0.0
    %3556 = vmatpush1.msra.mxu0 0.0
    %3557 = vmatprep.subr.mxu0 0.0
    %3558 = vmatpush1.msra.mxu0 0.0
    %3559 = vmatprep.subr.mxu0 0.0
    %3560 = vmatpush1.msra.mxu0 0.0
    %3561 = vmatprep.mubr.f32.mxu0 0.0
    %3562 = vmatmul.mubr.f32.gmra.mrb[0].mxu0 %v2903
    %v3563 = vpop.f32.mrb[0].mxu0
    %v3564 = vadd.f32 %v1342, %v3563
    %v3565 = vpop.f32.mrb[0].mxu0
    %3566 = vdwg.mxu0
    %v3567 = vadd.f32 %v3350, %v3424
    %v3568 = vxor.u32 %v3567, 2147483648
    %v3569 = vmul.f32 %v3568, 1.442695
    %v3570 = vpow.pop %v3569
    %v3571 = vadd.f32 %v3570, 1.0
    %v3572 = vrcp.pop %v3571
    %v3573 = vmul.f32 1.0, %v3572
    %v3574 = vadd.f32 %v3353, %v3494
    %v3575 = vxor.u32 %v3574, 2147483648
    %v3576 = vmul.f32 %v3575, 1.442695
    %v3577 = vpow.pop %v3576
    %v3578 = vadd.f32 %v3577, 1.0
    %v3579 = vrcp.pop %v3578
    %v3580 = vmul.f32 1.0, %v3579
    %v3581 = vmul.f32 %v3573, %v3564
    %v3582 = vadd.f32 %v3356, %v3581
    %v3583 = vtanh.pop %v3582
    %v3584 = vsub.f32 1.0, %v3580
    %v3585 = vmul.f32 %v3584, %v3583
    %v3586 = vmul.f32 %v3580, %v2901
    %v3587 = vadd.f32 %v3585, %v3586
    %v3589 = vsel %vm301, %v3587, 0
    %3591 = vmatprep.subr.mxu0 0.0
    %3592 = vmatpush1.msra.mxu0 %v1435
    %3593 = vmatprep.subr.mxu0 0.0
    %3594 = vmatpush1.msra.mxu0 %v1436
    %3595 = vmatprep.subr.mxu0 0.0
    %3596 = vmatpush1.msra.mxu0 %v1437
    %3597 = vmatprep.subr.mxu0 0.0
    %3598 = vmatpush1.msra.mxu0 %v1438
    %3599 = vmatprep.subr.mxu0 0.0
    %3600 = vmatpush1.msra.mxu0 %v1439
    %3601 = vmatprep.subr.mxu0 0.0
    %3602 = vmatpush1.msra.mxu0 %v1440
    %3603 = vmatprep.subr.mxu0 0.0
    %3604 = vmatpush1.msra.mxu0 %v1441
    %3605 = vmatprep.subr.mxu0 0.0
    %3606 = vmatpush1.msra.mxu0 %v1442
    %3607 = vmatprep.subr.mxu0 0.0
    %3608 = vmatpush1.msra.mxu0 0.0
    %3609 = vmatprep.subr.mxu0 0.0
    %3610 = vmatpush1.msra.mxu0 0.0
    %3611 = vmatprep.subr.mxu0 0.0
    %3612 = vmatpush1.msra.mxu0 0.0
    %3613 = vmatprep.subr.mxu0 0.0
    %3614 = vmatpush1.msra.mxu0 0.0
    %3615 = vmatprep.subr.mxu0 0.0
    %3616 = vmatpush1.msra.mxu0 0.0
    %3617 = vmatprep.subr.mxu0 0.0
    %3618 = vmatpush1.msra.mxu0 0.0
    %3619 = vmatprep.subr.mxu0 0.0
    %3620 = vmatpush1.msra.mxu0 0.0
    %3621 = vmatprep.subr.mxu0 0.0
    %3622 = vmatpush1.msra.mxu0 0.0
    %3623 = vmatprep.subr.mxu0 0.0
    %3624 = vmatpush1.msra.mxu0 0.0
    %3625 = vmatprep.subr.mxu0 0.0
    %3626 = vmatpush1.msra.mxu0 0.0
    %3627 = vmatprep.subr.mxu0 0.0
    %3628 = vmatpush1.msra.mxu0 0.0
    %3629 = vmatprep.subr.mxu0 0.0
    %3630 = vmatpush1.msra.mxu0 0.0
    %3631 = vmatprep.subr.mxu0 0.0
    %3632 = vmatpush1.msra.mxu0 0.0
    %3633 = vmatprep.subr.mxu0 0.0
    %3634 = vmatpush1.msra.mxu0 0.0
    %3635 = vmatprep.subr.mxu0 0.0
    %3636 = vmatpush1.msra.mxu0 0.0
    %3637 = vmatprep.subr.mxu0 0.0
    %3638 = vmatpush1.msra.mxu0 0.0
    %3639 = vmatprep.subr.mxu0 0.0
    %3640 = vmatpush1.msra.mxu0 0.0
    %3641 = vmatprep.subr.mxu0 0.0
    %3642 = vmatpush1.msra.mxu0 0.0
    %3643 = vmatprep.subr.mxu0 0.0
    %3644 = vmatpush1.msra.mxu0 0.0
    %3645 = vmatprep.subr.mxu0 0.0
    %3646 = vmatpush1.msra.mxu0 0.0
    %3647 = vmatprep.subr.mxu0 0.0
    %3648 = vmatpush1.msra.mxu0 0.0
    %3649 = vmatprep.subr.mxu0 0.0
    %3650 = vmatpush1.msra.mxu0 0.0
    %3651 = vmatprep.subr.mxu0 0.0
    %3652 = vmatpush1.msra.mxu0 0.0
    %3653 = vmatprep.subr.mxu0 0.0
    %3654 = vmatpush1.msra.mxu0 0.0
    %3655 = vmatprep.mubr.f32.mxu0 0.0
    %3656 = vmatmul.mubr.f32.gmra.mrb[0].mxu0 %v3589
    %v3657 = vpop.f32.mrb[0].mxu0
    %v3658 = vadd.f32 %v1448, %v3657
    %v3659 = vpop.f32.mrb[0].mxu0
    %3660 = vdwg.mxu0
    %3661 = vmatprep.subr.mxu0 0.0
    %3662 = vmatpush1.msra.mxu0 %v1524
    %3663 = vmatprep.subr.mxu0 0.0
    %3664 = vmatpush1.msra.mxu0 %v1525
    %3665 = vmatprep.subr.mxu0 0.0
    %3666 = vmatpush1.msra.mxu0 %v1526
    %3667 = vmatprep.subr.mxu0 0.0
    %3668 = vmatpush1.msra.mxu0 %v1527
    %3669 = vmatprep.subr.mxu0 0.0
    %3670 = vmatpush1.msra.mxu0 %v1528
    %3671 = vmatprep.subr.mxu0 0.0
    %3672 = vmatpush1.msra.mxu0 %v1529
    %3673 = vmatprep.subr.mxu0 0.0
    %3674 = vmatpush1.msra.mxu0 %v1530
    %3675 = vmatprep.subr.mxu0 0.0
    %3676 = vmatpush1.msra.mxu0 %v1531
    %3677 = vmatprep.subr.mxu0 0.0
    %3678 = vmatpush1.msra.mxu0 0.0
    %3679 = vmatprep.subr.mxu0 0.0
    %3680 = vmatpush1.msra.mxu0 0.0
    %3681 = vmatprep.subr.mxu0 0.0
    %3682 = vmatpush1.msra.mxu0 0.0
    %3683 = vmatprep.subr.mxu0 0.0
    %3684 = vmatpush1.msra.mxu0 0.0
    %3685 = vmatprep.subr.mxu0 0.0
    %3686 = vmatpush1.msra.mxu0 0.0
    %3687 = vmatprep.subr.mxu0 0.0
    %3688 = vmatpush1.msra.mxu0 0.0
    %3689 = vmatprep.subr.mxu0 0.0
    %3690 = vmatpush1.msra.mxu0 0.0
    %3691 = vmatprep.subr.mxu0 0.0
    %3692 = vmatpush1.msra.mxu0 0.0
    %3693 = vmatprep.subr.mxu0 0.0
    %3694 = vmatpush1.msra.mxu0 0.0
    %3695 = vmatprep.subr.mxu0 0.0
    %3696 = vmatpush1.msra.mxu0 0.0
    %3697 = vmatprep.subr.mxu0 0.0
    %3698 = vmatpush1.msra.mxu0 0.0
    %3699 = vmatprep.subr.mxu0 0.0
    %3700 = vmatpush1.msra.mxu0 0.0
    %3701 = vmatprep.subr.mxu0 0.0
    %3702 = vmatpush1.msra.mxu0 0.0
    %3703 = vmatprep.subr.mxu0 0.0
    %3704 = vmatpush1.msra.mxu0 0.0
    %3705 = vmatprep.subr.mxu0 0.0
    %3706 = vmatpush1.msra.mxu0 0.0
    %3707 = vmatprep.subr.mxu0 0.0
    %3708 = vmatpush1.msra.mxu0 0.0
    %3709 = vmatprep.subr.mxu0 0.0
    %3710 = vmatpush1.msra.mxu0 0.0
    %3711 = vmatprep.subr.mxu0 0.0
    %3712 = vmatpush1.msra.mxu0 0.0
    %3713 = vmatprep.subr.mxu0 0.0
    %3714 = vmatpush1.msra.mxu0 0.0
    %3715 = vmatprep.subr.mxu0 0.0
    %3716 = vmatpush1.msra.mxu0 0.0
    %3717 = vmatprep.subr.mxu0 0.0
    %3718 = vmatpush1.msra.mxu0 0.0
    %3719 = vmatprep.subr.mxu0 0.0
    %3720 = vmatpush1.msra.mxu0 0.0
    %3721 = vmatprep.subr.mxu0 0.0
    %3722 = vmatpush1.msra.mxu0 0.0
    %3723 = vmatprep.subr.mxu0 0.0
    %3724 = vmatpush1.msra.mxu0 0.0
    %3725 = vmatprep.mubr.f32.mxu0 0.0
    %3726 = vmatmul.mubr.f32.gmra.mrb[0].mxu0 %v3589
    %v3727 = vpop.f32.mrb[0].mxu0
    %v3728 = vadd.f32 %v1538, %v3727
    %v3729 = vpop.f32.mrb[0].mxu0
    %3730 = vdwg.mxu0
    %3731 = vmatprep.subr.mxu0 0.0
    %3732 = vmatpush1.msra.mxu0 %v1611
    %3733 = vmatprep.subr.mxu0 0.0
    %3734 = vmatpush1.msra.mxu0 %v1612
    %3735 = vmatprep.subr.mxu0 0.0
    %3736 = vmatpush1.msra.mxu0 %v1613
    %3737 = vmatprep.subr.mxu0 0.0
    %3738 = vmatpush1.msra.mxu0 %v1614
    %3739 = vmatprep.subr.mxu0 0.0
    %3740 = vmatpush1.msra.mxu0 %v1615
    %3741 = vmatprep.subr.mxu0 0.0
    %3742 = vmatpush1.msra.mxu0 %v1616
    %3743 = vmatprep.subr.mxu0 0.0
    %3744 = vmatpush1.msra.mxu0 %v1617
    %3745 = vmatprep.subr.mxu0 0.0
    %3746 = vmatpush1.msra.mxu0 %v1618
    %3747 = vmatprep.subr.mxu0 0.0
    %3748 = vmatpush1.msra.mxu0 0.0
    %3749 = vmatprep.subr.mxu0 0.0
    %3750 = vmatpush1.msra.mxu0 0.0
    %3751 = vmatprep.subr.mxu0 0.0
    %3752 = vmatpush1.msra.mxu0 0.0
    %3753 = vmatprep.subr.mxu0 0.0
    %3754 = vmatpush1.msra.mxu0 0.0
    %3755 = vmatprep.subr.mxu0 0.0
    %3756 = vmatpush1.msra.mxu0 0.0
    %3757 = vmatprep.subr.mxu0 0.0
    %3758 = vmatpush1.msra.mxu0 0.0
    %3759 = vmatprep.subr.mxu0 0.0
    %3760 = vmatpush1.msra.mxu0 0.0
    %3761 = vmatprep.subr.mxu0 0.0
    %3762 = vmatpush1.msra.mxu0 0.0
    %3763 = vmatprep.subr.mxu0 0.0
    %3764 = vmatpush1.msra.mxu0 0.0
    %3765 = vmatprep.subr.mxu0 0.0
    %3766 = vmatpush1.msra.mxu0 0.0
    %3767 = vmatprep.subr.mxu0 0.0
    %3768 = vmatpush1.msra.mxu0 0.0
    %3769 = vmatprep.subr.mxu0 0.0
    %3770 = vmatpush1.msra.mxu0 0.0
    %3771 = vmatprep.subr.mxu0 0.0
    %3772 = vmatpush1.msra.mxu0 0.0
    %3773 = vmatprep.subr.mxu0 0.0
    %3774 = vmatpush1.msra.mxu0 0.0
    %3775 = vmatprep.subr.mxu0 0.0
    %3776 = vmatpush1.msra.mxu0 0.0
    %3777 = vmatprep.subr.mxu0 0.0
    %3778 = vmatpush1.msra.mxu0 0.0
    %3779 = vmatprep.subr.mxu0 0.0
    %3780 = vmatpush1.msra.mxu0 0.0
    %3781 = vmatprep.subr.mxu0 0.0
    %3782 = vmatpush1.msra.mxu0 0.0
    %3783 = vmatprep.subr.mxu0 0.0
    %3784 = vmatpush1.msra.mxu0 0.0
    %3785 = vmatprep.subr.mxu0 0.0
    %3786 = vmatpush1.msra.mxu0 0.0
    %3787 = vmatprep.subr.mxu0 0.0
    %3788 = vmatpush1.msra.mxu0 0.0
    %3789 = vmatprep.subr.mxu0 0.0
    %3790 = vmatpush1.msra.mxu0 0.0
    %3791 = vmatprep.subr.mxu0 0.0
    %3792 = vmatpush1.msra.mxu0 0.0
    %3793 = vmatprep.subr.mxu0 0.0
    %3794 = vmatpush1.msra.mxu0 0.0
    %3795 = vmatprep.mubr.f32.mxu0 0.0
    %3796 = vmatmul.mubr.f32.gmra.mrb[0].mxu0 %v3589
    %v3797 = vpop.f32.mrb[0].mxu0
    %v3798 = vadd.f32 %v1625, %v3797
    %v3799 = vpop.f32.mrb[0].mxu0
    %3800 = vdwg.mxu0
    %v3802 = vsel %vm301, %v3348, 0
    %3804 = vmatprep.subr.mxu0 0.0
    %3805 = vmatpush1.msra.mxu0 %v1697
    %3806 = vmatprep.subr.mxu0 0.0
    %3807 = vmatpush1.msra.mxu0 %v1698
    %3808 = vmatprep.subr.mxu0 0.0
    %3809 = vmatpush1.msra.mxu0 %v1699
    %3810 = vmatprep.subr.mxu0 0.0
    %3811 = vmatpush1.msra.mxu0 %v1700
    %3812 = vmatprep.subr.mxu0 0.0
    %3813 = vmatpush1.msra.mxu0 %v1701
    %3814 = vmatprep.subr.mxu0 0.0
    %3815 = vmatpush1.msra.mxu0 %v1702
    %3816 = vmatprep.subr.mxu0 0.0
    %3817 = vmatpush1.msra.mxu0 %v1703
    %3818 = vmatprep.subr.mxu0 0.0
    %3819 = vmatpush1.msra.mxu0 %v1704
    %3820 = vmatprep.subr.mxu0 0.0
    %3821 = vmatpush1.msra.mxu0 0.0
    %3822 = vmatprep.subr.mxu0 0.0
    %3823 = vmatpush1.msra.mxu0 0.0
    %3824 = vmatprep.subr.mxu0 0.0
    %3825 = vmatpush1.msra.mxu0 0.0
    %3826 = vmatprep.subr.mxu0 0.0
    %3827 = vmatpush1.msra.mxu0 0.0
    %3828 = vmatprep.subr.mxu0 0.0
    %3829 = vmatpush1.msra.mxu0 0.0
    %3830 = vmatprep.subr.mxu0 0.0
    %3831 = vmatpush1.msra.mxu0 0.0
    %3832 = vmatprep.subr.mxu0 0.0
    %3833 = vmatpush1.msra.mxu0 0.0
    %3834 = vmatprep.subr.mxu0 0.0
    %3835 = vmatpush1.msra.mxu0 0.0
    %3836 = vmatprep.subr.mxu0 0.0
    %3837 = vmatpush1.msra.mxu0 0.0
    %3838 = vmatprep.subr.mxu0 0.0
    %3839 = vmatpush1.msra.mxu0 0.0
    %3840 = vmatprep.subr.mxu0 0.0
    %3841 = vmatpush1.msra.mxu0 0.0
    %3842 = vmatprep.subr.mxu0 0.0
    %3843 = vmatpush1.msra.mxu0 0.0
    %3844 = vmatprep.subr.mxu0 0.0
    %3845 = vmatpush1.msra.mxu0 0.0
    %3846 = vmatprep.subr.mxu0 0.0
    %3847 = vmatpush1.msra.mxu0 0.0
    %3848 = vmatprep.subr.mxu0 0.0
    %3849 = vmatpush1.msra.mxu0 0.0
    %3850 = vmatprep.subr.mxu0 0.0
    %3851 = vmatpush1.msra.mxu0 0.0
    %3852 = vmatprep.subr.mxu0 0.0
    %3853 = vmatpush1.msra.mxu0 0.0
    %3854 = vmatprep.subr.mxu0 0.0
    %3855 = vmatpush1.msra.mxu0 0.0
    %3856 = vmatprep.subr.mxu0 0.0
    %3857 = vmatpush1.msra.mxu0 0.0
    %3858 = vmatprep.subr.mxu0 0.0
    %3859 = vmatpush1.msra.mxu0 0.0
    %3860 = vmatprep.subr.mxu0 0.0
    %3861 = vmatpush1.msra.mxu0 0.0
    %3862 = vmatprep.subr.mxu0 0.0
    %3863 = vmatpush1.msra.mxu0 0.0
    %3864 = vmatprep.subr.mxu0 0.0
    %3865 = vmatpush1.msra.mxu0 0.0
    %3866 = vmatprep.subr.mxu0 0.0
    %3867 = vmatpush1.msra.mxu0 0.0
    %3868 = vmatprep.mubr.f32.mxu0 0.0
    %3869 = vmatmul.mubr.f32.gmra.mrb[0].mxu0 %v3802
    %v3870 = vpop.f32.mrb[0].mxu0
    %v3871 = vadd.f32 %v1710, %v3870
    %v3872 = vpop.f32.mrb[0].mxu0
    %3873 = vdwg.mxu0
    %3874 = vmatprep.subr.mxu0 0.0
    %3875 = vmatpush1.msra.mxu0 %v1783
    %3876 = vmatprep.subr.mxu0 0.0
    %3877 = vmatpush1.msra.mxu0 %v1784
    %3878 = vmatprep.subr.mxu0 0.0
    %3879 = vmatpush1.msra.mxu0 %v1785
    %3880 = vmatprep.subr.mxu0 0.0
    %3881 = vmatpush1.msra.mxu0 %v1786
    %3882 = vmatprep.subr.mxu0 0.0
    %3883 = vmatpush1.msra.mxu0 %v1787
    %3884 = vmatprep.subr.mxu0 0.0
    %3885 = vmatpush1.msra.mxu0 %v1788
    %3886 = vmatprep.subr.mxu0 0.0
    %3887 = vmatpush1.msra.mxu0 %v1789
    %3888 = vmatprep.subr.mxu0 0.0
    %3889 = vmatpush1.msra.mxu0 %v1790
    %3890 = vmatprep.subr.mxu0 0.0
    %3891 = vmatpush1.msra.mxu0 0.0
    %3892 = vmatprep.subr.mxu0 0.0
    %3893 = vmatpush1.msra.mxu0 0.0
    %3894 = vmatprep.subr.mxu0 0.0
    %3895 = vmatpush1.msra.mxu0 0.0
    %3896 = vmatprep.subr.mxu0 0.0
    %3897 = vmatpush1.msra.mxu0 0.0
    %3898 = vmatprep.subr.mxu0 0.0
    %3899 = vmatpush1.msra.mxu0 0.0
    %3900 = vmatprep.subr.mxu0 0.0
    %3901 = vmatpush1.msra.mxu0 0.0
    %3902 = vmatprep.subr.mxu0 0.0
    %3903 = vmatpush1.msra.mxu0 0.0
    %3904 = vmatprep.subr.mxu0 0.0
    %3905 = vmatpush1.msra.mxu0 0.0
    %3906 = vmatprep.subr.mxu0 0.0
    %3907 = vmatpush1.msra.mxu0 0.0
    %3908 = vmatprep.subr.mxu0 0.0
    %3909 = vmatpush1.msra.mxu0 0.0
    %3910 = vmatprep.subr.mxu0 0.0
    %3911 = vmatpush1.msra.mxu0 0.0
    %3912 = vmatprep.subr.mxu0 0.0
    %3913 = vmatpush1.msra.mxu0 0.0
    %3914 = vmatprep.subr.mxu0 0.0
    %3915 = vmatpush1.msra.mxu0 0.0
    %3916 = vmatprep.subr.mxu0 0.0
    %3917 = vmatpush1.msra.mxu0 0.0
    %3918 = vmatprep.subr.mxu0 0.0
    %3919 = vmatpush1.msra.mxu0 0.0
    %3920 = vmatprep.subr.mxu0 0.0
    %3921 = vmatpush1.msra.mxu0 0.0
    %3922 = vmatprep.subr.mxu0 0.0
    %3923 = vmatpush1.msra.mxu0 0.0
    %3924 = vmatprep.subr.mxu0 0.0
    %3925 = vmatpush1.msra.mxu0 0.0
    %3926 = vmatprep.subr.mxu0 0.0
    %3927 = vmatpush1.msra.mxu0 0.0
    %3928 = vmatprep.subr.mxu0 0.0
    %3929 = vmatpush1.msra.mxu0 0.0
    %3930 = vmatprep.subr.mxu0 0.0
    %3931 = vmatpush1.msra.mxu0 0.0
    %3932 = vmatprep.subr.mxu0 0.0
    %3933 = vmatpush1.msra.mxu0 0.0
    %3934 = vmatprep.subr.mxu0 0.0
    %3935 = vmatpush1.msra.mxu0 0.0
    %3936 = vmatprep.subr.mxu0 0.0
    %3937 = vmatpush1.msra.mxu0 0.0
    %3938 = vmatprep.mubr.f32.mxu0 0.0
    %3939 = vmatmul.mubr.f32.gmra.mrb[0].mxu0 %v3802
    %v3940 = vpop.f32.mrb[0].mxu0
    %v3941 = vadd.f32 %v1797, %v3940
    %v3942 = vpop.f32.mrb[0].mxu0
    %3943 = vdwg.mxu0
    %3944 = vmatprep.subr.mxu0 0.0
    %3945 = vmatpush1.msra.mxu0 %v1870
    %3946 = vmatprep.subr.mxu0 0.0
    %3947 = vmatpush1.msra.mxu0 %v1871
    %3948 = vmatprep.subr.mxu0 0.0
    %3949 = vmatpush1.msra.mxu0 %v1872
    %3950 = vmatprep.subr.mxu0 0.0
    %3951 = vmatpush1.msra.mxu0 %v1873
    %3952 = vmatprep.subr.mxu0 0.0
    %3953 = vmatpush1.msra.mxu0 %v1874
    %3954 = vmatprep.subr.mxu0 0.0
    %3955 = vmatpush1.msra.mxu0 %v1875
    %3956 = vmatprep.subr.mxu0 0.0
    %3957 = vmatpush1.msra.mxu0 %v1876
    %3958 = vmatprep.subr.mxu0 0.0
    %3959 = vmatpush1.msra.mxu0 %v1877
    %3960 = vmatprep.subr.mxu0 0.0
    %3961 = vmatpush1.msra.mxu0 0.0
    %3962 = vmatprep.subr.mxu0 0.0
    %3963 = vmatpush1.msra.mxu0 0.0
    %3964 = vmatprep.subr.mxu0 0.0
    %3965 = vmatpush1.msra.mxu0 0.0
    %3966 = vmatprep.subr.mxu0 0.0
    %3967 = vmatpush1.msra.mxu0 0.0
    %3968 = vmatprep.subr.mxu0 0.0
    %3969 = vmatpush1.msra.mxu0 0.0
    %3970 = vmatprep.subr.mxu0 0.0
    %3971 = vmatpush1.msra.mxu0 0.0
    %3972 = vmatprep.subr.mxu0 0.0
    %3973 = vmatpush1.msra.mxu0 0.0
    %3974 = vmatprep.subr.mxu0 0.0
    %3975 = vmatpush1.msra.mxu0 0.0
    %3976 = vmatprep.subr.mxu0 0.0
    %3977 = vmatpush1.msra.mxu0 0.0
    %3978 = vmatprep.subr.mxu0 0.0
    %3979 = vmatpush1.msra.mxu0 0.0
    %3980 = vmatprep.subr.mxu0 0.0
    %3981 = vmatpush1.msra.mxu0 0.0
    %3982 = vmatprep.subr.mxu0 0.0
    %3983 = vmatpush1.msra.mxu0 0.0
    %3984 = vmatprep.subr.mxu0 0.0
    %3985 = vmatpush1.msra.mxu0 0.0
    %3986 = vmatprep.subr.mxu0 0.0
    %3987 = vmatpush1.msra.mxu0 0.0
    %3988 = vmatprep.subr.mxu0 0.0
    %3989 = vmatpush1.msra.mxu0 0.0
    %3990 = vmatprep.subr.mxu0 0.0
    %3991 = vmatpush1.msra.mxu0 0.0
    %3992 = vmatprep.subr.mxu0 0.0
    %3993 = vmatpush1.msra.mxu0 0.0
    %3994 = vmatprep.subr.mxu0 0.0
    %3995 = vmatpush1.msra.mxu0 0.0
    %3996 = vmatprep.subr.mxu0 0.0
    %3997 = vmatpush1.msra.mxu0 0.0
    %3998 = vmatprep.subr.mxu0 0.0
    %3999 = vmatpush1.msra.mxu0 0.0
    %4000 = vmatprep.subr.mxu0 0.0
    %4001 = vmatpush1.msra.mxu0 0.0
    %4002 = vmatprep.subr.mxu0 0.0
    %4003 = vmatpush1.msra.mxu0 0.0
    %4004 = vmatprep.subr.mxu0 0.0
    %4005 = vmatpush1.msra.mxu0 0.0
    %4006 = vmatprep.subr.mxu0 0.0
    %4007 = vmatpush1.msra.mxu0 0.0
    %4008 = vmatprep.mubr.f32.mxu0 0.0
    %4009 = vmatmul.mubr.f32.gmra.mrb[0].mxu0 %v3802
    %v4010 = vpop.f32.mrb[0].mxu0
    %v4011 = vadd.f32 %v1884, %v4010
    %v4012 = vpop.f32.mrb[0].mxu0
    %4013 = vdwg.mxu0
    %v4014 = vadd.f32 %v3658, %v3871
    %v4015 = vxor.u32 %v4014, 2147483648
    %v4016 = vmul.f32 %v4015, 1.442695
    %v4017 = vpow.pop %v4016
    %v4018 = vadd.f32 %v4017, 1.0
    %v4019 = vrcp.pop %v4018
    %v4020 = vmul.f32 1.0, %v4019
    %v4021 = vadd.f32 %v3728, %v3941
    %v4022 = vxor.u32 %v4021, 2147483648
    %v4023 = vmul.f32 %v4022, 1.442695
    %v4024 = vpow.pop %v4023
    %v4025 = vadd.f32 %v4024, 1.0
    %v4026 = vrcp.pop %v4025
    %v4027 = vmul.f32 1.0, %v4026
    %v4028 = vmul.f32 %v4020, %v4011
    %v4029 = vadd.f32 %v3798, %v4028
    %v4030 = vtanh.pop %v4029
    %v4031 = vsub.f32 1.0, %v4027
    %v4032 = vmul.f32 %v4031, %v4030
    %v4033 = vmul.f32 %v4027, %v3348
    %v4034 = vadd.f32 %v4032, %v4033
    %s4035 = scalar_lea.vmem [#allocation2], 32
    %v4036 = vld [vmem:[%s4035] sm:$0xff]
    %s4037 = sadd.s32 32, 64
    %s4038 = scalar_lea.vmem [#allocation2], %s4037
    %v4039 = vld [vmem:[%s4038] sm:$0xff]
    %s4040 = sadd.s32 32, 128
    %s4041 = scalar_lea.vmem [#allocation2], %s4040
    %v4042 = vld [vmem:[%s4041] sm:$0xff]
    %4043 = vmatprep.subr.mxu0 0.0
    %4044 = vmatpush1.msra.mxu0 %v1152
    %4045 = vmatprep.subr.mxu0 0.0
    %4046 = vmatpush1.msra.mxu0 %v1153
    %4047 = vmatprep.subr.mxu0 0.0
    %4048 = vmatpush1.msra.mxu0 %v1154
    %4049 = vmatprep.subr.mxu0 0.0
    %4050 = vmatpush1.msra.mxu0 %v1155
    %4051 = vmatprep.subr.mxu0 0.0
    %4052 = vmatpush1.msra.mxu0 %v1156
    %4053 = vmatprep.subr.mxu0 0.0
    %4054 = vmatpush1.msra.mxu0 %v1157
    %4055 = vmatprep.subr.mxu0 0.0
    %4056 = vmatpush1.msra.mxu0 %v1158
    %4057 = vmatprep.subr.mxu0 0.0
    %4058 = vmatpush1.msra.mxu0 %v1159
    %4059 = vmatprep.subr.mxu0 0.0
    %4060 = vmatpush1.msra.mxu0 0.0
    %4061 = vmatprep.subr.mxu0 0.0
    %4062 = vmatpush1.msra.mxu0 0.0
    %4063 = vmatprep.subr.mxu0 0.0
    %4064 = vmatpush1.msra.mxu0 0.0
    %4065 = vmatprep.subr.mxu0 0.0
    %4066 = vmatpush1.msra.mxu0 0.0
    %4067 = vmatprep.subr.mxu0 0.0
    %4068 = vmatpush1.msra.mxu0 0.0
    %4069 = vmatprep.subr.mxu0 0.0
    %4070 = vmatpush1.msra.mxu0 0.0
    %4071 = vmatprep.subr.mxu0 0.0
    %4072 = vmatpush1.msra.mxu0 0.0
    %4073 = vmatprep.subr.mxu0 0.0
    %4074 = vmatpush1.msra.mxu0 0.0
    %4075 = vmatprep.subr.mxu0 0.0
    %4076 = vmatpush1.msra.mxu0 0.0
    %4077 = vmatprep.subr.mxu0 0.0
    %4078 = vmatpush1.msra.mxu0 0.0
    %4079 = vmatprep.subr.mxu0 0.0
    %4080 = vmatpush1.msra.mxu0 0.0
    %4081 = vmatprep.subr.mxu0 0.0
    %4082 = vmatpush1.msra.mxu0 0.0
    %4083 = vmatprep.subr.mxu0 0.0
    %4084 = vmatpush1.msra.mxu0 0.0
    %4085 = vmatprep.subr.mxu0 0.0
    %4086 = vmatpush1.msra.mxu0 0.0
    %4087 = vmatprep.subr.mxu0 0.0
    %4088 = vmatpush1.msra.mxu0 0.0
    %4089 = vmatprep.subr.mxu0 0.0
    %4090 = vmatpush1.msra.mxu0 0.0
    %4091 = vmatprep.subr.mxu0 0.0
    %4092 = vmatpush1.msra.mxu0 0.0
    %4093 = vmatprep.subr.mxu0 0.0
    %4094 = vmatpush1.msra.mxu0 0.0
    %4095 = vmatprep.subr.mxu0 0.0
    %4096 = vmatpush1.msra.mxu0 0.0
    %4097 = vmatprep.subr.mxu0 0.0
    %4098 = vmatpush1.msra.mxu0 0.0
    %4099 = vmatprep.subr.mxu0 0.0
    %4100 = vmatpush1.msra.mxu0 0.0
    %4101 = vmatprep.subr.mxu0 0.0
    %4102 = vmatpush1.msra.mxu0 0.0
    %4103 = vmatprep.subr.mxu0 0.0
    %4104 = vmatpush1.msra.mxu0 0.0
    %4105 = vmatprep.subr.mxu0 0.0
    %4106 = vmatpush1.msra.mxu0 0.0
    %4107 = vmatprep.mubr.f32.mxu0 0.0
    %4108 = vmatmul.mubr.f32.gmra.mrb[0].mxu0 %v3589
    %v4109 = vpop.f32.mrb[0].mxu0
    %v4110 = vadd.f32 %v1165, %v4109
    %v4111 = vpop.f32.mrb[0].mxu0
    %4112 = vdwg.mxu0
    %4113 = vmatprep.subr.mxu0 0.0
    %4114 = vmatpush1.msra.mxu0 %v1241
    %4115 = vmatprep.subr.mxu0 0.0
    %4116 = vmatpush1.msra.mxu0 %v1242
    %4117 = vmatprep.subr.mxu0 0.0
    %4118 = vmatpush1.msra.mxu0 %v1243
    %4119 = vmatprep.subr.mxu0 0.0
    %4120 = vmatpush1.msra.mxu0 %v1244
    %4121 = vmatprep.subr.mxu0 0.0
    %4122 = vmatpush1.msra.mxu0 %v1245
    %4123 = vmatprep.subr.mxu0 0.0
    %4124 = vmatpush1.msra.mxu0 %v1246
    %4125 = vmatprep.subr.mxu0 0.0
    %4126 = vmatpush1.msra.mxu0 %v1247
    %4127 = vmatprep.subr.mxu0 0.0
    %4128 = vmatpush1.msra.mxu0 %v1248
    %4129 = vmatprep.subr.mxu0 0.0
    %4130 = vmatpush1.msra.mxu0 0.0
    %4131 = vmatprep.subr.mxu0 0.0
    %4132 = vmatpush1.msra.mxu0 0.0
    %4133 = vmatprep.subr.mxu0 0.0
    %4134 = vmatpush1.msra.mxu0 0.0
    %4135 = vmatprep.subr.mxu0 0.0
    %4136 = vmatpush1.msra.mxu0 0.0
    %4137 = vmatprep.subr.mxu0 0.0
    %4138 = vmatpush1.msra.mxu0 0.0
    %4139 = vmatprep.subr.mxu0 0.0
    %4140 = vmatpush1.msra.mxu0 0.0
    %4141 = vmatprep.subr.mxu0 0.0
    %4142 = vmatpush1.msra.mxu0 0.0
    %4143 = vmatprep.subr.mxu0 0.0
    %4144 = vmatpush1.msra.mxu0 0.0
    %4145 = vmatprep.subr.mxu0 0.0
    %4146 = vmatpush1.msra.mxu0 0.0
    %4147 = vmatprep.subr.mxu0 0.0
    %4148 = vmatpush1.msra.mxu0 0.0
    %4149 = vmatprep.subr.mxu0 0.0
    %4150 = vmatpush1.msra.mxu0 0.0
    %4151 = vmatprep.subr.mxu0 0.0
    %4152 = vmatpush1.msra.mxu0 0.0
    %4153 = vmatprep.subr.mxu0 0.0
    %4154 = vmatpush1.msra.mxu0 0.0
    %4155 = vmatprep.subr.mxu0 0.0
    %4156 = vmatpush1.msra.mxu0 0.0
    %4157 = vmatprep.subr.mxu0 0.0
    %4158 = vmatpush1.msra.mxu0 0.0
    %4159 = vmatprep.subr.mxu0 0.0
    %4160 = vmatpush1.msra.mxu0 0.0
    %4161 = vmatprep.subr.mxu0 0.0
    %4162 = vmatpush1.msra.mxu0 0.0
    %4163 = vmatprep.subr.mxu0 0.0
    %4164 = vmatpush1.msra.mxu0 0.0
    %4165 = vmatprep.subr.mxu0 0.0
    %4166 = vmatpush1.msra.mxu0 0.0
    %4167 = vmatprep.subr.mxu0 0.0
    %4168 = vmatpush1.msra.mxu0 0.0
    %4169 = vmatprep.subr.mxu0 0.0
    %4170 = vmatpush1.msra.mxu0 0.0
    %4171 = vmatprep.subr.mxu0 0.0
    %4172 = vmatpush1.msra.mxu0 0.0
    %4173 = vmatprep.subr.mxu0 0.0
    %4174 = vmatpush1.msra.mxu0 0.0
    %4175 = vmatprep.subr.mxu0 0.0
    %4176 = vmatpush1.msra.mxu0 0.0
    %4177 = vmatprep.mubr.f32.mxu0 0.0
    %4178 = vmatmul.mubr.f32.gmra.mrb[0].mxu0 %v3589
    %v4179 = vpop.f32.mrb[0].mxu0
    %v4180 = vadd.f32 %v1255, %v4179
    %v4181 = vpop.f32.mrb[0].mxu0
    %4182 = vdwg.mxu0
    %4183 = vmatprep.subr.mxu0 0.0
    %4184 = vmatpush1.msra.mxu0 %v1328
    %4185 = vmatprep.subr.mxu0 0.0
    %4186 = vmatpush1.msra.mxu0 %v1329
    %4187 = vmatprep.subr.mxu0 0.0
    %4188 = vmatpush1.msra.mxu0 %v1330
    %4189 = vmatprep.subr.mxu0 0.0
    %4190 = vmatpush1.msra.mxu0 %v1331
    %4191 = vmatprep.subr.mxu0 0.0
    %4192 = vmatpush1.msra.mxu0 %v1332
    %4193 = vmatprep.subr.mxu0 0.0
    %4194 = vmatpush1.msra.mxu0 %v1333
    %4195 = vmatprep.subr.mxu0 0.0
    %4196 = vmatpush1.msra.mxu0 %v1334
    %4197 = vmatprep.subr.mxu0 0.0
    %4198 = vmatpush1.msra.mxu0 %v1335
    %4199 = vmatprep.subr.mxu0 0.0
    %4200 = vmatpush1.msra.mxu0 0.0
    %4201 = vmatprep.subr.mxu0 0.0
    %4202 = vmatpush1.msra.mxu0 0.0
    %4203 = vmatprep.subr.mxu0 0.0
    %4204 = vmatpush1.msra.mxu0 0.0
    %4205 = vmatprep.subr.mxu0 0.0
    %4206 = vmatpush1.msra.mxu0 0.0
    %4207 = vmatprep.subr.mxu0 0.0
    %4208 = vmatpush1.msra.mxu0 0.0
    %4209 = vmatprep.subr.mxu0 0.0
    %4210 = vmatpush1.msra.mxu0 0.0
    %4211 = vmatprep.subr.mxu0 0.0
    %4212 = vmatpush1.msra.mxu0 0.0
    %4213 = vmatprep.subr.mxu0 0.0
    %4214 = vmatpush1.msra.mxu0 0.0
    %4215 = vmatprep.subr.mxu0 0.0
    %4216 = vmatpush1.msra.mxu0 0.0
    %4217 = vmatprep.subr.mxu0 0.0
    %4218 = vmatpush1.msra.mxu0 0.0
    %4219 = vmatprep.subr.mxu0 0.0
    %4220 = vmatpush1.msra.mxu0 0.0
    %4221 = vmatprep.subr.mxu0 0.0
    %4222 = vmatpush1.msra.mxu0 0.0
    %4223 = vmatprep.subr.mxu0 0.0
    %4224 = vmatpush1.msra.mxu0 0.0
    %4225 = vmatprep.subr.mxu0 0.0
    %4226 = vmatpush1.msra.mxu0 0.0
    %4227 = vmatprep.subr.mxu0 0.0
    %4228 = vmatpush1.msra.mxu0 0.0
    %4229 = vmatprep.subr.mxu0 0.0
    %4230 = vmatpush1.msra.mxu0 0.0
    %4231 = vmatprep.subr.mxu0 0.0
    %4232 = vmatpush1.msra.mxu0 0.0
    %4233 = vmatprep.subr.mxu0 0.0
    %4234 = vmatpush1.msra.mxu0 0.0
    %4235 = vmatprep.subr.mxu0 0.0
    %4236 = vmatpush1.msra.mxu0 0.0
    %4237 = vmatprep.subr.mxu0 0.0
    %4238 = vmatpush1.msra.mxu0 0.0
    %4239 = vmatprep.subr.mxu0 0.0
    %4240 = vmatpush1.msra.mxu0 0.0
    %4241 = vmatprep.subr.mxu0 0.0
    %4242 = vmatpush1.msra.mxu0 0.0
    %4243 = vmatprep.subr.mxu0 0.0
    %4244 = vmatpush1.msra.mxu0 0.0
    %4245 = vmatprep.subr.mxu0 0.0
    %4246 = vmatpush1.msra.mxu0 0.0
    %4247 = vmatprep.mubr.f32.mxu0 0.0
    %4248 = vmatmul.mubr.f32.gmra.mrb[0].mxu0 %v3589
    %v4249 = vpop.f32.mrb[0].mxu0
    %v4250 = vadd.f32 %v1342, %v4249
    %v4251 = vpop.f32.mrb[0].mxu0
    %4252 = vdwg.mxu0
    %v4253 = vadd.f32 %v4036, %v4110
    %v4254 = vxor.u32 %v4253, 2147483648
    %v4255 = vmul.f32 %v4254, 1.442695
    %v4256 = vpow.pop %v4255
    %v4257 = vadd.f32 %v4256, 1.0
    %v4258 = vrcp.pop %v4257
    %v4259 = vmul.f32 1.0, %v4258
    %v4260 = vadd.f32 %v4039, %v4180
    %v4261 = vxor.u32 %v4260, 2147483648
    %v4262 = vmul.f32 %v4261, 1.442695
    %v4263 = vpow.pop %v4262
    %v4264 = vadd.f32 %v4263, 1.0
    %v4265 = vrcp.pop %v4264
    %v4266 = vmul.f32 1.0, %v4265
    %v4267 = vmul.f32 %v4259, %v4250
    %v4268 = vadd.f32 %v4042, %v4267
    %v4269 = vtanh.pop %v4268
    %v4270 = vsub.f32 1.0, %v4266
    %v4271 = vmul.f32 %v4270, %v4269
    %v4272 = vmul.f32 %v4266, %v3587
    %v4273 = vadd.f32 %v4271, %v4272
    %v4275 = vsel %vm301, %v4273, 0
    %4277 = vmatprep.subr.mxu0 0.0
    %4278 = vmatpush1.msra.mxu0 %v1435
    %4279 = vmatprep.subr.mxu0 0.0
    %4280 = vmatpush1.msra.mxu0 %v1436
    %4281 = vmatprep.subr.mxu0 0.0
    %4282 = vmatpush1.msra.mxu0 %v1437
    %4283 = vmatprep.subr.mxu0 0.0
    %4284 = vmatpush1.msra.mxu0 %v1438
    %4285 = vmatprep.subr.mxu0 0.0
    %4286 = vmatpush1.msra.mxu0 %v1439
    %4287 = vmatprep.subr.mxu0 0.0
    %4288 = vmatpush1.msra.mxu0 %v1440
    %4289 = vmatprep.subr.mxu0 0.0
    %4290 = vmatpush1.msra.mxu0 %v1441
    %4291 = vmatprep.subr.mxu0 0.0
    %4292 = vmatpush1.msra.mxu0 %v1442
    %4293 = vmatprep.subr.mxu0 0.0
    %4294 = vmatpush1.msra.mxu0 0.0
    %4295 = vmatprep.subr.mxu0 0.0
    %4296 = vmatpush1.msra.mxu0 0.0
    %4297 = vmatprep.subr.mxu0 0.0
    %4298 = vmatpush1.msra.mxu0 0.0
    %4299 = vmatprep.subr.mxu0 0.0
    %4300 = vmatpush1.msra.mxu0 0.0
    %4301 = vmatprep.subr.mxu0 0.0
    %4302 = vmatpush1.msra.mxu0 0.0
    %4303 = vmatprep.subr.mxu0 0.0
    %4304 = vmatpush1.msra.mxu0 0.0
    %4305 = vmatprep.subr.mxu0 0.0
    %4306 = vmatpush1.msra.mxu0 0.0
    %4307 = vmatprep.subr.mxu0 0.0
    %4308 = vmatpush1.msra.mxu0 0.0
    %4309 = vmatprep.subr.mxu0 0.0
    %4310 = vmatpush1.msra.mxu0 0.0
    %4311 = vmatprep.subr.mxu0 0.0
    %4312 = vmatpush1.msra.mxu0 0.0
    %4313 = vmatprep.subr.mxu0 0.0
    %4314 = vmatpush1.msra.mxu0 0.0
    %4315 = vmatprep.subr.mxu0 0.0
    %4316 = vmatpush1.msra.mxu0 0.0
    %4317 = vmatprep.subr.mxu0 0.0
    %4318 = vmatpush1.msra.mxu0 0.0
    %4319 = vmatprep.subr.mxu0 0.0
    %4320 = vmatpush1.msra.mxu0 0.0
    %4321 = vmatprep.subr.mxu0 0.0
    %4322 = vmatpush1.msra.mxu0 0.0
    %4323 = vmatprep.subr.mxu0 0.0
    %4324 = vmatpush1.msra.mxu0 0.0
    %4325 = vmatprep.subr.mxu0 0.0
    %4326 = vmatpush1.msra.mxu0 0.0
    %4327 = vmatprep.subr.mxu0 0.0
    %4328 = vmatpush1.msra.mxu0 0.0
    %4329 = vmatprep.subr.mxu0 0.0
    %4330 = vmatpush1.msra.mxu0 0.0
    %4331 = vmatprep.subr.mxu0 0.0
    %4332 = vmatpush1.msra.mxu0 0.0
    %4333 = vmatprep.subr.mxu0 0.0
    %4334 = vmatpush1.msra.mxu0 0.0
    %4335 = vmatprep.subr.mxu0 0.0
    %4336 = vmatpush1.msra.mxu0 0.0
    %4337 = vmatprep.subr.mxu0 0.0
    %4338 = vmatpush1.msra.mxu0 0.0
    %4339 = vmatprep.subr.mxu0 0.0
    %4340 = vmatpush1.msra.mxu0 0.0
    %4341 = vmatprep.mubr.f32.mxu0 0.0
    %4342 = vmatmul.mubr.f32.gmra.mrb[0].mxu0 %v4275
    %v4343 = vpop.f32.mrb[0].mxu0
    %v4344 = vadd.f32 %v1448, %v4343
    %v4345 = vpop.f32.mrb[0].mxu0
    %4346 = vdwg.mxu0
    %4347 = vmatprep.subr.mxu0 0.0
    %4348 = vmatpush1.msra.mxu0 %v1524
    %4349 = vmatprep.subr.mxu0 0.0
    %4350 = vmatpush1.msra.mxu0 %v1525
    %4351 = vmatprep.subr.mxu0 0.0
    %4352 = vmatpush1.msra.mxu0 %v1526
    %4353 = vmatprep.subr.mxu0 0.0
    %4354 = vmatpush1.msra.mxu0 %v1527
    %4355 = vmatprep.subr.mxu0 0.0
    %4356 = vmatpush1.msra.mxu0 %v1528
    %4357 = vmatprep.subr.mxu0 0.0
    %4358 = vmatpush1.msra.mxu0 %v1529
    %4359 = vmatprep.subr.mxu0 0.0
    %4360 = vmatpush1.msra.mxu0 %v1530
    %4361 = vmatprep.subr.mxu0 0.0
    %4362 = vmatpush1.msra.mxu0 %v1531
    %4363 = vmatprep.subr.mxu0 0.0
    %4364 = vmatpush1.msra.mxu0 0.0
    %4365 = vmatprep.subr.mxu0 0.0
    %4366 = vmatpush1.msra.mxu0 0.0
    %4367 = vmatprep.subr.mxu0 0.0
    %4368 = vmatpush1.msra.mxu0 0.0
    %4369 = vmatprep.subr.mxu0 0.0
    %4370 = vmatpush1.msra.mxu0 0.0
    %4371 = vmatprep.subr.mxu0 0.0
    %4372 = vmatpush1.msra.mxu0 0.0
    %4373 = vmatprep.subr.mxu0 0.0
    %4374 = vmatpush1.msra.mxu0 0.0
    %4375 = vmatprep.subr.mxu0 0.0
    %4376 = vmatpush1.msra.mxu0 0.0
    %4377 = vmatprep.subr.mxu0 0.0
    %4378 = vmatpush1.msra.mxu0 0.0
    %4379 = vmatprep.subr.mxu0 0.0
    %4380 = vmatpush1.msra.mxu0 0.0
    %4381 = vmatprep.subr.mxu0 0.0
    %4382 = vmatpush1.msra.mxu0 0.0
    %4383 = vmatprep.subr.mxu0 0.0
    %4384 = vmatpush1.msra.mxu0 0.0
    %4385 = vmatprep.subr.mxu0 0.0
    %4386 = vmatpush1.msra.mxu0 0.0
    %4387 = vmatprep.subr.mxu0 0.0
    %4388 = vmatpush1.msra.mxu0 0.0
    %4389 = vmatprep.subr.mxu0 0.0
    %4390 = vmatpush1.msra.mxu0 0.0
    %4391 = vmatprep.subr.mxu0 0.0
    %4392 = vmatpush1.msra.mxu0 0.0
    %4393 = vmatprep.subr.mxu0 0.0
    %4394 = vmatpush1.msra.mxu0 0.0
    %4395 = vmatprep.subr.mxu0 0.0
    %4396 = vmatpush1.msra.mxu0 0.0
    %4397 = vmatprep.subr.mxu0 0.0
    %4398 = vmatpush1.msra.mxu0 0.0
    %4399 = vmatprep.subr.mxu0 0.0
    %4400 = vmatpush1.msra.mxu0 0.0
    %4401 = vmatprep.subr.mxu0 0.0
    %4402 = vmatpush1.msra.mxu0 0.0
    %4403 = vmatprep.subr.mxu0 0.0
    %4404 = vmatpush1.msra.mxu0 0.0
    %4405 = vmatprep.subr.mxu0 0.0
    %4406 = vmatpush1.msra.mxu0 0.0
    %4407 = vmatprep.subr.mxu0 0.0
    %4408 = vmatpush1.msra.mxu0 0.0
    %4409 = vmatprep.subr.mxu0 0.0
    %4410 = vmatpush1.msra.mxu0 0.0
    %4411 = vmatprep.mubr.f32.mxu0 0.0
    %4412 = vmatmul.mubr.f32.gmra.mrb[0].mxu0 %v4275
    %v4413 = vpop.f32.mrb[0].mxu0
    %v4414 = vadd.f32 %v1538, %v4413
    %v4415 = vpop.f32.mrb[0].mxu0
    %4416 = vdwg.mxu0
    %4417 = vmatprep.subr.mxu0 0.0
    %4418 = vmatpush1.msra.mxu0 %v1611
    %4419 = vmatprep.subr.mxu0 0.0
    %4420 = vmatpush1.msra.mxu0 %v1612
    %4421 = vmatprep.subr.mxu0 0.0
    %4422 = vmatpush1.msra.mxu0 %v1613
    %4423 = vmatprep.subr.mxu0 0.0
    %4424 = vmatpush1.msra.mxu0 %v1614
    %4425 = vmatprep.subr.mxu0 0.0
    %4426 = vmatpush1.msra.mxu0 %v1615
    %4427 = vmatprep.subr.mxu0 0.0
    %4428 = vmatpush1.msra.mxu0 %v1616
    %4429 = vmatprep.subr.mxu0 0.0
    %4430 = vmatpush1.msra.mxu0 %v1617
    %4431 = vmatprep.subr.mxu0 0.0
    %4432 = vmatpush1.msra.mxu0 %v1618
    %4433 = vmatprep.subr.mxu0 0.0
    %4434 = vmatpush1.msra.mxu0 0.0
    %4435 = vmatprep.subr.mxu0 0.0
    %4436 = vmatpush1.msra.mxu0 0.0
    %4437 = vmatprep.subr.mxu0 0.0
    %4438 = vmatpush1.msra.mxu0 0.0
    %4439 = vmatprep.subr.mxu0 0.0
    %4440 = vmatpush1.msra.mxu0 0.0
    %4441 = vmatprep.subr.mxu0 0.0
    %4442 = vmatpush1.msra.mxu0 0.0
    %4443 = vmatprep.subr.mxu0 0.0
    %4444 = vmatpush1.msra.mxu0 0.0
    %4445 = vmatprep.subr.mxu0 0.0
    %4446 = vmatpush1.msra.mxu0 0.0
    %4447 = vmatprep.subr.mxu0 0.0
    %4448 = vmatpush1.msra.mxu0 0.0
    %4449 = vmatprep.subr.mxu0 0.0
    %4450 = vmatpush1.msra.mxu0 0.0
    %4451 = vmatprep.subr.mxu0 0.0
    %4452 = vmatpush1.msra.mxu0 0.0
    %4453 = vmatprep.subr.mxu0 0.0
    %4454 = vmatpush1.msra.mxu0 0.0
    %4455 = vmatprep.subr.mxu0 0.0
    %4456 = vmatpush1.msra.mxu0 0.0
    %4457 = vmatprep.subr.mxu0 0.0
    %4458 = vmatpush1.msra.mxu0 0.0
    %4459 = vmatprep.subr.mxu0 0.0
    %4460 = vmatpush1.msra.mxu0 0.0
    %4461 = vmatprep.subr.mxu0 0.0
    %4462 = vmatpush1.msra.mxu0 0.0
    %4463 = vmatprep.subr.mxu0 0.0
    %4464 = vmatpush1.msra.mxu0 0.0
    %4465 = vmatprep.subr.mxu0 0.0
    %4466 = vmatpush1.msra.mxu0 0.0
    %4467 = vmatprep.subr.mxu0 0.0
    %4468 = vmatpush1.msra.mxu0 0.0
    %4469 = vmatprep.subr.mxu0 0.0
    %4470 = vmatpush1.msra.mxu0 0.0
    %4471 = vmatprep.subr.mxu0 0.0
    %4472 = vmatpush1.msra.mxu0 0.0
    %4473 = vmatprep.subr.mxu0 0.0
    %4474 = vmatpush1.msra.mxu0 0.0
    %4475 = vmatprep.subr.mxu0 0.0
    %4476 = vmatpush1.msra.mxu0 0.0
    %4477 = vmatprep.subr.mxu0 0.0
    %4478 = vmatpush1.msra.mxu0 0.0
    %4479 = vmatprep.subr.mxu0 0.0
    %4480 = vmatpush1.msra.mxu0 0.0
    %4481 = vmatprep.mubr.f32.mxu0 0.0
    %4482 = vmatmul.mubr.f32.gmra.mrb[0].mxu0 %v4275
    %v4483 = vpop.f32.mrb[0].mxu0
    %v4484 = vadd.f32 %v1625, %v4483
    %v4485 = vpop.f32.mrb[0].mxu0
    %4486 = vdwg.mxu0
    %v4488 = vsel %vm301, %v4034, 0
    %4490 = vmatprep.subr.mxu0 0.0
    %4491 = vmatpush1.msra.mxu0 %v1697
    %4492 = vmatprep.subr.mxu0 0.0
    %4493 = vmatpush1.msra.mxu0 %v1698
    %4494 = vmatprep.subr.mxu0 0.0
    %4495 = vmatpush1.msra.mxu0 %v1699
    %4496 = vmatprep.subr.mxu0 0.0
    %4497 = vmatpush1.msra.mxu0 %v1700
    %4498 = vmatprep.subr.mxu0 0.0
    %4499 = vmatpush1.msra.mxu0 %v1701
    %4500 = vmatprep.subr.mxu0 0.0
    %4501 = vmatpush1.msra.mxu0 %v1702
    %4502 = vmatprep.subr.mxu0 0.0
    %4503 = vmatpush1.msra.mxu0 %v1703
    %4504 = vmatprep.subr.mxu0 0.0
    %4505 = vmatpush1.msra.mxu0 %v1704
    %4506 = vmatprep.subr.mxu0 0.0
    %4507 = vmatpush1.msra.mxu0 0.0
    %4508 = vmatprep.subr.mxu0 0.0
    %4509 = vmatpush1.msra.mxu0 0.0
    %4510 = vmatprep.subr.mxu0 0.0
    %4511 = vmatpush1.msra.mxu0 0.0
    %4512 = vmatprep.subr.mxu0 0.0
    %4513 = vmatpush1.msra.mxu0 0.0
    %4514 = vmatprep.subr.mxu0 0.0
    %4515 = vmatpush1.msra.mxu0 0.0
    %4516 = vmatprep.subr.mxu0 0.0
    %4517 = vmatpush1.msra.mxu0 0.0
    %4518 = vmatprep.subr.mxu0 0.0
    %4519 = vmatpush1.msra.mxu0 0.0
    %4520 = vmatprep.subr.mxu0 0.0
    %4521 = vmatpush1.msra.mxu0 0.0
    %4522 = vmatprep.subr.mxu0 0.0
    %4523 = vmatpush1.msra.mxu0 0.0
    %4524 = vmatprep.subr.mxu0 0.0
    %4525 = vmatpush1.msra.mxu0 0.0
    %4526 = vmatprep.subr.mxu0 0.0
    %4527 = vmatpush1.msra.mxu0 0.0
    %4528 = vmatprep.subr.mxu0 0.0
    %4529 = vmatpush1.msra.mxu0 0.0
    %4530 = vmatprep.subr.mxu0 0.0
    %4531 = vmatpush1.msra.mxu0 0.0
    %4532 = vmatprep.subr.mxu0 0.0
    %4533 = vmatpush1.msra.mxu0 0.0
    %4534 = vmatprep.subr.mxu0 0.0
    %4535 = vmatpush1.msra.mxu0 0.0
    %4536 = vmatprep.subr.mxu0 0.0
    %4537 = vmatpush1.msra.mxu0 0.0
    %4538 = vmatprep.subr.mxu0 0.0
    %4539 = vmatpush1.msra.mxu0 0.0
    %4540 = vmatprep.subr.mxu0 0.0
    %4541 = vmatpush1.msra.mxu0 0.0
    %4542 = vmatprep.subr.mxu0 0.0
    %4543 = vmatpush1.msra.mxu0 0.0
    %4544 = vmatprep.subr.mxu0 0.0
    %4545 = vmatpush1.msra.mxu0 0.0
    %4546 = vmatprep.subr.mxu0 0.0
    %4547 = vmatpush1.msra.mxu0 0.0
    %4548 = vmatprep.subr.mxu0 0.0
    %4549 = vmatpush1.msra.mxu0 0.0
    %4550 = vmatprep.subr.mxu0 0.0
    %4551 = vmatpush1.msra.mxu0 0.0
    %4552 = vmatprep.subr.mxu0 0.0
    %4553 = vmatpush1.msra.mxu0 0.0
    %4554 = vmatprep.mubr.f32.mxu0 0.0
    %4555 = vmatmul.mubr.f32.gmra.mrb[0].mxu0 %v4488
    %v4556 = vpop.f32.mrb[0].mxu0
    %v4557 = vadd.f32 %v1710, %v4556
    %v4558 = vpop.f32.mrb[0].mxu0
    %4559 = vdwg.mxu0
    %4560 = vmatprep.subr.mxu0 0.0
    %4561 = vmatpush1.msra.mxu0 %v1783
    %4562 = vmatprep.subr.mxu0 0.0
    %4563 = vmatpush1.msra.mxu0 %v1784
    %4564 = vmatprep.subr.mxu0 0.0
    %4565 = vmatpush1.msra.mxu0 %v1785
    %4566 = vmatprep.subr.mxu0 0.0
    %4567 = vmatpush1.msra.mxu0 %v1786
    %4568 = vmatprep.subr.mxu0 0.0
    %4569 = vmatpush1.msra.mxu0 %v1787
    %4570 = vmatprep.subr.mxu0 0.0
    %4571 = vmatpush1.msra.mxu0 %v1788
    %4572 = vmatprep.subr.mxu0 0.0
    %4573 = vmatpush1.msra.mxu0 %v1789
    %4574 = vmatprep.subr.mxu0 0.0
    %4575 = vmatpush1.msra.mxu0 %v1790
    %4576 = vmatprep.subr.mxu0 0.0
    %4577 = vmatpush1.msra.mxu0 0.0
    %4578 = vmatprep.subr.mxu0 0.0
    %4579 = vmatpush1.msra.mxu0 0.0
    %4580 = vmatprep.subr.mxu0 0.0
    %4581 = vmatpush1.msra.mxu0 0.0
    %4582 = vmatprep.subr.mxu0 0.0
    %4583 = vmatpush1.msra.mxu0 0.0
    %4584 = vmatprep.subr.mxu0 0.0
    %4585 = vmatpush1.msra.mxu0 0.0
    %4586 = vmatprep.subr.mxu0 0.0
    %4587 = vmatpush1.msra.mxu0 0.0
    %4588 = vmatprep.subr.mxu0 0.0
    %4589 = vmatpush1.msra.mxu0 0.0
    %4590 = vmatprep.subr.mxu0 0.0
    %4591 = vmatpush1.msra.mxu0 0.0
    %4592 = vmatprep.subr.mxu0 0.0
    %4593 = vmatpush1.msra.mxu0 0.0
    %4594 = vmatprep.subr.mxu0 0.0
    %4595 = vmatpush1.msra.mxu0 0.0
    %4596 = vmatprep.subr.mxu0 0.0
    %4597 = vmatpush1.msra.mxu0 0.0
    %4598 = vmatprep.subr.mxu0 0.0
    %4599 = vmatpush1.msra.mxu0 0.0
    %4600 = vmatprep.subr.mxu0 0.0
    %4601 = vmatpush1.msra.mxu0 0.0
    %4602 = vmatprep.subr.mxu0 0.0
    %4603 = vmatpush1.msra.mxu0 0.0
    %4604 = vmatprep.subr.mxu0 0.0
    %4605 = vmatpush1.msra.mxu0 0.0
    %4606 = vmatprep.subr.mxu0 0.0
    %4607 = vmatpush1.msra.mxu0 0.0
    %4608 = vmatprep.subr.mxu0 0.0
    %4609 = vmatpush1.msra.mxu0 0.0
    %4610 = vmatprep.subr.mxu0 0.0
    %4611 = vmatpush1.msra.mxu0 0.0
    %4612 = vmatprep.subr.mxu0 0.0
    %4613 = vmatpush1.msra.mxu0 0.0
    %4614 = vmatprep.subr.mxu0 0.0
    %4615 = vmatpush1.msra.mxu0 0.0
    %4616 = vmatprep.subr.mxu0 0.0
    %4617 = vmatpush1.msra.mxu0 0.0
    %4618 = vmatprep.subr.mxu0 0.0
    %4619 = vmatpush1.msra.mxu0 0.0
    %4620 = vmatprep.subr.mxu0 0.0
    %4621 = vmatpush1.msra.mxu0 0.0
    %4622 = vmatprep.subr.mxu0 0.0
    %4623 = vmatpush1.msra.mxu0 0.0
    %4624 = vmatprep.mubr.f32.mxu0 0.0
    %4625 = vmatmul.mubr.f32.gmra.mrb[0].mxu0 %v4488
    %v4626 = vpop.f32.mrb[0].mxu0
    %v4627 = vadd.f32 %v1797, %v4626
    %v4628 = vpop.f32.mrb[0].mxu0
    %4629 = vdwg.mxu0
    %4630 = vmatprep.subr.mxu0 0.0
    %4631 = vmatpush1.msra.mxu0 %v1870
    %4632 = vmatprep.subr.mxu0 0.0
    %4633 = vmatpush1.msra.mxu0 %v1871
    %4634 = vmatprep.subr.mxu0 0.0
    %4635 = vmatpush1.msra.mxu0 %v1872
    %4636 = vmatprep.subr.mxu0 0.0
    %4637 = vmatpush1.msra.mxu0 %v1873
    %4638 = vmatprep.subr.mxu0 0.0
    %4639 = vmatpush1.msra.mxu0 %v1874
    %4640 = vmatprep.subr.mxu0 0.0
    %4641 = vmatpush1.msra.mxu0 %v1875
    %4642 = vmatprep.subr.mxu0 0.0
    %4643 = vmatpush1.msra.mxu0 %v1876
    %4644 = vmatprep.subr.mxu0 0.0
    %4645 = vmatpush1.msra.mxu0 %v1877
    %4646 = vmatprep.subr.mxu0 0.0
    %4647 = vmatpush1.msra.mxu0 0.0
    %4648 = vmatprep.subr.mxu0 0.0
    %4649 = vmatpush1.msra.mxu0 0.0
    %4650 = vmatprep.subr.mxu0 0.0
    %4651 = vmatpush1.msra.mxu0 0.0
    %4652 = vmatprep.subr.mxu0 0.0
    %4653 = vmatpush1.msra.mxu0 0.0
    %4654 = vmatprep.subr.mxu0 0.0
    %4655 = vmatpush1.msra.mxu0 0.0
    %4656 = vmatprep.subr.mxu0 0.0
    %4657 = vmatpush1.msra.mxu0 0.0
    %4658 = vmatprep.subr.mxu0 0.0
    %4659 = vmatpush1.msra.mxu0 0.0
    %4660 = vmatprep.subr.mxu0 0.0
    %4661 = vmatpush1.msra.mxu0 0.0
    %4662 = vmatprep.subr.mxu0 0.0
    %4663 = vmatpush1.msra.mxu0 0.0
    %4664 = vmatprep.subr.mxu0 0.0
    %4665 = vmatpush1.msra.mxu0 0.0
    %4666 = vmatprep.subr.mxu0 0.0
    %4667 = vmatpush1.msra.mxu0 0.0
    %4668 = vmatprep.subr.mxu0 0.0
    %4669 = vmatpush1.msra.mxu0 0.0
    %4670 = vmatprep.subr.mxu0 0.0
    %4671 = vmatpush1.msra.mxu0 0.0
    %4672 = vmatprep.subr.mxu0 0.0
    %4673 = vmatpush1.msra.mxu0 0.0
    %4674 = vmatprep.subr.mxu0 0.0
    %4675 = vmatpush1.msra.mxu0 0.0
    %4676 = vmatprep.subr.mxu0 0.0
    %4677 = vmatpush1.msra.mxu0 0.0
    %4678 = vmatprep.subr.mxu0 0.0
    %4679 = vmatpush1.msra.mxu0 0.0
    %4680 = vmatprep.subr.mxu0 0.0
    %4681 = vmatpush1.msra.mxu0 0.0
    %4682 = vmatprep.subr.mxu0 0.0
    %4683 = vmatpush1.msra.mxu0 0.0
    %4684 = vmatprep.subr.mxu0 0.0
    %4685 = vmatpush1.msra.mxu0 0.0
    %4686 = vmatprep.subr.mxu0 0.0
    %4687 = vmatpush1.msra.mxu0 0.0
    %4688 = vmatprep.subr.mxu0 0.0
    %4689 = vmatpush1.msra.mxu0 0.0
    %4690 = vmatprep.subr.mxu0 0.0
    %4691 = vmatpush1.msra.mxu0 0.0
    %4692 = vmatprep.subr.mxu0 0.0
    %4693 = vmatpush1.msra.mxu0 0.0
    %4694 = vmatprep.mubr.f32.mxu0 0.0
    %4695 = vmatmul.mubr.f32.gmra.mrb[0].mxu0 %v4488
    %v4696 = vpop.f32.mrb[0].mxu0
    %v4697 = vadd.f32 %v1884, %v4696
    %v4698 = vpop.f32.mrb[0].mxu0
    %4699 = vdwg.mxu0
    %v4700 = vadd.f32 %v4344, %v4557
    %v4701 = vxor.u32 %v4700, 2147483648
    %v4702 = vmul.f32 %v4701, 1.442695
    %v4703 = vpow.pop %v4702
    %v4704 = vadd.f32 %v4703, 1.0
    %v4705 = vrcp.pop %v4704
    %v4706 = vmul.f32 1.0, %v4705
    %v4707 = vadd.f32 %v4414, %v4627
    %v4708 = vxor.u32 %v4707, 2147483648
    %v4709 = vmul.f32 %v4708, 1.442695
    %v4710 = vpow.pop %v4709
    %v4711 = vadd.f32 %v4710, 1.0
    %v4712 = vrcp.pop %v4711
    %v4713 = vmul.f32 1.0, %v4712
    %v4714 = vmul.f32 %v4706, %v4697
    %v4715 = vadd.f32 %v4484, %v4714
    %v4716 = vtanh.pop %v4715
    %v4717 = vsub.f32 1.0, %v4713
    %v4718 = vmul.f32 %v4717, %v4716
    %v4719 = vmul.f32 %v4713, %v4034
    %v4720 = vadd.f32 %v4718, %v4719
    %s4721 = scalar_lea.vmem [#allocation2], 40
    %v4722 = vld [vmem:[%s4721] sm:$0xff]
    %s4723 = sadd.s32 40, 64
    %s4724 = scalar_lea.vmem [#allocation2], %s4723
    %v4725 = vld [vmem:[%s4724] sm:$0xff]
    %s4726 = sadd.s32 40, 128
    %s4727 = scalar_lea.vmem [#allocation2], %s4726
    %v4728 = vld [vmem:[%s4727] sm:$0xff]
    %4729 = vmatprep.subr.mxu0 0.0
    %4730 = vmatpush1.msra.mxu0 %v1152
    %4731 = vmatprep.subr.mxu0 0.0
    %4732 = vmatpush1.msra.mxu0 %v1153
    %4733 = vmatprep.subr.mxu0 0.0
    %4734 = vmatpush1.msra.mxu0 %v1154
    %4735 = vmatprep.subr.mxu0 0.0
    %4736 = vmatpush1.msra.mxu0 %v1155
    %4737 = vmatprep.subr.mxu0 0.0
    %4738 = vmatpush1.msra.mxu0 %v1156
    %4739 = vmatprep.subr.mxu0 0.0
    %4740 = vmatpush1.msra.mxu0 %v1157
    %4741 = vmatprep.subr.mxu0 0.0
    %4742 = vmatpush1.msra.mxu0 %v1158
    %4743 = vmatprep.subr.mxu0 0.0
    %4744 = vmatpush1.msra.mxu0 %v1159
    %4745 = vmatprep.subr.mxu0 0.0
    %4746 = vmatpush1.msra.mxu0 0.0
    %4747 = vmatprep.subr.mxu0 0.0
    %4748 = vmatpush1.msra.mxu0 0.0
    %4749 = vmatprep.subr.mxu0 0.0
    %4750 = vmatpush1.msra.mxu0 0.0
    %4751 = vmatprep.subr.mxu0 0.0
    %4752 = vmatpush1.msra.mxu0 0.0
    %4753 = vmatprep.subr.mxu0 0.0
    %4754 = vmatpush1.msra.mxu0 0.0
    %4755 = vmatprep.subr.mxu0 0.0
    %4756 = vmatpush1.msra.mxu0 0.0
    %4757 = vmatprep.subr.mxu0 0.0
    %4758 = vmatpush1.msra.mxu0 0.0
    %4759 = vmatprep.subr.mxu0 0.0
    %4760 = vmatpush1.msra.mxu0 0.0
    %4761 = vmatprep.subr.mxu0 0.0
    %4762 = vmatpush1.msra.mxu0 0.0
    %4763 = vmatprep.subr.mxu0 0.0
    %4764 = vmatpush1.msra.mxu0 0.0
    %4765 = vmatprep.subr.mxu0 0.0
    %4766 = vmatpush1.msra.mxu0 0.0
    %4767 = vmatprep.subr.mxu0 0.0
    %4768 = vmatpush1.msra.mxu0 0.0
    %4769 = vmatprep.subr.mxu0 0.0
    %4770 = vmatpush1.msra.mxu0 0.0
    %4771 = vmatprep.subr.mxu0 0.0
    %4772 = vmatpush1.msra.mxu0 0.0
    %4773 = vmatprep.subr.mxu0 0.0
    %4774 = vmatpush1.msra.mxu0 0.0
    %4775 = vmatprep.subr.mxu0 0.0
    %4776 = vmatpush1.msra.mxu0 0.0
    %4777 = vmatprep.subr.mxu0 0.0
    %4778 = vmatpush1.msra.mxu0 0.0
    %4779 = vmatprep.subr.mxu0 0.0
    %4780 = vmatpush1.msra.mxu0 0.0
    %4781 = vmatprep.subr.mxu0 0.0
    %4782 = vmatpush1.msra.mxu0 0.0
    %4783 = vmatprep.subr.mxu0 0.0
    %4784 = vmatpush1.msra.mxu0 0.0
    %4785 = vmatprep.subr.mxu0 0.0
    %4786 = vmatpush1.msra.mxu0 0.0
    %4787 = vmatprep.subr.mxu0 0.0
    %4788 = vmatpush1.msra.mxu0 0.0
    %4789 = vmatprep.subr.mxu0 0.0
    %4790 = vmatpush1.msra.mxu0 0.0
    %4791 = vmatprep.subr.mxu0 0.0
    %4792 = vmatpush1.msra.mxu0 0.0
    %4793 = vmatprep.mubr.f32.mxu0 0.0
    %4794 = vmatmul.mubr.f32.gmra.mrb[0].mxu0 %v4275
    %v4795 = vpop.f32.mrb[0].mxu0
    %v4796 = vadd.f32 %v1165, %v4795
    %v4797 = vpop.f32.mrb[0].mxu0
    %4798 = vdwg.mxu0
    %4799 = vmatprep.subr.mxu0 0.0
    %4800 = vmatpush1.msra.mxu0 %v1241
    %4801 = vmatprep.subr.mxu0 0.0
    %4802 = vmatpush1.msra.mxu0 %v1242
    %4803 = vmatprep.subr.mxu0 0.0
    %4804 = vmatpush1.msra.mxu0 %v1243
    %4805 = vmatprep.subr.mxu0 0.0
    %4806 = vmatpush1.msra.mxu0 %v1244
    %4807 = vmatprep.subr.mxu0 0.0
    %4808 = vmatpush1.msra.mxu0 %v1245
    %4809 = vmatprep.subr.mxu0 0.0
    %4810 = vmatpush1.msra.mxu0 %v1246
    %4811 = vmatprep.subr.mxu0 0.0
    %4812 = vmatpush1.msra.mxu0 %v1247
    %4813 = vmatprep.subr.mxu0 0.0
    %4814 = vmatpush1.msra.mxu0 %v1248
    %4815 = vmatprep.subr.mxu0 0.0
    %4816 = vmatpush1.msra.mxu0 0.0
    %4817 = vmatprep.subr.mxu0 0.0
    %4818 = vmatpush1.msra.mxu0 0.0
    %4819 = vmatprep.subr.mxu0 0.0
    %4820 = vmatpush1.msra.mxu0 0.0
    %4821 = vmatprep.subr.mxu0 0.0
    %4822 = vmatpush1.msra.mxu0 0.0
    %4823 = vmatprep.subr.mxu0 0.0
    %4824 = vmatpush1.msra.mxu0 0.0
    %4825 = vmatprep.subr.mxu0 0.0
    %4826 = vmatpush1.msra.mxu0 0.0
    %4827 = vmatprep.subr.mxu0 0.0
    %4828 = vmatpush1.msra.mxu0 0.0
    %4829 = vmatprep.subr.mxu0 0.0
    %4830 = vmatpush1.msra.mxu0 0.0
    %4831 = vmatprep.subr.mxu0 0.0
    %4832 = vmatpush1.msra.mxu0 0.0
    %4833 = vmatprep.subr.mxu0 0.0
    %4834 = vmatpush1.msra.mxu0 0.0
    %4835 = vmatprep.subr.mxu0 0.0
    %4836 = vmatpush1.msra.mxu0 0.0
    %4837 = vmatprep.subr.mxu0 0.0
    %4838 = vmatpush1.msra.mxu0 0.0
    %4839 = vmatprep.subr.mxu0 0.0
    %4840 = vmatpush1.msra.mxu0 0.0
    %4841 = vmatprep.subr.mxu0 0.0
    %4842 = vmatpush1.msra.mxu0 0.0
    %4843 = vmatprep.subr.mxu0 0.0
    %4844 = vmatpush1.msra.mxu0 0.0
    %4845 = vmatprep.subr.mxu0 0.0
    %4846 = vmatpush1.msra.mxu0 0.0
    %4847 = vmatprep.subr.mxu0 0.0
    %4848 = vmatpush1.msra.mxu0 0.0
    %4849 = vmatprep.subr.mxu0 0.0
    %4850 = vmatpush1.msra.mxu0 0.0
    %4851 = vmatprep.subr.mxu0 0.0
    %4852 = vmatpush1.msra.mxu0 0.0
    %4853 = vmatprep.subr.mxu0 0.0
    %4854 = vmatpush1.msra.mxu0 0.0
    %4855 = vmatprep.subr.mxu0 0.0
    %4856 = vmatpush1.msra.mxu0 0.0
    %4857 = vmatprep.subr.mxu0 0.0
    %4858 = vmatpush1.msra.mxu0 0.0
    %4859 = vmatprep.subr.mxu0 0.0
    %4860 = vmatpush1.msra.mxu0 0.0
    %4861 = vmatprep.subr.mxu0 0.0
    %4862 = vmatpush1.msra.mxu0 0.0
    %4863 = vmatprep.mubr.f32.mxu0 0.0
    %4864 = vmatmul.mubr.f32.gmra.mrb[0].mxu0 %v4275
    %v4865 = vpop.f32.mrb[0].mxu0
    %v4866 = vadd.f32 %v1255, %v4865
    %v4867 = vpop.f32.mrb[0].mxu0
    %4868 = vdwg.mxu0
    %4869 = vmatprep.subr.mxu0 0.0
    %4870 = vmatpush1.msra.mxu0 %v1328
    %4871 = vmatprep.subr.mxu0 0.0
    %4872 = vmatpush1.msra.mxu0 %v1329
    %4873 = vmatprep.subr.mxu0 0.0
    %4874 = vmatpush1.msra.mxu0 %v1330
    %4875 = vmatprep.subr.mxu0 0.0
    %4876 = vmatpush1.msra.mxu0 %v1331
    %4877 = vmatprep.subr.mxu0 0.0
    %4878 = vmatpush1.msra.mxu0 %v1332
    %4879 = vmatprep.subr.mxu0 0.0
    %4880 = vmatpush1.msra.mxu0 %v1333
    %4881 = vmatprep.subr.mxu0 0.0
    %4882 = vmatpush1.msra.mxu0 %v1334
    %4883 = vmatprep.subr.mxu0 0.0
    %4884 = vmatpush1.msra.mxu0 %v1335
    %4885 = vmatprep.subr.mxu0 0.0
    %4886 = vmatpush1.msra.mxu0 0.0
    %4887 = vmatprep.subr.mxu0 0.0
    %4888 = vmatpush1.msra.mxu0 0.0
    %4889 = vmatprep.subr.mxu0 0.0
    %4890 = vmatpush1.msra.mxu0 0.0
    %4891 = vmatprep.subr.mxu0 0.0
    %4892 = vmatpush1.msra.mxu0 0.0
    %4893 = vmatprep.subr.mxu0 0.0
    %4894 = vmatpush1.msra.mxu0 0.0
    %4895 = vmatprep.subr.mxu0 0.0
    %4896 = vmatpush1.msra.mxu0 0.0
    %4897 = vmatprep.subr.mxu0 0.0
    %4898 = vmatpush1.msra.mxu0 0.0
    %4899 = vmatprep.subr.mxu0 0.0
    %4900 = vmatpush1.msra.mxu0 0.0
    %4901 = vmatprep.subr.mxu0 0.0
    %4902 = vmatpush1.msra.mxu0 0.0
    %4903 = vmatprep.subr.mxu0 0.0
    %4904 = vmatpush1.msra.mxu0 0.0
    %4905 = vmatprep.subr.mxu0 0.0
    %4906 = vmatpush1.msra.mxu0 0.0
    %4907 = vmatprep.subr.mxu0 0.0
    %4908 = vmatpush1.msra.mxu0 0.0
    %4909 = vmatprep.subr.mxu0 0.0
    %4910 = vmatpush1.msra.mxu0 0.0
    %4911 = vmatprep.subr.mxu0 0.0
    %4912 = vmatpush1.msra.mxu0 0.0
    %4913 = vmatprep.subr.mxu0 0.0
    %4914 = vmatpush1.msra.mxu0 0.0
    %4915 = vmatprep.subr.mxu0 0.0
    %4916 = vmatpush1.msra.mxu0 0.0
    %4917 = vmatprep.subr.mxu0 0.0
    %4918 = vmatpush1.msra.mxu0 0.0
    %4919 = vmatprep.subr.mxu0 0.0
    %4920 = vmatpush1.msra.mxu0 0.0
    %4921 = vmatprep.subr.mxu0 0.0
    %4922 = vmatpush1.msra.mxu0 0.0
    %4923 = vmatprep.subr.mxu0 0.0
    %4924 = vmatpush1.msra.mxu0 0.0
    %4925 = vmatprep.subr.mxu0 0.0
    %4926 = vmatpush1.msra.mxu0 0.0
    %4927 = vmatprep.subr.mxu0 0.0
    %4928 = vmatpush1.msra.mxu0 0.0
    %4929 = vmatprep.subr.mxu0 0.0
    %4930 = vmatpush1.msra.mxu0 0.0
    %4931 = vmatprep.subr.mxu0 0.0
    %4932 = vmatpush1.msra.mxu0 0.0
    %4933 = vmatprep.mubr.f32.mxu0 0.0
    %4934 = vmatmul.mubr.f32.gmra.mrb[0].mxu0 %v4275
    %v4935 = vpop.f32.mrb[0].mxu0
    %v4936 = vadd.f32 %v1342, %v4935
    %v4937 = vpop.f32.mrb[0].mxu0
    %4938 = vdwg.mxu0
    %v4939 = vadd.f32 %v4722, %v4796
    %v4940 = vxor.u32 %v4939, 2147483648
    %v4941 = vmul.f32 %v4940, 1.442695
    %v4942 = vpow.pop %v4941
    %v4943 = vadd.f32 %v4942, 1.0
    %v4944 = vrcp.pop %v4943
    %v4945 = vmul.f32 1.0, %v4944
    %v4946 = vadd.f32 %v4725, %v4866
    %v4947 = vxor.u32 %v4946, 2147483648
    %v4948 = vmul.f32 %v4947, 1.442695
    %v4949 = vpow.pop %v4948
    %v4950 = vadd.f32 %v4949, 1.0
    %v4951 = vrcp.pop %v4950
    %v4952 = vmul.f32 1.0, %v4951
    %v4953 = vmul.f32 %v4945, %v4936
    %v4954 = vadd.f32 %v4728, %v4953
    %v4955 = vtanh.pop %v4954
    %v4956 = vsub.f32 1.0, %v4952
    %v4957 = vmul.f32 %v4956, %v4955
    %v4958 = vmul.f32 %v4952, %v4273
    %v4959 = vadd.f32 %v4957, %v4958
    %v4961 = vsel %vm301, %v4959, 0
    %4963 = vmatprep.subr.mxu0 0.0
    %4964 = vmatpush1.msra.mxu0 %v1435
    %4965 = vmatprep.subr.mxu0 0.0
    %4966 = vmatpush1.msra.mxu0 %v1436
    %4967 = vmatprep.subr.mxu0 0.0
    %4968 = vmatpush1.msra.mxu0 %v1437
    %4969 = vmatprep.subr.mxu0 0.0
    %4970 = vmatpush1.msra.mxu0 %v1438
    %4971 = vmatprep.subr.mxu0 0.0
    %4972 = vmatpush1.msra.mxu0 %v1439
    %4973 = vmatprep.subr.mxu0 0.0
    %4974 = vmatpush1.msra.mxu0 %v1440
    %4975 = vmatprep.subr.mxu0 0.0
    %4976 = vmatpush1.msra.mxu0 %v1441
    %4977 = vmatprep.subr.mxu0 0.0
    %4978 = vmatpush1.msra.mxu0 %v1442
    %4979 = vmatprep.subr.mxu0 0.0
    %4980 = vmatpush1.msra.mxu0 0.0
    %4981 = vmatprep.subr.mxu0 0.0
    %4982 = vmatpush1.msra.mxu0 0.0
    %4983 = vmatprep.subr.mxu0 0.0
    %4984 = vmatpush1.msra.mxu0 0.0
    %4985 = vmatprep.subr.mxu0 0.0
    %4986 = vmatpush1.msra.mxu0 0.0
    %4987 = vmatprep.subr.mxu0 0.0
    %4988 = vmatpush1.msra.mxu0 0.0
    %4989 = vmatprep.subr.mxu0 0.0
    %4990 = vmatpush1.msra.mxu0 0.0
    %4991 = vmatprep.subr.mxu0 0.0
    %4992 = vmatpush1.msra.mxu0 0.0
    %4993 = vmatprep.subr.mxu0 0.0
    %4994 = vmatpush1.msra.mxu0 0.0
    %4995 = vmatprep.subr.mxu0 0.0
    %4996 = vmatpush1.msra.mxu0 0.0
    %4997 = vmatprep.subr.mxu0 0.0
    %4998 = vmatpush1.msra.mxu0 0.0
    %4999 = vmatprep.subr.mxu0 0.0
    %5000 = vmatpush1.msra.mxu0 0.0
    %5001 = vmatprep.subr.mxu0 0.0
    %5002 = vmatpush1.msra.mxu0 0.0
    %5003 = vmatprep.subr.mxu0 0.0
    %5004 = vmatpush1.msra.mxu0 0.0
    %5005 = vmatprep.subr.mxu0 0.0
    %5006 = vmatpush1.msra.mxu0 0.0
    %5007 = vmatprep.subr.mxu0 0.0
    %5008 = vmatpush1.msra.mxu0 0.0
    %5009 = vmatprep.subr.mxu0 0.0
    %5010 = vmatpush1.msra.mxu0 0.0
    %5011 = vmatprep.subr.mxu0 0.0
    %5012 = vmatpush1.msra.mxu0 0.0
    %5013 = vmatprep.subr.mxu0 0.0
    %5014 = vmatpush1.msra.mxu0 0.0
    %5015 = vmatprep.subr.mxu0 0.0
    %5016 = vmatpush1.msra.mxu0 0.0
    %5017 = vmatprep.subr.mxu0 0.0
    %5018 = vmatpush1.msra.mxu0 0.0
    %5019 = vmatprep.subr.mxu0 0.0
    %5020 = vmatpush1.msra.mxu0 0.0
    %5021 = vmatprep.subr.mxu0 0.0
    %5022 = vmatpush1.msra.mxu0 0.0
    %5023 = vmatprep.subr.mxu0 0.0
    %5024 = vmatpush1.msra.mxu0 0.0
    %5025 = vmatprep.subr.mxu0 0.0
    %5026 = vmatpush1.msra.mxu0 0.0
    %5027 = vmatprep.mubr.f32.mxu0 0.0
    %5028 = vmatmul.mubr.f32.gmra.mrb[0].mxu0 %v4961
    %v5029 = vpop.f32.mrb[0].mxu0
    %v5030 = vadd.f32 %v1448, %v5029
    %v5031 = vpop.f32.mrb[0].mxu0
    %5032 = vdwg.mxu0
    %5033 = vmatprep.subr.mxu0 0.0
    %5034 = vmatpush1.msra.mxu0 %v1524
    %5035 = vmatprep.subr.mxu0 0.0
    %5036 = vmatpush1.msra.mxu0 %v1525
    %5037 = vmatprep.subr.mxu0 0.0
    %5038 = vmatpush1.msra.mxu0 %v1526
    %5039 = vmatprep.subr.mxu0 0.0
    %5040 = vmatpush1.msra.mxu0 %v1527
    %5041 = vmatprep.subr.mxu0 0.0
    %5042 = vmatpush1.msra.mxu0 %v1528
    %5043 = vmatprep.subr.mxu0 0.0
    %5044 = vmatpush1.msra.mxu0 %v1529
    %5045 = vmatprep.subr.mxu0 0.0
    %5046 = vmatpush1.msra.mxu0 %v1530
    %5047 = vmatprep.subr.mxu0 0.0
    %5048 = vmatpush1.msra.mxu0 %v1531
    %5049 = vmatprep.subr.mxu0 0.0
    %5050 = vmatpush1.msra.mxu0 0.0
    %5051 = vmatprep.subr.mxu0 0.0
    %5052 = vmatpush1.msra.mxu0 0.0
    %5053 = vmatprep.subr.mxu0 0.0
    %5054 = vmatpush1.msra.mxu0 0.0
    %5055 = vmatprep.subr.mxu0 0.0
    %5056 = vmatpush1.msra.mxu0 0.0
    %5057 = vmatprep.subr.mxu0 0.0
    %5058 = vmatpush1.msra.mxu0 0.0
    %5059 = vmatprep.subr.mxu0 0.0
    %5060 = vmatpush1.msra.mxu0 0.0
    %5061 = vmatprep.subr.mxu0 0.0
    %5062 = vmatpush1.msra.mxu0 0.0
    %5063 = vmatprep.subr.mxu0 0.0
    %5064 = vmatpush1.msra.mxu0 0.0
    %5065 = vmatprep.subr.mxu0 0.0
    %5066 = vmatpush1.msra.mxu0 0.0
    %5067 = vmatprep.subr.mxu0 0.0
    %5068 = vmatpush1.msra.mxu0 0.0
    %5069 = vmatprep.subr.mxu0 0.0
    %5070 = vmatpush1.msra.mxu0 0.0
    %5071 = vmatprep.subr.mxu0 0.0
    %5072 = vmatpush1.msra.mxu0 0.0
    %5073 = vmatprep.subr.mxu0 0.0
    %5074 = vmatpush1.msra.mxu0 0.0
    %5075 = vmatprep.subr.mxu0 0.0
    %5076 = vmatpush1.msra.mxu0 0.0
    %5077 = vmatprep.subr.mxu0 0.0
    %5078 = vmatpush1.msra.mxu0 0.0
    %5079 = vmatprep.subr.mxu0 0.0
    %5080 = vmatpush1.msra.mxu0 0.0
    %5081 = vmatprep.subr.mxu0 0.0
    %5082 = vmatpush1.msra.mxu0 0.0
    %5083 = vmatprep.subr.mxu0 0.0
    %5084 = vmatpush1.msra.mxu0 0.0
    %5085 = vmatprep.subr.mxu0 0.0
    %5086 = vmatpush1.msra.mxu0 0.0
    %5087 = vmatprep.subr.mxu0 0.0
    %5088 = vmatpush1.msra.mxu0 0.0
    %5089 = vmatprep.subr.mxu0 0.0
    %5090 = vmatpush1.msra.mxu0 0.0
    %5091 = vmatprep.subr.mxu0 0.0
    %5092 = vmatpush1.msra.mxu0 0.0
    %5093 = vmatprep.subr.mxu0 0.0
    %5094 = vmatpush1.msra.mxu0 0.0
    %5095 = vmatprep.subr.mxu0 0.0
    %5096 = vmatpush1.msra.mxu0 0.0
    %5097 = vmatprep.mubr.f32.mxu0 0.0
    %5098 = vmatmul.mubr.f32.gmra.mrb[0].mxu0 %v4961
    %v5099 = vpop.f32.mrb[0].mxu0
    %v5100 = vadd.f32 %v1538, %v5099
    %v5101 = vpop.f32.mrb[0].mxu0
    %5102 = vdwg.mxu0
    %5103 = vmatprep.subr.mxu0 0.0
    %5104 = vmatpush1.msra.mxu0 %v1611
    %5105 = vmatprep.subr.mxu0 0.0
    %5106 = vmatpush1.msra.mxu0 %v1612
    %5107 = vmatprep.subr.mxu0 0.0
    %5108 = vmatpush1.msra.mxu0 %v1613
    %5109 = vmatprep.subr.mxu0 0.0
    %5110 = vmatpush1.msra.mxu0 %v1614
    %5111 = vmatprep.subr.mxu0 0.0
    %5112 = vmatpush1.msra.mxu0 %v1615
    %5113 = vmatprep.subr.mxu0 0.0
    %5114 = vmatpush1.msra.mxu0 %v1616
    %5115 = vmatprep.subr.mxu0 0.0
    %5116 = vmatpush1.msra.mxu0 %v1617
    %5117 = vmatprep.subr.mxu0 0.0
    %5118 = vmatpush1.msra.mxu0 %v1618
    %5119 = vmatprep.subr.mxu0 0.0
    %5120 = vmatpush1.msra.mxu0 0.0
    %5121 = vmatprep.subr.mxu0 0.0
    %5122 = vmatpush1.msra.mxu0 0.0
    %5123 = vmatprep.subr.mxu0 0.0
    %5124 = vmatpush1.msra.mxu0 0.0
    %5125 = vmatprep.subr.mxu0 0.0
    %5126 = vmatpush1.msra.mxu0 0.0
    %5127 = vmatprep.subr.mxu0 0.0
    %5128 = vmatpush1.msra.mxu0 0.0
    %5129 = vmatprep.subr.mxu0 0.0
    %5130 = vmatpush1.msra.mxu0 0.0
    %5131 = vmatprep.subr.mxu0 0.0
    %5132 = vmatpush1.msra.mxu0 0.0
    %5133 = vmatprep.subr.mxu0 0.0
    %5134 = vmatpush1.msra.mxu0 0.0
    %5135 = vmatprep.subr.mxu0 0.0
    %5136 = vmatpush1.msra.mxu0 0.0
    %5137 = vmatprep.subr.mxu0 0.0
    %5138 = vmatpush1.msra.mxu0 0.0
    %5139 = vmatprep.subr.mxu0 0.0
    %5140 = vmatpush1.msra.mxu0 0.0
    %5141 = vmatprep.subr.mxu0 0.0
    %5142 = vmatpush1.msra.mxu0 0.0
    %5143 = vmatprep.subr.mxu0 0.0
    %5144 = vmatpush1.msra.mxu0 0.0
    %5145 = vmatprep.subr.mxu0 0.0
    %5146 = vmatpush1.msra.mxu0 0.0
    %5147 = vmatprep.subr.mxu0 0.0
    %5148 = vmatpush1.msra.mxu0 0.0
    %5149 = vmatprep.subr.mxu0 0.0
    %5150 = vmatpush1.msra.mxu0 0.0
    %5151 = vmatprep.subr.mxu0 0.0
    %5152 = vmatpush1.msra.mxu0 0.0
    %5153 = vmatprep.subr.mxu0 0.0
    %5154 = vmatpush1.msra.mxu0 0.0
    %5155 = vmatprep.subr.mxu0 0.0
    %5156 = vmatpush1.msra.mxu0 0.0
    %5157 = vmatprep.subr.mxu0 0.0
    %5158 = vmatpush1.msra.mxu0 0.0
    %5159 = vmatprep.subr.mxu0 0.0
    %5160 = vmatpush1.msra.mxu0 0.0
    %5161 = vmatprep.subr.mxu0 0.0
    %5162 = vmatpush1.msra.mxu0 0.0
    %5163 = vmatprep.subr.mxu0 0.0
    %5164 = vmatpush1.msra.mxu0 0.0
    %5165 = vmatprep.subr.mxu0 0.0
    %5166 = vmatpush1.msra.mxu0 0.0
    %5167 = vmatprep.mubr.f32.mxu0 0.0
    %5168 = vmatmul.mubr.f32.gmra.mrb[0].mxu0 %v4961
    %v5169 = vpop.f32.mrb[0].mxu0
    %v5170 = vadd.f32 %v1625, %v5169
    %v5171 = vpop.f32.mrb[0].mxu0
    %5172 = vdwg.mxu0
    %v5174 = vsel %vm301, %v4720, 0
    %5176 = vmatprep.subr.mxu0 0.0
    %5177 = vmatpush1.msra.mxu0 %v1697
    %5178 = vmatprep.subr.mxu0 0.0
    %5179 = vmatpush1.msra.mxu0 %v1698
    %5180 = vmatprep.subr.mxu0 0.0
    %5181 = vmatpush1.msra.mxu0 %v1699
    %5182 = vmatprep.subr.mxu0 0.0
    %5183 = vmatpush1.msra.mxu0 %v1700
    %5184 = vmatprep.subr.mxu0 0.0
    %5185 = vmatpush1.msra.mxu0 %v1701
    %5186 = vmatprep.subr.mxu0 0.0
    %5187 = vmatpush1.msra.mxu0 %v1702
    %5188 = vmatprep.subr.mxu0 0.0
    %5189 = vmatpush1.msra.mxu0 %v1703
    %5190 = vmatprep.subr.mxu0 0.0
    %5191 = vmatpush1.msra.mxu0 %v1704
    %5192 = vmatprep.subr.mxu0 0.0
    %5193 = vmatpush1.msra.mxu0 0.0
    %5194 = vmatprep.subr.mxu0 0.0
    %5195 = vmatpush1.msra.mxu0 0.0
    %5196 = vmatprep.subr.mxu0 0.0
    %5197 = vmatpush1.msra.mxu0 0.0
    %5198 = vmatprep.subr.mxu0 0.0
    %5199 = vmatpush1.msra.mxu0 0.0
    %5200 = vmatprep.subr.mxu0 0.0
    %5201 = vmatpush1.msra.mxu0 0.0
    %5202 = vmatprep.subr.mxu0 0.0
    %5203 = vmatpush1.msra.mxu0 0.0
    %5204 = vmatprep.subr.mxu0 0.0
    %5205 = vmatpush1.msra.mxu0 0.0
    %5206 = vmatprep.subr.mxu0 0.0
    %5207 = vmatpush1.msra.mxu0 0.0
    %5208 = vmatprep.subr.mxu0 0.0
    %5209 = vmatpush1.msra.mxu0 0.0
    %5210 = vmatprep.subr.mxu0 0.0
    %5211 = vmatpush1.msra.mxu0 0.0
    %5212 = vmatprep.subr.mxu0 0.0
    %5213 = vmatpush1.msra.mxu0 0.0
    %5214 = vmatprep.subr.mxu0 0.0
    %5215 = vmatpush1.msra.mxu0 0.0
    %5216 = vmatprep.subr.mxu0 0.0
    %5217 = vmatpush1.msra.mxu0 0.0
    %5218 = vmatprep.subr.mxu0 0.0
    %5219 = vmatpush1.msra.mxu0 0.0
    %5220 = vmatprep.subr.mxu0 0.0
    %5221 = vmatpush1.msra.mxu0 0.0
    %5222 = vmatprep.subr.mxu0 0.0
    %5223 = vmatpush1.msra.mxu0 0.0
    %5224 = vmatprep.subr.mxu0 0.0
    %5225 = vmatpush1.msra.mxu0 0.0
    %5226 = vmatprep.subr.mxu0 0.0
    %5227 = vmatpush1.msra.mxu0 0.0
    %5228 = vmatprep.subr.mxu0 0.0
    %5229 = vmatpush1.msra.mxu0 0.0
    %5230 = vmatprep.subr.mxu0 0.0
    %5231 = vmatpush1.msra.mxu0 0.0
    %5232 = vmatprep.subr.mxu0 0.0
    %5233 = vmatpush1.msra.mxu0 0.0
    %5234 = vmatprep.subr.mxu0 0.0
    %5235 = vmatpush1.msra.mxu0 0.0
    %5236 = vmatprep.subr.mxu0 0.0
    %5237 = vmatpush1.msra.mxu0 0.0
    %5238 = vmatprep.subr.mxu0 0.0
    %5239 = vmatpush1.msra.mxu0 0.0
    %5240 = vmatprep.mubr.f32.mxu0 0.0
    %5241 = vmatmul.mubr.f32.gmra.mrb[0].mxu0 %v5174
    %v5242 = vpop.f32.mrb[0].mxu0
    %v5243 = vadd.f32 %v1710, %v5242
    %v5244 = vpop.f32.mrb[0].mxu0
    %5245 = vdwg.mxu0
    %5246 = vmatprep.subr.mxu0 0.0
    %5247 = vmatpush1.msra.mxu0 %v1783
    %5248 = vmatprep.subr.mxu0 0.0
    %5249 = vmatpush1.msra.mxu0 %v1784
    %5250 = vmatprep.subr.mxu0 0.0
    %5251 = vmatpush1.msra.mxu0 %v1785
    %5252 = vmatprep.subr.mxu0 0.0
    %5253 = vmatpush1.msra.mxu0 %v1786
    %5254 = vmatprep.subr.mxu0 0.0
    %5255 = vmatpush1.msra.mxu0 %v1787
    %5256 = vmatprep.subr.mxu0 0.0
    %5257 = vmatpush1.msra.mxu0 %v1788
    %5258 = vmatprep.subr.mxu0 0.0
    %5259 = vmatpush1.msra.mxu0 %v1789
    %5260 = vmatprep.subr.mxu0 0.0
    %5261 = vmatpush1.msra.mxu0 %v1790
    %5262 = vmatprep.subr.mxu0 0.0
    %5263 = vmatpush1.msra.mxu0 0.0
    %5264 = vmatprep.subr.mxu0 0.0
    %5265 = vmatpush1.msra.mxu0 0.0
    %5266 = vmatprep.subr.mxu0 0.0
    %5267 = vmatpush1.msra.mxu0 0.0
    %5268 = vmatprep.subr.mxu0 0.0
    %5269 = vmatpush1.msra.mxu0 0.0
    %5270 = vmatprep.subr.mxu0 0.0
    %5271 = vmatpush1.msra.mxu0 0.0
    %5272 = vmatprep.subr.mxu0 0.0
    %5273 = vmatpush1.msra.mxu0 0.0
    %5274 = vmatprep.subr.mxu0 0.0
    %5275 = vmatpush1.msra.mxu0 0.0
    %5276 = vmatprep.subr.mxu0 0.0
    %5277 = vmatpush1.msra.mxu0 0.0
    %5278 = vmatprep.subr.mxu0 0.0
    %5279 = vmatpush1.msra.mxu0 0.0
    %5280 = vmatprep.subr.mxu0 0.0
    %5281 = vmatpush1.msra.mxu0 0.0
    %5282 = vmatprep.subr.mxu0 0.0
    %5283 = vmatpush1.msra.mxu0 0.0
    %5284 = vmatprep.subr.mxu0 0.0
    %5285 = vmatpush1.msra.mxu0 0.0
    %5286 = vmatprep.subr.mxu0 0.0
    %5287 = vmatpush1.msra.mxu0 0.0
    %5288 = vmatprep.subr.mxu0 0.0
    %5289 = vmatpush1.msra.mxu0 0.0
    %5290 = vmatprep.subr.mxu0 0.0
    %5291 = vmatpush1.msra.mxu0 0.0
    %5292 = vmatprep.subr.mxu0 0.0
    %5293 = vmatpush1.msra.mxu0 0.0
    %5294 = vmatprep.subr.mxu0 0.0
    %5295 = vmatpush1.msra.mxu0 0.0
    %5296 = vmatprep.subr.mxu0 0.0
    %5297 = vmatpush1.msra.mxu0 0.0
    %5298 = vmatprep.subr.mxu0 0.0
    %5299 = vmatpush1.msra.mxu0 0.0
    %5300 = vmatprep.subr.mxu0 0.0
    %5301 = vmatpush1.msra.mxu0 0.0
    %5302 = vmatprep.subr.mxu0 0.0
    %5303 = vmatpush1.msra.mxu0 0.0
    %5304 = vmatprep.subr.mxu0 0.0
    %5305 = vmatpush1.msra.mxu0 0.0
    %5306 = vmatprep.subr.mxu0 0.0
    %5307 = vmatpush1.msra.mxu0 0.0
    %5308 = vmatprep.subr.mxu0 0.0
    %5309 = vmatpush1.msra.mxu0 0.0
    %5310 = vmatprep.mubr.f32.mxu0 0.0
    %5311 = vmatmul.mubr.f32.gmra.mrb[0].mxu0 %v5174
    %v5312 = vpop.f32.mrb[0].mxu0
    %v5313 = vadd.f32 %v1797, %v5312
    %v5314 = vpop.f32.mrb[0].mxu0
    %5315 = vdwg.mxu0
    %5316 = vmatprep.subr.mxu0 0.0
    %5317 = vmatpush1.msra.mxu0 %v1870
    %5318 = vmatprep.subr.mxu0 0.0
    %5319 = vmatpush1.msra.mxu0 %v1871
    %5320 = vmatprep.subr.mxu0 0.0
    %5321 = vmatpush1.msra.mxu0 %v1872
    %5322 = vmatprep.subr.mxu0 0.0
    %5323 = vmatpush1.msra.mxu0 %v1873
    %5324 = vmatprep.subr.mxu0 0.0
    %5325 = vmatpush1.msra.mxu0 %v1874
    %5326 = vmatprep.subr.mxu0 0.0
    %5327 = vmatpush1.msra.mxu0 %v1875
    %5328 = vmatprep.subr.mxu0 0.0
    %5329 = vmatpush1.msra.mxu0 %v1876
    %5330 = vmatprep.subr.mxu0 0.0
    %5331 = vmatpush1.msra.mxu0 %v1877
    %5332 = vmatprep.subr.mxu0 0.0
    %5333 = vmatpush1.msra.mxu0 0.0
    %5334 = vmatprep.subr.mxu0 0.0
    %5335 = vmatpush1.msra.mxu0 0.0
    %5336 = vmatprep.subr.mxu0 0.0
    %5337 = vmatpush1.msra.mxu0 0.0
    %5338 = vmatprep.subr.mxu0 0.0
    %5339 = vmatpush1.msra.mxu0 0.0
    %5340 = vmatprep.subr.mxu0 0.0
    %5341 = vmatpush1.msra.mxu0 0.0
    %5342 = vmatprep.subr.mxu0 0.0
    %5343 = vmatpush1.msra.mxu0 0.0
    %5344 = vmatprep.subr.mxu0 0.0
    %5345 = vmatpush1.msra.mxu0 0.0
    %5346 = vmatprep.subr.mxu0 0.0
    %5347 = vmatpush1.msra.mxu0 0.0
    %5348 = vmatprep.subr.mxu0 0.0
    %5349 = vmatpush1.msra.mxu0 0.0
    %5350 = vmatprep.subr.mxu0 0.0
    %5351 = vmatpush1.msra.mxu0 0.0
    %5352 = vmatprep.subr.mxu0 0.0
    %5353 = vmatpush1.msra.mxu0 0.0
    %5354 = vmatprep.subr.mxu0 0.0
    %5355 = vmatpush1.msra.mxu0 0.0
    %5356 = vmatprep.subr.mxu0 0.0
    %5357 = vmatpush1.msra.mxu0 0.0
    %5358 = vmatprep.subr.mxu0 0.0
    %5359 = vmatpush1.msra.mxu0 0.0
    %5360 = vmatprep.subr.mxu0 0.0
    %5361 = vmatpush1.msra.mxu0 0.0
    %5362 = vmatprep.subr.mxu0 0.0
    %5363 = vmatpush1.msra.mxu0 0.0
    %5364 = vmatprep.subr.mxu0 0.0
    %5365 = vmatpush1.msra.mxu0 0.0
    %5366 = vmatprep.subr.mxu0 0.0
    %5367 = vmatpush1.msra.mxu0 0.0
    %5368 = vmatprep.subr.mxu0 0.0
    %5369 = vmatpush1.msra.mxu0 0.0
    %5370 = vmatprep.subr.mxu0 0.0
    %5371 = vmatpush1.msra.mxu0 0.0
    %5372 = vmatprep.subr.mxu0 0.0
    %5373 = vmatpush1.msra.mxu0 0.0
    %5374 = vmatprep.subr.mxu0 0.0
    %5375 = vmatpush1.msra.mxu0 0.0
    %5376 = vmatprep.subr.mxu0 0.0
    %5377 = vmatpush1.msra.mxu0 0.0
    %5378 = vmatprep.subr.mxu0 0.0
    %5379 = vmatpush1.msra.mxu0 0.0
    %5380 = vmatprep.mubr.f32.mxu0 0.0
    %5381 = vmatmul.mubr.f32.gmra.mrb[0].mxu0 %v5174
    %v5382 = vpop.f32.mrb[0].mxu0
    %v5383 = vadd.f32 %v1884, %v5382
    %v5384 = vpop.f32.mrb[0].mxu0
    %5385 = vdwg.mxu0
    %v5386 = vadd.f32 %v5030, %v5243
    %v5387 = vxor.u32 %v5386, 2147483648
    %v5388 = vmul.f32 %v5387, 1.442695
    %v5389 = vpow.pop %v5388
    %v5390 = vadd.f32 %v5389, 1.0
    %v5391 = vrcp.pop %v5390
    %v5392 = vmul.f32 1.0, %v5391
    %v5393 = vadd.f32 %v5100, %v5313
    %v5394 = vxor.u32 %v5393, 2147483648
    %v5395 = vmul.f32 %v5394, 1.442695
    %v5396 = vpow.pop %v5395
    %v5397 = vadd.f32 %v5396, 1.0
    %v5398 = vrcp.pop %v5397
    %v5399 = vmul.f32 1.0, %v5398
    %v5400 = vmul.f32 %v5392, %v5383
    %v5401 = vadd.f32 %v5170, %v5400
    %v5402 = vtanh.pop %v5401
    %v5403 = vsub.f32 1.0, %v5399
    %v5404 = vmul.f32 %v5403, %v5402
    %v5405 = vmul.f32 %v5399, %v4720
    %v5406 = vadd.f32 %v5404, %v5405
    %s5407 = scalar_lea.vmem [#allocation2], 48
    %v5408 = vld [vmem:[%s5407] sm:$0xff]
    %s5409 = sadd.s32 48, 64
    %s5410 = scalar_lea.vmem [#allocation2], %s5409
    %v5411 = vld [vmem:[%s5410] sm:$0xff]
    %s5412 = sadd.s32 48, 128
    %s5413 = scalar_lea.vmem [#allocation2], %s5412
    %v5414 = vld [vmem:[%s5413] sm:$0xff]
    %5415 = vmatprep.subr.mxu0 0.0
    %5416 = vmatpush1.msra.mxu0 %v1152
    %5417 = vmatprep.subr.mxu0 0.0
    %5418 = vmatpush1.msra.mxu0 %v1153
    %5419 = vmatprep.subr.mxu0 0.0
    %5420 = vmatpush1.msra.mxu0 %v1154
    %5421 = vmatprep.subr.mxu0 0.0
    %5422 = vmatpush1.msra.mxu0 %v1155
    %5423 = vmatprep.subr.mxu0 0.0
    %5424 = vmatpush1.msra.mxu0 %v1156
    %5425 = vmatprep.subr.mxu0 0.0
    %5426 = vmatpush1.msra.mxu0 %v1157
    %5427 = vmatprep.subr.mxu0 0.0
    %5428 = vmatpush1.msra.mxu0 %v1158
    %5429 = vmatprep.subr.mxu0 0.0
    %5430 = vmatpush1.msra.mxu0 %v1159
    %5431 = vmatprep.subr.mxu0 0.0
    %5432 = vmatpush1.msra.mxu0 0.0
    %5433 = vmatprep.subr.mxu0 0.0
    %5434 = vmatpush1.msra.mxu0 0.0
    %5435 = vmatprep.subr.mxu0 0.0
    %5436 = vmatpush1.msra.mxu0 0.0
    %5437 = vmatprep.subr.mxu0 0.0
    %5438 = vmatpush1.msra.mxu0 0.0
    %5439 = vmatprep.subr.mxu0 0.0
    %5440 = vmatpush1.msra.mxu0 0.0
    %5441 = vmatprep.subr.mxu0 0.0
    %5442 = vmatpush1.msra.mxu0 0.0
    %5443 = vmatprep.subr.mxu0 0.0
    %5444 = vmatpush1.msra.mxu0 0.0
    %5445 = vmatprep.subr.mxu0 0.0
    %5446 = vmatpush1.msra.mxu0 0.0
    %5447 = vmatprep.subr.mxu0 0.0
    %5448 = vmatpush1.msra.mxu0 0.0
    %5449 = vmatprep.subr.mxu0 0.0
    %5450 = vmatpush1.msra.mxu0 0.0
    %5451 = vmatprep.subr.mxu0 0.0
    %5452 = vmatpush1.msra.mxu0 0.0
    %5453 = vmatprep.subr.mxu0 0.0
    %5454 = vmatpush1.msra.mxu0 0.0
    %5455 = vmatprep.subr.mxu0 0.0
    %5456 = vmatpush1.msra.mxu0 0.0
    %5457 = vmatprep.subr.mxu0 0.0
    %5458 = vmatpush1.msra.mxu0 0.0
    %5459 = vmatprep.subr.mxu0 0.0
    %5460 = vmatpush1.msra.mxu0 0.0
    %5461 = vmatprep.subr.mxu0 0.0
    %5462 = vmatpush1.msra.mxu0 0.0
    %5463 = vmatprep.subr.mxu0 0.0
    %5464 = vmatpush1.msra.mxu0 0.0
    %5465 = vmatprep.subr.mxu0 0.0
    %5466 = vmatpush1.msra.mxu0 0.0
    %5467 = vmatprep.subr.mxu0 0.0
    %5468 = vmatpush1.msra.mxu0 0.0
    %5469 = vmatprep.subr.mxu0 0.0
    %5470 = vmatpush1.msra.mxu0 0.0
    %5471 = vmatprep.subr.mxu0 0.0
    %5472 = vmatpush1.msra.mxu0 0.0
    %5473 = vmatprep.subr.mxu0 0.0
    %5474 = vmatpush1.msra.mxu0 0.0
    %5475 = vmatprep.subr.mxu0 0.0
    %5476 = vmatpush1.msra.mxu0 0.0
    %5477 = vmatprep.subr.mxu0 0.0
    %5478 = vmatpush1.msra.mxu0 0.0
    %5479 = vmatprep.mubr.f32.mxu0 0.0
    %5480 = vmatmul.mubr.f32.gmra.mrb[0].mxu0 %v4961
    %v5481 = vpop.f32.mrb[0].mxu0
    %v5482 = vadd.f32 %v1165, %v5481
    %v5483 = vpop.f32.mrb[0].mxu0
    %5484 = vdwg.mxu0
    %5485 = vmatprep.subr.mxu0 0.0
    %5486 = vmatpush1.msra.mxu0 %v1241
    %5487 = vmatprep.subr.mxu0 0.0
    %5488 = vmatpush1.msra.mxu0 %v1242
    %5489 = vmatprep.subr.mxu0 0.0
    %5490 = vmatpush1.msra.mxu0 %v1243
    %5491 = vmatprep.subr.mxu0 0.0
    %5492 = vmatpush1.msra.mxu0 %v1244
    %5493 = vmatprep.subr.mxu0 0.0
    %5494 = vmatpush1.msra.mxu0 %v1245
    %5495 = vmatprep.subr.mxu0 0.0
    %5496 = vmatpush1.msra.mxu0 %v1246
    %5497 = vmatprep.subr.mxu0 0.0
    %5498 = vmatpush1.msra.mxu0 %v1247
    %5499 = vmatprep.subr.mxu0 0.0
    %5500 = vmatpush1.msra.mxu0 %v1248
    %5501 = vmatprep.subr.mxu0 0.0
    %5502 = vmatpush1.msra.mxu0 0.0
    %5503 = vmatprep.subr.mxu0 0.0
    %5504 = vmatpush1.msra.mxu0 0.0
    %5505 = vmatprep.subr.mxu0 0.0
    %5506 = vmatpush1.msra.mxu0 0.0
    %5507 = vmatprep.subr.mxu0 0.0
    %5508 = vmatpush1.msra.mxu0 0.0
    %5509 = vmatprep.subr.mxu0 0.0
    %5510 = vmatpush1.msra.mxu0 0.0
    %5511 = vmatprep.subr.mxu0 0.0
    %5512 = vmatpush1.msra.mxu0 0.0
    %5513 = vmatprep.subr.mxu0 0.0
    %5514 = vmatpush1.msra.mxu0 0.0
    %5515 = vmatprep.subr.mxu0 0.0
    %5516 = vmatpush1.msra.mxu0 0.0
    %5517 = vmatprep.subr.mxu0 0.0
    %5518 = vmatpush1.msra.mxu0 0.0
    %5519 = vmatprep.subr.mxu0 0.0
    %5520 = vmatpush1.msra.mxu0 0.0
    %5521 = vmatprep.subr.mxu0 0.0
    %5522 = vmatpush1.msra.mxu0 0.0
    %5523 = vmatprep.subr.mxu0 0.0
    %5524 = vmatpush1.msra.mxu0 0.0
    %5525 = vmatprep.subr.mxu0 0.0
    %5526 = vmatpush1.msra.mxu0 0.0
    %5527 = vmatprep.subr.mxu0 0.0
    %5528 = vmatpush1.msra.mxu0 0.0
    %5529 = vmatprep.subr.mxu0 0.0
    %5530 = vmatpush1.msra.mxu0 0.0
    %5531 = vmatprep.subr.mxu0 0.0
    %5532 = vmatpush1.msra.mxu0 0.0
    %5533 = vmatprep.subr.mxu0 0.0
    %5534 = vmatpush1.msra.mxu0 0.0
    %5535 = vmatprep.subr.mxu0 0.0
    %5536 = vmatpush1.msra.mxu0 0.0
    %5537 = vmatprep.subr.mxu0 0.0
    %5538 = vmatpush1.msra.mxu0 0.0
    %5539 = vmatprep.subr.mxu0 0.0
    %5540 = vmatpush1.msra.mxu0 0.0
    %5541 = vmatprep.subr.mxu0 0.0
    %5542 = vmatpush1.msra.mxu0 0.0
    %5543 = vmatprep.subr.mxu0 0.0
    %5544 = vmatpush1.msra.mxu0 0.0
    %5545 = vmatprep.subr.mxu0 0.0
    %5546 = vmatpush1.msra.mxu0 0.0
    %5547 = vmatprep.subr.mxu0 0.0
    %5548 = vmatpush1.msra.mxu0 0.0
    %5549 = vmatprep.mubr.f32.mxu0 0.0
    %5550 = vmatmul.mubr.f32.gmra.mrb[0].mxu0 %v4961
    %v5551 = vpop.f32.mrb[0].mxu0
    %v5552 = vadd.f32 %v1255, %v5551
    %v5553 = vpop.f32.mrb[0].mxu0
    %5554 = vdwg.mxu0
    %5555 = vmatprep.subr.mxu0 0.0
    %5556 = vmatpush1.msra.mxu0 %v1328
    %5557 = vmatprep.subr.mxu0 0.0
    %5558 = vmatpush1.msra.mxu0 %v1329
    %5559 = vmatprep.subr.mxu0 0.0
    %5560 = vmatpush1.msra.mxu0 %v1330
    %5561 = vmatprep.subr.mxu0 0.0
    %5562 = vmatpush1.msra.mxu0 %v1331
    %5563 = vmatprep.subr.mxu0 0.0
    %5564 = vmatpush1.msra.mxu0 %v1332
    %5565 = vmatprep.subr.mxu0 0.0
    %5566 = vmatpush1.msra.mxu0 %v1333
    %5567 = vmatprep.subr.mxu0 0.0
    %5568 = vmatpush1.msra.mxu0 %v1334
    %5569 = vmatprep.subr.mxu0 0.0
    %5570 = vmatpush1.msra.mxu0 %v1335
    %5571 = vmatprep.subr.mxu0 0.0
    %5572 = vmatpush1.msra.mxu0 0.0
    %5573 = vmatprep.subr.mxu0 0.0
    %5574 = vmatpush1.msra.mxu0 0.0
    %5575 = vmatprep.subr.mxu0 0.0
    %5576 = vmatpush1.msra.mxu0 0.0
    %5577 = vmatprep.subr.mxu0 0.0
    %5578 = vmatpush1.msra.mxu0 0.0
    %5579 = vmatprep.subr.mxu0 0.0
    %5580 = vmatpush1.msra.mxu0 0.0
    %5581 = vmatprep.subr.mxu0 0.0
    %5582 = vmatpush1.msra.mxu0 0.0
    %5583 = vmatprep.subr.mxu0 0.0
    %5584 = vmatpush1.msra.mxu0 0.0
    %5585 = vmatprep.subr.mxu0 0.0
    %5586 = vmatpush1.msra.mxu0 0.0
    %5587 = vmatprep.subr.mxu0 0.0
    %5588 = vmatpush1.msra.mxu0 0.0
    %5589 = vmatprep.subr.mxu0 0.0
    %5590 = vmatpush1.msra.mxu0 0.0
    %5591 = vmatprep.subr.mxu0 0.0
    %5592 = vmatpush1.msra.mxu0 0.0
    %5593 = vmatprep.subr.mxu0 0.0
    %5594 = vmatpush1.msra.mxu0 0.0
    %5595 = vmatprep.subr.mxu0 0.0
    %5596 = vmatpush1.msra.mxu0 0.0
    %5597 = vmatprep.subr.mxu0 0.0
    %5598 = vmatpush1.msra.mxu0 0.0
    %5599 = vmatprep.subr.mxu0 0.0
    %5600 = vmatpush1.msra.mxu0 0.0
    %5601 = vmatprep.subr.mxu0 0.0
    %5602 = vmatpush1.msra.mxu0 0.0
    %5603 = vmatprep.subr.mxu0 0.0
    %5604 = vmatpush1.msra.mxu0 0.0
    %5605 = vmatprep.subr.mxu0 0.0
    %5606 = vmatpush1.msra.mxu0 0.0
    %5607 = vmatprep.subr.mxu0 0.0
    %5608 = vmatpush1.msra.mxu0 0.0
    %5609 = vmatprep.subr.mxu0 0.0
    %5610 = vmatpush1.msra.mxu0 0.0
    %5611 = vmatprep.subr.mxu0 0.0
    %5612 = vmatpush1.msra.mxu0 0.0
    %5613 = vmatprep.subr.mxu0 0.0
    %5614 = vmatpush1.msra.mxu0 0.0
    %5615 = vmatprep.subr.mxu0 0.0
    %5616 = vmatpush1.msra.mxu0 0.0
    %5617 = vmatprep.subr.mxu0 0.0
    %5618 = vmatpush1.msra.mxu0 0.0
    %5619 = vmatprep.mubr.f32.mxu0 0.0
    %5620 = vmatmul.mubr.f32.gmra.mrb[0].mxu0 %v4961
    %v5621 = vpop.f32.mrb[0].mxu0
    %v5622 = vadd.f32 %v1342, %v5621
    %v5623 = vpop.f32.mrb[0].mxu0
    %5624 = vdwg.mxu0
    %v5625 = vadd.f32 %v5408, %v5482
    %v5626 = vxor.u32 %v5625, 2147483648
    %v5627 = vmul.f32 %v5626, 1.442695
    %v5628 = vpow.pop %v5627
    %v5629 = vadd.f32 %v5628, 1.0
    %v5630 = vrcp.pop %v5629
    %v5631 = vmul.f32 1.0, %v5630
    %v5632 = vadd.f32 %v5411, %v5552
    %v5633 = vxor.u32 %v5632, 2147483648
    %v5634 = vmul.f32 %v5633, 1.442695
    %v5635 = vpow.pop %v5634
    %v5636 = vadd.f32 %v5635, 1.0
    %v5637 = vrcp.pop %v5636
    %v5638 = vmul.f32 1.0, %v5637
    %v5639 = vmul.f32 %v5631, %v5622
    %v5640 = vadd.f32 %v5414, %v5639
    %v5641 = vtanh.pop %v5640
    %v5642 = vsub.f32 1.0, %v5638
    %v5643 = vmul.f32 %v5642, %v5641
    %v5644 = vmul.f32 %v5638, %v4959
    %v5645 = vadd.f32 %v5643, %v5644
    %v5647 = vsel %vm301, %v5645, 0
    %5649 = vmatprep.subr.mxu0 0.0
    %5650 = vmatpush1.msra.mxu0 %v1435
    %5651 = vmatprep.subr.mxu0 0.0
    %5652 = vmatpush1.msra.mxu0 %v1436
    %5653 = vmatprep.subr.mxu0 0.0
    %5654 = vmatpush1.msra.mxu0 %v1437
    %5655 = vmatprep.subr.mxu0 0.0
    %5656 = vmatpush1.msra.mxu0 %v1438
    %5657 = vmatprep.subr.mxu0 0.0
    %5658 = vmatpush1.msra.mxu0 %v1439
    %5659 = vmatprep.subr.mxu0 0.0
    %5660 = vmatpush1.msra.mxu0 %v1440
    %5661 = vmatprep.subr.mxu0 0.0
    %5662 = vmatpush1.msra.mxu0 %v1441
    %5663 = vmatprep.subr.mxu0 0.0
    %5664 = vmatpush1.msra.mxu0 %v1442
    %5665 = vmatprep.subr.mxu0 0.0
    %5666 = vmatpush1.msra.mxu0 0.0
    %5667 = vmatprep.subr.mxu0 0.0
    %5668 = vmatpush1.msra.mxu0 0.0
    %5669 = vmatprep.subr.mxu0 0.0
    %5670 = vmatpush1.msra.mxu0 0.0
    %5671 = vmatprep.subr.mxu0 0.0
    %5672 = vmatpush1.msra.mxu0 0.0
    %5673 = vmatprep.subr.mxu0 0.0
    %5674 = vmatpush1.msra.mxu0 0.0
    %5675 = vmatprep.subr.mxu0 0.0
    %5676 = vmatpush1.msra.mxu0 0.0
    %5677 = vmatprep.subr.mxu0 0.0
    %5678 = vmatpush1.msra.mxu0 0.0
    %5679 = vmatprep.subr.mxu0 0.0
    %5680 = vmatpush1.msra.mxu0 0.0
    %5681 = vmatprep.subr.mxu0 0.0
    %5682 = vmatpush1.msra.mxu0 0.0
    %5683 = vmatprep.subr.mxu0 0.0
    %5684 = vmatpush1.msra.mxu0 0.0
    %5685 = vmatprep.subr.mxu0 0.0
    %5686 = vmatpush1.msra.mxu0 0.0
    %5687 = vmatprep.subr.mxu0 0.0
    %5688 = vmatpush1.msra.mxu0 0.0
    %5689 = vmatprep.subr.mxu0 0.0
    %5690 = vmatpush1.msra.mxu0 0.0
    %5691 = vmatprep.subr.mxu0 0.0
    %5692 = vmatpush1.msra.mxu0 0.0
    %5693 = vmatprep.subr.mxu0 0.0
    %5694 = vmatpush1.msra.mxu0 0.0
    %5695 = vmatprep.subr.mxu0 0.0
    %5696 = vmatpush1.msra.mxu0 0.0
    %5697 = vmatprep.subr.mxu0 0.0
    %5698 = vmatpush1.msra.mxu0 0.0
    %5699 = vmatprep.subr.mxu0 0.0
    %5700 = vmatpush1.msra.mxu0 0.0
    %5701 = vmatprep.subr.mxu0 0.0
    %5702 = vmatpush1.msra.mxu0 0.0
    %5703 = vmatprep.subr.mxu0 0.0
    %5704 = vmatpush1.msra.mxu0 0.0
    %5705 = vmatprep.subr.mxu0 0.0
    %5706 = vmatpush1.msra.mxu0 0.0
    %5707 = vmatprep.subr.mxu0 0.0
    %5708 = vmatpush1.msra.mxu0 0.0
    %5709 = vmatprep.subr.mxu0 0.0
    %5710 = vmatpush1.msra.mxu0 0.0
    %5711 = vmatprep.subr.mxu0 0.0
    %5712 = vmatpush1.msra.mxu0 0.0
    %5713 = vmatprep.mubr.f32.mxu0 0.0
    %5714 = vmatmul.mubr.f32.gmra.mrb[0].mxu0 %v5647
    %v5715 = vpop.f32.mrb[0].mxu0
    %v5716 = vadd.f32 %v1448, %v5715
    %v5717 = vpop.f32.mrb[0].mxu0
    %5718 = vdwg.mxu0
    %5719 = vmatprep.subr.mxu0 0.0
    %5720 = vmatpush1.msra.mxu0 %v1524
    %5721 = vmatprep.subr.mxu0 0.0
    %5722 = vmatpush1.msra.mxu0 %v1525
    %5723 = vmatprep.subr.mxu0 0.0
    %5724 = vmatpush1.msra.mxu0 %v1526
    %5725 = vmatprep.subr.mxu0 0.0
    %5726 = vmatpush1.msra.mxu0 %v1527
    %5727 = vmatprep.subr.mxu0 0.0
    %5728 = vmatpush1.msra.mxu0 %v1528
    %5729 = vmatprep.subr.mxu0 0.0
    %5730 = vmatpush1.msra.mxu0 %v1529
    %5731 = vmatprep.subr.mxu0 0.0
    %5732 = vmatpush1.msra.mxu0 %v1530
    %5733 = vmatprep.subr.mxu0 0.0
    %5734 = vmatpush1.msra.mxu0 %v1531
    %5735 = vmatprep.subr.mxu0 0.0
    %5736 = vmatpush1.msra.mxu0 0.0
    %5737 = vmatprep.subr.mxu0 0.0
    %5738 = vmatpush1.msra.mxu0 0.0
    %5739 = vmatprep.subr.mxu0 0.0
    %5740 = vmatpush1.msra.mxu0 0.0
    %5741 = vmatprep.subr.mxu0 0.0
    %5742 = vmatpush1.msra.mxu0 0.0
    %5743 = vmatprep.subr.mxu0 0.0
    %5744 = vmatpush1.msra.mxu0 0.0
    %5745 = vmatprep.subr.mxu0 0.0
    %5746 = vmatpush1.msra.mxu0 0.0
    %5747 = vmatprep.subr.mxu0 0.0
    %5748 = vmatpush1.msra.mxu0 0.0
    %5749 = vmatprep.subr.mxu0 0.0
    %5750 = vmatpush1.msra.mxu0 0.0
    %5751 = vmatprep.subr.mxu0 0.0
    %5752 = vmatpush1.msra.mxu0 0.0
    %5753 = vmatprep.subr.mxu0 0.0
    %5754 = vmatpush1.msra.mxu0 0.0
    %5755 = vmatprep.subr.mxu0 0.0
    %5756 = vmatpush1.msra.mxu0 0.0
    %5757 = vmatprep.subr.mxu0 0.0
    %5758 = vmatpush1.msra.mxu0 0.0
    %5759 = vmatprep.subr.mxu0 0.0
    %5760 = vmatpush1.msra.mxu0 0.0
    %5761 = vmatprep.subr.mxu0 0.0
    %5762 = vmatpush1.msra.mxu0 0.0
    %5763 = vmatprep.subr.mxu0 0.0
    %5764 = vmatpush1.msra.mxu0 0.0
    %5765 = vmatprep.subr.mxu0 0.0
    %5766 = vmatpush1.msra.mxu0 0.0
    %5767 = vmatprep.subr.mxu0 0.0
    %5768 = vmatpush1.msra.mxu0 0.0
    %5769 = vmatprep.subr.mxu0 0.0
    %5770 = vmatpush1.msra.mxu0 0.0
    %5771 = vmatprep.subr.mxu0 0.0
    %5772 = vmatpush1.msra.mxu0 0.0
    %5773 = vmatprep.subr.mxu0 0.0
    %5774 = vmatpush1.msra.mxu0 0.0
    %5775 = vmatprep.subr.mxu0 0.0
    %5776 = vmatpush1.msra.mxu0 0.0
    %5777 = vmatprep.subr.mxu0 0.0
    %5778 = vmatpush1.msra.mxu0 0.0
    %5779 = vmatprep.subr.mxu0 0.0
    %5780 = vmatpush1.msra.mxu0 0.0
    %5781 = vmatprep.subr.mxu0 0.0
    %5782 = vmatpush1.msra.mxu0 0.0
    %5783 = vmatprep.mubr.f32.mxu0 0.0
    %5784 = vmatmul.mubr.f32.gmra.mrb[0].mxu0 %v5647
    %v5785 = vpop.f32.mrb[0].mxu0
    %v5786 = vadd.f32 %v1538, %v5785
    %v5787 = vpop.f32.mrb[0].mxu0
    %5788 = vdwg.mxu0
    %5789 = vmatprep.subr.mxu0 0.0
    %5790 = vmatpush1.msra.mxu0 %v1611
    %5791 = vmatprep.subr.mxu0 0.0
    %5792 = vmatpush1.msra.mxu0 %v1612
    %5793 = vmatprep.subr.mxu0 0.0
    %5794 = vmatpush1.msra.mxu0 %v1613
    %5795 = vmatprep.subr.mxu0 0.0
    %5796 = vmatpush1.msra.mxu0 %v1614
    %5797 = vmatprep.subr.mxu0 0.0
    %5798 = vmatpush1.msra.mxu0 %v1615
    %5799 = vmatprep.subr.mxu0 0.0
    %5800 = vmatpush1.msra.mxu0 %v1616
    %5801 = vmatprep.subr.mxu0 0.0
    %5802 = vmatpush1.msra.mxu0 %v1617
    %5803 = vmatprep.subr.mxu0 0.0
    %5804 = vmatpush1.msra.mxu0 %v1618
    %5805 = vmatprep.subr.mxu0 0.0
    %5806 = vmatpush1.msra.mxu0 0.0
    %5807 = vmatprep.subr.mxu0 0.0
    %5808 = vmatpush1.msra.mxu0 0.0
    %5809 = vmatprep.subr.mxu0 0.0
    %5810 = vmatpush1.msra.mxu0 0.0
    %5811 = vmatprep.subr.mxu0 0.0
    %5812 = vmatpush1.msra.mxu0 0.0
    %5813 = vmatprep.subr.mxu0 0.0
    %5814 = vmatpush1.msra.mxu0 0.0
    %5815 = vmatprep.subr.mxu0 0.0
    %5816 = vmatpush1.msra.mxu0 0.0
    %5817 = vmatprep.subr.mxu0 0.0
    %5818 = vmatpush1.msra.mxu0 0.0
    %5819 = vmatprep.subr.mxu0 0.0
    %5820 = vmatpush1.msra.mxu0 0.0
    %5821 = vmatprep.subr.mxu0 0.0
    %5822 = vmatpush1.msra.mxu0 0.0
    %5823 = vmatprep.subr.mxu0 0.0
    %5824 = vmatpush1.msra.mxu0 0.0
    %5825 = vmatprep.subr.mxu0 0.0
    %5826 = vmatpush1.msra.mxu0 0.0
    %5827 = vmatprep.subr.mxu0 0.0
    %5828 = vmatpush1.msra.mxu0 0.0
    %5829 = vmatprep.subr.mxu0 0.0
    %5830 = vmatpush1.msra.mxu0 0.0
    %5831 = vmatprep.subr.mxu0 0.0
    %5832 = vmatpush1.msra.mxu0 0.0
    %5833 = vmatprep.subr.mxu0 0.0
    %5834 = vmatpush1.msra.mxu0 0.0
    %5835 = vmatprep.subr.mxu0 0.0
    %5836 = vmatpush1.msra.mxu0 0.0
    %5837 = vmatprep.subr.mxu0 0.0
    %5838 = vmatpush1.msra.mxu0 0.0
    %5839 = vmatprep.subr.mxu0 0.0
    %5840 = vmatpush1.msra.mxu0 0.0
    %5841 = vmatprep.subr.mxu0 0.0
    %5842 = vmatpush1.msra.mxu0 0.0
    %5843 = vmatprep.subr.mxu0 0.0
    %5844 = vmatpush1.msra.mxu0 0.0
    %5845 = vmatprep.subr.mxu0 0.0
    %5846 = vmatpush1.msra.mxu0 0.0
    %5847 = vmatprep.subr.mxu0 0.0
    %5848 = vmatpush1.msra.mxu0 0.0
    %5849 = vmatprep.subr.mxu0 0.0
    %5850 = vmatpush1.msra.mxu0 0.0
    %5851 = vmatprep.subr.mxu0 0.0
    %5852 = vmatpush1.msra.mxu0 0.0
    %5853 = vmatprep.mubr.f32.mxu0 0.0
    %5854 = vmatmul.mubr.f32.gmra.mrb[0].mxu0 %v5647
    %v5855 = vpop.f32.mrb[0].mxu0
    %v5856 = vadd.f32 %v1625, %v5855
    %v5857 = vpop.f32.mrb[0].mxu0
    %5858 = vdwg.mxu0
    %v5860 = vsel %vm301, %v5406, 0
    %5862 = vmatprep.subr.mxu0 0.0
    %5863 = vmatpush1.msra.mxu0 %v1697
    %5864 = vmatprep.subr.mxu0 0.0
    %5865 = vmatpush1.msra.mxu0 %v1698
    %5866 = vmatprep.subr.mxu0 0.0
    %5867 = vmatpush1.msra.mxu0 %v1699
    %5868 = vmatprep.subr.mxu0 0.0
    %5869 = vmatpush1.msra.mxu0 %v1700
    %5870 = vmatprep.subr.mxu0 0.0
    %5871 = vmatpush1.msra.mxu0 %v1701
    %5872 = vmatprep.subr.mxu0 0.0
    %5873 = vmatpush1.msra.mxu0 %v1702
    %5874 = vmatprep.subr.mxu0 0.0
    %5875 = vmatpush1.msra.mxu0 %v1703
    %5876 = vmatprep.subr.mxu0 0.0
    %5877 = vmatpush1.msra.mxu0 %v1704
    %5878 = vmatprep.subr.mxu0 0.0
    %5879 = vmatpush1.msra.mxu0 0.0
    %5880 = vmatprep.subr.mxu0 0.0
    %5881 = vmatpush1.msra.mxu0 0.0
    %5882 = vmatprep.subr.mxu0 0.0
    %5883 = vmatpush1.msra.mxu0 0.0
    %5884 = vmatprep.subr.mxu0 0.0
    %5885 = vmatpush1.msra.mxu0 0.0
    %5886 = vmatprep.subr.mxu0 0.0
    %5887 = vmatpush1.msra.mxu0 0.0
    %5888 = vmatprep.subr.mxu0 0.0
    %5889 = vmatpush1.msra.mxu0 0.0
    %5890 = vmatprep.subr.mxu0 0.0
    %5891 = vmatpush1.msra.mxu0 0.0
    %5892 = vmatprep.subr.mxu0 0.0
    %5893 = vmatpush1.msra.mxu0 0.0
    %5894 = vmatprep.subr.mxu0 0.0
    %5895 = vmatpush1.msra.mxu0 0.0
    %5896 = vmatprep.subr.mxu0 0.0
    %5897 = vmatpush1.msra.mxu0 0.0
    %5898 = vmatprep.subr.mxu0 0.0
    %5899 = vmatpush1.msra.mxu0 0.0
    %5900 = vmatprep.subr.mxu0 0.0
    %5901 = vmatpush1.msra.mxu0 0.0
    %5902 = vmatprep.subr.mxu0 0.0
    %5903 = vmatpush1.msra.mxu0 0.0
    %5904 = vmatprep.subr.mxu0 0.0
    %5905 = vmatpush1.msra.mxu0 0.0
    %5906 = vmatprep.subr.mxu0 0.0
    %5907 = vmatpush1.msra.mxu0 0.0
    %5908 = vmatprep.subr.mxu0 0.0
    %5909 = vmatpush1.msra.mxu0 0.0
    %5910 = vmatprep.subr.mxu0 0.0
    %5911 = vmatpush1.msra.mxu0 0.0
    %5912 = vmatprep.subr.mxu0 0.0
    %5913 = vmatpush1.msra.mxu0 0.0
    %5914 = vmatprep.subr.mxu0 0.0
    %5915 = vmatpush1.msra.mxu0 0.0
    %5916 = vmatprep.subr.mxu0 0.0
    %5917 = vmatpush1.msra.mxu0 0.0
    %5918 = vmatprep.subr.mxu0 0.0
    %5919 = vmatpush1.msra.mxu0 0.0
    %5920 = vmatprep.subr.mxu0 0.0
    %5921 = vmatpush1.msra.mxu0 0.0
    %5922 = vmatprep.subr.mxu0 0.0
    %5923 = vmatpush1.msra.mxu0 0.0
    %5924 = vmatprep.subr.mxu0 0.0
    %5925 = vmatpush1.msra.mxu0 0.0
    %5926 = vmatprep.mubr.f32.mxu0 0.0
    %5927 = vmatmul.mubr.f32.gmra.mrb[0].mxu0 %v5860
    %v5928 = vpop.f32.mrb[0].mxu0
    %v5929 = vadd.f32 %v1710, %v5928
    %v5930 = vpop.f32.mrb[0].mxu0
    %5931 = vdwg.mxu0
    %5932 = vmatprep.subr.mxu0 0.0
    %5933 = vmatpush1.msra.mxu0 %v1783
    %5934 = vmatprep.subr.mxu0 0.0
    %5935 = vmatpush1.msra.mxu0 %v1784
    %5936 = vmatprep.subr.mxu0 0.0
    %5937 = vmatpush1.msra.mxu0 %v1785
    %5938 = vmatprep.subr.mxu0 0.0
    %5939 = vmatpush1.msra.mxu0 %v1786
    %5940 = vmatprep.subr.mxu0 0.0
    %5941 = vmatpush1.msra.mxu0 %v1787
    %5942 = vmatprep.subr.mxu0 0.0
    %5943 = vmatpush1.msra.mxu0 %v1788
    %5944 = vmatprep.subr.mxu0 0.0
    %5945 = vmatpush1.msra.mxu0 %v1789
    %5946 = vmatprep.subr.mxu0 0.0
    %5947 = vmatpush1.msra.mxu0 %v1790
    %5948 = vmatprep.subr.mxu0 0.0
    %5949 = vmatpush1.msra.mxu0 0.0
    %5950 = vmatprep.subr.mxu0 0.0
    %5951 = vmatpush1.msra.mxu0 0.0
    %5952 = vmatprep.subr.mxu0 0.0
    %5953 = vmatpush1.msra.mxu0 0.0
    %5954 = vmatprep.subr.mxu0 0.0
    %5955 = vmatpush1.msra.mxu0 0.0
    %5956 = vmatprep.subr.mxu0 0.0
    %5957 = vmatpush1.msra.mxu0 0.0
    %5958 = vmatprep.subr.mxu0 0.0
    %5959 = vmatpush1.msra.mxu0 0.0
    %5960 = vmatprep.subr.mxu0 0.0
    %5961 = vmatpush1.msra.mxu0 0.0
    %5962 = vmatprep.subr.mxu0 0.0
    %5963 = vmatpush1.msra.mxu0 0.0
    %5964 = vmatprep.subr.mxu0 0.0
    %5965 = vmatpush1.msra.mxu0 0.0
    %5966 = vmatprep.subr.mxu0 0.0
    %5967 = vmatpush1.msra.mxu0 0.0
    %5968 = vmatprep.subr.mxu0 0.0
    %5969 = vmatpush1.msra.mxu0 0.0
    %5970 = vmatprep.subr.mxu0 0.0
    %5971 = vmatpush1.msra.mxu0 0.0
    %5972 = vmatprep.subr.mxu0 0.0
    %5973 = vmatpush1.msra.mxu0 0.0
    %5974 = vmatprep.subr.mxu0 0.0
    %5975 = vmatpush1.msra.mxu0 0.0
    %5976 = vmatprep.subr.mxu0 0.0
    %5977 = vmatpush1.msra.mxu0 0.0
    %5978 = vmatprep.subr.mxu0 0.0
    %5979 = vmatpush1.msra.mxu0 0.0
    %5980 = vmatprep.subr.mxu0 0.0
    %5981 = vmatpush1.msra.mxu0 0.0
    %5982 = vmatprep.subr.mxu0 0.0
    %5983 = vmatpush1.msra.mxu0 0.0
    %5984 = vmatprep.subr.mxu0 0.0
    %5985 = vmatpush1.msra.mxu0 0.0
    %5986 = vmatprep.subr.mxu0 0.0
    %5987 = vmatpush1.msra.mxu0 0.0
    %5988 = vmatprep.subr.mxu0 0.0
    %5989 = vmatpush1.msra.mxu0 0.0
    %5990 = vmatprep.subr.mxu0 0.0
    %5991 = vmatpush1.msra.mxu0 0.0
    %5992 = vmatprep.subr.mxu0 0.0
    %5993 = vmatpush1.msra.mxu0 0.0
    %5994 = vmatprep.subr.mxu0 0.0
    %5995 = vmatpush1.msra.mxu0 0.0
    %5996 = vmatprep.mubr.f32.mxu0 0.0
    %5997 = vmatmul.mubr.f32.gmra.mrb[0].mxu0 %v5860
    %v5998 = vpop.f32.mrb[0].mxu0
    %v5999 = vadd.f32 %v1797, %v5998
    %v6000 = vpop.f32.mrb[0].mxu0
    %6001 = vdwg.mxu0
    %6002 = vmatprep.subr.mxu0 0.0
    %6003 = vmatpush1.msra.mxu0 %v1870
    %6004 = vmatprep.subr.mxu0 0.0
    %6005 = vmatpush1.msra.mxu0 %v1871
    %6006 = vmatprep.subr.mxu0 0.0
    %6007 = vmatpush1.msra.mxu0 %v1872
    %6008 = vmatprep.subr.mxu0 0.0
    %6009 = vmatpush1.msra.mxu0 %v1873
    %6010 = vmatprep.subr.mxu0 0.0
    %6011 = vmatpush1.msra.mxu0 %v1874
    %6012 = vmatprep.subr.mxu0 0.0
    %6013 = vmatpush1.msra.mxu0 %v1875
    %6014 = vmatprep.subr.mxu0 0.0
    %6015 = vmatpush1.msra.mxu0 %v1876
    %6016 = vmatprep.subr.mxu0 0.0
    %6017 = vmatpush1.msra.mxu0 %v1877
    %6018 = vmatprep.subr.mxu0 0.0
    %6019 = vmatpush1.msra.mxu0 0.0
    %6020 = vmatprep.subr.mxu0 0.0
    %6021 = vmatpush1.msra.mxu0 0.0
    %6022 = vmatprep.subr.mxu0 0.0
    %6023 = vmatpush1.msra.mxu0 0.0
    %6024 = vmatprep.subr.mxu0 0.0
    %6025 = vmatpush1.msra.mxu0 0.0
    %6026 = vmatprep.subr.mxu0 0.0
    %6027 = vmatpush1.msra.mxu0 0.0
    %6028 = vmatprep.subr.mxu0 0.0
    %6029 = vmatpush1.msra.mxu0 0.0
    %6030 = vmatprep.subr.mxu0 0.0
    %6031 = vmatpush1.msra.mxu0 0.0
    %6032 = vmatprep.subr.mxu0 0.0
    %6033 = vmatpush1.msra.mxu0 0.0
    %6034 = vmatprep.subr.mxu0 0.0
    %6035 = vmatpush1.msra.mxu0 0.0
    %6036 = vmatprep.subr.mxu0 0.0
    %6037 = vmatpush1.msra.mxu0 0.0
    %6038 = vmatprep.subr.mxu0 0.0
    %6039 = vmatpush1.msra.mxu0 0.0
    %6040 = vmatprep.subr.mxu0 0.0
    %6041 = vmatpush1.msra.mxu0 0.0
    %6042 = vmatprep.subr.mxu0 0.0
    %6043 = vmatpush1.msra.mxu0 0.0
    %6044 = vmatprep.subr.mxu0 0.0
    %6045 = vmatpush1.msra.mxu0 0.0
    %6046 = vmatprep.subr.mxu0 0.0
    %6047 = vmatpush1.msra.mxu0 0.0
    %6048 = vmatprep.subr.mxu0 0.0
    %6049 = vmatpush1.msra.mxu0 0.0
    %6050 = vmatprep.subr.mxu0 0.0
    %6051 = vmatpush1.msra.mxu0 0.0
    %6052 = vmatprep.subr.mxu0 0.0
    %6053 = vmatpush1.msra.mxu0 0.0
    %6054 = vmatprep.subr.mxu0 0.0
    %6055 = vmatpush1.msra.mxu0 0.0
    %6056 = vmatprep.subr.mxu0 0.0
    %6057 = vmatpush1.msra.mxu0 0.0
    %6058 = vmatprep.subr.mxu0 0.0
    %6059 = vmatpush1.msra.mxu0 0.0
    %6060 = vmatprep.subr.mxu0 0.0
    %6061 = vmatpush1.msra.mxu0 0.0
    %6062 = vmatprep.subr.mxu0 0.0
    %6063 = vmatpush1.msra.mxu0 0.0
    %6064 = vmatprep.subr.mxu0 0.0
    %6065 = vmatpush1.msra.mxu0 0.0
    %6066 = vmatprep.mubr.f32.mxu0 0.0
    %6067 = vmatmul.mubr.f32.gmra.mrb[0].mxu0 %v5860
    %v6068 = vpop.f32.mrb[0].mxu0
    %v6069 = vadd.f32 %v1884, %v6068
    %v6070 = vpop.f32.mrb[0].mxu0
    %6071 = vdwg.mxu0
    %v6072 = vadd.f32 %v5716, %v5929
    %v6073 = vxor.u32 %v6072, 2147483648
    %v6074 = vmul.f32 %v6073, 1.442695
    %v6075 = vpow.pop %v6074
    %v6076 = vadd.f32 %v6075, 1.0
    %v6077 = vrcp.pop %v6076
    %v6078 = vmul.f32 1.0, %v6077
    %v6079 = vadd.f32 %v5786, %v5999
    %v6080 = vxor.u32 %v6079, 2147483648
    %v6081 = vmul.f32 %v6080, 1.442695
    %v6082 = vpow.pop %v6081
    %v6083 = vadd.f32 %v6082, 1.0
    %v6084 = vrcp.pop %v6083
    %v6085 = vmul.f32 1.0, %v6084
    %v6086 = vmul.f32 %v6078, %v6069
    %v6087 = vadd.f32 %v5856, %v6086
    %v6088 = vtanh.pop %v6087
    %v6089 = vsub.f32 1.0, %v6085
    %v6090 = vmul.f32 %v6089, %v6088
    %v6091 = vmul.f32 %v6085, %v5406
    %v6092 = vadd.f32 %v6090, %v6091
    %s6093 = scalar_lea.vmem [#allocation2], 56
    %v6094 = vld [vmem:[%s6093] sm:$0xff]
    %s6095 = sadd.s32 56, 64
    %s6096 = scalar_lea.vmem [#allocation2], %s6095
    %v6097 = vld [vmem:[%s6096] sm:$0xff]
    %s6098 = sadd.s32 56, 128
    %s6099 = scalar_lea.vmem [#allocation2], %s6098
    %v6100 = vld [vmem:[%s6099] sm:$0xff]
    %6101 = vmatprep.subr.mxu0 0.0
    %6102 = vmatpush1.msra.mxu0 %v1152
    %6103 = vmatprep.subr.mxu0 0.0
    %6104 = vmatpush1.msra.mxu0 %v1153
    %6105 = vmatprep.subr.mxu0 0.0
    %6106 = vmatpush1.msra.mxu0 %v1154
    %6107 = vmatprep.subr.mxu0 0.0
    %6108 = vmatpush1.msra.mxu0 %v1155
    %6109 = vmatprep.subr.mxu0 0.0
    %6110 = vmatpush1.msra.mxu0 %v1156
    %6111 = vmatprep.subr.mxu0 0.0
    %6112 = vmatpush1.msra.mxu0 %v1157
    %6113 = vmatprep.subr.mxu0 0.0
    %6114 = vmatpush1.msra.mxu0 %v1158
    %6115 = vmatprep.subr.mxu0 0.0
    %6116 = vmatpush1.msra.mxu0 %v1159
    %6117 = vmatprep.subr.mxu0 0.0
    %6118 = vmatpush1.msra.mxu0 0.0
    %6119 = vmatprep.subr.mxu0 0.0
    %6120 = vmatpush1.msra.mxu0 0.0
    %6121 = vmatprep.subr.mxu0 0.0
    %6122 = vmatpush1.msra.mxu0 0.0
    %6123 = vmatprep.subr.mxu0 0.0
    %6124 = vmatpush1.msra.mxu0 0.0
    %6125 = vmatprep.subr.mxu0 0.0
    %6126 = vmatpush1.msra.mxu0 0.0
    %6127 = vmatprep.subr.mxu0 0.0
    %6128 = vmatpush1.msra.mxu0 0.0
    %6129 = vmatprep.subr.mxu0 0.0
    %6130 = vmatpush1.msra.mxu0 0.0
    %6131 = vmatprep.subr.mxu0 0.0
    %6132 = vmatpush1.msra.mxu0 0.0
    %6133 = vmatprep.subr.mxu0 0.0
    %6134 = vmatpush1.msra.mxu0 0.0
    %6135 = vmatprep.subr.mxu0 0.0
    %6136 = vmatpush1.msra.mxu0 0.0
    %6137 = vmatprep.subr.mxu0 0.0
    %6138 = vmatpush1.msra.mxu0 0.0
    %6139 = vmatprep.subr.mxu0 0.0
    %6140 = vmatpush1.msra.mxu0 0.0
    %6141 = vmatprep.subr.mxu0 0.0
    %6142 = vmatpush1.msra.mxu0 0.0
    %6143 = vmatprep.subr.mxu0 0.0
    %6144 = vmatpush1.msra.mxu0 0.0
    %6145 = vmatprep.subr.mxu0 0.0
    %6146 = vmatpush1.msra.mxu0 0.0
    %6147 = vmatprep.subr.mxu0 0.0
    %6148 = vmatpush1.msra.mxu0 0.0
    %6149 = vmatprep.subr.mxu0 0.0
    %6150 = vmatpush1.msra.mxu0 0.0
    %6151 = vmatprep.subr.mxu0 0.0
    %6152 = vmatpush1.msra.mxu0 0.0
    %6153 = vmatprep.subr.mxu0 0.0
    %6154 = vmatpush1.msra.mxu0 0.0
    %6155 = vmatprep.subr.mxu0 0.0
    %6156 = vmatpush1.msra.mxu0 0.0
    %6157 = vmatprep.subr.mxu0 0.0
    %6158 = vmatpush1.msra.mxu0 0.0
    %6159 = vmatprep.subr.mxu0 0.0
    %6160 = vmatpush1.msra.mxu0 0.0
    %6161 = vmatprep.subr.mxu0 0.0
    %6162 = vmatpush1.msra.mxu0 0.0
    %6163 = vmatprep.subr.mxu0 0.0
    %6164 = vmatpush1.msra.mxu0 0.0
    %6165 = vmatprep.mubr.f32.mxu0 0.0
    %6166 = vmatmul.mubr.f32.gmra.mrb[0].mxu0 %v5647
    %v6167 = vpop.f32.mrb[0].mxu0
    %v6168 = vadd.f32 %v1165, %v6167
    %v6169 = vpop.f32.mrb[0].mxu0
    %6170 = vdwg.mxu0
    %6171 = vmatprep.subr.mxu0 0.0
    %6172 = vmatpush1.msra.mxu0 %v1241
    %6173 = vmatprep.subr.mxu0 0.0
    %6174 = vmatpush1.msra.mxu0 %v1242
    %6175 = vmatprep.subr.mxu0 0.0
    %6176 = vmatpush1.msra.mxu0 %v1243
    %6177 = vmatprep.subr.mxu0 0.0
    %6178 = vmatpush1.msra.mxu0 %v1244
    %6179 = vmatprep.subr.mxu0 0.0
    %6180 = vmatpush1.msra.mxu0 %v1245
    %6181 = vmatprep.subr.mxu0 0.0
    %6182 = vmatpush1.msra.mxu0 %v1246
    %6183 = vmatprep.subr.mxu0 0.0
    %6184 = vmatpush1.msra.mxu0 %v1247
    %6185 = vmatprep.subr.mxu0 0.0
    %6186 = vmatpush1.msra.mxu0 %v1248
    %6187 = vmatprep.subr.mxu0 0.0
    %6188 = vmatpush1.msra.mxu0 0.0
    %6189 = vmatprep.subr.mxu0 0.0
    %6190 = vmatpush1.msra.mxu0 0.0
    %6191 = vmatprep.subr.mxu0 0.0
    %6192 = vmatpush1.msra.mxu0 0.0
    %6193 = vmatprep.subr.mxu0 0.0
    %6194 = vmatpush1.msra.mxu0 0.0
    %6195 = vmatprep.subr.mxu0 0.0
    %6196 = vmatpush1.msra.mxu0 0.0
    %6197 = vmatprep.subr.mxu0 0.0
    %6198 = vmatpush1.msra.mxu0 0.0
    %6199 = vmatprep.subr.mxu0 0.0
    %6200 = vmatpush1.msra.mxu0 0.0
    %6201 = vmatprep.subr.mxu0 0.0
    %6202 = vmatpush1.msra.mxu0 0.0
    %6203 = vmatprep.subr.mxu0 0.0
    %6204 = vmatpush1.msra.mxu0 0.0
    %6205 = vmatprep.subr.mxu0 0.0
    %6206 = vmatpush1.msra.mxu0 0.0
    %6207 = vmatprep.subr.mxu0 0.0
    %6208 = vmatpush1.msra.mxu0 0.0
    %6209 = vmatprep.subr.mxu0 0.0
    %6210 = vmatpush1.msra.mxu0 0.0
    %6211 = vmatprep.subr.mxu0 0.0
    %6212 = vmatpush1.msra.mxu0 0.0
    %6213 = vmatprep.subr.mxu0 0.0
    %6214 = vmatpush1.msra.mxu0 0.0
    %6215 = vmatprep.subr.mxu0 0.0
    %6216 = vmatpush1.msra.mxu0 0.0
    %6217 = vmatprep.subr.mxu0 0.0
    %6218 = vmatpush1.msra.mxu0 0.0
    %6219 = vmatprep.subr.mxu0 0.0
    %6220 = vmatpush1.msra.mxu0 0.0
    %6221 = vmatprep.subr.mxu0 0.0
    %6222 = vmatpush1.msra.mxu0 0.0
    %6223 = vmatprep.subr.mxu0 0.0
    %6224 = vmatpush1.msra.mxu0 0.0
    %6225 = vmatprep.subr.mxu0 0.0
    %6226 = vmatpush1.msra.mxu0 0.0
    %6227 = vmatprep.subr.mxu0 0.0
    %6228 = vmatpush1.msra.mxu0 0.0
    %6229 = vmatprep.subr.mxu0 0.0
    %6230 = vmatpush1.msra.mxu0 0.0
    %6231 = vmatprep.subr.mxu0 0.0
    %6232 = vmatpush1.msra.mxu0 0.0
    %6233 = vmatprep.subr.mxu0 0.0
    %6234 = vmatpush1.msra.mxu0 0.0
    %6235 = vmatprep.mubr.f32.mxu0 0.0
    %6236 = vmatmul.mubr.f32.gmra.mrb[0].mxu0 %v5647
    %v6237 = vpop.f32.mrb[0].mxu0
    %v6238 = vadd.f32 %v1255, %v6237
    %v6239 = vpop.f32.mrb[0].mxu0
    %6240 = vdwg.mxu0
    %6241 = vmatprep.subr.mxu0 0.0
    %6242 = vmatpush1.msra.mxu0 %v1328
    %6243 = vmatprep.subr.mxu0 0.0
    %6244 = vmatpush1.msra.mxu0 %v1329
    %6245 = vmatprep.subr.mxu0 0.0
    %6246 = vmatpush1.msra.mxu0 %v1330
    %6247 = vmatprep.subr.mxu0 0.0
    %6248 = vmatpush1.msra.mxu0 %v1331
    %6249 = vmatprep.subr.mxu0 0.0
    %6250 = vmatpush1.msra.mxu0 %v1332
    %6251 = vmatprep.subr.mxu0 0.0
    %6252 = vmatpush1.msra.mxu0 %v1333
    %6253 = vmatprep.subr.mxu0 0.0
    %6254 = vmatpush1.msra.mxu0 %v1334
    %6255 = vmatprep.subr.mxu0 0.0
    %6256 = vmatpush1.msra.mxu0 %v1335
    %6257 = vmatprep.subr.mxu0 0.0
    %6258 = vmatpush1.msra.mxu0 0.0
    %6259 = vmatprep.subr.mxu0 0.0
    %6260 = vmatpush1.msra.mxu0 0.0
    %6261 = vmatprep.subr.mxu0 0.0
    %6262 = vmatpush1.msra.mxu0 0.0
    %6263 = vmatprep.subr.mxu0 0.0
    %6264 = vmatpush1.msra.mxu0 0.0
    %6265 = vmatprep.subr.mxu0 0.0
    %6266 = vmatpush1.msra.mxu0 0.0
    %6267 = vmatprep.subr.mxu0 0.0
    %6268 = vmatpush1.msra.mxu0 0.0
    %6269 = vmatprep.subr.mxu0 0.0
    %6270 = vmatpush1.msra.mxu0 0.0
    %6271 = vmatprep.subr.mxu0 0.0
    %6272 = vmatpush1.msra.mxu0 0.0
    %6273 = vmatprep.subr.mxu0 0.0
    %6274 = vmatpush1.msra.mxu0 0.0
    %6275 = vmatprep.subr.mxu0 0.0
    %6276 = vmatpush1.msra.mxu0 0.0
    %6277 = vmatprep.subr.mxu0 0.0
    %6278 = vmatpush1.msra.mxu0 0.0
    %6279 = vmatprep.subr.mxu0 0.0
    %6280 = vmatpush1.msra.mxu0 0.0
    %6281 = vmatprep.subr.mxu0 0.0
    %6282 = vmatpush1.msra.mxu0 0.0
    %6283 = vmatprep.subr.mxu0 0.0
    %6284 = vmatpush1.msra.mxu0 0.0
    %6285 = vmatprep.subr.mxu0 0.0
    %6286 = vmatpush1.msra.mxu0 0.0
    %6287 = vmatprep.subr.mxu0 0.0
    %6288 = vmatpush1.msra.mxu0 0.0
    %6289 = vmatprep.subr.mxu0 0.0
    %6290 = vmatpush1.msra.mxu0 0.0
    %6291 = vmatprep.subr.mxu0 0.0
    %6292 = vmatpush1.msra.mxu0 0.0
    %6293 = vmatprep.subr.mxu0 0.0
    %6294 = vmatpush1.msra.mxu0 0.0
    %6295 = vmatprep.subr.mxu0 0.0
    %6296 = vmatpush1.msra.mxu0 0.0
    %6297 = vmatprep.subr.mxu0 0.0
    %6298 = vmatpush1.msra.mxu0 0.0
    %6299 = vmatprep.subr.mxu0 0.0
    %6300 = vmatpush1.msra.mxu0 0.0
    %6301 = vmatprep.subr.mxu0 0.0
    %6302 = vmatpush1.msra.mxu0 0.0
    %6303 = vmatprep.subr.mxu0 0.0
    %6304 = vmatpush1.msra.mxu0 0.0
    %6305 = vmatprep.mubr.f32.mxu0 0.0
    %6306 = vmatmul.mubr.f32.gmra.mrb[0].mxu0 %v5647
    %v6307 = vpop.f32.mrb[0].mxu0
    %v6308 = vadd.f32 %v1342, %v6307
    %v6309 = vpop.f32.mrb[0].mxu0
    %6310 = vdwg.mxu0
    %v6311 = vadd.f32 %v6094, %v6168
    %v6312 = vxor.u32 %v6311, 2147483648
    %v6313 = vmul.f32 %v6312, 1.442695
    %v6314 = vpow.pop %v6313
    %v6315 = vadd.f32 %v6314, 1.0
    %v6316 = vrcp.pop %v6315
    %v6317 = vmul.f32 1.0, %v6316
    %v6318 = vadd.f32 %v6097, %v6238
    %v6319 = vxor.u32 %v6318, 2147483648
    %v6320 = vmul.f32 %v6319, 1.442695
    %v6321 = vpow.pop %v6320
    %v6322 = vadd.f32 %v6321, 1.0
    %v6323 = vrcp.pop %v6322
    %v6324 = vmul.f32 1.0, %v6323
    %v6325 = vmul.f32 %v6317, %v6308
    %v6326 = vadd.f32 %v6100, %v6325
    %v6327 = vtanh.pop %v6326
    %v6328 = vsub.f32 1.0, %v6324
    %v6329 = vmul.f32 %v6328, %v6327
    %v6330 = vmul.f32 %v6324, %v5645
    %v6331 = vadd.f32 %v6329, %v6330
    %v6333 = vsel %vm301, %v6331, 0
    %6335 = vmatprep.subr.mxu0 0.0
    %6336 = vmatpush1.msra.mxu0 %v1435
    %6337 = vmatprep.subr.mxu0 0.0
    %6338 = vmatpush1.msra.mxu0 %v1436
    %6339 = vmatprep.subr.mxu0 0.0
    %6340 = vmatpush1.msra.mxu0 %v1437
    %6341 = vmatprep.subr.mxu0 0.0
    %6342 = vmatpush1.msra.mxu0 %v1438
    %6343 = vmatprep.subr.mxu0 0.0
    %6344 = vmatpush1.msra.mxu0 %v1439
    %6345 = vmatprep.subr.mxu0 0.0
    %6346 = vmatpush1.msra.mxu0 %v1440
    %6347 = vmatprep.subr.mxu0 0.0
    %6348 = vmatpush1.msra.mxu0 %v1441
    %6349 = vmatprep.subr.mxu0 0.0
    %6350 = vmatpush1.msra.mxu0 %v1442
    %6351 = vmatprep.subr.mxu0 0.0
    %6352 = vmatpush1.msra.mxu0 0.0
    %6353 = vmatprep.subr.mxu0 0.0
    %6354 = vmatpush1.msra.mxu0 0.0
    %6355 = vmatprep.subr.mxu0 0.0
    %6356 = vmatpush1.msra.mxu0 0.0
    %6357 = vmatprep.subr.mxu0 0.0
    %6358 = vmatpush1.msra.mxu0 0.0
    %6359 = vmatprep.subr.mxu0 0.0
    %6360 = vmatpush1.msra.mxu0 0.0
    %6361 = vmatprep.subr.mxu0 0.0
    %6362 = vmatpush1.msra.mxu0 0.0
    %6363 = vmatprep.subr.mxu0 0.0
    %6364 = vmatpush1.msra.mxu0 0.0
    %6365 = vmatprep.subr.mxu0 0.0
    %6366 = vmatpush1.msra.mxu0 0.0
    %6367 = vmatprep.subr.mxu0 0.0
    %6368 = vmatpush1.msra.mxu0 0.0
    %6369 = vmatprep.subr.mxu0 0.0
    %6370 = vmatpush1.msra.mxu0 0.0
    %6371 = vmatprep.subr.mxu0 0.0
    %6372 = vmatpush1.msra.mxu0 0.0
    %6373 = vmatprep.subr.mxu0 0.0
    %6374 = vmatpush1.msra.mxu0 0.0
    %6375 = vmatprep.subr.mxu0 0.0
    %6376 = vmatpush1.msra.mxu0 0.0
    %6377 = vmatprep.subr.mxu0 0.0
    %6378 = vmatpush1.msra.mxu0 0.0
    %6379 = vmatprep.subr.mxu0 0.0
    %6380 = vmatpush1.msra.mxu0 0.0
    %6381 = vmatprep.subr.mxu0 0.0
    %6382 = vmatpush1.msra.mxu0 0.0
    %6383 = vmatprep.subr.mxu0 0.0
    %6384 = vmatpush1.msra.mxu0 0.0
    %6385 = vmatprep.subr.mxu0 0.0
    %6386 = vmatpush1.msra.mxu0 0.0
    %6387 = vmatprep.subr.mxu0 0.0
    %6388 = vmatpush1.msra.mxu0 0.0
    %6389 = vmatprep.subr.mxu0 0.0
    %6390 = vmatpush1.msra.mxu0 0.0
    %6391 = vmatprep.subr.mxu0 0.0
    %6392 = vmatpush1.msra.mxu0 0.0
    %6393 = vmatprep.subr.mxu0 0.0
    %6394 = vmatpush1.msra.mxu0 0.0
    %6395 = vmatprep.subr.mxu0 0.0
    %6396 = vmatpush1.msra.mxu0 0.0
    %6397 = vmatprep.subr.mxu0 0.0
    %6398 = vmatpush1.msra.mxu0 0.0
    %6399 = vmatprep.mubr.f32.mxu0 0.0
    %6400 = vmatmul.mubr.f32.gmra.mrb[0].mxu0 %v6333
    %v6401 = vpop.f32.mrb[0].mxu0
    %v6402 = vadd.f32 %v1448, %v6401
    %v6403 = vpop.f32.mrb[0].mxu0
    %6404 = vdwg.mxu0
    %6405 = vmatprep.subr.mxu0 0.0
    %6406 = vmatpush1.msra.mxu0 %v1524
    %6407 = vmatprep.subr.mxu0 0.0
    %6408 = vmatpush1.msra.mxu0 %v1525
    %6409 = vmatprep.subr.mxu0 0.0
    %6410 = vmatpush1.msra.mxu0 %v1526
    %6411 = vmatprep.subr.mxu0 0.0
    %6412 = vmatpush1.msra.mxu0 %v1527
    %6413 = vmatprep.subr.mxu0 0.0
    %6414 = vmatpush1.msra.mxu0 %v1528
    %6415 = vmatprep.subr.mxu0 0.0
    %6416 = vmatpush1.msra.mxu0 %v1529
    %6417 = vmatprep.subr.mxu0 0.0
    %6418 = vmatpush1.msra.mxu0 %v1530
    %6419 = vmatprep.subr.mxu0 0.0
    %6420 = vmatpush1.msra.mxu0 %v1531
    %6421 = vmatprep.subr.mxu0 0.0
    %6422 = vmatpush1.msra.mxu0 0.0
    %6423 = vmatprep.subr.mxu0 0.0
    %6424 = vmatpush1.msra.mxu0 0.0
    %6425 = vmatprep.subr.mxu0 0.0
    %6426 = vmatpush1.msra.mxu0 0.0
    %6427 = vmatprep.subr.mxu0 0.0
    %6428 = vmatpush1.msra.mxu0 0.0
    %6429 = vmatprep.subr.mxu0 0.0
    %6430 = vmatpush1.msra.mxu0 0.0
    %6431 = vmatprep.subr.mxu0 0.0
    %6432 = vmatpush1.msra.mxu0 0.0
    %6433 = vmatprep.subr.mxu0 0.0
    %6434 = vmatpush1.msra.mxu0 0.0
    %6435 = vmatprep.subr.mxu0 0.0
    %6436 = vmatpush1.msra.mxu0 0.0
    %6437 = vmatprep.subr.mxu0 0.0
    %6438 = vmatpush1.msra.mxu0 0.0
    %6439 = vmatprep.subr.mxu0 0.0
    %6440 = vmatpush1.msra.mxu0 0.0
    %6441 = vmatprep.subr.mxu0 0.0
    %6442 = vmatpush1.msra.mxu0 0.0
    %6443 = vmatprep.subr.mxu0 0.0
    %6444 = vmatpush1.msra.mxu0 0.0
    %6445 = vmatprep.subr.mxu0 0.0
    %6446 = vmatpush1.msra.mxu0 0.0
    %6447 = vmatprep.subr.mxu0 0.0
    %6448 = vmatpush1.msra.mxu0 0.0
    %6449 = vmatprep.subr.mxu0 0.0
    %6450 = vmatpush1.msra.mxu0 0.0
    %6451 = vmatprep.subr.mxu0 0.0
    %6452 = vmatpush1.msra.mxu0 0.0
    %6453 = vmatprep.subr.mxu0 0.0
    %6454 = vmatpush1.msra.mxu0 0.0
    %6455 = vmatprep.subr.mxu0 0.0
    %6456 = vmatpush1.msra.mxu0 0.0
    %6457 = vmatprep.subr.mxu0 0.0
    %6458 = vmatpush1.msra.mxu0 0.0
    %6459 = vmatprep.subr.mxu0 0.0
    %6460 = vmatpush1.msra.mxu0 0.0
    %6461 = vmatprep.subr.mxu0 0.0
    %6462 = vmatpush1.msra.mxu0 0.0
    %6463 = vmatprep.subr.mxu0 0.0
    %6464 = vmatpush1.msra.mxu0 0.0
    %6465 = vmatprep.subr.mxu0 0.0
    %6466 = vmatpush1.msra.mxu0 0.0
    %6467 = vmatprep.subr.mxu0 0.0
    %6468 = vmatpush1.msra.mxu0 0.0
    %6469 = vmatprep.mubr.f32.mxu0 0.0
    %6470 = vmatmul.mubr.f32.gmra.mrb[0].mxu0 %v6333
    %v6471 = vpop.f32.mrb[0].mxu0
    %v6472 = vadd.f32 %v1538, %v6471
    %v6473 = vpop.f32.mrb[0].mxu0
    %6474 = vdwg.mxu0
    %6475 = vmatprep.subr.mxu0 0.0
    %6476 = vmatpush1.msra.mxu0 %v1611
    %6477 = vmatprep.subr.mxu0 0.0
    %6478 = vmatpush1.msra.mxu0 %v1612
    %6479 = vmatprep.subr.mxu0 0.0
    %6480 = vmatpush1.msra.mxu0 %v1613
    %6481 = vmatprep.subr.mxu0 0.0
    %6482 = vmatpush1.msra.mxu0 %v1614
    %6483 = vmatprep.subr.mxu0 0.0
    %6484 = vmatpush1.msra.mxu0 %v1615
    %6485 = vmatprep.subr.mxu0 0.0
    %6486 = vmatpush1.msra.mxu0 %v1616
    %6487 = vmatprep.subr.mxu0 0.0
    %6488 = vmatpush1.msra.mxu0 %v1617
    %6489 = vmatprep.subr.mxu0 0.0
    %6490 = vmatpush1.msra.mxu0 %v1618
    %6491 = vmatprep.subr.mxu0 0.0
    %6492 = vmatpush1.msra.mxu0 0.0
    %6493 = vmatprep.subr.mxu0 0.0
    %6494 = vmatpush1.msra.mxu0 0.0
    %6495 = vmatprep.subr.mxu0 0.0
    %6496 = vmatpush1.msra.mxu0 0.0
    %6497 = vmatprep.subr.mxu0 0.0
    %6498 = vmatpush1.msra.mxu0 0.0
    %6499 = vmatprep.subr.mxu0 0.0
    %6500 = vmatpush1.msra.mxu0 0.0
    %6501 = vmatprep.subr.mxu0 0.0
    %6502 = vmatpush1.msra.mxu0 0.0
    %6503 = vmatprep.subr.mxu0 0.0
    %6504 = vmatpush1.msra.mxu0 0.0
    %6505 = vmatprep.subr.mxu0 0.0
    %6506 = vmatpush1.msra.mxu0 0.0
    %6507 = vmatprep.subr.mxu0 0.0
    %6508 = vmatpush1.msra.mxu0 0.0
    %6509 = vmatprep.subr.mxu0 0.0
    %6510 = vmatpush1.msra.mxu0 0.0
    %6511 = vmatprep.subr.mxu0 0.0
    %6512 = vmatpush1.msra.mxu0 0.0
    %6513 = vmatprep.subr.mxu0 0.0
    %6514 = vmatpush1.msra.mxu0 0.0
    %6515 = vmatprep.subr.mxu0 0.0
    %6516 = vmatpush1.msra.mxu0 0.0
    %6517 = vmatprep.subr.mxu0 0.0
    %6518 = vmatpush1.msra.mxu0 0.0
    %6519 = vmatprep.subr.mxu0 0.0
    %6520 = vmatpush1.msra.mxu0 0.0
    %6521 = vmatprep.subr.mxu0 0.0
    %6522 = vmatpush1.msra.mxu0 0.0
    %6523 = vmatprep.subr.mxu0 0.0
    %6524 = vmatpush1.msra.mxu0 0.0
    %6525 = vmatprep.subr.mxu0 0.0
    %6526 = vmatpush1.msra.mxu0 0.0
    %6527 = vmatprep.subr.mxu0 0.0
    %6528 = vmatpush1.msra.mxu0 0.0
    %6529 = vmatprep.subr.mxu0 0.0
    %6530 = vmatpush1.msra.mxu0 0.0
    %6531 = vmatprep.subr.mxu0 0.0
    %6532 = vmatpush1.msra.mxu0 0.0
    %6533 = vmatprep.subr.mxu0 0.0
    %6534 = vmatpush1.msra.mxu0 0.0
    %6535 = vmatprep.subr.mxu0 0.0
    %6536 = vmatpush1.msra.mxu0 0.0
    %6537 = vmatprep.subr.mxu0 0.0
    %6538 = vmatpush1.msra.mxu0 0.0
    %6539 = vmatprep.mubr.f32.mxu0 0.0
    %6540 = vmatmul.mubr.f32.gmra.mrb[0].mxu0 %v6333
    %v6541 = vpop.f32.mrb[0].mxu0
    %v6542 = vadd.f32 %v1625, %v6541
    %v6543 = vpop.f32.mrb[0].mxu0
    %6544 = vdwg.mxu0
    %v6546 = vsel %vm301, %v6092, 0
    %6548 = vmatprep.subr.mxu0 0.0
    %6549 = vmatpush1.msra.mxu0 %v1697
    %6550 = vmatprep.subr.mxu0 0.0
    %6551 = vmatpush1.msra.mxu0 %v1698
    %6552 = vmatprep.subr.mxu0 0.0
    %6553 = vmatpush1.msra.mxu0 %v1699
    %6554 = vmatprep.subr.mxu0 0.0
    %6555 = vmatpush1.msra.mxu0 %v1700
    %6556 = vmatprep.subr.mxu0 0.0
    %6557 = vmatpush1.msra.mxu0 %v1701
    %6558 = vmatprep.subr.mxu0 0.0
    %6559 = vmatpush1.msra.mxu0 %v1702
    %6560 = vmatprep.subr.mxu0 0.0
    %6561 = vmatpush1.msra.mxu0 %v1703
    %6562 = vmatprep.subr.mxu0 0.0
    %6563 = vmatpush1.msra.mxu0 %v1704
    %6564 = vmatprep.subr.mxu0 0.0
    %6565 = vmatpush1.msra.mxu0 0.0
    %6566 = vmatprep.subr.mxu0 0.0
    %6567 = vmatpush1.msra.mxu0 0.0
    %6568 = vmatprep.subr.mxu0 0.0
    %6569 = vmatpush1.msra.mxu0 0.0
    %6570 = vmatprep.subr.mxu0 0.0
    %6571 = vmatpush1.msra.mxu0 0.0
    %6572 = vmatprep.subr.mxu0 0.0
    %6573 = vmatpush1.msra.mxu0 0.0
    %6574 = vmatprep.subr.mxu0 0.0
    %6575 = vmatpush1.msra.mxu0 0.0
    %6576 = vmatprep.subr.mxu0 0.0
    %6577 = vmatpush1.msra.mxu0 0.0
    %6578 = vmatprep.subr.mxu0 0.0
    %6579 = vmatpush1.msra.mxu0 0.0
    %6580 = vmatprep.subr.mxu0 0.0
    %6581 = vmatpush1.msra.mxu0 0.0
    %6582 = vmatprep.subr.mxu0 0.0
    %6583 = vmatpush1.msra.mxu0 0.0
    %6584 = vmatprep.subr.mxu0 0.0
    %6585 = vmatpush1.msra.mxu0 0.0
    %6586 = vmatprep.subr.mxu0 0.0
    %6587 = vmatpush1.msra.mxu0 0.0
    %6588 = vmatprep.subr.mxu0 0.0
    %6589 = vmatpush1.msra.mxu0 0.0
    %6590 = vmatprep.subr.mxu0 0.0
    %6591 = vmatpush1.msra.mxu0 0.0
    %6592 = vmatprep.subr.mxu0 0.0
    %6593 = vmatpush1.msra.mxu0 0.0
    %6594 = vmatprep.subr.mxu0 0.0
    %6595 = vmatpush1.msra.mxu0 0.0
    %6596 = vmatprep.subr.mxu0 0.0
    %6597 = vmatpush1.msra.mxu0 0.0
    %6598 = vmatprep.subr.mxu0 0.0
    %6599 = vmatpush1.msra.mxu0 0.0
    %6600 = vmatprep.subr.mxu0 0.0
    %6601 = vmatpush1.msra.mxu0 0.0
    %6602 = vmatprep.subr.mxu0 0.0
    %6603 = vmatpush1.msra.mxu0 0.0
    %6604 = vmatprep.subr.mxu0 0.0
    %6605 = vmatpush1.msra.mxu0 0.0
    %6606 = vmatprep.subr.mxu0 0.0
    %6607 = vmatpush1.msra.mxu0 0.0
    %6608 = vmatprep.subr.mxu0 0.0
    %6609 = vmatpush1.msra.mxu0 0.0
    %6610 = vmatprep.subr.mxu0 0.0
    %6611 = vmatpush1.msra.mxu0 0.0
    %6612 = vmatprep.mubr.f32.mxu0 0.0
    %6613 = vmatmul.mubr.f32.gmra.mrb[0].mxu0 %v6546
    %v6614 = vpop.f32.mrb[0].mxu0
    %v6615 = vadd.f32 %v1710, %v6614
    %v6616 = vpop.f32.mrb[0].mxu0
    %6617 = vdwg.mxu0
    %6618 = vmatprep.subr.mxu0 0.0
    %6619 = vmatpush1.msra.mxu0 %v1783
    %6620 = vmatprep.subr.mxu0 0.0
    %6621 = vmatpush1.msra.mxu0 %v1784
    %6622 = vmatprep.subr.mxu0 0.0
    %6623 = vmatpush1.msra.mxu0 %v1785
    %6624 = vmatprep.subr.mxu0 0.0
    %6625 = vmatpush1.msra.mxu0 %v1786
    %6626 = vmatprep.subr.mxu0 0.0
    %6627 = vmatpush1.msra.mxu0 %v1787
    %6628 = vmatprep.subr.mxu0 0.0
    %6629 = vmatpush1.msra.mxu0 %v1788
    %6630 = vmatprep.subr.mxu0 0.0
    %6631 = vmatpush1.msra.mxu0 %v1789
    %6632 = vmatprep.subr.mxu0 0.0
    %6633 = vmatpush1.msra.mxu0 %v1790
    %6634 = vmatprep.subr.mxu0 0.0
    %6635 = vmatpush1.msra.mxu0 0.0
    %6636 = vmatprep.subr.mxu0 0.0
    %6637 = vmatpush1.msra.mxu0 0.0
    %6638 = vmatprep.subr.mxu0 0.0
    %6639 = vmatpush1.msra.mxu0 0.0
    %6640 = vmatprep.subr.mxu0 0.0
    %6641 = vmatpush1.msra.mxu0 0.0
    %6642 = vmatprep.subr.mxu0 0.0
    %6643 = vmatpush1.msra.mxu0 0.0
    %6644 = vmatprep.subr.mxu0 0.0
    %6645 = vmatpush1.msra.mxu0 0.0
    %6646 = vmatprep.subr.mxu0 0.0
    %6647 = vmatpush1.msra.mxu0 0.0
    %6648 = vmatprep.subr.mxu0 0.0
    %6649 = vmatpush1.msra.mxu0 0.0
    %6650 = vmatprep.subr.mxu0 0.0
    %6651 = vmatpush1.msra.mxu0 0.0
    %6652 = vmatprep.subr.mxu0 0.0
    %6653 = vmatpush1.msra.mxu0 0.0
    %6654 = vmatprep.subr.mxu0 0.0
    %6655 = vmatpush1.msra.mxu0 0.0
    %6656 = vmatprep.subr.mxu0 0.0
    %6657 = vmatpush1.msra.mxu0 0.0
    %6658 = vmatprep.subr.mxu0 0.0
    %6659 = vmatpush1.msra.mxu0 0.0
    %6660 = vmatprep.subr.mxu0 0.0
    %6661 = vmatpush1.msra.mxu0 0.0
    %6662 = vmatprep.subr.mxu0 0.0
    %6663 = vmatpush1.msra.mxu0 0.0
    %6664 = vmatprep.subr.mxu0 0.0
    %6665 = vmatpush1.msra.mxu0 0.0
    %6666 = vmatprep.subr.mxu0 0.0
    %6667 = vmatpush1.msra.mxu0 0.0
    %6668 = vmatprep.subr.mxu0 0.0
    %6669 = vmatpush1.msra.mxu0 0.0
    %6670 = vmatprep.subr.mxu0 0.0
    %6671 = vmatpush1.msra.mxu0 0.0
    %6672 = vmatprep.subr.mxu0 0.0
    %6673 = vmatpush1.msra.mxu0 0.0
    %6674 = vmatprep.subr.mxu0 0.0
    %6675 = vmatpush1.msra.mxu0 0.0
    %6676 = vmatprep.subr.mxu0 0.0
    %6677 = vmatpush1.msra.mxu0 0.0
    %6678 = vmatprep.subr.mxu0 0.0
    %6679 = vmatpush1.msra.mxu0 0.0
    %6680 = vmatprep.subr.mxu0 0.0
    %6681 = vmatpush1.msra.mxu0 0.0
    %6682 = vmatprep.mubr.f32.mxu0 0.0
    %6683 = vmatmul.mubr.f32.gmra.mrb[0].mxu0 %v6546
    %v6684 = vpop.f32.mrb[0].mxu0
    %v6685 = vadd.f32 %v1797, %v6684
    %v6686 = vpop.f32.mrb[0].mxu0
    %6687 = vdwg.mxu0
    %6688 = vmatprep.subr.mxu0 0.0
    %6689 = vmatpush1.msra.mxu0 %v1870
    %6690 = vmatprep.subr.mxu0 0.0
    %6691 = vmatpush1.msra.mxu0 %v1871
    %6692 = vmatprep.subr.mxu0 0.0
    %6693 = vmatpush1.msra.mxu0 %v1872
    %6694 = vmatprep.subr.mxu0 0.0
    %6695 = vmatpush1.msra.mxu0 %v1873
    %6696 = vmatprep.subr.mxu0 0.0
    %6697 = vmatpush1.msra.mxu0 %v1874
    %6698 = vmatprep.subr.mxu0 0.0
    %6699 = vmatpush1.msra.mxu0 %v1875
    %6700 = vmatprep.subr.mxu0 0.0
    %6701 = vmatpush1.msra.mxu0 %v1876
    %6702 = vmatprep.subr.mxu0 0.0
    %6703 = vmatpush1.msra.mxu0 %v1877
    %6704 = vmatprep.subr.mxu0 0.0
    %6705 = vmatpush1.msra.mxu0 0.0
    %6706 = vmatprep.subr.mxu0 0.0
    %6707 = vmatpush1.msra.mxu0 0.0
    %6708 = vmatprep.subr.mxu0 0.0
    %6709 = vmatpush1.msra.mxu0 0.0
    %6710 = vmatprep.subr.mxu0 0.0
    %6711 = vmatpush1.msra.mxu0 0.0
    %6712 = vmatprep.subr.mxu0 0.0
    %6713 = vmatpush1.msra.mxu0 0.0
    %6714 = vmatprep.subr.mxu0 0.0
    %6715 = vmatpush1.msra.mxu0 0.0
    %6716 = vmatprep.subr.mxu0 0.0
    %6717 = vmatpush1.msra.mxu0 0.0
    %6718 = vmatprep.subr.mxu0 0.0
    %6719 = vmatpush1.msra.mxu0 0.0
    %6720 = vmatprep.subr.mxu0 0.0
    %6721 = vmatpush1.msra.mxu0 0.0
    %6722 = vmatprep.subr.mxu0 0.0
    %6723 = vmatpush1.msra.mxu0 0.0
    %6724 = vmatprep.subr.mxu0 0.0
    %6725 = vmatpush1.msra.mxu0 0.0
    %6726 = vmatprep.subr.mxu0 0.0
    %6727 = vmatpush1.msra.mxu0 0.0
    %6728 = vmatprep.subr.mxu0 0.0
    %6729 = vmatpush1.msra.mxu0 0.0
    %6730 = vmatprep.subr.mxu0 0.0
    %6731 = vmatpush1.msra.mxu0 0.0
    %6732 = vmatprep.subr.mxu0 0.0
    %6733 = vmatpush1.msra.mxu0 0.0
    %6734 = vmatprep.subr.mxu0 0.0
    %6735 = vmatpush1.msra.mxu0 0.0
    %6736 = vmatprep.subr.mxu0 0.0
    %6737 = vmatpush1.msra.mxu0 0.0
    %6738 = vmatprep.subr.mxu0 0.0
    %6739 = vmatpush1.msra.mxu0 0.0
    %6740 = vmatprep.subr.mxu0 0.0
    %6741 = vmatpush1.msra.mxu0 0.0
    %6742 = vmatprep.subr.mxu0 0.0
    %6743 = vmatpush1.msra.mxu0 0.0
    %6744 = vmatprep.subr.mxu0 0.0
    %6745 = vmatpush1.msra.mxu0 0.0
    %6746 = vmatprep.subr.mxu0 0.0
    %6747 = vmatpush1.msra.mxu0 0.0
    %6748 = vmatprep.subr.mxu0 0.0
    %6749 = vmatpush1.msra.mxu0 0.0
    %6750 = vmatprep.subr.mxu0 0.0
    %6751 = vmatpush1.msra.mxu0 0.0
    %6752 = vmatprep.mubr.f32.mxu0 0.0
    %6753 = vmatmul.mubr.f32.gmra.mrb[0].mxu0 %v6546
    %v6754 = vpop.f32.mrb[0].mxu0
    %v6755 = vadd.f32 %v1884, %v6754
    %v6756 = vpop.f32.mrb[0].mxu0
    %6757 = vdwg.mxu0
    %v6758 = vadd.f32 %v6402, %v6615
    %v6759 = vxor.u32 %v6758, 2147483648
    %v6760 = vmul.f32 %v6759, 1.442695
    %v6761 = vpow.pop %v6760
    %v6762 = vadd.f32 %v6761, 1.0
    %v6763 = vrcp.pop %v6762
    %v6764 = vmul.f32 1.0, %v6763
    %v6765 = vadd.f32 %v6472, %v6685
    %v6766 = vxor.u32 %v6765, 2147483648
    %v6767 = vmul.f32 %v6766, 1.442695
    %v6768 = vpow.pop %v6767
    %v6769 = vadd.f32 %v6768, 1.0
    %v6770 = vrcp.pop %v6769
    %v6771 = vmul.f32 1.0, %v6770
    %v6772 = vmul.f32 %v6764, %v6755
    %v6773 = vadd.f32 %v6542, %v6772
    %v6774 = vtanh.pop %v6773
    %v6775 = vsub.f32 1.0, %v6771
    %v6776 = vmul.f32 %v6775, %v6774
    %v6777 = vmul.f32 %v6771, %v6092
    %v6778 = vadd.f32 %v6776, %v6777
    %6779 = vst.msk [vmem:[#allocation15] sm:$0xff] %vm301, %v6778
    // Predicated region
    $region98: #{tpu_custom_call.1} parent=1 // pred_check
      _
    $region99: #{tpu_custom_call.1} parent=1 // pred_check_branch
      %6781 = sbr.rel (0) target = $region101
    $region100: #{tpu_custom_call.1} parent=1 // pred_region
      %s6783 = ssub.s32 128, 128
      %6784 = vsyncadd [#allocation5], %s6783
      %s6786 = sshll.u32 [#allocation15], 4
      %s6787 = int_to_ptr.vmem [resolvable:$true] %s6786
      %6789 = dma.vmem_to_hbm [thread:$0]  %s6787, 128, %s17, [#allocation5]
    $region101: #{tpu_custom_call.1} parent=1 // pred_fallthru
      _
    // Predicated region
    $region102: #{tpu_custom_call.1} parent=1 // pred_check
      _
    $region103: #{tpu_custom_call.1} parent=1 // pred_check_branch
      %6791 = sbr.rel (0) target = $region105
    $region104: #{tpu_custom_call.1} parent=1 // pred_region
      %6792 = dma.done [#allocation5], 128
    $region105: #{tpu_custom_call.1} parent=1 // pred_fallthru
      _
    %6793 = vsyncpa [#allocation4], 1
    %6794 = vsyncpa [#allocation7], 1
    %6795 = vsyncpa [#allocation10], 1
    %6796 = vsyncpa [#allocation13], 1
    %6797 = vsyncpa [#allocation5], 1

</llo_original>
